<compile_context>
chip_gen: v7x
topology: tpu7x:2x2x1
jax: 0.10.0
libtpu: 0.0.40
codegen_flags: <defaults>
</compile_context>

<pallas_src>
import functools

import jax
import jax.numpy as jnp
from jax import lax
from jax.experimental import pallas as pl
from jax.experimental.pallas import tpu as pltpu

CODE_DIM = 4
N_CLASSES = 3
LRELU_SLOPE = 0.2
HEAD_PAD = 128  # lane-dense padded width of the fused cat+cont head output


# ----------------------------------------------------------------------------
# Kernel 1: layer-1 conv (Cin=1) as a single im2col matmul + bias + LeakyReLU.
#   x_ref: (ho*wo, 16) bf16   w_ref: (16, 32) bf16   b_ref: (1, 32) f32
# ----------------------------------------------------------------------------
def _matmul_bias_lrelu_kernel(x_ref, w_ref, b_ref, o_ref, *, slope):
    y = jnp.dot(x_ref[...], w_ref[...], preferred_element_type=jnp.float32)
    y = y + b_ref[...]
    y = jnp.where(y > 0, y, slope * y)
    o_ref[...] = y.astype(o_ref.dtype)


def conv1_im2col_matmul(patches, w, b):
    B, M, K = patches.shape
    cout = w.shape[-1]
    cost = pl.CostEstimate(
        flops=2 * B * M * K * cout, transcendentals=0,
        bytes_accessed=patches.size * 2 + w.size * 2 + b.size * 4 + B * M * cout * 2)
    return pl.pallas_call(
        functools.partial(_matmul_bias_lrelu_kernel, slope=LRELU_SLOPE),
        out_shape=jax.ShapeDtypeStruct((B, M, cout), jnp.bfloat16),
        grid=(B,),
        in_specs=[
            pl.BlockSpec((None, M, K), lambda n: (n, 0, 0)),
            pl.BlockSpec((K, cout), lambda n: (0, 0)),
            pl.BlockSpec((1, cout), lambda n: (0, 0)),
        ],
        out_specs=pl.BlockSpec((None, M, cout), lambda n: (n, 0, 0)),
        compiler_params=pltpu.CompilerParams(dimension_semantics=("parallel",)),
        cost_estimate=cost,
    )(patches, w, b)


# ----------------------------------------------------------------------------
# Kernel 2: conv layers 2-4 (4x4, stride 2, pad 1) + LeakyReLU on a
# space-to-depth view of the padded input:
#     xs[r, c, (2p+q)*Cin + ci] = x_pad[2r+p, 2c+q, ci],  p, q in {0, 1}
# so the conv becomes 2 full-plane matmuls (a = 0, 1) with the two b-taps
# concatenated along the contraction dim:
#     out[i*wo+j, :] = sum_a [xs[i+a, j, :], xs[i+a, j+1, :]] @ Wcat[a]
# ----------------------------------------------------------------------------
def _conv_s2d_kernel(x_ref, w_ref, b_ref, o_ref, *, ho, wo, slope):
    # x_ref: (ho+1, wo+1, c4) bf16   w_ref: (2, 2*c4, cout) bf16
    # b_ref: (1, cout) f32           o_ref: (ho, wo, cout)  bf16
    c4 = x_ref.shape[-1]
    cout = o_ref.shape[-1]
    bias = b_ref[...]

    def lrelu(v):
        return jnp.where(v > 0, v, slope * v)

    if wo % 8 == 0:
        # Full-plane path: M = ho*wo rows per tap matmul, K = 2*c4.
        acc = jnp.zeros((ho * wo, cout), jnp.float32)
        for a in range(2):
            blk = x_ref[pl.ds(a, ho)]                              # (ho, wo+1, c4)
            lhs = jnp.concatenate([blk[:, 0:wo, :], blk[:, 1:wo + 1, :]], axis=-1)
            lhs = lhs.reshape(ho * wo, 2 * c4)
            acc = acc + jnp.dot(lhs, w_ref[a],
                                preferred_element_type=jnp.float32)
        y = lrelu(acc + bias)
        o_ref[...] = y.reshape(ho, wo, cout).astype(o_ref.dtype)
    else:
        # Tiny plane (wo < 8, last conv): statically unrolled per-row path with
        # hoisted weight / bias / row loads (each input row loaded exactly once).
        w0 = w_ref[0]
        w1 = w_ref[1]
        rows = [x_ref[i] for i in range(ho + 1)]                   # (wo+1, c4) each
        lhs_rows = [jnp.concatenate([r[0:wo, :], r[1:wo + 1, :]], axis=-1)
                    for r in rows]
        for i in range(ho):
            acc = jnp.dot(lhs_rows[i], w0, preferred_element_type=jnp.float32)
            acc = acc + jnp.dot(lhs_rows[i + 1], w1,
                                preferred_element_type=jnp.float32)
            o_ref[i] = lrelu(acc + bias).astype(o_ref.dtype)


def _pad_space_to_depth(x_nhwc):
    """Zero-pad by 1, fold the stride-2 phase into channels (no duplication)."""
    B, H, W, C = x_nhwc.shape
    xp = jnp.pad(x_nhwc, ((0, 0), (1, 1), (1, 1), (0, 0)))
    hs, ws = (H + 2) // 2, (W + 2) // 2
    xs = xp.reshape(B, hs, 2, ws, 2, C)
    xs = jnp.transpose(xs, (0, 1, 3, 2, 4, 5))
    return xs.reshape(B, hs, ws, 4 * C)


def conv_s2d(xs, w_pack, bias):
    """Conv2d(Cin->Cout, 4, 2, 1) + LeakyReLU(0.2) as one pallas_call."""
    B, hs, ws, c4 = xs.shape
    ho, wo = hs - 1, ws - 1
    cout = w_pack.shape[-1]
    cost = pl.CostEstimate(
        flops=2 * B * ho * wo * (4 * c4) * cout, transcendentals=0,
        bytes_accessed=xs.size * 2 + w_pack.size * 2 + bias.size * 4
                       + B * ho * wo * cout * 2)
    kern = functools.partial(_conv_s2d_kernel, ho=ho, wo=wo, slope=LRELU_SLOPE)
    return pl.pallas_call(
        kern,
        out_shape=jax.ShapeDtypeStruct((B, ho, wo, cout), jnp.bfloat16),
        grid=(B,),
        in_specs=[
            pl.BlockSpec((None, hs, ws, c4), lambda n: (n, 0, 0, 0)),
            pl.BlockSpec(w_pack.shape, lambda n: (0, 0, 0)),
            pl.BlockSpec(bias.shape, lambda n: (0, 0)),
        ],
        out_specs=pl.BlockSpec((None, ho, wo, cout), lambda n: (n, 0, 0, 0)),
        compiler_params=pltpu.CompilerParams(dimension_semantics=("parallel",)),
        cost_estimate=cost,
    )(xs, w_pack, bias)


# ----------------------------------------------------------------------------
# Kernel 3: fused FC tail, gridded over batch tiles.
#   fc1(1024->128)+LReLU -> fc2(128->128)+LReLU -> padded head (128->128)
#   (cols 0:3 = softmax cat, cols 3:7 = cont, rest zero) -> one lane-dense store.
# ----------------------------------------------------------------------------
def _fc_tail_kernel(x_ref, w1_ref, b1_ref, w2_ref, b2_ref, wh_ref, bh_ref,
                    out_ref, *, slope, n_classes):
    def lrelu(v):
        return jnp.where(v > 0, v, slope * v)

    h = jnp.dot(x_ref[...], w1_ref[...], preferred_element_type=jnp.float32)
    h = lrelu(h + b1_ref[...])
    h = jnp.dot(h.astype(jnp.bfloat16), w2_ref[...],
                preferred_element_type=jnp.float32)
    h = lrelu(h + b2_ref[...])
    z = jnp.dot(h.astype(jnp.bfloat16), wh_ref[...],
                preferred_element_type=jnp.float32) + bh_ref[...]   # (bm, 128)

    # Full-width masked softmax over the first n_classes lanes (lane-dense,
    # no narrow slices / masked stores); cols >= n_classes pass z through.
    col = lax.broadcasted_iota(jnp.int32, z.shape, 1)
    is_cat = col < n_classes
    logits = jnp.where(is_cat, z, -1e30)
    m = jnp.max(logits, axis=-1, keepdims=True)
    e = jnp.exp(logits - m)
    p = e * pl.reciprocal(jnp.sum(e, axis=-1, keepdims=True), approx=True)
    out_ref[...] = jnp.where(is_cat, p, z).astype(out_ref.dtype)


def fc_tail(x_flat, params):
    B, K = x_flat.shape
    bm = min(B, 128)
    w1, b1 = params["fc1_w"], params["fc1_b"]
    w2, b2 = params["fc2_w"], params["fc2_b"]
    wh, bh = params["head_w"], params["head_b"]
    wbytes = sum(a.size * a.dtype.itemsize for a in (w1, b1, w2, b2, wh, bh))
    cost = pl.CostEstimate(
        flops=2 * B * (K * 128 + 128 * 128 + 128 * HEAD_PAD),
        transcendentals=B * HEAD_PAD,
        bytes_accessed=x_flat.size * 2 + wbytes + B * HEAD_PAD * 4)
    kern = functools.partial(_fc_tail_kernel, slope=LRELU_SLOPE,
                             n_classes=N_CLASSES)
    return pl.pallas_call(
        kern,
        out_shape=jax.ShapeDtypeStruct((B, HEAD_PAD), jnp.float32),
        grid=(pl.cdiv(B, bm),),
        in_specs=[
            pl.BlockSpec((bm, K), lambda i: (i, 0)),
            pl.BlockSpec(w1.shape, lambda i: (0, 0)),
            pl.BlockSpec(b1.shape, lambda i: (0, 0)),
            pl.BlockSpec(w2.shape, lambda i: (0, 0)),
            pl.BlockSpec(b2.shape, lambda i: (0, 0)),
            pl.BlockSpec(wh.shape, lambda i: (0, 0)),
            pl.BlockSpec(bh.shape, lambda i: (0, 0)),
        ],
        out_specs=pl.BlockSpec((bm, HEAD_PAD), lambda i: (i, 0)),
        compiler_params=pltpu.CompilerParams(dimension_semantics=("parallel",)),
        cost_estimate=cost,
    )(x_flat, w1, b1, w2, b2, wh, bh)


# ----------------------------------------------------------------------------
# Parameter setup (deterministic) + spectral normalization glue (init-time).
# ----------------------------------------------------------------------------
def spectral_normalize(w, key, n_iters=8):
    """Divide w by its largest singular value (w viewed as (dim0, -1))."""
    w2 = w.reshape(w.shape[0], -1)
    u = jax.random.normal(key, (w2.shape[0],), jnp.float32)
    u = u / (jnp.linalg.norm(u) + 1e-12)
    v = None
    for _ in range(n_iters):
        v = w2.T @ u
        v = v / (jnp.linalg.norm(v) + 1e-12)
        u = w2 @ v
        u = u / (jnp.linalg.norm(u) + 1e-12)
    sigma = u @ (w2 @ v)
    return w / sigma


def _uniform(key, shape, fan_in):
    bound = (1.0 / fan_in) ** 0.5
    return jax.random.uniform(key, shape, jnp.float32, -bound, bound)


def _pack_conv_weight_bcat(w_oihw):
    """(Cout, Cin, 4, 4) -> (2, 8*Cin, Cout): tap a, k = b*4Cin + (2p+q)*Cin + ci."""
    cout, cin = w_oihw.shape[:2]
    w6 = w_oihw.reshape(cout, cin, 2, 2, 2, 2)     # (co, ci, a, p, b, q)
    wp = jnp.transpose(w6, (2, 4, 3, 5, 1, 0))     # (a, b, p, q, ci, co)
    return wp.reshape(2, 8 * cin, cout)


def init_params(key):
    keys = iter(jax.random.split(key, 24))

    raw_convs, packed_convs = [], []
    for li, (cin, cout) in enumerate([(1, 32), (32, 32), (32, 64), (64, 64)]):
        fan_in = cin * 16
        w = spectral_normalize(_uniform(next(keys), (cout, cin, 4, 4), fan_in),
                               next(keys))
        b = _uniform(next(keys), (cout,), fan_in)
        raw_convs.append((w, b))
        if li == 0:
            wp = w[:, 0, :, :].reshape(cout, 16).T        # im2col weight (16, 32)
        else:
            wp = _pack_conv_weight_bcat(w)                # (2, 8*cin, cout)
        packed_convs.append((wp.astype(jnp.bfloat16),
                             b.reshape(1, cout).astype(jnp.float32)))

    def linear(fin, fout):
        w = spectral_normalize(_uniform(next(keys), (fout, fin), fin), next(keys))
        b = _uniform(next(keys), (fout,), fin)
        return w, b

    w1, b1 = linear(1024, 128)
    w2, b2 = linear(128, 128)
    wc, bc = linear(128, N_CLASSES)
    wd, bd = linear(128, CODE_DIM)

    raw = {"convs": raw_convs, "fc1": (w1, b1), "fc2": (w2, b2),
           "cat": (wc, bc), "cont": (wd, bd)}

    # fc1: fold PyTorch's NCHW flatten order into the weight so the kernel can
    # consume the conv4 output in NHWC-flatten order without any transpose.
    w1p = jnp.transpose(w1.reshape(128, 64, 4, 4), (2, 3, 1, 0)).reshape(1024, 128)

    # cat (128->3, softmax) + cont (128->4) folded into one lane-dense
    # zero-padded (128, 128) head matmul.
    head_w = jnp.zeros((128, HEAD_PAD), jnp.float32)
    head_w = head_w.at[:, :N_CLASSES].set(wc.T)
    head_w = head_w.at[:, N_CLASSES:N_CLASSES + CODE_DIM].set(wd.T)
    head_b = jnp.zeros((HEAD_PAD,), jnp.float32)
    head_b = head_b.at[:N_CLASSES].set(bc)
    head_b = head_b.at[N_CLASSES:N_CLASSES + CODE_DIM].set(bd)

    packed = {
        "convs": packed_convs,
        "fc1_w": w1p.astype(jnp.bfloat16),
        "fc1_b": b1.reshape(1, 128).astype(jnp.float32),
        "fc2_w": w2.T.astype(jnp.bfloat16),
        "fc2_b": b2.reshape(1, 128).astype(jnp.float32),
        "head_w": head_w.astype(jnp.bfloat16),
        "head_b": head_b.reshape(1, HEAD_PAD).astype(jnp.float32),
    }
    return packed, raw


# ----------------------------------------------------------------------------
# Forward pass (matches PyTorch Encoder.forward)
# ----------------------------------------------------------------------------
def encoder_forward(img_nchw, params):
    B, C, H, W = img_nchw.shape                    # C == 1
    x2d = img_nchw.astype(jnp.bfloat16).reshape(B, H, W)

    # Layer 1: Cin=1 -> full 4x4/stride-2/pad-1 im2col (cheap XLA slices),
    # then one (H/2*W/2, 16) @ (16, 32) matmul kernel.
    xp = jnp.pad(x2d, ((0, 0), (1, 1), (1, 1)))
    patches = jnp.stack([xp[:, p:p + H:2, q:q + W:2]
                         for p in range(4) for q in range(4)], axis=-1)
    ho, wo = H // 2, W // 2
    patches = patches.reshape(B, ho * wo, 16)
    w0, b0 = params["convs"][0]
    x = conv1_im2col_matmul(patches, w0, b0).reshape(B, ho, wo, 32)

    # Layers 2-4: pad + space-to-depth in XLA (no duplication), conv kernel.
    for w_pack, bias in params["convs"][1:]:
        xs = _pad_space_to_depth(x)
        x = conv_s2d(xs, w_pack, bias)             # 32 -> 16 -> 8 -> 4 spatial

    x_flat = x.reshape(B, -1)                      # NHWC flatten; fc1_w permuted to match
    out = fc_tail(x_flat, params)                  # (B, 128) lane-dense
    cat = out[:, :N_CLASSES]
    cont = out[:, N_CLASSES:N_CLASSES + CODE_DIM]
    return cat, cont


# Pure-JAX f32 reference (same normalized weights) for a correctness check.
def reference_forward(img_nchw, raw):
    x = img_nchw
    for w, b in raw["convs"]:
        x = lax.conv_general_dilated(
            x, w, window_strides=(2, 2), padding=((1, 1), (1, 1)),
            dimension_numbers=("NCHW", "OIHW", "NCHW"))
        x = x + b.reshape(1, -1, 1, 1)
        x = jnp.where(x > 0, x, LRELU_SLOPE * x)
    x = x.reshape(x.shape[0], -1)
    for w, b in (raw["fc1"], raw["fc2"]):
        x = x @ w.T + b
        x = jnp.where(x > 0, x, LRELU_SLOPE * x)
    wc, bc = raw["cat"]
    wd, bd = raw["cont"]
    cat = jax.nn.softmax(x @ wc.T + bc, axis=-1)
    cont = x @ wd.T + bd
    return cat, cont


if __name__ == "__main__":
    key = jax.random.PRNGKey(0)
    k_img, k_par = jax.random.split(key)
    # dSprites-style input: batch=2, 1 channel, 64x64 (forced by fc1's 1024 = 64*4*4)
    img = jax.random.normal(k_img, (2, 1, 64, 64), jnp.float32)
    packed, raw = init_params(k_par)

    fwd = jax.jit(encoder_forward)
    cat, cont = fwd(img, packed)
    cat, cont = jax.block_until_ready((cat, cont))

    cat_ref, cont_ref = jax.jit(reference_forward)(img, raw)

    assert cat.shape == (2, N_CLASSES), cat.shape
    assert cont.shape == (2, CODE_DIM), cont.shape
    assert bool(jnp.all(jnp.isfinite(cat))) and bool(jnp.all(jnp.isfinite(cont)))
    # approx reciprocal in the softmax denominator -> loosened tolerance.
    assert bool(jnp.allclose(jnp.sum(cat, axis=-1), 1.0, atol=1e-2))
    # bf16 matmuls vs f32 reference -> generous tolerance.
    assert bool(jnp.allclose(cat, cat_ref, atol=5e-2, rtol=5e-2))
    assert bool(jnp.allclose(cont, cont_ref, atol=5e-2, rtol=5e-2))
    print("KERNEL_OK")
</pallas_src>

<mosaic_0001>
module attributes {stable_mosaic.version = 11 : i64} {
  func.func @_matmul_bias_lrelu_kernel(%arg0: i32, %arg1: memref<1x1024x16xbf16, #tpu.memory_space<vmem>>, %arg2: memref<16x32xbf16, #tpu.memory_space<vmem>>, %arg3: memref<1x32xf32, #tpu.memory_space<vmem>>, %arg4: memref<1x1024x32xbf16, #tpu.memory_space<vmem>>) attributes {dimension_semantics = [#tpu.dimension_semantics<parallel>], iteration_bounds = array<i64: 2>, scalar_prefetch = 0 : i64, scratch_operands = 0 : i64, tpu.core_type = #tpu.core_type<tc>, window_params = [{transform_indices = @transform_0, window_bounds = array<i64: 1, 1024, 16>}, {pipeline_mode = #tpu.pipeline_mode<synchronous>, transform_indices = @transform_1, window_bounds = array<i64: 16, 32>}, {pipeline_mode = #tpu.pipeline_mode<synchronous>, transform_indices = @transform_2, window_bounds = array<i64: 1, 32>}, {transform_indices = @transform_3, window_bounds = array<i64: 1, 1024, 32>}]} {
    %c0 = arith.constant 0 : index
    %c0_0 = arith.constant 0 : index
    %c0_1 = arith.constant 0 : index
    %0 = vector.load %arg1[%c0, %c0_0, %c0_1] : memref<1x1024x16xbf16, #tpu.memory_space<vmem>>, vector<1x1024x16xbf16>
    %1 = vector.shape_cast %0 : vector<1x1024x16xbf16> to vector<1024x16xbf16>
    %c0_2 = arith.constant 0 : index
    %c0_3 = arith.constant 0 : index
    %2 = vector.load %arg2[%c0_2, %c0_3] : memref<16x32xbf16, #tpu.memory_space<vmem>>, vector<16x32xbf16>
    %cst = arith.constant dense<0.000000e+00> : vector<1024x32xf32>
    %3 = tpu.matmul %1, %2, %cst {dimension_numbers = #tpu.dot_dimension_numbers<[1], [0], [0], [1], [0, 0, 1, 1], [], []>} : vector<1024x16xbf16>, vector<16x32xbf16>, vector<1024x32xf32> -> vector<1024x32xf32>
    %c0_4 = arith.constant 0 : index
    %c0_5 = arith.constant 0 : index
    %4 = vector.load %arg3[%c0_4, %c0_5] : memref<1x32xf32, #tpu.memory_space<vmem>>, vector<1x32xf32>
    %5 = vector.broadcast %4 : vector<1x32xf32> to vector<1024x32xf32>
    %6 = arith.addf %3, %5 : vector<1024x32xf32>
    %cst_6 = arith.constant 0.000000e+00 : f32
    %7 = vector.broadcast %cst_6 : f32 to vector<1024x32xf32>
    %8 = arith.cmpf ogt, %6, %7 : vector<1024x32xf32>
    %cst_7 = arith.constant 2.000000e-01 : f32
    %9 = vector.broadcast %cst_7 : f32 to vector<1024x32xf32>
    %10 = arith.mulf %9, %6 : vector<1024x32xf32>
    %11 = arith.select %8, %6, %10 : vector<1024x32xi1>, vector<1024x32xf32>
    %12 = arith.truncf %11 : vector<1024x32xf32> to vector<1024x32xbf16>
    %c0_8 = arith.constant 0 : index
    %c0_9 = arith.constant 0 : index
    %c0_10 = arith.constant 0 : index
    %13 = vector.load %arg4[%c0_8, %c0_9, %c0_10] : memref<1x1024x32xbf16, #tpu.memory_space<vmem>>, vector<1x1024x32xbf16>
    %14 = vector.shape_cast %13 : vector<1x1024x32xbf16> to vector<1024x32xbf16>
    %15 = vector.shape_cast %12 : vector<1024x32xbf16> to vector<1x1024x32xbf16>
    tpu.vector_store %arg4[%c0_8, %c0_9, %c0_10], %15 {strides = array<i32>} : memref<1x1024x32xbf16, #tpu.memory_space<vmem>>, vector<1x1024x32xbf16>,
    return
  }
  func.func @transform_0(%arg0: i32) -> (i32, i32, i32) {
    %c0_i32 = arith.constant 0 : i32
    %c0_i32_0 = arith.constant 0 : i32
    %c0_i32_1 = arith.constant 0 : i32
    return %arg0, %c0_i32, %c0_i32_0 : i32, i32, i32
  }
  func.func @transform_1(%arg0: i32) -> (i32, i32) {
    %c0_i32 = arith.constant 0 : i32
    %c0_i32_0 = arith.constant 0 : i32
    %c0_i32_1 = arith.constant 0 : i32
    return %c0_i32, %c0_i32_0 : i32, i32
  }
  func.func @transform_2(%arg0: i32) -> (i32, i32) {
    %c0_i32 = arith.constant 0 : i32
    %c0_i32_0 = arith.constant 0 : i32
    %c0_i32_1 = arith.constant 0 : i32
    return %c0_i32, %c0_i32_0 : i32, i32
  }
  func.func @transform_3(%arg0: i32) -> (i32, i32, i32) {
    %c0_i32 = arith.constant 0 : i32
    %c0_i32_0 = arith.constant 0 : i32
    %c0_i32_1 = arith.constant 0 : i32
    return %arg0, %c0_i32, %c0_i32_0 : i32, i32, i32
  }
}

module attributes {stable_mosaic.version = 11 : i64} {
  func.func @_conv_s2d_kernel(%arg0: i32, %arg1: memref<1x17x17x128xbf16, #tpu.memory_space<vmem>>, %arg2: memref<2x256x32xbf16, #tpu.memory_space<vmem>>, %arg3: memref<1x32xf32, #tpu.memory_space<vmem>>, %arg4: memref<1x16x16x32xbf16, #tpu.memory_space<vmem>>) attributes {dimension_semantics = [#tpu.dimension_semantics<parallel>], iteration_bounds = array<i64: 2>, scalar_prefetch = 0 : i64, scratch_operands = 0 : i64, tpu.core_type = #tpu.core_type<tc>, window_params = [{transform_indices = @transform_0, window_bounds = array<i64: 1, 17, 17, 128>}, {pipeline_mode = #tpu.pipeline_mode<synchronous>, transform_indices = @transform_1, window_bounds = array<i64: 2, 256, 32>}, {pipeline_mode = #tpu.pipeline_mode<synchronous>, transform_indices = @transform_2, window_bounds = array<i64: 1, 32>}, {transform_indices = @transform_3, window_bounds = array<i64: 1, 16, 16, 32>}]} {
    %c0 = arith.constant 0 : index
    %c0_0 = arith.constant 0 : index
    %0 = vector.load %arg3[%c0, %c0_0] : memref<1x32xf32, #tpu.memory_space<vmem>>, vector<1x32xf32>
    %cst = arith.constant 0.000000e+00 : f32
    %1 = vector.broadcast %cst : f32 to vector<256x32xf32>
    %c0_1 = arith.constant 0 : index
    %c0_2 = arith.constant 0 : index
    %c0_3 = arith.constant 0 : index
    %c0_4 = arith.constant 0 : index
    %2 = vector.load %arg1[%c0_1, %c0_2, %c0_3, %c0_4] : memref<1x17x17x128xbf16, #tpu.memory_space<vmem>>, vector<1x16x17x128xbf16>
    %3 = vector.shape_cast %2 : vector<1x16x17x128xbf16> to vector<16x17x128xbf16>
    %4 = vector.extract_strided_slice %3 {offsets = [0, 0, 0], sizes = [16, 16, 128], strides = [1, 1, 1]} : vector<16x17x128xbf16> to vector<16x16x128xbf16>
    %5 = vector.extract_strided_slice %3 {offsets = [0, 1, 0], sizes = [16, 16, 128], strides = [1, 1, 1]} : vector<16x17x128xbf16> to vector<16x16x128xbf16>
    %6 = tpu.concatenate %4, %5 in 2 : vector<16x16x128xbf16>, vector<16x16x128xbf16> -> vector<16x16x256xbf16>
    %7 = vector.shape_cast %6 : vector<16x16x256xbf16> to vector<256x256xbf16>
    %c0_5 = arith.constant 0 : index
    %c0_6 = arith.constant 0 : index
    %c0_7 = arith.constant 0 : index
    %8 = vector.load %arg2[%c0_5, %c0_6, %c0_7] : memref<2x256x32xbf16, #tpu.memory_space<vmem>>, vector<1x256x32xbf16>
    %9 = vector.shape_cast %8 : vector<1x256x32xbf16> to vector<256x32xbf16>
    %cst_8 = arith.constant dense<0.000000e+00> : vector<256x32xf32>
    %10 = tpu.matmul %7, %9, %cst_8 {dimension_numbers = #tpu.dot_dimension_numbers<[1], [0], [0], [1], [0, 0, 1, 1], [], []>} : vector<256x256xbf16>, vector<256x32xbf16>, vector<256x32xf32> -> vector<256x32xf32>
    %11 = arith.addf %1, %10 : vector<256x32xf32>
    %c0_9 = arith.constant 0 : index
    %c1 = arith.constant 1 : index
    %c0_10 = arith.constant 0 : index
    %c0_11 = arith.constant 0 : index
    %12 = vector.load %arg1[%c0_9, %c1, %c0_10, %c0_11] : memref<1x17x17x128xbf16, #tpu.memory_space<vmem>>, vector<1x16x17x128xbf16>
    %13 = vector.shape_cast %12 : vector<1x16x17x128xbf16> to vector<16x17x128xbf16>
    %14 = vector.extract_strided_slice %13 {offsets = [0, 0, 0], sizes = [16, 16, 128], strides = [1, 1, 1]} : vector<16x17x128xbf16> to vector<16x16x128xbf16>
    %15 = vector.extract_strided_slice %13 {offsets = [0, 1, 0], sizes = [16, 16, 128], strides = [1, 1, 1]} : vector<16x17x128xbf16> to vector<16x16x128xbf16>
    %16 = tpu.concatenate %14, %15 in 2 : vector<16x16x128xbf16>, vector<16x16x128xbf16> -> vector<16x16x256xbf16>
    %17 = vector.shape_cast %16 : vector<16x16x256xbf16> to vector<256x256xbf16>
    %c1_12 = arith.constant 1 : index
    %c0_13 = arith.constant 0 : index
    %c0_14 = arith.constant 0 : index
    %18 = vector.load %arg2[%c1_12, %c0_13, %c0_14] : memref<2x256x32xbf16, #tpu.memory_space<vmem>>, vector<1x256x32xbf16>
    %19 = vector.shape_cast %18 : vector<1x256x32xbf16> to vector<256x32xbf16>
    %cst_15 = arith.constant dense<0.000000e+00> : vector<256x32xf32>
    %20 = tpu.matmul %17, %19, %cst_15 {dimension_numbers = #tpu.dot_dimension_numbers<[1], [0], [0], [1], [0, 0, 1, 1], [], []>} : vector<256x256xbf16>, vector<256x32xbf16>, vector<256x32xf32> -> vector<256x32xf32>
    %21 = arith.addf %11, %20 : vector<256x32xf32>
    %22 = vector.broadcast %0 : vector<1x32xf32> to vector<256x32xf32>
    %23 = arith.addf %21, %22 : vector<256x32xf32>
    %cst_16 = arith.constant 0.000000e+00 : f32
    %24 = vector.broadcast %cst_16 : f32 to vector<256x32xf32>
    %25 = arith.cmpf ogt, %23, %24 : vector<256x32xf32>
    %cst_17 = arith.constant 2.000000e-01 : f32
    %26 = vector.broadcast %cst_17 : f32 to vector<256x32xf32>
    %27 = arith.mulf %26, %23 : vector<256x32xf32>
    %28 = arith.select %25, %23, %27 : vector<256x32xi1>, vector<256x32xf32>
    %29 = vector.shape_cast %28 : vector<256x32xf32> to vector<16x16x32xf32>
    %30 = arith.truncf %29 : vector<16x16x32xf32> to vector<16x16x32xbf16>
    %c0_18 = arith.constant 0 : index
    %c0_19 = arith.constant 0 : index
    %c0_20 = arith.constant 0 : index
    %c0_21 = arith.constant 0 : index
    %31 = vector.load %arg4[%c0_18, %c0_19, %c0_20, %c0_21] : memref<1x16x16x32xbf16, #tpu.memory_space<vmem>>, vector<1x16x16x32xbf16>
    %32 = vector.shape_cast %31 : vector<1x16x16x32xbf16> to vector<16x16x32xbf16>
    %33 = vector.shape_cast %30 : vector<16x16x32xbf16> to vector<1x16x16x32xbf16>
    tpu.vector_store %arg4[%c0_18, %c0_19, %c0_20, %c0_21], %33 {strides = array<i32>} : memref<1x16x16x32xbf16, #tpu.memory_space<vmem>>, vector<1x16x16x32xbf16>,
    return
  }
  func.func @transform_0(%arg0: i32) -> (i32, i32, i32, i32) {
    %c0_i32 = arith.constant 0 : i32
    %c0_i32_0 = arith.constant 0 : i32
    %c0_i32_1 = arith.constant 0 : i32
    %c0_i32_2 = arith.constant 0 : i32
    return %arg0, %c0_i32, %c0_i32_0, %c0_i32_1 : i32, i32, i32, i32
  }
  func.func @transform_1(%arg0: i32) -> (i32, i32, i32) {
    %c0_i32 = arith.constant 0 : i32
    %c0_i32_0 = arith.constant 0 : i32
    %c0_i32_1 = arith.constant 0 : i32
    %c0_i32_2 = arith.constant 0 : i32
    return %c0_i32, %c0_i32_0, %c0_i32_1 : i32, i32, i32
  }
  func.func @transform_2(%arg0: i32) -> (i32, i32) {
    %c0_i32 = arith.constant 0 : i32
    %c0_i32_0 = arith.constant 0 : i32
    %c0_i32_1 = arith.constant 0 : i32
    return %c0_i32, %c0_i32_0 : i32, i32
  }
  func.func @transform_3(%arg0: i32) -> (i32, i32, i32, i32) {
    %c0_i32 = arith.constant 0 : i32
    %c0_i32_0 = arith.constant 0 : i32
    %c0_i32_1 = arith.constant 0 : i32
    %c0_i32_2 = arith.constant 0 : i32
    return %arg0, %c0_i32, %c0_i32_0, %c0_i32_1 : i32, i32, i32, i32
  }
}

module attributes {stable_mosaic.version = 11 : i64} {
  func.func @_conv_s2d_kernel(%arg0: i32, %arg1: memref<1x9x9x128xbf16, #tpu.memory_space<vmem>>, %arg2: memref<2x256x64xbf16, #tpu.memory_space<vmem>>, %arg3: memref<1x64xf32, #tpu.memory_space<vmem>>, %arg4: memref<1x8x8x64xbf16, #tpu.memory_space<vmem>>) attributes {dimension_semantics = [#tpu.dimension_semantics<parallel>], iteration_bounds = array<i64: 2>, scalar_prefetch = 0 : i64, scratch_operands = 0 : i64, tpu.core_type = #tpu.core_type<tc>, window_params = [{transform_indices = @transform_0, window_bounds = array<i64: 1, 9, 9, 128>}, {pipeline_mode = #tpu.pipeline_mode<synchronous>, transform_indices = @transform_1, window_bounds = array<i64: 2, 256, 64>}, {pipeline_mode = #tpu.pipeline_mode<synchronous>, transform_indices = @transform_2, window_bounds = array<i64: 1, 64>}, {transform_indices = @transform_3, window_bounds = array<i64: 1, 8, 8, 64>}]} {
    %c0 = arith.constant 0 : index
    %c0_0 = arith.constant 0 : index
    %0 = vector.load %arg3[%c0, %c0_0] : memref<1x64xf32, #tpu.memory_space<vmem>>, vector<1x64xf32>
    %cst = arith.constant 0.000000e+00 : f32
    %1 = vector.broadcast %cst : f32 to vector<64x64xf32>
    %c0_1 = arith.constant 0 : index
    %c0_2 = arith.constant 0 : index
    %c0_3 = arith.constant 0 : index
    %c0_4 = arith.constant 0 : index
    %2 = vector.load %arg1[%c0_1, %c0_2, %c0_3, %c0_4] : memref<1x9x9x128xbf16, #tpu.memory_space<vmem>>, vector<1x8x9x128xbf16>
    %3 = vector.shape_cast %2 : vector<1x8x9x128xbf16> to vector<8x9x128xbf16>
    %4 = vector.extract_strided_slice %3 {offsets = [0, 0, 0], sizes = [8, 8, 128], strides = [1, 1, 1]} : vector<8x9x128xbf16> to vector<8x8x128xbf16>
    %5 = vector.extract_strided_slice %3 {offsets = [0, 1, 0], sizes = [8, 8, 128], strides = [1, 1, 1]} : vector<8x9x128xbf16> to vector<8x8x128xbf16>
    %6 = tpu.concatenate %4, %5 in 2 : vector<8x8x128xbf16>, vector<8x8x128xbf16> -> vector<8x8x256xbf16>
    %7 = vector.shape_cast %6 : vector<8x8x256xbf16> to vector<64x256xbf16>
    %c0_5 = arith.constant 0 : index
    %c0_6 = arith.constant 0 : index
    %c0_7 = arith.constant 0 : index
    %8 = vector.load %arg2[%c0_5, %c0_6, %c0_7] : memref<2x256x64xbf16, #tpu.memory_space<vmem>>, vector<1x256x64xbf16>
    %9 = vector.shape_cast %8 : vector<1x256x64xbf16> to vector<256x64xbf16>
    %cst_8 = arith.constant dense<0.000000e+00> : vector<64x64xf32>
    %10 = tpu.matmul %7, %9, %cst_8 {dimension_numbers = #tpu.dot_dimension_numbers<[1], [0], [0], [1], [0, 0, 1, 1], [], []>} : vector<64x256xbf16>, vector<256x64xbf16>, vector<64x64xf32> -> vector<64x64xf32>
    %11 = arith.addf %1, %10 : vector<64x64xf32>
    %c0_9 = arith.constant 0 : index
    %c1 = arith.constant 1 : index
    %c0_10 = arith.constant 0 : index
    %c0_11 = arith.constant 0 : index
    %12 = vector.load %arg1[%c0_9, %c1, %c0_10, %c0_11] : memref<1x9x9x128xbf16, #tpu.memory_space<vmem>>, vector<1x8x9x128xbf16>
    %13 = vector.shape_cast %12 : vector<1x8x9x128xbf16> to vector<8x9x128xbf16>
    %14 = vector.extract_strided_slice %13 {offsets = [0, 0, 0], sizes = [8, 8, 128], strides = [1, 1, 1]} : vector<8x9x128xbf16> to vector<8x8x128xbf16>
    %15 = vector.extract_strided_slice %13 {offsets = [0, 1, 0], sizes = [8, 8, 128], strides = [1, 1, 1]} : vector<8x9x128xbf16> to vector<8x8x128xbf16>
    %16 = tpu.concatenate %14, %15 in 2 : vector<8x8x128xbf16>, vector<8x8x128xbf16> -> vector<8x8x256xbf16>
    %17 = vector.shape_cast %16 : vector<8x8x256xbf16> to vector<64x256xbf16>
    %c1_12 = arith.constant 1 : index
    %c0_13 = arith.constant 0 : index
    %c0_14 = arith.constant 0 : index
    %18 = vector.load %arg2[%c1_12, %c0_13, %c0_14] : memref<2x256x64xbf16, #tpu.memory_space<vmem>>, vector<1x256x64xbf16>
    %19 = vector.shape_cast %18 : vector<1x256x64xbf16> to vector<256x64xbf16>
    %cst_15 = arith.constant dense<0.000000e+00> : vector<64x64xf32>
    %20 = tpu.matmul %17, %19, %cst_15 {dimension_numbers = #tpu.dot_dimension_numbers<[1], [0], [0], [1], [0, 0, 1, 1], [], []>} : vector<64x256xbf16>, vector<256x64xbf16>, vector<64x64xf32> -> vector<64x64xf32>
    %21 = arith.addf %11, %20 : vector<64x64xf32>
    %22 = vector.broadcast %0 : vector<1x64xf32> to vector<64x64xf32>
    %23 = arith.addf %21, %22 : vector<64x64xf32>
    %cst_16 = arith.constant 0.000000e+00 : f32
    %24 = vector.broadcast %cst_16 : f32 to vector<64x64xf32>
    %25 = arith.cmpf ogt, %23, %24 : vector<64x64xf32>
    %cst_17 = arith.constant 2.000000e-01 : f32
    %26 = vector.broadcast %cst_17 : f32 to vector<64x64xf32>
    %27 = arith.mulf %26, %23 : vector<64x64xf32>
    %28 = arith.select %25, %23, %27 : vector<64x64xi1>, vector<64x64xf32>
    %29 = vector.shape_cast %28 : vector<64x64xf32> to vector<8x8x64xf32>
    %30 = arith.truncf %29 : vector<8x8x64xf32> to vector<8x8x64xbf16>
    %c0_18 = arith.constant 0 : index
    %c0_19 = arith.constant 0 : index
    %c0_20 = arith.constant 0 : index
    %c0_21 = arith.constant 0 : index
    %31 = vector.load %arg4[%c0_18, %c0_19, %c0_20, %c0_21] : memref<1x8x8x64xbf16, #tpu.memory_space<vmem>>, vector<1x8x8x64xbf16>
    %32 = vector.shape_cast %31 : vector<1x8x8x64xbf16> to vector<8x8x64xbf16>
    %33 = vector.shape_cast %30 : vector<8x8x64xbf16> to vector<1x8x8x64xbf16>
    tpu.vector_store %arg4[%c0_18, %c0_19, %c0_20, %c0_21], %33 {strides = array<i32>} : memref<1x8x8x64xbf16, #tpu.memory_space<vmem>>, vector<1x8x8x64xbf16>,
    return
  }
  func.func @transform_0(%arg0: i32) -> (i32, i32, i32, i32) {
    %c0_i32 = arith.constant 0 : i32
    %c0_i32_0 = arith.constant 0 : i32
    %c0_i32_1 = arith.constant 0 : i32
    %c0_i32_2 = arith.constant 0 : i32
    return %arg0, %c0_i32, %c0_i32_0, %c0_i32_1 : i32, i32, i32, i32
  }
  func.func @transform_1(%arg0: i32) -> (i32, i32, i32) {
    %c0_i32 = arith.constant 0 : i32
    %c0_i32_0 = arith.constant 0 : i32
    %c0_i32_1 = arith.constant 0 : i32
    %c0_i32_2 = arith.constant 0 : i32
    return %c0_i32, %c0_i32_0, %c0_i32_1 : i32, i32, i32
  }
  func.func @transform_2(%arg0: i32) -> (i32, i32) {
    %c0_i32 = arith.constant 0 : i32
    %c0_i32_0 = arith.constant 0 : i32
    %c0_i32_1 = arith.constant 0 : i32
    return %c0_i32, %c0_i32_0 : i32, i32
  }
  func.func @transform_3(%arg0: i32) -> (i32, i32, i32, i32) {
    %c0_i32 = arith.constant 0 : i32
    %c0_i32_0 = arith.constant 0 : i32
    %c0_i32_1 = arith.constant 0 : i32
    %c0_i32_2 = arith.constant 0 : i32
    return %arg0, %c0_i32, %c0_i32_0, %c0_i32_1 : i32, i32, i32, i32
  }
}

module attributes {stable_mosaic.version = 11 : i64} {
  func.func @_conv_s2d_kernel(%arg0: i32, %arg1: memref<1x5x5x256xbf16, #tpu.memory_space<vmem>>, %arg2: memref<2x512x64xbf16, #tpu.memory_space<vmem>>, %arg3: memref<1x64xf32, #tpu.memory_space<vmem>>, %arg4: memref<1x4x4x64xbf16, #tpu.memory_space<vmem>>) attributes {dimension_semantics = [#tpu.dimension_semantics<parallel>], iteration_bounds = array<i64: 2>, scalar_prefetch = 0 : i64, scratch_operands = 0 : i64, tpu.core_type = #tpu.core_type<tc>, window_params = [{transform_indices = @transform_0, window_bounds = array<i64: 1, 5, 5, 256>}, {pipeline_mode = #tpu.pipeline_mode<synchronous>, transform_indices = @transform_1, window_bounds = array<i64: 2, 512, 64>}, {pipeline_mode = #tpu.pipeline_mode<synchronous>, transform_indices = @transform_2, window_bounds = array<i64: 1, 64>}, {transform_indices = @transform_3, window_bounds = array<i64: 1, 4, 4, 64>}]} {
    %c0 = arith.constant 0 : index
    %c0_0 = arith.constant 0 : index
    %0 = vector.load %arg3[%c0, %c0_0] : memref<1x64xf32, #tpu.memory_space<vmem>>, vector<1x64xf32>
    %c0_1 = arith.constant 0 : index
    %c0_2 = arith.constant 0 : index
    %c0_3 = arith.constant 0 : index
    %1 = vector.load %arg2[%c0_1, %c0_2, %c0_3] : memref<2x512x64xbf16, #tpu.memory_space<vmem>>, vector<1x512x64xbf16>
    %2 = vector.shape_cast %1 : vector<1x512x64xbf16> to vector<512x64xbf16>
    %c1 = arith.constant 1 : index
    %c0_4 = arith.constant 0 : index
    %c0_5 = arith.constant 0 : index
    %3 = vector.load %arg2[%c1, %c0_4, %c0_5] : memref<2x512x64xbf16, #tpu.memory_space<vmem>>, vector<1x512x64xbf16>
    %4 = vector.shape_cast %3 : vector<1x512x64xbf16> to vector<512x64xbf16>
    %c0_6 = arith.constant 0 : index
    %c0_7 = arith.constant 0 : index
    %c0_8 = arith.constant 0 : index
    %c0_9 = arith.constant 0 : index
    %5 = vector.load %arg1[%c0_6, %c0_7, %c0_8, %c0_9] : memref<1x5x5x256xbf16, #tpu.memory_space<vmem>>, vector<1x1x5x256xbf16>
    %6 = vector.shape_cast %5 : vector<1x1x5x256xbf16> to vector<5x256xbf16>
    %c0_10 = arith.constant 0 : index
    %c1_11 = arith.constant 1 : index
    %c0_12 = arith.constant 0 : index
    %c0_13 = arith.constant 0 : index
    %7 = vector.load %arg1[%c0_10, %c1_11, %c0_12, %c0_13] : memref<1x5x5x256xbf16, #tpu.memory_space<vmem>>, vector<1x1x5x256xbf16>
    %8 = vector.shape_cast %7 : vector<1x1x5x256xbf16> to vector<5x256xbf16>
    %c0_14 = arith.constant 0 : index
    %c2 = arith.constant 2 : index
    %c0_15 = arith.constant 0 : index
    %c0_16 = arith.constant 0 : index
    %9 = vector.load %arg1[%c0_14, %c2, %c0_15, %c0_16] : memref<1x5x5x256xbf16, #tpu.memory_space<vmem>>, vector<1x1x5x256xbf16>
    %10 = vector.shape_cast %9 : vector<1x1x5x256xbf16> to vector<5x256xbf16>
    %c0_17 = arith.constant 0 : index
    %c3 = arith.constant 3 : index
    %c0_18 = arith.constant 0 : index
    %c0_19 = arith.constant 0 : index
    %11 = vector.load %arg1[%c0_17, %c3, %c0_18, %c0_19] : memref<1x5x5x256xbf16, #tpu.memory_space<vmem>>, vector<1x1x5x256xbf16>
    %12 = vector.shape_cast %11 : vector<1x1x5x256xbf16> to vector<5x256xbf16>
    %c0_20 = arith.constant 0 : index
    %c4 = arith.constant 4 : index
    %c0_21 = arith.constant 0 : index
    %c0_22 = arith.constant 0 : index
    %13 = vector.load %arg1[%c0_20, %c4, %c0_21, %c0_22] : memref<1x5x5x256xbf16, #tpu.memory_space<vmem>>, vector<1x1x5x256xbf16>
    %14 = vector.shape_cast %13 : vector<1x1x5x256xbf16> to vector<5x256xbf16>
    %15 = vector.extract_strided_slice %6 {offsets = [0, 0], sizes = [4, 256], strides = [1, 1]} : vector<5x256xbf16> to vector<4x256xbf16>
    %16 = vector.extract_strided_slice %6 {offsets = [1, 0], sizes = [4, 256], strides = [1, 1]} : vector<5x256xbf16> to vector<4x256xbf16>
    %17 = tpu.concatenate %15, %16 in 1 : vector<4x256xbf16>, vector<4x256xbf16> -> vector<4x512xbf16>
    %18 = vector.extract_strided_slice %8 {offsets = [0, 0], sizes = [4, 256], strides = [1, 1]} : vector<5x256xbf16> to vector<4x256xbf16>
    %19 = vector.extract_strided_slice %8 {offsets = [1, 0], sizes = [4, 256], strides = [1, 1]} : vector<5x256xbf16> to vector<4x256xbf16>
    %20 = tpu.concatenate %18, %19 in 1 : vector<4x256xbf16>, vector<4x256xbf16> -> vector<4x512xbf16>
    %21 = vector.extract_strided_slice %10 {offsets = [0, 0], sizes = [4, 256], strides = [1, 1]} : vector<5x256xbf16> to vector<4x256xbf16>
    %22 = vector.extract_strided_slice %10 {offsets = [1, 0], sizes = [4, 256], strides = [1, 1]} : vector<5x256xbf16> to vector<4x256xbf16>
    %23 = tpu.concatenate %21, %22 in 1 : vector<4x256xbf16>, vector<4x256xbf16> -> vector<4x512xbf16>
    %24 = vector.extract_strided_slice %12 {offsets = [0, 0], sizes = [4, 256], strides = [1, 1]} : vector<5x256xbf16> to vector<4x256xbf16>
    %25 = vector.extract_strided_slice %12 {offsets = [1, 0], sizes = [4, 256], strides = [1, 1]} : vector<5x256xbf16> to vector<4x256xbf16>
    %26 = tpu.concatenate %24, %25 in 1 : vector<4x256xbf16>, vector<4x256xbf16> -> vector<4x512xbf16>
    %27 = vector.extract_strided_slice %14 {offsets = [0, 0], sizes = [4, 256], strides = [1, 1]} : vector<5x256xbf16> to vector<4x256xbf16>
    %28 = vector.extract_strided_slice %14 {offsets = [1, 0], sizes = [4, 256], strides = [1, 1]} : vector<5x256xbf16> to vector<4x256xbf16>
    %29 = tpu.concatenate %27, %28 in 1 : vector<4x256xbf16>, vector<4x256xbf16> -> vector<4x512xbf16>
    %cst = arith.constant dense<0.000000e+00> : vector<4x64xf32>
    %30 = tpu.matmul %17, %2, %cst {dimension_numbers = #tpu.dot_dimension_numbers<[1], [0], [0], [1], [0, 0, 1, 1], [], []>} : vector<4x512xbf16>, vector<512x64xbf16>, vector<4x64xf32> -> vector<4x64xf32>
    %cst_23 = arith.constant dense<0.000000e+00> : vector<4x64xf32>
    %31 = tpu.matmul %20, %4, %cst_23 {dimension_numbers = #tpu.dot_dimension_numbers<[1], [0], [0], [1], [0, 0, 1, 1], [], []>} : vector<4x512xbf16>, vector<512x64xbf16>, vector<4x64xf32> -> vector<4x64xf32>
    %32 = arith.addf %30, %31 : vector<4x64xf32>
    %33 = vector.broadcast %0 : vector<1x64xf32> to vector<4x64xf32>
    %34 = arith.addf %32, %33 : vector<4x64xf32>
    %cst_24 = arith.constant 0.000000e+00 : f32
    %35 = vector.broadcast %cst_24 : f32 to vector<4x64xf32>
    %36 = arith.cmpf ogt, %34, %35 : vector<4x64xf32>
    %cst_25 = arith.constant 2.000000e-01 : f32
    %37 = vector.broadcast %cst_25 : f32 to vector<4x64xf32>
    %38 = arith.mulf %37, %34 : vector<4x64xf32>
    %39 = arith.select %36, %34, %38 : vector<4x64xi1>, vector<4x64xf32>
    %40 = arith.truncf %39 : vector<4x64xf32> to vector<4x64xbf16>
    %c0_26 = arith.constant 0 : index
    %c0_27 = arith.constant 0 : index
    %c0_28 = arith.constant 0 : index
    %c0_29 = arith.constant 0 : index
    %41 = vector.load %arg4[%c0_26, %c0_27, %c0_28, %c0_29] : memref<1x4x4x64xbf16, #tpu.memory_space<vmem>>, vector<1x1x4x64xbf16>
    %42 = vector.shape_cast %41 : vector<1x1x4x64xbf16> to vector<4x64xbf16>
    %43 = vector.shape_cast %40 : vector<4x64xbf16> to vector<1x1x4x64xbf16>
    tpu.vector_store %arg4[%c0_26, %c0_27, %c0_28, %c0_29], %43 {strides = array<i32>} : memref<1x4x4x64xbf16, #tpu.memory_space<vmem>>, vector<1x1x4x64xbf16>,
    %cst_30 = arith.constant dense<0.000000e+00> : vector<4x64xf32>
    %44 = tpu.matmul %20, %2, %cst_30 {dimension_numbers = #tpu.dot_dimension_numbers<[1], [0], [0], [1], [0, 0, 1, 1], [], []>} : vector<4x512xbf16>, vector<512x64xbf16>, vector<4x64xf32> -> vector<4x64xf32>
    %cst_31 = arith.constant dense<0.000000e+00> : vector<4x64xf32>
    %45 = tpu.matmul %23, %4, %cst_31 {dimension_numbers = #tpu.dot_dimension_numbers<[1], [0], [0], [1], [0, 0, 1, 1], [], []>} : vector<4x512xbf16>, vector<512x64xbf16>, vector<4x64xf32> -> vector<4x64xf32>
    %46 = arith.addf %44, %45 : vector<4x64xf32>
    %47 = vector.broadcast %0 : vector<1x64xf32> to vector<4x64xf32>
    %48 = arith.addf %46, %47 : vector<4x64xf32>
    %cst_32 = arith.constant 0.000000e+00 : f32
    %49 = vector.broadcast %cst_32 : f32 to vector<4x64xf32>
    %50 = arith.cmpf ogt, %48, %49 : vector<4x64xf32>
    %cst_33 = arith.constant 2.000000e-01 : f32
    %51 = vector.broadcast %cst_33 : f32 to vector<4x64xf32>
    %52 = arith.mulf %51, %48 : vector<4x64xf32>
    %53 = arith.select %50, %48, %52 : vector<4x64xi1>, vector<4x64xf32>
    %54 = arith.truncf %53 : vector<4x64xf32> to vector<4x64xbf16>
    %c0_34 = arith.constant 0 : index
    %c1_35 = arith.constant 1 : index
    %c0_36 = arith.constant 0 : index
    %c0_37 = arith.constant 0 : index
    %55 = vector.load %arg4[%c0_34, %c1_35, %c0_36, %c0_37] : memref<1x4x4x64xbf16, #tpu.memory_space<vmem>>, vector<1x1x4x64xbf16>
    %56 = vector.shape_cast %55 : vector<1x1x4x64xbf16> to vector<4x64xbf16>
    %57 = vector.shape_cast %54 : vector<4x64xbf16> to vector<1x1x4x64xbf16>
    tpu.vector_store %arg4[%c0_34, %c1_35, %c0_36, %c0_37], %57 {strides = array<i32>} : memref<1x4x4x64xbf16, #tpu.memory_space<vmem>>, vector<1x1x4x64xbf16>,
    %cst_38 = arith.constant dense<0.000000e+00> : vector<4x64xf32>
    %58 = tpu.matmul %23, %2, %cst_38 {dimension_numbers = #tpu.dot_dimension_numbers<[1], [0], [0], [1], [0, 0, 1, 1], [], []>} : vector<4x512xbf16>, vector<512x64xbf16>, vector<4x64xf32> -> vector<4x64xf32>
    %cst_39 = arith.constant dense<0.000000e+00> : vector<4x64xf32>
    %59 = tpu.matmul %26, %4, %cst_39 {dimension_numbers = #tpu.dot_dimension_numbers<[1], [0], [0], [1], [0, 0, 1, 1], [], []>} : vector<4x512xbf16>, vector<512x64xbf16>, vector<4x64xf32> -> vector<4x64xf32>
    %60 = arith.addf %58, %59 : vector<4x64xf32>
    %61 = vector.broadcast %0 : vector<1x64xf32> to vector<4x64xf32>
    %62 = arith.addf %60, %61 : vector<4x64xf32>
    %cst_40 = arith.constant 0.000000e+00 : f32
    %63 = vector.broadcast %cst_40 : f32 to vector<4x64xf32>
    %64 = arith.cmpf ogt, %62, %63 : vector<4x64xf32>
    %cst_41 = arith.constant 2.000000e-01 : f32
    %65 = vector.broadcast %cst_41 : f32 to vector<4x64xf32>
    %66 = arith.mulf %65, %62 : vector<4x64xf32>
    %67 = arith.select %64, %62, %66 : vector<4x64xi1>, vector<4x64xf32>
    %68 = arith.truncf %67 : vector<4x64xf32> to vector<4x64xbf16>
    %c0_42 = arith.constant 0 : index
    %c2_43 = arith.constant 2 : index
    %c0_44 = arith.constant 0 : index
    %c0_45 = arith.constant 0 : index
    %69 = vector.load %arg4[%c0_42, %c2_43, %c0_44, %c0_45] : memref<1x4x4x64xbf16, #tpu.memory_space<vmem>>, vector<1x1x4x64xbf16>
    %70 = vector.shape_cast %69 : vector<1x1x4x64xbf16> to vector<4x64xbf16>
    %71 = vector.shape_cast %68 : vector<4x64xbf16> to vector<1x1x4x64xbf16>
    tpu.vector_store %arg4[%c0_42, %c2_43, %c0_44, %c0_45], %71 {strides = array<i32>} : memref<1x4x4x64xbf16, #tpu.memory_space<vmem>>, vector<1x1x4x64xbf16>,
    %cst_46 = arith.constant dense<0.000000e+00> : vector<4x64xf32>
    %72 = tpu.matmul %26, %2, %cst_46 {dimension_numbers = #tpu.dot_dimension_numbers<[1], [0], [0], [1], [0, 0, 1, 1], [], []>} : vector<4x512xbf16>, vector<512x64xbf16>, vector<4x64xf32> -> vector<4x64xf32>
    %cst_47 = arith.constant dense<0.000000e+00> : vector<4x64xf32>
    %73 = tpu.matmul %29, %4, %cst_47 {dimension_numbers = #tpu.dot_dimension_numbers<[1], [0], [0], [1], [0, 0, 1, 1], [], []>} : vector<4x512xbf16>, vector<512x64xbf16>, vector<4x64xf32> -> vector<4x64xf32>
    %74 = arith.addf %72, %73 : vector<4x64xf32>
    %75 = vector.broadcast %0 : vector<1x64xf32> to vector<4x64xf32>
    %76 = arith.addf %74, %75 : vector<4x64xf32>
    %cst_48 = arith.constant 0.000000e+00 : f32
    %77 = vector.broadcast %cst_48 : f32 to vector<4x64xf32>
    %78 = arith.cmpf ogt, %76, %77 : vector<4x64xf32>
    %cst_49 = arith.constant 2.000000e-01 : f32
    %79 = vector.broadcast %cst_49 : f32 to vector<4x64xf32>
    %80 = arith.mulf %79, %76 : vector<4x64xf32>
    %81 = arith.select %78, %76, %80 : vector<4x64xi1>, vector<4x64xf32>
    %82 = arith.truncf %81 : vector<4x64xf32> to vector<4x64xbf16>
    %c0_50 = arith.constant 0 : index
    %c3_51 = arith.constant 3 : index
    %c0_52 = arith.constant 0 : index
    %c0_53 = arith.constant 0 : index
    %83 = vector.load %arg4[%c0_50, %c3_51, %c0_52, %c0_53] : memref<1x4x4x64xbf16, #tpu.memory_space<vmem>>, vector<1x1x4x64xbf16>
    %84 = vector.shape_cast %83 : vector<1x1x4x64xbf16> to vector<4x64xbf16>
    %85 = vector.shape_cast %82 : vector<4x64xbf16> to vector<1x1x4x64xbf16>
    tpu.vector_store %arg4[%c0_50, %c3_51, %c0_52, %c0_53], %85 {strides = array<i32>} : memref<1x4x4x64xbf16, #tpu.memory_space<vmem>>, vector<1x1x4x64xbf16>,
    return
  }
  func.func @transform_0(%arg0: i32) -> (i32, i32, i32, i32) {
    %c0_i32 = arith.constant 0 : i32
    %c0_i32_0 = arith.constant 0 : i32
    %c0_i32_1 = arith.constant 0 : i32
    %c0_i32_2 = arith.constant 0 : i32
    return %arg0, %c0_i32, %c0_i32_0, %c0_i32_1 : i32, i32, i32, i32
  }
  func.func @transform_1(%arg0: i32) -> (i32, i32, i32) {
    %c0_i32 = arith.constant 0 : i32
    %c0_i32_0 = arith.constant 0 : i32
    %c0_i32_1 = arith.constant 0 : i32
    %c0_i32_2 = arith.constant 0 : i32
    return %c0_i32, %c0_i32_0, %c0_i32_1 : i32, i32, i32
  }
  func.func @transform_2(%arg0: i32) -> (i32, i32) {
    %c0_i32 = arith.constant 0 : i32
    %c0_i32_0 = arith.constant 0 : i32
    %c0_i32_1 = arith.constant 0 : i32
    return %c0_i32, %c0_i32_0 : i32, i32
  }
  func.func @transform_3(%arg0: i32) -> (i32, i32, i32, i32) {
    %c0_i32 = arith.constant 0 : i32
    %c0_i32_0 = arith.constant 0 : i32
    %c0_i32_1 = arith.constant 0 : i32
    %c0_i32_2 = arith.constant 0 : i32
    return %arg0, %c0_i32, %c0_i32_0, %c0_i32_1 : i32, i32, i32, i32
  }
}

module attributes {stable_mosaic.version = 11 : i64} {
  func.func @_fc_tail_kernel(%arg0: i32, %arg1: memref<2x1024xbf16, #tpu.memory_space<vmem>>, %arg2: memref<1024x128xbf16, #tpu.memory_space<vmem>>, %arg3: memref<1x128xf32, #tpu.memory_space<vmem>>, %arg4: memref<128x128xbf16, #tpu.memory_space<vmem>>, %arg5: memref<1x128xf32, #tpu.memory_space<vmem>>, %arg6: memref<128x128xbf16, #tpu.memory_space<vmem>>, %arg7: memref<1x128xf32, #tpu.memory_space<vmem>>, %arg8: memref<2x128xf32, #tpu.memory_space<vmem>>) attributes {dimension_semantics = [#tpu.dimension_semantics<parallel>], iteration_bounds = array<i64: 1>, scalar_prefetch = 0 : i64, scratch_operands = 0 : i64, tpu.core_type = #tpu.core_type<tc>, window_params = [{transform_indices = @transform_0, window_bounds = array<i64: 2, 1024>}, {pipeline_mode = #tpu.pipeline_mode<synchronous>, transform_indices = @transform_1, window_bounds = array<i64: 1024, 128>}, {pipeline_mode = #tpu.pipeline_mode<synchronous>, transform_indices = @transform_2, window_bounds = array<i64: 1, 128>}, {pipeline_mode = #tpu.pipeline_mode<synchronous>, transform_indices = @transform_3, window_bounds = array<i64: 128, 128>}, {pipeline_mode = #tpu.pipeline_mode<synchronous>, transform_indices = @transform_4, window_bounds = array<i64: 1, 128>}, {pipeline_mode = #tpu.pipeline_mode<synchronous>, transform_indices = @transform_5, window_bounds = array<i64: 128, 128>}, {pipeline_mode = #tpu.pipeline_mode<synchronous>, transform_indices = @transform_6, window_bounds = array<i64: 1, 128>}, {transform_indices = @transform_7, window_bounds = array<i64: 2, 128>}]} {
    %c0 = arith.constant 0 : index
    %c0_0 = arith.constant 0 : index
    %0 = vector.load %arg1[%c0, %c0_0] : memref<2x1024xbf16, #tpu.memory_space<vmem>>, vector<2x1024xbf16>
    %c0_1 = arith.constant 0 : index
    %c0_2 = arith.constant 0 : index
    %1 = vector.load %arg2[%c0_1, %c0_2] : memref<1024x128xbf16, #tpu.memory_space<vmem>>, vector<1024x128xbf16>
    %cst = arith.constant dense<0.000000e+00> : vector<2x128xf32>
    %2 = tpu.matmul %0, %1, %cst {dimension_numbers = #tpu.dot_dimension_numbers<[1], [0], [0], [1], [0, 0, 1, 1], [], []>} : vector<2x1024xbf16>, vector<1024x128xbf16>, vector<2x128xf32> -> vector<2x128xf32>
    %c0_3 = arith.constant 0 : index
    %c0_4 = arith.constant 0 : index
    %3 = vector.load %arg3[%c0_3, %c0_4] : memref<1x128xf32, #tpu.memory_space<vmem>>, vector<1x128xf32>
    %4 = vector.broadcast %3 : vector<1x128xf32> to vector<2x128xf32>
    %5 = arith.addf %2, %4 : vector<2x128xf32>
    %cst_5 = arith.constant 0.000000e+00 : f32
    %6 = vector.broadcast %cst_5 : f32 to vector<2x128xf32>
    %7 = arith.cmpf ogt, %5, %6 : vector<2x128xf32>
    %cst_6 = arith.constant 2.000000e-01 : f32
    %8 = vector.broadcast %cst_6 : f32 to vector<2x128xf32>
    %9 = arith.mulf %8, %5 : vector<2x128xf32>
    %10 = arith.select %7, %5, %9 : vector<2x128xi1>, vector<2x128xf32>
    %11 = arith.truncf %10 : vector<2x128xf32> to vector<2x128xbf16>
    %c0_7 = arith.constant 0 : index
    %c0_8 = arith.constant 0 : index
    %12 = vector.load %arg4[%c0_7, %c0_8] : memref<128x128xbf16, #tpu.memory_space<vmem>>, vector<128x128xbf16>
    %cst_9 = arith.constant dense<0.000000e+00> : vector<2x128xf32>
    %13 = tpu.matmul %11, %12, %cst_9 {dimension_numbers = #tpu.dot_dimension_numbers<[1], [0], [0], [1], [0, 0, 1, 1], [], []>} : vector<2x128xbf16>, vector<128x128xbf16>, vector<2x128xf32> -> vector<2x128xf32>
    %c0_10 = arith.constant 0 : index
    %c0_11 = arith.constant 0 : index
    %14 = vector.load %arg5[%c0_10, %c0_11] : memref<1x128xf32, #tpu.memory_space<vmem>>, vector<1x128xf32>
    %15 = vector.broadcast %14 : vector<1x128xf32> to vector<2x128xf32>
    %16 = arith.addf %13, %15 : vector<2x128xf32>
    %cst_12 = arith.constant 0.000000e+00 : f32
    %17 = vector.broadcast %cst_12 : f32 to vector<2x128xf32>
    %18 = arith.cmpf ogt, %16, %17 : vector<2x128xf32>
    %cst_13 = arith.constant 2.000000e-01 : f32
    %19 = vector.broadcast %cst_13 : f32 to vector<2x128xf32>
    %20 = arith.mulf %19, %16 : vector<2x128xf32>
    %21 = arith.select %18, %16, %20 : vector<2x128xi1>, vector<2x128xf32>
    %22 = arith.truncf %21 : vector<2x128xf32> to vector<2x128xbf16>
    %c0_14 = arith.constant 0 : index
    %c0_15 = arith.constant 0 : index
    %23 = vector.load %arg6[%c0_14, %c0_15] : memref<128x128xbf16, #tpu.memory_space<vmem>>, vector<128x128xbf16>
    %cst_16 = arith.constant dense<0.000000e+00> : vector<2x128xf32>
    %24 = tpu.matmul %22, %23, %cst_16 {dimension_numbers = #tpu.dot_dimension_numbers<[1], [0], [0], [1], [0, 0, 1, 1], [], []>} : vector<2x128xbf16>, vector<128x128xbf16>, vector<2x128xf32> -> vector<2x128xf32>
    %c0_17 = arith.constant 0 : index
    %c0_18 = arith.constant 0 : index
    %25 = vector.load %arg7[%c0_17, %c0_18] : memref<1x128xf32, #tpu.memory_space<vmem>>, vector<1x128xf32>
    %26 = vector.broadcast %25 : vector<1x128xf32> to vector<2x128xf32>
    %27 = arith.addf %24, %26 : vector<2x128xf32>
    %28 = tpu.iota {dimensions = array<i32: 1>} : vector<2x128xi32>
    %c3_i32 = arith.constant 3 : i32
    %29 = vector.broadcast %c3_i32 : i32 to vector<2x128xi32>
    %30 = arith.cmpi slt, %28, %29 : vector<2x128xi32>
    %cst_19 = arith.constant -1.000000e+30 : f32
    %31 = vector.broadcast %cst_19 : f32 to vector<2x128xf32>
    %32 = arith.select %30, %27, %31 : vector<2x128xi1>, vector<2x128xf32>
    %cst_20 = arith.constant dense<0xFF800000> : vector<2xf32>
    %33 = vector.multi_reduction <maximumf>, %32, %cst_20 [1] : vector<2x128xf32> to vector<2xf32>
    %34 = vector.shape_cast %33 : vector<2xf32> to vector<2x1xf32>
    %35 = vector.broadcast %34 : vector<2x1xf32> to vector<2x128xf32>
    %36 = arith.subf %32, %35 : vector<2x128xf32>
    %37 = math.exp %36 : vector<2x128xf32>
    %cst_21 = arith.constant dense<0.000000e+00> : vector<2xf32>
    %38 = vector.multi_reduction <add>, %37, %cst_21 [1] : vector<2x128xf32> to vector<2xf32>
    %39 = vector.shape_cast %38 : vector<2xf32> to vector<2x1xf32>
    %40 = tpu.reciprocal %39 {approx = true} : vector<2x1xf32> -> vector<2x1xf32>
    %41 = vector.broadcast %40 : vector<2x1xf32> to vector<2x128xf32>
    %42 = arith.mulf %37, %41 : vector<2x128xf32>
    %43 = arith.select %30, %42, %27 : vector<2x128xi1>, vector<2x128xf32>
    %c0_22 = arith.constant 0 : index
    %c0_23 = arith.constant 0 : index
    %44 = vector.load %arg8[%c0_22, %c0_23] : memref<2x128xf32, #tpu.memory_space<vmem>>, vector<2x128xf32>
    tpu.vector_store %arg8[%c0_22, %c0_23], %43 {strides = array<i32>} : memref<2x128xf32, #tpu.memory_space<vmem>>, vector<2x128xf32>,
    return
  }
  func.func @transform_0(%arg0: i32) -> (i32, i32) {
    %c0_i32 = arith.constant 0 : i32
    %c0_i32_0 = arith.constant 0 : i32
    return %arg0, %c0_i32 : i32, i32
  }
  func.func @transform_1(%arg0: i32) -> (i32, i32) {
    %c0_i32 = arith.constant 0 : i32
    %c0_i32_0 = arith.constant 0 : i32
    %c0_i32_1 = arith.constant 0 : i32
    return %c0_i32, %c0_i32_0 : i32, i32
  }
  func.func @transform_2(%arg0: i32) -> (i32, i32) {
    %c0_i32 = arith.constant 0 : i32
    %c0_i32_0 = arith.constant 0 : i32
    %c0_i32_1 = arith.constant 0 : i32
    return %c0_i32, %c0_i32_0 : i32, i32
  }
  func.func @transform_3(%arg0: i32) -> (i32, i32) {
    %c0_i32 = arith.constant 0 : i32
    %c0_i32_0 = arith.constant 0 : i32
    %c0_i32_1 = arith.constant 0 : i32
    return %c0_i32, %c0_i32_0 : i32, i32
  }
  func.func @transform_4(%arg0: i32) -> (i32, i32) {
    %c0_i32 = arith.constant 0 : i32
    %c0_i32_0 = arith.constant 0 : i32
    %c0_i32_1 = arith.constant 0 : i32
    return %c0_i32, %c0_i32_0 : i32, i32
  }
  func.func @transform_5(%arg0: i32) -> (i32, i32) {
    %c0_i32 = arith.constant 0 : i32
    %c0_i32_0 = arith.constant 0 : i32
    %c0_i32_1 = arith.constant 0 : i32
    return %c0_i32, %c0_i32_0 : i32, i32
  }
  func.func @transform_6(%arg0: i32) -> (i32, i32) {
    %c0_i32 = arith.constant 0 : i32
    %c0_i32_0 = arith.constant 0 : i32
    %c0_i32_1 = arith.constant 0 : i32
    return %c0_i32, %c0_i32_0 : i32, i32
  }
  func.func @transform_7(%arg0: i32) -> (i32, i32) {
    %c0_i32 = arith.constant 0 : i32
    %c0_i32_0 = arith.constant 0 : i32
    return %arg0, %c0_i32 : i32, i32
  }
}

</mosaic_0001>

<llo_original>
// kernel: encoder_forward.5
$region0: #{encoder_forward.5}
  #allocation0 [shape = 'u32[]', space=smem, size = 0x4, offset = 0x4, fixed_abs, tag = 'smem constant byte address 0x4 - core index']
  #allocation1 [shape = 'u32[144,128]{1,0:T(1,128)}', space=vmem, size = 0x12000, scoped, tag = 'internal scratch']
  %s0 = inlined_call_operand.vmem [shape: bf16[2,1024,16], index: 0, kind: input, shape index: {}]
  %s1 = inlined_call_operand.vmem [shape: bf16[16,32], index: 1, kind: input, shape index: {}]
  %s2 = inlined_call_operand.vmem [shape: f32[1,32], index: 2, kind: input, shape index: {}]
  %s3 = inlined_call_operand.vmem [shape: bf16[2,1024,32], index: 3, kind: output, shape index: {}]
  %s4 = sld [smem:[#allocation0]]
  $region45: #{encoder_forward.5} parent=0
    _
  %s6 = ssub.s32 1, %s4
  %s7 = scalar_select 0, %s6, %s4
  loop: start=0, step=1, limit=4
  $region2: #{encoder_forward.5} parent=0 // loop_pre_header
    _
  $region3: #{encoder_forward.5} parent=0 // loop_header
    %s9 = sphi 0, %s13
    %p10 = scmp.ge.s32.totalorder %s9, 4
    %s19 = sphi 0, %s21
    %s22 = sphi 0, %s19
    %s23 = sphi 0, %s22
    %s39 = sphi 0, %s23
    %s43 = sphi 0, %s43
    %s45 = sphi 0, %s43
    %s46 = sphi 0, %s45
    %s60 = sphi 0, %s46
    %s64 = sphi 0, %s64
    %s66 = sphi 0, %s64
    %s67 = sphi 0, %s66
    %s81 = sphi 0, %s67
    %s87 = sphi 0, %s89
    %s90 = sphi 0, %s87
    %s91 = sphi 0, %s90
    %s107 = sphi 0, %s91
  $region4: #{encoder_forward.5} parent=0 // loop_header_branch
    %12 = sbr.rel (%p10) target = $region8
  $region5: #{encoder_forward.5} parent=0 // loop_body
    %s14 = ssub.s32 %s9, 1
    %s15 = ssub.s32 %s9, 2
    %s16 = sadd.s32 %s9, 1
    %s17 = ssub.s32 %s9, %s16
    %p18 = scmp.eq.s32.totalorder %s17, 0
    %s20 = sadd.s32 %s19, 1
    %s21 = scalar_select %p18, %s19, %s20
    %p24 = pneg %p18
    %p25 = scmp.eq.s32.totalorder %s9, 1
    %p26 = por %p24, %p25
    %p27 = scmp.ne.s32.totalorder %s19, %s22
    %p28 = scmp.eq.s32.totalorder %s9, 0
    %p29 = por %p27, %p28
    %p30 = scmp.ne.s32.totalorder %s19, %s22
    %p31 = scmp.eq.s32.totalorder %s14, 1
    %p32 = por %p30, %p31
    %p33 = scmp.ne.s32.totalorder %s22, %s23
    %p34 = scmp.eq.s32.totalorder %s14, 0
    %p35 = por %p33, %p34
    %p36 = scmp.ne.s32.totalorder %s22, %s23
    %p37 = scmp.eq.s32.totalorder %s15, 1
    %p38 = por %p36, %p37
    %p40 = scmp.ne.s32.totalorder %s23, %s39
    %p41 = scmp.eq.s32.totalorder %s15, 0
    %p42 = por %p40, %p41
    %s44 = sadd.s32 %s43, 1
    %p47 = scmp.eq.s32.totalorder %s9, 1
    %p48 = scmp.ne.s32.totalorder %s43, %s45
    %p49 = scmp.eq.s32.totalorder %s9, 0
    %p50 = por %p48, %p49
    %p51 = scmp.ne.s32.totalorder %s43, %s45
    %p52 = scmp.eq.s32.totalorder %s14, 1
    %p53 = por %p51, %p52
    %p54 = scmp.ne.s32.totalorder %s45, %s46
    %p55 = scmp.eq.s32.totalorder %s14, 0
    %p56 = por %p54, %p55
    %p57 = scmp.ne.s32.totalorder %s45, %s46
    %p58 = scmp.eq.s32.totalorder %s15, 1
    %p59 = por %p57, %p58
    %p61 = scmp.ne.s32.totalorder %s46, %s60
    %p62 = scmp.eq.s32.totalorder %s15, 0
    %p63 = por %p61, %p62
    %s65 = sadd.s32 %s64, 1
    %p68 = scmp.eq.s32.totalorder %s9, 1
    %p69 = scmp.ne.s32.totalorder %s64, %s66
    %p70 = scmp.eq.s32.totalorder %s9, 0
    %p71 = por %p69, %p70
    %p72 = scmp.ne.s32.totalorder %s64, %s66
    %p73 = scmp.eq.s32.totalorder %s14, 1
    %p74 = por %p72, %p73
    %p75 = scmp.ne.s32.totalorder %s66, %s67
    %p76 = scmp.eq.s32.totalorder %s14, 0
    %p77 = por %p75, %p76
    %p78 = scmp.ne.s32.totalorder %s66, %s67
    %p79 = scmp.eq.s32.totalorder %s15, 1
    %p80 = por %p78, %p79
    %p82 = scmp.ne.s32.totalorder %s67, %s81
    %p83 = scmp.eq.s32.totalorder %s15, 0
    %p84 = por %p82, %p83
    %s85 = ssub.s32 %s9, %s16
    %p86 = scmp.eq.s32.totalorder %s85, 0
    %s88 = sadd.s32 %s87, 1
    %s89 = scalar_select %p86, %s87, %s88
    %p92 = pneg %p86
    %p93 = scmp.eq.s32.totalorder %s9, 1
    %p94 = por %p92, %p93
    %p95 = scmp.ne.s32.totalorder %s87, %s90
    %p96 = scmp.eq.s32.totalorder %s9, 0
    %p97 = por %p95, %p96
    %p98 = scmp.ne.s32.totalorder %s87, %s90
    %p99 = scmp.eq.s32.totalorder %s14, 1
    %p100 = por %p98, %p99
    %p101 = scmp.ne.s32.totalorder %s90, %s91
    %p102 = scmp.eq.s32.totalorder %s14, 0
    %p103 = por %p101, %p102
    %p104 = scmp.ne.s32.totalorder %s90, %s91
    %p105 = scmp.eq.s32.totalorder %s15, 1
    %p106 = por %p104, %p105
    %p108 = scmp.ne.s32.totalorder %s91, %s107
    %p109 = scmp.eq.s32.totalorder %s15, 0
    %p110 = por %p108, %p109
    %p111 = scmp.le.s32.totalorder 1, %s9
    %p112 = scmp.lt.s32.totalorder %s9, 3
    %p113 = pnand %p111, %p112
    %p114 = pneg %p113
    // Predicated region
    $region9: #{encoder_forward.5} parent=5 // pred_check
      _
    $region10: #{encoder_forward.5} parent=5 // pred_check_branch
      %116 = sbr.rel (%p113) target = $region12
    $region11: #{encoder_forward.5} parent=5 // pred_region
      %s117 = ssub.s32 %s9, 1
      // Predicated region
      $region13: #{encoder_forward.5} parent=11 // pred_check
        %p118 = pneg %p56
      $region14: #{encoder_forward.5} parent=11 // pred_check_branch
        %120 = sbr.rel (%p118) target = $region16
      $region15: #{encoder_forward.5} parent=11 // pred_region
        _
      $region16: #{encoder_forward.5} parent=11 // pred_fallthru
        _
      // Predicated region
      $region17: #{encoder_forward.5} parent=11 // pred_check
        %p121 = pneg %p77
      $region18: #{encoder_forward.5} parent=11 // pred_check_branch
        %123 = sbr.rel (%p121) target = $region20
      $region19: #{encoder_forward.5} parent=11 // pred_region
        _
      $region20: #{encoder_forward.5} parent=11 // pred_fallthru
        _
    $region12: #{encoder_forward.5} parent=5 // pred_fallthru
      _
    %p124 = scmp.lt.s32.totalorder %s9, 2
    // Predicated region
    $region21: #{encoder_forward.5} parent=5 // pred_check
      %p125 = pneg %p124
    $region22: #{encoder_forward.5} parent=5 // pred_check_branch
      %127 = sbr.rel (%p125) target = $region24
    $region23: #{encoder_forward.5} parent=5 // pred_region
      // Predicated region
      $region25: #{encoder_forward.5} parent=23 // pred_check
        %p128 = pneg %p29
      $region26: #{encoder_forward.5} parent=23 // pred_check_branch
        %130 = sbr.rel (%p128) target = $region28
      $region27: #{encoder_forward.5} parent=23 // pred_region
        %p131 = scmp.lt.s32.totalorder %s9, 1
        %s132 = scalar_select %p131, %s9, 1
        %s133 = smul.addr %s132, 128
        %s134 = smul.addr %s133, 4
        %s135 = scalar_lea.vmem %s0, %s134
      $region28: #{encoder_forward.5} parent=23 // pred_fallthru
        _
    $region24: #{encoder_forward.5} parent=5 // pred_fallthru
      _
    %p136 = scmp.le.s32.totalorder 1, %s9
    %p137 = scmp.lt.s32.totalorder %s9, 3
    %p138 = pnand %p136, %p137
    %p139 = pneg %p138
    // Predicated region
    $region29: #{encoder_forward.5} parent=5 // pred_check
      _
    $region30: #{encoder_forward.5} parent=5 // pred_check_branch
      %141 = sbr.rel (%p138) target = $region32
    $region31: #{encoder_forward.5} parent=5 // pred_region
      %s142 = ssub.s32 %s9, 1
      %p143 = scmp.lt.s32.totalorder %s14, 1
      %s144 = scalar_select %p143, %s14, 1
      %s145 = smul.addr %s144, 128
      %s146 = smul.addr %s145, 4
      %s147 = scalar_lea.vmem %s0, %s146
      %p148 = pneg %p35
      %p149 = pneg %p32
      %p150 = pneg %p56
      %p151 = pneg %p53
      %p152 = pneg %p77
      %p153 = pneg %p74
      %p154 = pneg %p103
      %p155 = pneg %p100
      %p156 = scmp.lt.s32.totalorder %s14, 1
      %s157 = scalar_select %p156, %s14, 1
      %s158 = smul.addr %s157, 128
      %s159 = smul.addr %s158, 4
      %s160 = scalar_lea.vmem %s3, %s159
      %p161 = scmp.lt.s32.totalorder %s14, 1
      %s162 = scalar_select %p161, %s14, 1
      %s163 = smul.addr %s162, 128
      %s164 = smul.addr %s163, 4
      %s165 = scalar_lea.vmem %s0, %s164
      %p166 = scmp.lt.s32.totalorder %s14, 1
      %s167 = scalar_select %p166, %s14, 1
      %s168 = smul.addr %s167, 128
      %s169 = smul.addr %s168, 4
      %s170 = scalar_lea.vmem %s3, %s169
      %v172 = vld [vmem:[%s165] sm:$0xf]
      %v173 = vld [vmem:[%s165 + $0x4] sm:$0xf]
      %v174 = vld [vmem:[%s165 + $0x8] sm:$0xf]
      %v175 = vld [vmem:[%s165 + $0xc] sm:$0xf]
      %v176 = vld [vmem:[%s165 + $0x10] sm:$0xf]
      %v177 = vld [vmem:[%s165 + $0x14] sm:$0xf]
      %v178 = vld [vmem:[%s165 + $0x18] sm:$0xf]
      %v179 = vld [vmem:[%s165 + $0x1c] sm:$0xf]
      %v180 = vld [vmem:[%s165 + $0x20] sm:$0xf]
      %v181 = vld [vmem:[%s165 + $0x24] sm:$0xf]
      %v182 = vld [vmem:[%s165 + $0x28] sm:$0xf]
      %v183 = vld [vmem:[%s165 + $0x2c] sm:$0xf]
      %v184 = vld [vmem:[%s165 + $0x30] sm:$0xf]
      %v185 = vld [vmem:[%s165 + $0x34] sm:$0xf]
      %v186 = vld [vmem:[%s165 + $0x38] sm:$0xf]
      %v187 = vld [vmem:[%s165 + $0x3c] sm:$0xf]
      %v188 = vld [vmem:[%s165 + $0x40] sm:$0xf]
      %v189 = vld [vmem:[%s165 + $0x44] sm:$0xf]
      %v190 = vld [vmem:[%s165 + $0x48] sm:$0xf]
      %v191 = vld [vmem:[%s165 + $0x4c] sm:$0xf]
      %v192 = vld [vmem:[%s165 + $0x50] sm:$0xf]
      %v193 = vld [vmem:[%s165 + $0x54] sm:$0xf]
      %v194 = vld [vmem:[%s165 + $0x58] sm:$0xf]
      %v195 = vld [vmem:[%s165 + $0x5c] sm:$0xf]
      %v196 = vld [vmem:[%s165 + $0x60] sm:$0xf]
      %v197 = vld [vmem:[%s165 + $0x64] sm:$0xf]
      %v198 = vld [vmem:[%s165 + $0x68] sm:$0xf]
      %v199 = vld [vmem:[%s165 + $0x6c] sm:$0xf]
      %v200 = vld [vmem:[%s165 + $0x70] sm:$0xf]
      %v201 = vld [vmem:[%s165 + $0x74] sm:$0xf]
      %v202 = vld [vmem:[%s165 + $0x78] sm:$0xf]
      %v203 = vld [vmem:[%s165 + $0x7c] sm:$0xf]
      %v204 = vld [vmem:[%s165 + $0x80] sm:$0xf]
      %v205 = vld [vmem:[%s165 + $0x84] sm:$0xf]
      %v206 = vld [vmem:[%s165 + $0x88] sm:$0xf]
      %v207 = vld [vmem:[%s165 + $0x8c] sm:$0xf]
      %v208 = vld [vmem:[%s165 + $0x90] sm:$0xf]
      %v209 = vld [vmem:[%s165 + $0x94] sm:$0xf]
      %v210 = vld [vmem:[%s165 + $0x98] sm:$0xf]
      %v211 = vld [vmem:[%s165 + $0x9c] sm:$0xf]
      %v212 = vld [vmem:[%s165 + $0xa0] sm:$0xf]
      %v213 = vld [vmem:[%s165 + $0xa4] sm:$0xf]
      %v214 = vld [vmem:[%s165 + $0xa8] sm:$0xf]
      %v215 = vld [vmem:[%s165 + $0xac] sm:$0xf]
      %v216 = vld [vmem:[%s165 + $0xb0] sm:$0xf]
      %v217 = vld [vmem:[%s165 + $0xb4] sm:$0xf]
      %v218 = vld [vmem:[%s165 + $0xb8] sm:$0xf]
      %v219 = vld [vmem:[%s165 + $0xbc] sm:$0xf]
      %v220 = vld [vmem:[%s165 + $0xc0] sm:$0xf]
      %v221 = vld [vmem:[%s165 + $0xc4] sm:$0xf]
      %v222 = vld [vmem:[%s165 + $0xc8] sm:$0xf]
      %v223 = vld [vmem:[%s165 + $0xcc] sm:$0xf]
      %v224 = vld [vmem:[%s165 + $0xd0] sm:$0xf]
      %v225 = vld [vmem:[%s165 + $0xd4] sm:$0xf]
      %v226 = vld [vmem:[%s165 + $0xd8] sm:$0xf]
      %v227 = vld [vmem:[%s165 + $0xdc] sm:$0xf]
      %v228 = vld [vmem:[%s165 + $0xe0] sm:$0xf]
      %v229 = vld [vmem:[%s165 + $0xe4] sm:$0xf]
      %v230 = vld [vmem:[%s165 + $0xe8] sm:$0xf]
      %v231 = vld [vmem:[%s165 + $0xec] sm:$0xf]
      %v232 = vld [vmem:[%s165 + $0xf0] sm:$0xf]
      %v233 = vld [vmem:[%s165 + $0xf4] sm:$0xf]
      %v234 = vld [vmem:[%s165 + $0xf8] sm:$0xf]
      %v235 = vld [vmem:[%s165 + $0xfc] sm:$0xf]
      %v236 = vld [vmem:[%s165 + $0x100] sm:$0xf]
      %v237 = vld [vmem:[%s165 + $0x104] sm:$0xf]
      %v238 = vld [vmem:[%s165 + $0x108] sm:$0xf]
      %v239 = vld [vmem:[%s165 + $0x10c] sm:$0xf]
      %v240 = vld [vmem:[%s165 + $0x110] sm:$0xf]
      %v241 = vld [vmem:[%s165 + $0x114] sm:$0xf]
      %v242 = vld [vmem:[%s165 + $0x118] sm:$0xf]
      %v243 = vld [vmem:[%s165 + $0x11c] sm:$0xf]
      %v244 = vld [vmem:[%s165 + $0x120] sm:$0xf]
      %v245 = vld [vmem:[%s165 + $0x124] sm:$0xf]
      %v246 = vld [vmem:[%s165 + $0x128] sm:$0xf]
      %v247 = vld [vmem:[%s165 + $0x12c] sm:$0xf]
      %v248 = vld [vmem:[%s165 + $0x130] sm:$0xf]
      %v249 = vld [vmem:[%s165 + $0x134] sm:$0xf]
      %v250 = vld [vmem:[%s165 + $0x138] sm:$0xf]
      %v251 = vld [vmem:[%s165 + $0x13c] sm:$0xf]
      %v252 = vld [vmem:[%s165 + $0x140] sm:$0xf]
      %v253 = vld [vmem:[%s165 + $0x144] sm:$0xf]
      %v254 = vld [vmem:[%s165 + $0x148] sm:$0xf]
      %v255 = vld [vmem:[%s165 + $0x14c] sm:$0xf]
      %v256 = vld [vmem:[%s165 + $0x150] sm:$0xf]
      %v257 = vld [vmem:[%s165 + $0x154] sm:$0xf]
      %v258 = vld [vmem:[%s165 + $0x158] sm:$0xf]
      %v259 = vld [vmem:[%s165 + $0x15c] sm:$0xf]
      %v260 = vld [vmem:[%s165 + $0x160] sm:$0xf]
      %v261 = vld [vmem:[%s165 + $0x164] sm:$0xf]
      %v262 = vld [vmem:[%s165 + $0x168] sm:$0xf]
      %v263 = vld [vmem:[%s165 + $0x16c] sm:$0xf]
      %v264 = vld [vmem:[%s165 + $0x170] sm:$0xf]
      %v265 = vld [vmem:[%s165 + $0x174] sm:$0xf]
      %v266 = vld [vmem:[%s165 + $0x178] sm:$0xf]
      %v267 = vld [vmem:[%s165 + $0x17c] sm:$0xf]
      %v268 = vld [vmem:[%s165 + $0x180] sm:$0xf]
      %v269 = vld [vmem:[%s165 + $0x184] sm:$0xf]
      %v270 = vld [vmem:[%s165 + $0x188] sm:$0xf]
      %v271 = vld [vmem:[%s165 + $0x18c] sm:$0xf]
      %v272 = vld [vmem:[%s165 + $0x190] sm:$0xf]
      %v273 = vld [vmem:[%s165 + $0x194] sm:$0xf]
      %v274 = vld [vmem:[%s165 + $0x198] sm:$0xf]
      %v275 = vld [vmem:[%s165 + $0x19c] sm:$0xf]
      %v276 = vld [vmem:[%s165 + $0x1a0] sm:$0xf]
      %v277 = vld [vmem:[%s165 + $0x1a4] sm:$0xf]
      %v278 = vld [vmem:[%s165 + $0x1a8] sm:$0xf]
      %v279 = vld [vmem:[%s165 + $0x1ac] sm:$0xf]
      %v280 = vld [vmem:[%s165 + $0x1b0] sm:$0xf]
      %v281 = vld [vmem:[%s165 + $0x1b4] sm:$0xf]
      %v282 = vld [vmem:[%s165 + $0x1b8] sm:$0xf]
      %v283 = vld [vmem:[%s165 + $0x1bc] sm:$0xf]
      %v284 = vld [vmem:[%s165 + $0x1c0] sm:$0xf]
      %v285 = vld [vmem:[%s165 + $0x1c4] sm:$0xf]
      %v286 = vld [vmem:[%s165 + $0x1c8] sm:$0xf]
      %v287 = vld [vmem:[%s165 + $0x1cc] sm:$0xf]
      %v288 = vld [vmem:[%s165 + $0x1d0] sm:$0xf]
      %v289 = vld [vmem:[%s165 + $0x1d4] sm:$0xf]
      %v290 = vld [vmem:[%s165 + $0x1d8] sm:$0xf]
      %v291 = vld [vmem:[%s165 + $0x1dc] sm:$0xf]
      %v292 = vld [vmem:[%s165 + $0x1e0] sm:$0xf]
      %v293 = vld [vmem:[%s165 + $0x1e4] sm:$0xf]
      %v294 = vld [vmem:[%s165 + $0x1e8] sm:$0xf]
      %v295 = vld [vmem:[%s165 + $0x1ec] sm:$0xf]
      %v296 = vld [vmem:[%s165 + $0x1f0] sm:$0xf]
      %v297 = vld [vmem:[%s165 + $0x1f4] sm:$0xf]
      %v298 = vld [vmem:[%s165 + $0x1f8] sm:$0xf]
      %v299 = vld [vmem:[%s165 + $0x1fc] sm:$0xf]
      %v300 = vld [vmem:[%s1] sm:$0xf]
      %v301 = vld [vmem:[%s1 + $0x4] sm:$0xf]
      %v302 = vld [vmem:[%s2] sm:$0x1]
      %v304 = vlaneseq
      %v305 = vshrl.u32 %v304, 7
      %v306 = vsub.s32 0, %v305
      %v307 = vrot.slane %v302, %v306
      %v437 = vunpack.c.l.b16 %v172
      %v438 = vunpack.c.l.b16 %v173
      %v439 = vunpack.c.l.b16 %v174
      %v440 = vunpack.c.l.b16 %v175
      %v441 = vunpack.c.l.b16 %v176
      %v442 = vunpack.c.l.b16 %v177
      %v443 = vunpack.c.l.b16 %v178
      %v444 = vunpack.c.l.b16 %v179
      %v445 = vunpack.c.l.b16 %v180
      %v446 = vunpack.c.l.b16 %v181
      %v447 = vunpack.c.l.b16 %v182
      %v448 = vunpack.c.l.b16 %v183
      %v449 = vunpack.c.l.b16 %v184
      %v450 = vunpack.c.l.b16 %v185
      %v451 = vunpack.c.l.b16 %v186
      %v452 = vunpack.c.l.b16 %v187
      %v453 = vunpack.c.l.b16 %v188
      %v454 = vunpack.c.l.b16 %v189
      %v455 = vunpack.c.l.b16 %v190
      %v456 = vunpack.c.l.b16 %v191
      %v457 = vunpack.c.l.b16 %v192
      %v458 = vunpack.c.l.b16 %v193
      %v459 = vunpack.c.l.b16 %v194
      %v460 = vunpack.c.l.b16 %v195
      %v461 = vunpack.c.l.b16 %v196
      %v462 = vunpack.c.l.b16 %v197
      %v463 = vunpack.c.l.b16 %v198
      %v464 = vunpack.c.l.b16 %v199
      %v465 = vunpack.c.l.b16 %v200
      %v466 = vunpack.c.l.b16 %v201
      %v467 = vunpack.c.l.b16 %v202
      %v468 = vunpack.c.l.b16 %v203
      %v469 = vunpack.c.l.b16 %v204
      %v470 = vunpack.c.l.b16 %v205
      %v471 = vunpack.c.l.b16 %v206
      %v472 = vunpack.c.l.b16 %v207
      %v473 = vunpack.c.l.b16 %v208
      %v474 = vunpack.c.l.b16 %v209
      %v475 = vunpack.c.l.b16 %v210
      %v476 = vunpack.c.l.b16 %v211
      %v477 = vunpack.c.l.b16 %v212
      %v478 = vunpack.c.l.b16 %v213
      %v479 = vunpack.c.l.b16 %v214
      %v480 = vunpack.c.l.b16 %v215
      %v481 = vunpack.c.l.b16 %v216
      %v482 = vunpack.c.l.b16 %v217
      %v483 = vunpack.c.l.b16 %v218
      %v484 = vunpack.c.l.b16 %v219
      %v485 = vunpack.c.l.b16 %v220
      %v486 = vunpack.c.l.b16 %v221
      %v487 = vunpack.c.l.b16 %v222
      %v488 = vunpack.c.l.b16 %v223
      %v489 = vunpack.c.l.b16 %v224
      %v490 = vunpack.c.l.b16 %v225
      %v491 = vunpack.c.l.b16 %v226
      %v492 = vunpack.c.l.b16 %v227
      %v493 = vunpack.c.l.b16 %v228
      %v494 = vunpack.c.l.b16 %v229
      %v495 = vunpack.c.l.b16 %v230
      %v496 = vunpack.c.l.b16 %v231
      %v497 = vunpack.c.l.b16 %v232
      %v498 = vunpack.c.l.b16 %v233
      %v499 = vunpack.c.l.b16 %v234
      %v500 = vunpack.c.l.b16 %v235
      %v501 = vunpack.c.l.b16 %v236
      %v502 = vunpack.c.l.b16 %v237
      %v503 = vunpack.c.l.b16 %v238
      %v504 = vunpack.c.l.b16 %v239
      %v505 = vunpack.c.l.b16 %v240
      %v506 = vunpack.c.l.b16 %v241
      %v507 = vunpack.c.l.b16 %v242
      %v508 = vunpack.c.l.b16 %v243
      %v509 = vunpack.c.l.b16 %v244
      %v510 = vunpack.c.l.b16 %v245
      %v511 = vunpack.c.l.b16 %v246
      %v512 = vunpack.c.l.b16 %v247
      %v513 = vunpack.c.l.b16 %v248
      %v514 = vunpack.c.l.b16 %v249
      %v515 = vunpack.c.l.b16 %v250
      %v516 = vunpack.c.l.b16 %v251
      %v517 = vunpack.c.l.b16 %v252
      %v518 = vunpack.c.l.b16 %v253
      %v519 = vunpack.c.l.b16 %v254
      %v520 = vunpack.c.l.b16 %v255
      %v521 = vunpack.c.l.b16 %v256
      %v522 = vunpack.c.l.b16 %v257
      %v523 = vunpack.c.l.b16 %v258
      %v524 = vunpack.c.l.b16 %v259
      %v525 = vunpack.c.l.b16 %v260
      %v526 = vunpack.c.l.b16 %v261
      %v527 = vunpack.c.l.b16 %v262
      %v528 = vunpack.c.l.b16 %v263
      %v529 = vunpack.c.l.b16 %v264
      %v530 = vunpack.c.l.b16 %v265
      %v531 = vunpack.c.l.b16 %v266
      %v532 = vunpack.c.l.b16 %v267
      %v533 = vunpack.c.l.b16 %v268
      %v534 = vunpack.c.l.b16 %v269
      %v535 = vunpack.c.l.b16 %v270
      %v536 = vunpack.c.l.b16 %v271
      %v537 = vunpack.c.l.b16 %v272
      %v538 = vunpack.c.l.b16 %v273
      %v539 = vunpack.c.l.b16 %v274
      %v540 = vunpack.c.l.b16 %v275
      %v541 = vunpack.c.l.b16 %v276
      %v542 = vunpack.c.l.b16 %v277
      %v543 = vunpack.c.l.b16 %v278
      %v544 = vunpack.c.l.b16 %v279
      %v545 = vunpack.c.l.b16 %v280
      %v546 = vunpack.c.l.b16 %v281
      %v547 = vunpack.c.l.b16 %v282
      %v548 = vunpack.c.l.b16 %v283
      %v549 = vunpack.c.l.b16 %v284
      %v550 = vunpack.c.l.b16 %v285
      %v551 = vunpack.c.l.b16 %v286
      %v552 = vunpack.c.l.b16 %v287
      %v553 = vunpack.c.l.b16 %v288
      %v554 = vunpack.c.l.b16 %v289
      %v555 = vunpack.c.l.b16 %v290
      %v556 = vunpack.c.l.b16 %v291
      %v557 = vunpack.c.l.b16 %v292
      %v558 = vunpack.c.l.b16 %v293
      %v559 = vunpack.c.l.b16 %v294
      %v560 = vunpack.c.l.b16 %v295
      %v561 = vunpack.c.l.b16 %v296
      %v562 = vunpack.c.l.b16 %v297
      %v563 = vunpack.c.l.b16 %v298
      %v564 = vunpack.c.l.b16 %v299
      %v565 = vpack.c.b16 %v438, %v437
      %v566 = vpack.c.b16 %v440, %v439
      %v567 = vpack.c.b16 %v442, %v441
      %v568 = vpack.c.b16 %v444, %v443
      %v569 = vpack.c.b16 %v446, %v445
      %v570 = vpack.c.b16 %v448, %v447
      %v571 = vpack.c.b16 %v450, %v449
      %v572 = vpack.c.b16 %v452, %v451
      %v573 = vpack.c.b16 %v454, %v453
      %v574 = vpack.c.b16 %v456, %v455
      %v575 = vpack.c.b16 %v458, %v457
      %v576 = vpack.c.b16 %v460, %v459
      %v577 = vpack.c.b16 %v462, %v461
      %v578 = vpack.c.b16 %v464, %v463
      %v579 = vpack.c.b16 %v466, %v465
      %v580 = vpack.c.b16 %v468, %v467
      %v581 = vpack.c.b16 %v470, %v469
      %v582 = vpack.c.b16 %v472, %v471
      %v583 = vpack.c.b16 %v474, %v473
      %v584 = vpack.c.b16 %v476, %v475
      %v585 = vpack.c.b16 %v478, %v477
      %v586 = vpack.c.b16 %v480, %v479
      %v587 = vpack.c.b16 %v482, %v481
      %v588 = vpack.c.b16 %v484, %v483
      %v589 = vpack.c.b16 %v486, %v485
      %v590 = vpack.c.b16 %v488, %v487
      %v591 = vpack.c.b16 %v490, %v489
      %v592 = vpack.c.b16 %v492, %v491
      %v593 = vpack.c.b16 %v494, %v493
      %v594 = vpack.c.b16 %v496, %v495
      %v595 = vpack.c.b16 %v498, %v497
      %v596 = vpack.c.b16 %v500, %v499
      %v597 = vpack.c.b16 %v502, %v501
      %v598 = vpack.c.b16 %v504, %v503
      %v599 = vpack.c.b16 %v506, %v505
      %v600 = vpack.c.b16 %v508, %v507
      %v601 = vpack.c.b16 %v510, %v509
      %v602 = vpack.c.b16 %v512, %v511
      %v603 = vpack.c.b16 %v514, %v513
      %v604 = vpack.c.b16 %v516, %v515
      %v605 = vpack.c.b16 %v518, %v517
      %v606 = vpack.c.b16 %v520, %v519
      %v607 = vpack.c.b16 %v522, %v521
      %v608 = vpack.c.b16 %v524, %v523
      %v609 = vpack.c.b16 %v526, %v525
      %v610 = vpack.c.b16 %v528, %v527
      %v611 = vpack.c.b16 %v530, %v529
      %v612 = vpack.c.b16 %v532, %v531
      %v613 = vpack.c.b16 %v534, %v533
      %v614 = vpack.c.b16 %v536, %v535
      %v615 = vpack.c.b16 %v538, %v537
      %v616 = vpack.c.b16 %v540, %v539
      %v617 = vpack.c.b16 %v542, %v541
      %v618 = vpack.c.b16 %v544, %v543
      %v619 = vpack.c.b16 %v546, %v545
      %v620 = vpack.c.b16 %v548, %v547
      %v621 = vpack.c.b16 %v550, %v549
      %v622 = vpack.c.b16 %v552, %v551
      %v623 = vpack.c.b16 %v554, %v553
      %v624 = vpack.c.b16 %v556, %v555
      %v625 = vpack.c.b16 %v558, %v557
      %v626 = vpack.c.b16 %v560, %v559
      %v627 = vpack.c.b16 %v562, %v561
      %v628 = vpack.c.b16 %v564, %v563
      %v631 = vunpack.c.l.b16 %v300
      %v632 = vunpack.c.l.b16 %v301
      %v633 = vpack.c.b16 %v632, %v631
      %vm635 = vcmask 130048
      %v637 = vsel %vm635, %v565, 0
      %v640 = vsel %vm635, %v566, 0
      %v643 = vsel %vm635, %v567, 0
      %v646 = vsel %vm635, %v568, 0
      %v649 = vsel %vm635, %v569, 0
      %v652 = vsel %vm635, %v570, 0
      %v655 = vsel %vm635, %v571, 0
      %v658 = vsel %vm635, %v572, 0
      %v661 = vsel %vm635, %v573, 0
      %v664 = vsel %vm635, %v574, 0
      %v667 = vsel %vm635, %v575, 0
      %v670 = vsel %vm635, %v576, 0
      %v673 = vsel %vm635, %v577, 0
      %v676 = vsel %vm635, %v578, 0
      %v679 = vsel %vm635, %v579, 0
      %v682 = vsel %vm635, %v580, 0
      %v685 = vsel %vm635, %v581, 0
      %v688 = vsel %vm635, %v582, 0
      %v691 = vsel %vm635, %v583, 0
      %v694 = vsel %vm635, %v584, 0
      %v697 = vsel %vm635, %v585, 0
      %v700 = vsel %vm635, %v586, 0
      %v703 = vsel %vm635, %v587, 0
      %v706 = vsel %vm635, %v588, 0
      %v709 = vsel %vm635, %v589, 0
      %v712 = vsel %vm635, %v590, 0
      %v715 = vsel %vm635, %v591, 0
      %v718 = vsel %vm635, %v592, 0
      %v721 = vsel %vm635, %v593, 0
      %v724 = vsel %vm635, %v594, 0
      %v727 = vsel %vm635, %v595, 0
      %v730 = vsel %vm635, %v596, 0
      %v733 = vsel %vm635, %v597, 0
      %v736 = vsel %vm635, %v598, 0
      %v739 = vsel %vm635, %v599, 0
      %v742 = vsel %vm635, %v600, 0
      %v745 = vsel %vm635, %v601, 0
      %v748 = vsel %vm635, %v602, 0
      %v751 = vsel %vm635, %v603, 0
      %v754 = vsel %vm635, %v604, 0
      %v757 = vsel %vm635, %v605, 0
      %v760 = vsel %vm635, %v606, 0
      %v763 = vsel %vm635, %v607, 0
      %v766 = vsel %vm635, %v608, 0
      %v769 = vsel %vm635, %v609, 0
      %v772 = vsel %vm635, %v610, 0
      %v775 = vsel %vm635, %v611, 0
      %v778 = vsel %vm635, %v612, 0
      %v781 = vsel %vm635, %v613, 0
      %v784 = vsel %vm635, %v614, 0
      %v787 = vsel %vm635, %v615, 0
      %v790 = vsel %vm635, %v616, 0
      %v793 = vsel %vm635, %v617, 0
      %v796 = vsel %vm635, %v618, 0
      %v799 = vsel %vm635, %v619, 0
      %v802 = vsel %vm635, %v620, 0
      %v805 = vsel %vm635, %v621, 0
      %v808 = vsel %vm635, %v622, 0
      %v811 = vsel %vm635, %v623, 0
      %v814 = vsel %vm635, %v624, 0
      %v817 = vsel %vm635, %v625, 0
      %v820 = vsel %vm635, %v626, 0
      %v823 = vsel %vm635, %v627, 0
      %v826 = vsel %vm635, %v628, 0
      %828 = vmatprep.subr.bf16.mxu0 0
      %829 = vmatpush1.bf16.msra.mxu0 %v633
      %830 = vmatprep.subr.bf16.mxu0 0
      %831 = vmatpush1.bf16.msra.mxu0 0
      %832 = vmatprep.subr.bf16.mxu0 0
      %833 = vmatpush1.bf16.msra.mxu0 0
      %834 = vmatprep.subr.bf16.mxu0 0
      %835 = vmatpush1.bf16.msra.mxu0 0
      %836 = vmatprep.subr.bf16.mxu0 0
      %837 = vmatpush1.bf16.msra.mxu0 0
      %838 = vmatprep.subr.bf16.mxu0 0
      %839 = vmatpush1.bf16.msra.mxu0 0
      %840 = vmatprep.subr.bf16.mxu0 0
      %841 = vmatpush1.bf16.msra.mxu0 0
      %842 = vmatprep.subr.bf16.mxu0 0
      %843 = vmatpush1.bf16.msra.mxu0 0
      %844 = vmatprep.subr.bf16.mxu0 0
      %845 = vmatpush1.bf16.msra.mxu0 0
      %846 = vmatprep.subr.bf16.mxu0 0
      %847 = vmatpush1.bf16.msra.mxu0 0
      %848 = vmatprep.subr.bf16.mxu0 0
      %849 = vmatpush1.bf16.msra.mxu0 0
      %850 = vmatprep.subr.bf16.mxu0 0
      %851 = vmatpush1.bf16.msra.mxu0 0
      %852 = vmatprep.subr.bf16.mxu0 0
      %853 = vmatpush1.bf16.msra.mxu0 0
      %854 = vmatprep.subr.bf16.mxu0 0
      %855 = vmatpush1.bf16.msra.mxu0 0
      %856 = vmatprep.subr.bf16.mxu0 0
      %857 = vmatpush1.bf16.msra.mxu0 0
      %858 = vmatprep.subr.bf16.mxu0 0
      %859 = vmatpush1.bf16.msra.mxu0 0
      %860 = vmatprep.mubr.bf16.mxu0 0
      %861 = vmatmul.mubr.bf16.gmra.mrb[0].mxu0 %v637
      %v862 = vpop.f32.mrb[0].mxu0
      %v863 = vadd.f32 %v307, %v862
      %v864 = vpop.f32.mrb[0].mxu0
      %v865 = vpop.f32.mrb[0].mxu0
      %v866 = vadd.f32 %v307, %v865
      %v867 = vpop.f32.mrb[0].mxu0
      %868 = vmatprep.mubr.bf16.mxu0 0
      %869 = vmatmul.mubr.bf16.gmra.mrb[0].mxu0 %v640
      %v870 = vpop.f32.mrb[0].mxu0
      %v871 = vadd.f32 %v307, %v870
      %v872 = vpop.f32.mrb[0].mxu0
      %v873 = vpop.f32.mrb[0].mxu0
      %v874 = vadd.f32 %v307, %v873
      %v875 = vpop.f32.mrb[0].mxu0
      %876 = vmatprep.mubr.bf16.mxu0 0
      %877 = vmatmul.mubr.bf16.gmra.mrb[0].mxu0 %v643
      %v878 = vpop.f32.mrb[0].mxu0
      %v879 = vadd.f32 %v307, %v878
      %v880 = vpop.f32.mrb[0].mxu0
      %v881 = vpop.f32.mrb[0].mxu0
      %v882 = vadd.f32 %v307, %v881
      %v883 = vpop.f32.mrb[0].mxu0
      %884 = vmatprep.mubr.bf16.mxu0 0
      %885 = vmatmul.mubr.bf16.gmra.mrb[0].mxu0 %v646
      %v886 = vpop.f32.mrb[0].mxu0
      %v887 = vadd.f32 %v307, %v886
      %v888 = vpop.f32.mrb[0].mxu0
      %v889 = vpop.f32.mrb[0].mxu0
      %v890 = vadd.f32 %v307, %v889
      %v891 = vpop.f32.mrb[0].mxu0
      %892 = vmatprep.mubr.bf16.mxu0 0
      %893 = vmatmul.mubr.bf16.gmra.mrb[0].mxu0 %v649
      %v894 = vpop.f32.mrb[0].mxu0
      %v895 = vadd.f32 %v307, %v894
      %v896 = vpop.f32.mrb[0].mxu0
      %v897 = vpop.f32.mrb[0].mxu0
      %v898 = vadd.f32 %v307, %v897
      %v899 = vpop.f32.mrb[0].mxu0
      %900 = vmatprep.mubr.bf16.mxu0 0
      %901 = vmatmul.mubr.bf16.gmra.mrb[0].mxu0 %v652
      %v902 = vpop.f32.mrb[0].mxu0
      %v903 = vadd.f32 %v307, %v902
      %v904 = vpop.f32.mrb[0].mxu0
      %v905 = vpop.f32.mrb[0].mxu0
      %v906 = vadd.f32 %v307, %v905
      %v907 = vpop.f32.mrb[0].mxu0
      %908 = vmatprep.mubr.bf16.mxu0 0
      %909 = vmatmul.mubr.bf16.gmra.mrb[0].mxu0 %v655
      %v910 = vpop.f32.mrb[0].mxu0
      %v911 = vadd.f32 %v307, %v910
      %v912 = vpop.f32.mrb[0].mxu0
      %v913 = vpop.f32.mrb[0].mxu0
      %v914 = vadd.f32 %v307, %v913
      %v915 = vpop.f32.mrb[0].mxu0
      %916 = vmatprep.mubr.bf16.mxu0 0
      %917 = vmatmul.mubr.bf16.gmra.mrb[0].mxu0 %v658
      %v918 = vpop.f32.mrb[0].mxu0
      %v919 = vadd.f32 %v307, %v918
      %v920 = vpop.f32.mrb[0].mxu0
      %v921 = vpop.f32.mrb[0].mxu0
      %v922 = vadd.f32 %v307, %v921
      %v923 = vpop.f32.mrb[0].mxu0
      %924 = vmatprep.mubr.bf16.mxu0 0
      %925 = vmatmul.mubr.bf16.gmra.mrb[0].mxu0 %v661
      %v926 = vpop.f32.mrb[0].mxu0
      %v927 = vadd.f32 %v307, %v926
      %v928 = vpop.f32.mrb[0].mxu0
      %v929 = vpop.f32.mrb[0].mxu0
      %v930 = vadd.f32 %v307, %v929
      %v931 = vpop.f32.mrb[0].mxu0
      %932 = vmatprep.mubr.bf16.mxu0 0
      %933 = vmatmul.mubr.bf16.gmra.mrb[0].mxu0 %v664
      %v934 = vpop.f32.mrb[0].mxu0
      %v935 = vadd.f32 %v307, %v934
      %v936 = vpop.f32.mrb[0].mxu0
      %v937 = vpop.f32.mrb[0].mxu0
      %v938 = vadd.f32 %v307, %v937
      %v939 = vpop.f32.mrb[0].mxu0
      %940 = vmatprep.mubr.bf16.mxu0 0
      %941 = vmatmul.mubr.bf16.gmra.mrb[0].mxu0 %v667
      %v942 = vpop.f32.mrb[0].mxu0
      %v943 = vadd.f32 %v307, %v942
      %v944 = vpop.f32.mrb[0].mxu0
      %v945 = vpop.f32.mrb[0].mxu0
      %v946 = vadd.f32 %v307, %v945
      %v947 = vpop.f32.mrb[0].mxu0
      %948 = vmatprep.mubr.bf16.mxu0 0
      %949 = vmatmul.mubr.bf16.gmra.mrb[0].mxu0 %v670
      %v950 = vpop.f32.mrb[0].mxu0
      %v951 = vadd.f32 %v307, %v950
      %v952 = vpop.f32.mrb[0].mxu0
      %v953 = vpop.f32.mrb[0].mxu0
      %v954 = vadd.f32 %v307, %v953
      %v955 = vpop.f32.mrb[0].mxu0
      %956 = vmatprep.mubr.bf16.mxu0 0
      %957 = vmatmul.mubr.bf16.gmra.mrb[0].mxu0 %v673
      %v958 = vpop.f32.mrb[0].mxu0
      %v959 = vadd.f32 %v307, %v958
      %v960 = vpop.f32.mrb[0].mxu0
      %v961 = vpop.f32.mrb[0].mxu0
      %v962 = vadd.f32 %v307, %v961
      %v963 = vpop.f32.mrb[0].mxu0
      %964 = vmatprep.mubr.bf16.mxu0 0
      %965 = vmatmul.mubr.bf16.gmra.mrb[0].mxu0 %v676
      %v966 = vpop.f32.mrb[0].mxu0
      %v967 = vadd.f32 %v307, %v966
      %v968 = vpop.f32.mrb[0].mxu0
      %v969 = vpop.f32.mrb[0].mxu0
      %v970 = vadd.f32 %v307, %v969
      %v971 = vpop.f32.mrb[0].mxu0
      %972 = vmatprep.mubr.bf16.mxu0 0
      %973 = vmatmul.mubr.bf16.gmra.mrb[0].mxu0 %v679
      %v974 = vpop.f32.mrb[0].mxu0
      %v975 = vadd.f32 %v307, %v974
      %v976 = vpop.f32.mrb[0].mxu0
      %v977 = vpop.f32.mrb[0].mxu0
      %v978 = vadd.f32 %v307, %v977
      %v979 = vpop.f32.mrb[0].mxu0
      %980 = vmatprep.mubr.bf16.mxu0 0
      %981 = vmatmul.mubr.bf16.gmra.mrb[0].mxu0 %v682
      %v982 = vpop.f32.mrb[0].mxu0
      %v983 = vadd.f32 %v307, %v982
      %v984 = vpop.f32.mrb[0].mxu0
      %v985 = vpop.f32.mrb[0].mxu0
      %v986 = vadd.f32 %v307, %v985
      %v987 = vpop.f32.mrb[0].mxu0
      %988 = vmatprep.mubr.bf16.mxu0 0
      %989 = vmatmul.mubr.bf16.gmra.mrb[0].mxu0 %v685
      %v990 = vpop.f32.mrb[0].mxu0
      %v991 = vadd.f32 %v307, %v990
      %v992 = vpop.f32.mrb[0].mxu0
      %v993 = vpop.f32.mrb[0].mxu0
      %v994 = vadd.f32 %v307, %v993
      %v995 = vpop.f32.mrb[0].mxu0
      %996 = vmatprep.mubr.bf16.mxu0 0
      %997 = vmatmul.mubr.bf16.gmra.mrb[0].mxu0 %v688
      %v998 = vpop.f32.mrb[0].mxu0
      %v999 = vadd.f32 %v307, %v998
      %v1000 = vpop.f32.mrb[0].mxu0
      %v1001 = vpop.f32.mrb[0].mxu0
      %v1002 = vadd.f32 %v307, %v1001
      %v1003 = vpop.f32.mrb[0].mxu0
      %1004 = vmatprep.mubr.bf16.mxu0 0
      %1005 = vmatmul.mubr.bf16.gmra.mrb[0].mxu0 %v691
      %v1006 = vpop.f32.mrb[0].mxu0
      %v1007 = vadd.f32 %v307, %v1006
      %v1008 = vpop.f32.mrb[0].mxu0
      %v1009 = vpop.f32.mrb[0].mxu0
      %v1010 = vadd.f32 %v307, %v1009
      %v1011 = vpop.f32.mrb[0].mxu0
      %1012 = vmatprep.mubr.bf16.mxu0 0
      %1013 = vmatmul.mubr.bf16.gmra.mrb[0].mxu0 %v694
      %v1014 = vpop.f32.mrb[0].mxu0
      %v1015 = vadd.f32 %v307, %v1014
      %v1016 = vpop.f32.mrb[0].mxu0
      %v1017 = vpop.f32.mrb[0].mxu0
      %v1018 = vadd.f32 %v307, %v1017
      %v1019 = vpop.f32.mrb[0].mxu0
      %1020 = vmatprep.mubr.bf16.mxu0 0
      %1021 = vmatmul.mubr.bf16.gmra.mrb[0].mxu0 %v697
      %v1022 = vpop.f32.mrb[0].mxu0
      %v1023 = vadd.f32 %v307, %v1022
      %v1024 = vpop.f32.mrb[0].mxu0
      %v1025 = vpop.f32.mrb[0].mxu0
      %v1026 = vadd.f32 %v307, %v1025
      %v1027 = vpop.f32.mrb[0].mxu0
      %1028 = vmatprep.mubr.bf16.mxu0 0
      %1029 = vmatmul.mubr.bf16.gmra.mrb[0].mxu0 %v700
      %v1030 = vpop.f32.mrb[0].mxu0
      %v1031 = vadd.f32 %v307, %v1030
      %v1032 = vpop.f32.mrb[0].mxu0
      %v1033 = vpop.f32.mrb[0].mxu0
      %v1034 = vadd.f32 %v307, %v1033
      %v1035 = vpop.f32.mrb[0].mxu0
      %1036 = vmatprep.mubr.bf16.mxu0 0
      %1037 = vmatmul.mubr.bf16.gmra.mrb[0].mxu0 %v703
      %v1038 = vpop.f32.mrb[0].mxu0
      %v1039 = vadd.f32 %v307, %v1038
      %v1040 = vpop.f32.mrb[0].mxu0
      %v1041 = vpop.f32.mrb[0].mxu0
      %v1042 = vadd.f32 %v307, %v1041
      %v1043 = vpop.f32.mrb[0].mxu0
      %1044 = vmatprep.mubr.bf16.mxu0 0
      %1045 = vmatmul.mubr.bf16.gmra.mrb[0].mxu0 %v706
      %v1046 = vpop.f32.mrb[0].mxu0
      %v1047 = vadd.f32 %v307, %v1046
      %v1048 = vpop.f32.mrb[0].mxu0
      %v1049 = vpop.f32.mrb[0].mxu0
      %v1050 = vadd.f32 %v307, %v1049
      %v1051 = vpop.f32.mrb[0].mxu0
      %1052 = vmatprep.mubr.bf16.mxu0 0
      %1053 = vmatmul.mubr.bf16.gmra.mrb[0].mxu0 %v709
      %v1054 = vpop.f32.mrb[0].mxu0
      %v1055 = vadd.f32 %v307, %v1054
      %v1056 = vpop.f32.mrb[0].mxu0
      %v1057 = vpop.f32.mrb[0].mxu0
      %v1058 = vadd.f32 %v307, %v1057
      %v1059 = vpop.f32.mrb[0].mxu0
      %1060 = vmatprep.mubr.bf16.mxu0 0
      %1061 = vmatmul.mubr.bf16.gmra.mrb[0].mxu0 %v712
      %v1062 = vpop.f32.mrb[0].mxu0
      %v1063 = vadd.f32 %v307, %v1062
      %v1064 = vpop.f32.mrb[0].mxu0
      %v1065 = vpop.f32.mrb[0].mxu0
      %v1066 = vadd.f32 %v307, %v1065
      %v1067 = vpop.f32.mrb[0].mxu0
      %1068 = vmatprep.mubr.bf16.mxu0 0
      %1069 = vmatmul.mubr.bf16.gmra.mrb[0].mxu0 %v715
      %v1070 = vpop.f32.mrb[0].mxu0
      %v1071 = vadd.f32 %v307, %v1070
      %v1072 = vpop.f32.mrb[0].mxu0
      %v1073 = vpop.f32.mrb[0].mxu0
      %v1074 = vadd.f32 %v307, %v1073
      %v1075 = vpop.f32.mrb[0].mxu0
      %1076 = vmatprep.mubr.bf16.mxu0 0
      %1077 = vmatmul.mubr.bf16.gmra.mrb[0].mxu0 %v718
      %v1078 = vpop.f32.mrb[0].mxu0
      %v1079 = vadd.f32 %v307, %v1078
      %v1080 = vpop.f32.mrb[0].mxu0
      %v1081 = vpop.f32.mrb[0].mxu0
      %v1082 = vadd.f32 %v307, %v1081
      %v1083 = vpop.f32.mrb[0].mxu0
      %1084 = vmatprep.mubr.bf16.mxu0 0
      %1085 = vmatmul.mubr.bf16.gmra.mrb[0].mxu0 %v721
      %v1086 = vpop.f32.mrb[0].mxu0
      %v1087 = vadd.f32 %v307, %v1086
      %v1088 = vpop.f32.mrb[0].mxu0
      %v1089 = vpop.f32.mrb[0].mxu0
      %v1090 = vadd.f32 %v307, %v1089
      %v1091 = vpop.f32.mrb[0].mxu0
      %1092 = vmatprep.mubr.bf16.mxu0 0
      %1093 = vmatmul.mubr.bf16.gmra.mrb[0].mxu0 %v724
      %v1094 = vpop.f32.mrb[0].mxu0
      %v1095 = vadd.f32 %v307, %v1094
      %v1096 = vpop.f32.mrb[0].mxu0
      %v1097 = vpop.f32.mrb[0].mxu0
      %v1098 = vadd.f32 %v307, %v1097
      %v1099 = vpop.f32.mrb[0].mxu0
      %1100 = vmatprep.mubr.bf16.mxu0 0
      %1101 = vmatmul.mubr.bf16.gmra.mrb[0].mxu0 %v727
      %v1102 = vpop.f32.mrb[0].mxu0
      %v1103 = vadd.f32 %v307, %v1102
      %v1104 = vpop.f32.mrb[0].mxu0
      %v1105 = vpop.f32.mrb[0].mxu0
      %v1106 = vadd.f32 %v307, %v1105
      %v1107 = vpop.f32.mrb[0].mxu0
      %1108 = vmatprep.mubr.bf16.mxu0 0
      %1109 = vmatmul.mubr.bf16.gmra.mrb[0].mxu0 %v730
      %v1110 = vpop.f32.mrb[0].mxu0
      %v1111 = vadd.f32 %v307, %v1110
      %v1112 = vpop.f32.mrb[0].mxu0
      %v1113 = vpop.f32.mrb[0].mxu0
      %v1114 = vadd.f32 %v307, %v1113
      %v1115 = vpop.f32.mrb[0].mxu0
      %1116 = vmatprep.mubr.bf16.mxu0 0
      %1117 = vmatmul.mubr.bf16.gmra.mrb[0].mxu0 %v733
      %v1118 = vpop.f32.mrb[0].mxu0
      %v1119 = vadd.f32 %v307, %v1118
      %v1120 = vpop.f32.mrb[0].mxu0
      %v1121 = vpop.f32.mrb[0].mxu0
      %v1122 = vadd.f32 %v307, %v1121
      %v1123 = vpop.f32.mrb[0].mxu0
      %1124 = vmatprep.mubr.bf16.mxu0 0
      %1125 = vmatmul.mubr.bf16.gmra.mrb[0].mxu0 %v736
      %v1126 = vpop.f32.mrb[0].mxu0
      %v1127 = vadd.f32 %v307, %v1126
      %v1128 = vpop.f32.mrb[0].mxu0
      %v1129 = vpop.f32.mrb[0].mxu0
      %v1130 = vadd.f32 %v307, %v1129
      %v1131 = vpop.f32.mrb[0].mxu0
      %1132 = vmatprep.mubr.bf16.mxu0 0
      %1133 = vmatmul.mubr.bf16.gmra.mrb[0].mxu0 %v739
      %v1134 = vpop.f32.mrb[0].mxu0
      %v1135 = vadd.f32 %v307, %v1134
      %v1136 = vpop.f32.mrb[0].mxu0
      %v1137 = vpop.f32.mrb[0].mxu0
      %v1138 = vadd.f32 %v307, %v1137
      %v1139 = vpop.f32.mrb[0].mxu0
      %1140 = vmatprep.mubr.bf16.mxu0 0
      %1141 = vmatmul.mubr.bf16.gmra.mrb[0].mxu0 %v742
      %v1142 = vpop.f32.mrb[0].mxu0
      %v1143 = vadd.f32 %v307, %v1142
      %v1144 = vpop.f32.mrb[0].mxu0
      %v1145 = vpop.f32.mrb[0].mxu0
      %v1146 = vadd.f32 %v307, %v1145
      %v1147 = vpop.f32.mrb[0].mxu0
      %1148 = vmatprep.mubr.bf16.mxu0 0
      %1149 = vmatmul.mubr.bf16.gmra.mrb[0].mxu0 %v745
      %v1150 = vpop.f32.mrb[0].mxu0
      %v1151 = vadd.f32 %v307, %v1150
      %v1152 = vpop.f32.mrb[0].mxu0
      %v1153 = vpop.f32.mrb[0].mxu0
      %v1154 = vadd.f32 %v307, %v1153
      %v1155 = vpop.f32.mrb[0].mxu0
      %1156 = vmatprep.mubr.bf16.mxu0 0
      %1157 = vmatmul.mubr.bf16.gmra.mrb[0].mxu0 %v748
      %v1158 = vpop.f32.mrb[0].mxu0
      %v1159 = vadd.f32 %v307, %v1158
      %v1160 = vpop.f32.mrb[0].mxu0
      %v1161 = vpop.f32.mrb[0].mxu0
      %v1162 = vadd.f32 %v307, %v1161
      %v1163 = vpop.f32.mrb[0].mxu0
      %1164 = vmatprep.mubr.bf16.mxu0 0
      %1165 = vmatmul.mubr.bf16.gmra.mrb[0].mxu0 %v751
      %v1166 = vpop.f32.mrb[0].mxu0
      %v1167 = vadd.f32 %v307, %v1166
      %v1168 = vpop.f32.mrb[0].mxu0
      %v1169 = vpop.f32.mrb[0].mxu0
      %v1170 = vadd.f32 %v307, %v1169
      %v1171 = vpop.f32.mrb[0].mxu0
      %1172 = vmatprep.mubr.bf16.mxu0 0
      %1173 = vmatmul.mubr.bf16.gmra.mrb[0].mxu0 %v754
      %v1174 = vpop.f32.mrb[0].mxu0
      %v1175 = vadd.f32 %v307, %v1174
      %v1176 = vpop.f32.mrb[0].mxu0
      %v1177 = vpop.f32.mrb[0].mxu0
      %v1178 = vadd.f32 %v307, %v1177
      %v1179 = vpop.f32.mrb[0].mxu0
      %1180 = vmatprep.mubr.bf16.mxu0 0
      %1181 = vmatmul.mubr.bf16.gmra.mrb[0].mxu0 %v757
      %v1182 = vpop.f32.mrb[0].mxu0
      %v1183 = vadd.f32 %v307, %v1182
      %v1184 = vpop.f32.mrb[0].mxu0
      %v1185 = vpop.f32.mrb[0].mxu0
      %v1186 = vadd.f32 %v307, %v1185
      %v1187 = vpop.f32.mrb[0].mxu0
      %1188 = vmatprep.mubr.bf16.mxu0 0
      %1189 = vmatmul.mubr.bf16.gmra.mrb[0].mxu0 %v760
      %v1190 = vpop.f32.mrb[0].mxu0
      %v1191 = vadd.f32 %v307, %v1190
      %v1192 = vpop.f32.mrb[0].mxu0
      %v1193 = vpop.f32.mrb[0].mxu0
      %v1194 = vadd.f32 %v307, %v1193
      %v1195 = vpop.f32.mrb[0].mxu0
      %1196 = vmatprep.mubr.bf16.mxu0 0
      %1197 = vmatmul.mubr.bf16.gmra.mrb[0].mxu0 %v763
      %v1198 = vpop.f32.mrb[0].mxu0
      %v1199 = vadd.f32 %v307, %v1198
      %v1200 = vpop.f32.mrb[0].mxu0
      %v1201 = vpop.f32.mrb[0].mxu0
      %v1202 = vadd.f32 %v307, %v1201
      %v1203 = vpop.f32.mrb[0].mxu0
      %1204 = vmatprep.mubr.bf16.mxu0 0
      %1205 = vmatmul.mubr.bf16.gmra.mrb[0].mxu0 %v766
      %v1206 = vpop.f32.mrb[0].mxu0
      %v1207 = vadd.f32 %v307, %v1206
      %v1208 = vpop.f32.mrb[0].mxu0
      %v1209 = vpop.f32.mrb[0].mxu0
      %v1210 = vadd.f32 %v307, %v1209
      %v1211 = vpop.f32.mrb[0].mxu0
      %1212 = vmatprep.mubr.bf16.mxu0 0
      %1213 = vmatmul.mubr.bf16.gmra.mrb[0].mxu0 %v769
      %v1214 = vpop.f32.mrb[0].mxu0
      %v1215 = vadd.f32 %v307, %v1214
      %v1216 = vpop.f32.mrb[0].mxu0
      %v1217 = vpop.f32.mrb[0].mxu0
      %v1218 = vadd.f32 %v307, %v1217
      %v1219 = vpop.f32.mrb[0].mxu0
      %1220 = vmatprep.mubr.bf16.mxu0 0
      %1221 = vmatmul.mubr.bf16.gmra.mrb[0].mxu0 %v772
      %v1222 = vpop.f32.mrb[0].mxu0
      %v1223 = vadd.f32 %v307, %v1222
      %v1224 = vpop.f32.mrb[0].mxu0
      %v1225 = vpop.f32.mrb[0].mxu0
      %v1226 = vadd.f32 %v307, %v1225
      %v1227 = vpop.f32.mrb[0].mxu0
      %1228 = vmatprep.mubr.bf16.mxu0 0
      %1229 = vmatmul.mubr.bf16.gmra.mrb[0].mxu0 %v775
      %v1230 = vpop.f32.mrb[0].mxu0
      %v1231 = vadd.f32 %v307, %v1230
      %v1232 = vpop.f32.mrb[0].mxu0
      %v1233 = vpop.f32.mrb[0].mxu0
      %v1234 = vadd.f32 %v307, %v1233
      %v1235 = vpop.f32.mrb[0].mxu0
      %1236 = vmatprep.mubr.bf16.mxu0 0
      %1237 = vmatmul.mubr.bf16.gmra.mrb[0].mxu0 %v778
      %v1238 = vpop.f32.mrb[0].mxu0
      %v1239 = vadd.f32 %v307, %v1238
      %v1240 = vpop.f32.mrb[0].mxu0
      %v1241 = vpop.f32.mrb[0].mxu0
      %v1242 = vadd.f32 %v307, %v1241
      %v1243 = vpop.f32.mrb[0].mxu0
      %1244 = vmatprep.mubr.bf16.mxu0 0
      %1245 = vmatmul.mubr.bf16.gmra.mrb[0].mxu0 %v781
      %v1246 = vpop.f32.mrb[0].mxu0
      %v1247 = vadd.f32 %v307, %v1246
      %v1248 = vpop.f32.mrb[0].mxu0
      %v1249 = vpop.f32.mrb[0].mxu0
      %v1250 = vadd.f32 %v307, %v1249
      %v1251 = vpop.f32.mrb[0].mxu0
      %1252 = vmatprep.mubr.bf16.mxu0 0
      %1253 = vmatmul.mubr.bf16.gmra.mrb[0].mxu0 %v784
      %v1254 = vpop.f32.mrb[0].mxu0
      %v1255 = vadd.f32 %v307, %v1254
      %v1256 = vpop.f32.mrb[0].mxu0
      %v1257 = vpop.f32.mrb[0].mxu0
      %v1258 = vadd.f32 %v307, %v1257
      %v1259 = vpop.f32.mrb[0].mxu0
      %1260 = vmatprep.mubr.bf16.mxu0 0
      %1261 = vmatmul.mubr.bf16.gmra.mrb[0].mxu0 %v787
      %v1262 = vpop.f32.mrb[0].mxu0
      %v1263 = vadd.f32 %v307, %v1262
      %v1264 = vpop.f32.mrb[0].mxu0
      %v1265 = vpop.f32.mrb[0].mxu0
      %v1266 = vadd.f32 %v307, %v1265
      %v1267 = vpop.f32.mrb[0].mxu0
      %1268 = vmatprep.mubr.bf16.mxu0 0
      %1269 = vmatmul.mubr.bf16.gmra.mrb[0].mxu0 %v790
      %v1270 = vpop.f32.mrb[0].mxu0
      %v1271 = vadd.f32 %v307, %v1270
      %v1272 = vpop.f32.mrb[0].mxu0
      %v1273 = vpop.f32.mrb[0].mxu0
      %v1274 = vadd.f32 %v307, %v1273
      %v1275 = vpop.f32.mrb[0].mxu0
      %1276 = vmatprep.mubr.bf16.mxu0 0
      %1277 = vmatmul.mubr.bf16.gmra.mrb[0].mxu0 %v793
      %v1278 = vpop.f32.mrb[0].mxu0
      %v1279 = vadd.f32 %v307, %v1278
      %v1280 = vpop.f32.mrb[0].mxu0
      %v1281 = vpop.f32.mrb[0].mxu0
      %v1282 = vadd.f32 %v307, %v1281
      %v1283 = vpop.f32.mrb[0].mxu0
      %1284 = vmatprep.mubr.bf16.mxu0 0
      %1285 = vmatmul.mubr.bf16.gmra.mrb[0].mxu0 %v796
      %v1286 = vpop.f32.mrb[0].mxu0
      %v1287 = vadd.f32 %v307, %v1286
      %v1288 = vpop.f32.mrb[0].mxu0
      %v1289 = vpop.f32.mrb[0].mxu0
      %v1290 = vadd.f32 %v307, %v1289
      %v1291 = vpop.f32.mrb[0].mxu0
      %1292 = vmatprep.mubr.bf16.mxu0 0
      %1293 = vmatmul.mubr.bf16.gmra.mrb[0].mxu0 %v799
      %v1294 = vpop.f32.mrb[0].mxu0
      %v1295 = vadd.f32 %v307, %v1294
      %v1296 = vpop.f32.mrb[0].mxu0
      %v1297 = vpop.f32.mrb[0].mxu0
      %v1298 = vadd.f32 %v307, %v1297
      %v1299 = vpop.f32.mrb[0].mxu0
      %1300 = vmatprep.mubr.bf16.mxu0 0
      %1301 = vmatmul.mubr.bf16.gmra.mrb[0].mxu0 %v802
      %v1302 = vpop.f32.mrb[0].mxu0
      %v1303 = vadd.f32 %v307, %v1302
      %v1304 = vpop.f32.mrb[0].mxu0
      %v1305 = vpop.f32.mrb[0].mxu0
      %v1306 = vadd.f32 %v307, %v1305
      %v1307 = vpop.f32.mrb[0].mxu0
      %1308 = vmatprep.mubr.bf16.mxu0 0
      %1309 = vmatmul.mubr.bf16.gmra.mrb[0].mxu0 %v805
      %v1310 = vpop.f32.mrb[0].mxu0
      %v1311 = vadd.f32 %v307, %v1310
      %v1312 = vpop.f32.mrb[0].mxu0
      %v1313 = vpop.f32.mrb[0].mxu0
      %v1314 = vadd.f32 %v307, %v1313
      %v1315 = vpop.f32.mrb[0].mxu0
      %1316 = vmatprep.mubr.bf16.mxu0 0
      %1317 = vmatmul.mubr.bf16.gmra.mrb[0].mxu0 %v808
      %v1318 = vpop.f32.mrb[0].mxu0
      %v1319 = vadd.f32 %v307, %v1318
      %v1320 = vpop.f32.mrb[0].mxu0
      %v1321 = vpop.f32.mrb[0].mxu0
      %v1322 = vadd.f32 %v307, %v1321
      %v1323 = vpop.f32.mrb[0].mxu0
      %1324 = vmatprep.mubr.bf16.mxu0 0
      %1325 = vmatmul.mubr.bf16.gmra.mrb[0].mxu0 %v811
      %v1326 = vpop.f32.mrb[0].mxu0
      %v1327 = vadd.f32 %v307, %v1326
      %v1328 = vpop.f32.mrb[0].mxu0
      %v1329 = vpop.f32.mrb[0].mxu0
      %v1330 = vadd.f32 %v307, %v1329
      %v1331 = vpop.f32.mrb[0].mxu0
      %1332 = vmatprep.mubr.bf16.mxu0 0
      %1333 = vmatmul.mubr.bf16.gmra.mrb[0].mxu0 %v814
      %v1334 = vpop.f32.mrb[0].mxu0
      %v1335 = vadd.f32 %v307, %v1334
      %v1336 = vpop.f32.mrb[0].mxu0
      %v1337 = vpop.f32.mrb[0].mxu0
      %v1338 = vadd.f32 %v307, %v1337
      %v1339 = vpop.f32.mrb[0].mxu0
      %1340 = vmatprep.mubr.bf16.mxu0 0
      %1341 = vmatmul.mubr.bf16.gmra.mrb[0].mxu0 %v817
      %v1342 = vpop.f32.mrb[0].mxu0
      %v1343 = vadd.f32 %v307, %v1342
      %v1344 = vpop.f32.mrb[0].mxu0
      %v1345 = vpop.f32.mrb[0].mxu0
      %v1346 = vadd.f32 %v307, %v1345
      %v1347 = vpop.f32.mrb[0].mxu0
      %1348 = vmatprep.mubr.bf16.mxu0 0
      %1349 = vmatmul.mubr.bf16.gmra.mrb[0].mxu0 %v820
      %v1350 = vpop.f32.mrb[0].mxu0
      %v1351 = vadd.f32 %v307, %v1350
      %v1352 = vpop.f32.mrb[0].mxu0
      %v1353 = vpop.f32.mrb[0].mxu0
      %v1354 = vadd.f32 %v307, %v1353
      %v1355 = vpop.f32.mrb[0].mxu0
      %1356 = vmatprep.mubr.bf16.mxu0 0
      %1357 = vmatmul.mubr.bf16.gmra.mrb[0].mxu0 %v823
      %v1358 = vpop.f32.mrb[0].mxu0
      %v1359 = vadd.f32 %v307, %v1358
      %v1360 = vpop.f32.mrb[0].mxu0
      %v1361 = vpop.f32.mrb[0].mxu0
      %v1362 = vadd.f32 %v307, %v1361
      %v1363 = vpop.f32.mrb[0].mxu0
      %1364 = vmatprep.mubr.bf16.mxu0 0
      %1365 = vmatmul.mubr.bf16.gmra.mrb[0].mxu0 %v826
      %v1366 = vpop.f32.mrb[0].mxu0
      %v1367 = vadd.f32 %v307, %v1366
      %v1368 = vpop.f32.mrb[0].mxu0
      %v1369 = vpop.f32.mrb[0].mxu0
      %v1370 = vadd.f32 %v307, %v1369
      %v1371 = vpop.f32.mrb[0].mxu0
      %1372 = vdwg.mxu0
      %vm1373 = vcmp.gt.f32.partialorder %v863, 0.0
      %vm1374 = vcmp.gt.f32.partialorder %v866, 0.0
      %vm1375 = vcmp.gt.f32.partialorder %v871, 0.0
      %vm1376 = vcmp.gt.f32.partialorder %v874, 0.0
      %vm1377 = vcmp.gt.f32.partialorder %v879, 0.0
      %vm1378 = vcmp.gt.f32.partialorder %v882, 0.0
      %vm1379 = vcmp.gt.f32.partialorder %v887, 0.0
      %vm1380 = vcmp.gt.f32.partialorder %v890, 0.0
      %vm1381 = vcmp.gt.f32.partialorder %v895, 0.0
      %vm1382 = vcmp.gt.f32.partialorder %v898, 0.0
      %vm1383 = vcmp.gt.f32.partialorder %v903, 0.0
      %vm1384 = vcmp.gt.f32.partialorder %v906, 0.0
      %vm1385 = vcmp.gt.f32.partialorder %v911, 0.0
      %vm1386 = vcmp.gt.f32.partialorder %v914, 0.0
      %vm1387 = vcmp.gt.f32.partialorder %v919, 0.0
      %vm1388 = vcmp.gt.f32.partialorder %v922, 0.0
      %vm1389 = vcmp.gt.f32.partialorder %v927, 0.0
      %vm1390 = vcmp.gt.f32.partialorder %v930, 0.0
      %vm1391 = vcmp.gt.f32.partialorder %v935, 0.0
      %vm1392 = vcmp.gt.f32.partialorder %v938, 0.0
      %vm1393 = vcmp.gt.f32.partialorder %v943, 0.0
      %vm1394 = vcmp.gt.f32.partialorder %v946, 0.0
      %vm1395 = vcmp.gt.f32.partialorder %v951, 0.0
      %vm1396 = vcmp.gt.f32.partialorder %v954, 0.0
      %vm1397 = vcmp.gt.f32.partialorder %v959, 0.0
      %vm1398 = vcmp.gt.f32.partialorder %v962, 0.0
      %vm1399 = vcmp.gt.f32.partialorder %v967, 0.0
      %vm1400 = vcmp.gt.f32.partialorder %v970, 0.0
      %vm1401 = vcmp.gt.f32.partialorder %v975, 0.0
      %vm1402 = vcmp.gt.f32.partialorder %v978, 0.0
      %vm1403 = vcmp.gt.f32.partialorder %v983, 0.0
      %vm1404 = vcmp.gt.f32.partialorder %v986, 0.0
      %vm1405 = vcmp.gt.f32.partialorder %v991, 0.0
      %vm1406 = vcmp.gt.f32.partialorder %v994, 0.0
      %vm1407 = vcmp.gt.f32.partialorder %v999, 0.0
      %vm1408 = vcmp.gt.f32.partialorder %v1002, 0.0
      %vm1409 = vcmp.gt.f32.partialorder %v1007, 0.0
      %vm1410 = vcmp.gt.f32.partialorder %v1010, 0.0
      %vm1411 = vcmp.gt.f32.partialorder %v1015, 0.0
      %vm1412 = vcmp.gt.f32.partialorder %v1018, 0.0
      %vm1413 = vcmp.gt.f32.partialorder %v1023, 0.0
      %vm1414 = vcmp.gt.f32.partialorder %v1026, 0.0
      %vm1415 = vcmp.gt.f32.partialorder %v1031, 0.0
      %vm1416 = vcmp.gt.f32.partialorder %v1034, 0.0
      %vm1417 = vcmp.gt.f32.partialorder %v1039, 0.0
      %vm1418 = vcmp.gt.f32.partialorder %v1042, 0.0
      %vm1419 = vcmp.gt.f32.partialorder %v1047, 0.0
      %vm1420 = vcmp.gt.f32.partialorder %v1050, 0.0
      %vm1421 = vcmp.gt.f32.partialorder %v1055, 0.0
      %vm1422 = vcmp.gt.f32.partialorder %v1058, 0.0
      %vm1423 = vcmp.gt.f32.partialorder %v1063, 0.0
      %vm1424 = vcmp.gt.f32.partialorder %v1066, 0.0
      %vm1425 = vcmp.gt.f32.partialorder %v1071, 0.0
      %vm1426 = vcmp.gt.f32.partialorder %v1074, 0.0
      %vm1427 = vcmp.gt.f32.partialorder %v1079, 0.0
      %vm1428 = vcmp.gt.f32.partialorder %v1082, 0.0
      %vm1429 = vcmp.gt.f32.partialorder %v1087, 0.0
      %vm1430 = vcmp.gt.f32.partialorder %v1090, 0.0
      %vm1431 = vcmp.gt.f32.partialorder %v1095, 0.0
      %vm1432 = vcmp.gt.f32.partialorder %v1098, 0.0
      %vm1433 = vcmp.gt.f32.partialorder %v1103, 0.0
      %vm1434 = vcmp.gt.f32.partialorder %v1106, 0.0
      %vm1435 = vcmp.gt.f32.partialorder %v1111, 0.0
      %vm1436 = vcmp.gt.f32.partialorder %v1114, 0.0
      %vm1437 = vcmp.gt.f32.partialorder %v1119, 0.0
      %vm1438 = vcmp.gt.f32.partialorder %v1122, 0.0
      %vm1439 = vcmp.gt.f32.partialorder %v1127, 0.0
      %vm1440 = vcmp.gt.f32.partialorder %v1130, 0.0
      %vm1441 = vcmp.gt.f32.partialorder %v1135, 0.0
      %vm1442 = vcmp.gt.f32.partialorder %v1138, 0.0
      %vm1443 = vcmp.gt.f32.partialorder %v1143, 0.0
      %vm1444 = vcmp.gt.f32.partialorder %v1146, 0.0
      %vm1445 = vcmp.gt.f32.partialorder %v1151, 0.0
      %vm1446 = vcmp.gt.f32.partialorder %v1154, 0.0
      %vm1447 = vcmp.gt.f32.partialorder %v1159, 0.0
      %vm1448 = vcmp.gt.f32.partialorder %v1162, 0.0
      %vm1449 = vcmp.gt.f32.partialorder %v1167, 0.0
      %vm1450 = vcmp.gt.f32.partialorder %v1170, 0.0
      %vm1451 = vcmp.gt.f32.partialorder %v1175, 0.0
      %vm1452 = vcmp.gt.f32.partialorder %v1178, 0.0
      %vm1453 = vcmp.gt.f32.partialorder %v1183, 0.0
      %vm1454 = vcmp.gt.f32.partialorder %v1186, 0.0
      %vm1455 = vcmp.gt.f32.partialorder %v1191, 0.0
      %vm1456 = vcmp.gt.f32.partialorder %v1194, 0.0
      %vm1457 = vcmp.gt.f32.partialorder %v1199, 0.0
      %vm1458 = vcmp.gt.f32.partialorder %v1202, 0.0
      %vm1459 = vcmp.gt.f32.partialorder %v1207, 0.0
      %vm1460 = vcmp.gt.f32.partialorder %v1210, 0.0
      %vm1461 = vcmp.gt.f32.partialorder %v1215, 0.0
      %vm1462 = vcmp.gt.f32.partialorder %v1218, 0.0
      %vm1463 = vcmp.gt.f32.partialorder %v1223, 0.0
      %vm1464 = vcmp.gt.f32.partialorder %v1226, 0.0
      %vm1465 = vcmp.gt.f32.partialorder %v1231, 0.0
      %vm1466 = vcmp.gt.f32.partialorder %v1234, 0.0
      %vm1467 = vcmp.gt.f32.partialorder %v1239, 0.0
      %vm1468 = vcmp.gt.f32.partialorder %v1242, 0.0
      %vm1469 = vcmp.gt.f32.partialorder %v1247, 0.0
      %vm1470 = vcmp.gt.f32.partialorder %v1250, 0.0
      %vm1471 = vcmp.gt.f32.partialorder %v1255, 0.0
      %vm1472 = vcmp.gt.f32.partialorder %v1258, 0.0
      %vm1473 = vcmp.gt.f32.partialorder %v1263, 0.0
      %vm1474 = vcmp.gt.f32.partialorder %v1266, 0.0
      %vm1475 = vcmp.gt.f32.partialorder %v1271, 0.0
      %vm1476 = vcmp.gt.f32.partialorder %v1274, 0.0
      %vm1477 = vcmp.gt.f32.partialorder %v1279, 0.0
      %vm1478 = vcmp.gt.f32.partialorder %v1282, 0.0
      %vm1479 = vcmp.gt.f32.partialorder %v1287, 0.0
      %vm1480 = vcmp.gt.f32.partialorder %v1290, 0.0
      %vm1481 = vcmp.gt.f32.partialorder %v1295, 0.0
      %vm1482 = vcmp.gt.f32.partialorder %v1298, 0.0
      %vm1483 = vcmp.gt.f32.partialorder %v1303, 0.0
      %vm1484 = vcmp.gt.f32.partialorder %v1306, 0.0
      %vm1485 = vcmp.gt.f32.partialorder %v1311, 0.0
      %vm1486 = vcmp.gt.f32.partialorder %v1314, 0.0
      %vm1487 = vcmp.gt.f32.partialorder %v1319, 0.0
      %vm1488 = vcmp.gt.f32.partialorder %v1322, 0.0
      %vm1489 = vcmp.gt.f32.partialorder %v1327, 0.0
      %vm1490 = vcmp.gt.f32.partialorder %v1330, 0.0
      %vm1491 = vcmp.gt.f32.partialorder %v1335, 0.0
      %vm1492 = vcmp.gt.f32.partialorder %v1338, 0.0
      %vm1493 = vcmp.gt.f32.partialorder %v1343, 0.0
      %vm1494 = vcmp.gt.f32.partialorder %v1346, 0.0
      %vm1495 = vcmp.gt.f32.partialorder %v1351, 0.0
      %vm1496 = vcmp.gt.f32.partialorder %v1354, 0.0
      %vm1497 = vcmp.gt.f32.partialorder %v1359, 0.0
      %vm1498 = vcmp.gt.f32.partialorder %v1362, 0.0
      %vm1499 = vcmp.gt.f32.partialorder %v1367, 0.0
      %vm1500 = vcmp.gt.f32.partialorder %v1370, 0.0
      %v1501 = vmul.f32 %v863, 0.2
      %v1502 = vmul.f32 %v866, 0.2
      %v1503 = vmul.f32 %v871, 0.2
      %v1504 = vmul.f32 %v874, 0.2
      %v1505 = vmul.f32 %v879, 0.2
      %v1506 = vmul.f32 %v882, 0.2
      %v1507 = vmul.f32 %v887, 0.2
      %v1508 = vmul.f32 %v890, 0.2
      %v1509 = vmul.f32 %v895, 0.2
      %v1510 = vmul.f32 %v898, 0.2
      %v1511 = vmul.f32 %v903, 0.2
      %v1512 = vmul.f32 %v906, 0.2
      %v1513 = vmul.f32 %v911, 0.2
      %v1514 = vmul.f32 %v914, 0.2
      %v1515 = vmul.f32 %v919, 0.2
      %v1516 = vmul.f32 %v922, 0.2
      %v1517 = vmul.f32 %v927, 0.2
      %v1518 = vmul.f32 %v930, 0.2
      %v1519 = vmul.f32 %v935, 0.2
      %v1520 = vmul.f32 %v938, 0.2
      %v1521 = vmul.f32 %v943, 0.2
      %v1522 = vmul.f32 %v946, 0.2
      %v1523 = vmul.f32 %v951, 0.2
      %v1524 = vmul.f32 %v954, 0.2
      %v1525 = vmul.f32 %v959, 0.2
      %v1526 = vmul.f32 %v962, 0.2
      %v1527 = vmul.f32 %v967, 0.2
      %v1528 = vmul.f32 %v970, 0.2
      %v1529 = vmul.f32 %v975, 0.2
      %v1530 = vmul.f32 %v978, 0.2
      %v1531 = vmul.f32 %v983, 0.2
      %v1532 = vmul.f32 %v986, 0.2
      %v1533 = vmul.f32 %v991, 0.2
      %v1534 = vmul.f32 %v994, 0.2
      %v1535 = vmul.f32 %v999, 0.2
      %v1536 = vmul.f32 %v1002, 0.2
      %v1537 = vmul.f32 %v1007, 0.2
      %v1538 = vmul.f32 %v1010, 0.2
      %v1539 = vmul.f32 %v1015, 0.2
      %v1540 = vmul.f32 %v1018, 0.2
      %v1541 = vmul.f32 %v1023, 0.2
      %v1542 = vmul.f32 %v1026, 0.2
      %v1543 = vmul.f32 %v1031, 0.2
      %v1544 = vmul.f32 %v1034, 0.2
      %v1545 = vmul.f32 %v1039, 0.2
      %v1546 = vmul.f32 %v1042, 0.2
      %v1547 = vmul.f32 %v1047, 0.2
      %v1548 = vmul.f32 %v1050, 0.2
      %v1549 = vmul.f32 %v1055, 0.2
      %v1550 = vmul.f32 %v1058, 0.2
      %v1551 = vmul.f32 %v1063, 0.2
      %v1552 = vmul.f32 %v1066, 0.2
      %v1553 = vmul.f32 %v1071, 0.2
      %v1554 = vmul.f32 %v1074, 0.2
      %v1555 = vmul.f32 %v1079, 0.2
      %v1556 = vmul.f32 %v1082, 0.2
      %v1557 = vmul.f32 %v1087, 0.2
      %v1558 = vmul.f32 %v1090, 0.2
      %v1559 = vmul.f32 %v1095, 0.2
      %v1560 = vmul.f32 %v1098, 0.2
      %v1561 = vmul.f32 %v1103, 0.2
      %v1562 = vmul.f32 %v1106, 0.2
      %v1563 = vmul.f32 %v1111, 0.2
      %v1564 = vmul.f32 %v1114, 0.2
      %v1565 = vmul.f32 %v1119, 0.2
      %v1566 = vmul.f32 %v1122, 0.2
      %v1567 = vmul.f32 %v1127, 0.2
      %v1568 = vmul.f32 %v1130, 0.2
      %v1569 = vmul.f32 %v1135, 0.2
      %v1570 = vmul.f32 %v1138, 0.2
      %v1571 = vmul.f32 %v1143, 0.2
      %v1572 = vmul.f32 %v1146, 0.2
      %v1573 = vmul.f32 %v1151, 0.2
      %v1574 = vmul.f32 %v1154, 0.2
      %v1575 = vmul.f32 %v1159, 0.2
      %v1576 = vmul.f32 %v1162, 0.2
      %v1577 = vmul.f32 %v1167, 0.2
      %v1578 = vmul.f32 %v1170, 0.2
      %v1579 = vmul.f32 %v1175, 0.2
      %v1580 = vmul.f32 %v1178, 0.2
      %v1581 = vmul.f32 %v1183, 0.2
      %v1582 = vmul.f32 %v1186, 0.2
      %v1583 = vmul.f32 %v1191, 0.2
      %v1584 = vmul.f32 %v1194, 0.2
      %v1585 = vmul.f32 %v1199, 0.2
      %v1586 = vmul.f32 %v1202, 0.2
      %v1587 = vmul.f32 %v1207, 0.2
      %v1588 = vmul.f32 %v1210, 0.2
      %v1589 = vmul.f32 %v1215, 0.2
      %v1590 = vmul.f32 %v1218, 0.2
      %v1591 = vmul.f32 %v1223, 0.2
      %v1592 = vmul.f32 %v1226, 0.2
      %v1593 = vmul.f32 %v1231, 0.2
      %v1594 = vmul.f32 %v1234, 0.2
      %v1595 = vmul.f32 %v1239, 0.2
      %v1596 = vmul.f32 %v1242, 0.2
      %v1597 = vmul.f32 %v1247, 0.2
      %v1598 = vmul.f32 %v1250, 0.2
      %v1599 = vmul.f32 %v1255, 0.2
      %v1600 = vmul.f32 %v1258, 0.2
      %v1601 = vmul.f32 %v1263, 0.2
      %v1602 = vmul.f32 %v1266, 0.2
      %v1603 = vmul.f32 %v1271, 0.2
      %v1604 = vmul.f32 %v1274, 0.2
      %v1605 = vmul.f32 %v1279, 0.2
      %v1606 = vmul.f32 %v1282, 0.2
      %v1607 = vmul.f32 %v1287, 0.2
      %v1608 = vmul.f32 %v1290, 0.2
      %v1609 = vmul.f32 %v1295, 0.2
      %v1610 = vmul.f32 %v1298, 0.2
      %v1611 = vmul.f32 %v1303, 0.2
      %v1612 = vmul.f32 %v1306, 0.2
      %v1613 = vmul.f32 %v1311, 0.2
      %v1614 = vmul.f32 %v1314, 0.2
      %v1615 = vmul.f32 %v1319, 0.2
      %v1616 = vmul.f32 %v1322, 0.2
      %v1617 = vmul.f32 %v1327, 0.2
      %v1618 = vmul.f32 %v1330, 0.2
      %v1619 = vmul.f32 %v1335, 0.2
      %v1620 = vmul.f32 %v1338, 0.2
      %v1621 = vmul.f32 %v1343, 0.2
      %v1622 = vmul.f32 %v1346, 0.2
      %v1623 = vmul.f32 %v1351, 0.2
      %v1624 = vmul.f32 %v1354, 0.2
      %v1625 = vmul.f32 %v1359, 0.2
      %v1626 = vmul.f32 %v1362, 0.2
      %v1627 = vmul.f32 %v1367, 0.2
      %v1628 = vmul.f32 %v1370, 0.2
      %v1629 = vsel %vm1373, %v863, %v1501
      %v1630 = vsel %vm1374, %v866, %v1502
      %v1631 = vsel %vm1375, %v871, %v1503
      %v1632 = vsel %vm1376, %v874, %v1504
      %v1633 = vsel %vm1377, %v879, %v1505
      %v1634 = vsel %vm1378, %v882, %v1506
      %v1635 = vsel %vm1379, %v887, %v1507
      %v1636 = vsel %vm1380, %v890, %v1508
      %v1637 = vsel %vm1381, %v895, %v1509
      %v1638 = vsel %vm1382, %v898, %v1510
      %v1639 = vsel %vm1383, %v903, %v1511
      %v1640 = vsel %vm1384, %v906, %v1512
      %v1641 = vsel %vm1385, %v911, %v1513
      %v1642 = vsel %vm1386, %v914, %v1514
      %v1643 = vsel %vm1387, %v919, %v1515
      %v1644 = vsel %vm1388, %v922, %v1516
      %v1645 = vsel %vm1389, %v927, %v1517
      %v1646 = vsel %vm1390, %v930, %v1518
      %v1647 = vsel %vm1391, %v935, %v1519
      %v1648 = vsel %vm1392, %v938, %v1520
      %v1649 = vsel %vm1393, %v943, %v1521
      %v1650 = vsel %vm1394, %v946, %v1522
      %v1651 = vsel %vm1395, %v951, %v1523
      %v1652 = vsel %vm1396, %v954, %v1524
      %v1653 = vsel %vm1397, %v959, %v1525
      %v1654 = vsel %vm1398, %v962, %v1526
      %v1655 = vsel %vm1399, %v967, %v1527
      %v1656 = vsel %vm1400, %v970, %v1528
      %v1657 = vsel %vm1401, %v975, %v1529
      %v1658 = vsel %vm1402, %v978, %v1530
      %v1659 = vsel %vm1403, %v983, %v1531
      %v1660 = vsel %vm1404, %v986, %v1532
      %v1661 = vsel %vm1405, %v991, %v1533
      %v1662 = vsel %vm1406, %v994, %v1534
      %v1663 = vsel %vm1407, %v999, %v1535
      %v1664 = vsel %vm1408, %v1002, %v1536
      %v1665 = vsel %vm1409, %v1007, %v1537
      %v1666 = vsel %vm1410, %v1010, %v1538
      %v1667 = vsel %vm1411, %v1015, %v1539
      %v1668 = vsel %vm1412, %v1018, %v1540
      %v1669 = vsel %vm1413, %v1023, %v1541
      %v1670 = vsel %vm1414, %v1026, %v1542
      %v1671 = vsel %vm1415, %v1031, %v1543
      %v1672 = vsel %vm1416, %v1034, %v1544
      %v1673 = vsel %vm1417, %v1039, %v1545
      %v1674 = vsel %vm1418, %v1042, %v1546
      %v1675 = vsel %vm1419, %v1047, %v1547
      %v1676 = vsel %vm1420, %v1050, %v1548
      %v1677 = vsel %vm1421, %v1055, %v1549
      %v1678 = vsel %vm1422, %v1058, %v1550
      %v1679 = vsel %vm1423, %v1063, %v1551
      %v1680 = vsel %vm1424, %v1066, %v1552
      %v1681 = vsel %vm1425, %v1071, %v1553
      %v1682 = vsel %vm1426, %v1074, %v1554
      %v1683 = vsel %vm1427, %v1079, %v1555
      %v1684 = vsel %vm1428, %v1082, %v1556
      %v1685 = vsel %vm1429, %v1087, %v1557
      %v1686 = vsel %vm1430, %v1090, %v1558
      %v1687 = vsel %vm1431, %v1095, %v1559
      %v1688 = vsel %vm1432, %v1098, %v1560
      %v1689 = vsel %vm1433, %v1103, %v1561
      %v1690 = vsel %vm1434, %v1106, %v1562
      %v1691 = vsel %vm1435, %v1111, %v1563
      %v1692 = vsel %vm1436, %v1114, %v1564
      %v1693 = vsel %vm1437, %v1119, %v1565
      %v1694 = vsel %vm1438, %v1122, %v1566
      %v1695 = vsel %vm1439, %v1127, %v1567
      %v1696 = vsel %vm1440, %v1130, %v1568
      %v1697 = vsel %vm1441, %v1135, %v1569
      %v1698 = vsel %vm1442, %v1138, %v1570
      %v1699 = vsel %vm1443, %v1143, %v1571
      %v1700 = vsel %vm1444, %v1146, %v1572
      %v1701 = vsel %vm1445, %v1151, %v1573
      %v1702 = vsel %vm1446, %v1154, %v1574
      %v1703 = vsel %vm1447, %v1159, %v1575
      %v1704 = vsel %vm1448, %v1162, %v1576
      %v1705 = vsel %vm1449, %v1167, %v1577
      %v1706 = vsel %vm1450, %v1170, %v1578
      %v1707 = vsel %vm1451, %v1175, %v1579
      %v1708 = vsel %vm1452, %v1178, %v1580
      %v1709 = vsel %vm1453, %v1183, %v1581
      %v1710 = vsel %vm1454, %v1186, %v1582
      %v1711 = vsel %vm1455, %v1191, %v1583
      %v1712 = vsel %vm1456, %v1194, %v1584
      %v1713 = vsel %vm1457, %v1199, %v1585
      %v1714 = vsel %vm1458, %v1202, %v1586
      %v1715 = vsel %vm1459, %v1207, %v1587
      %v1716 = vsel %vm1460, %v1210, %v1588
      %v1717 = vsel %vm1461, %v1215, %v1589
      %v1718 = vsel %vm1462, %v1218, %v1590
      %v1719 = vsel %vm1463, %v1223, %v1591
      %v1720 = vsel %vm1464, %v1226, %v1592
      %v1721 = vsel %vm1465, %v1231, %v1593
      %v1722 = vsel %vm1466, %v1234, %v1594
      %v1723 = vsel %vm1467, %v1239, %v1595
      %v1724 = vsel %vm1468, %v1242, %v1596
      %v1725 = vsel %vm1469, %v1247, %v1597
      %v1726 = vsel %vm1470, %v1250, %v1598
      %v1727 = vsel %vm1471, %v1255, %v1599
      %v1728 = vsel %vm1472, %v1258, %v1600
      %v1729 = vsel %vm1473, %v1263, %v1601
      %v1730 = vsel %vm1474, %v1266, %v1602
      %v1731 = vsel %vm1475, %v1271, %v1603
      %v1732 = vsel %vm1476, %v1274, %v1604
      %v1733 = vsel %vm1477, %v1279, %v1605
      %v1734 = vsel %vm1478, %v1282, %v1606
      %v1735 = vsel %vm1479, %v1287, %v1607
      %v1736 = vsel %vm1480, %v1290, %v1608
      %v1737 = vsel %vm1481, %v1295, %v1609
      %v1738 = vsel %vm1482, %v1298, %v1610
      %v1739 = vsel %vm1483, %v1303, %v1611
      %v1740 = vsel %vm1484, %v1306, %v1612
      %v1741 = vsel %vm1485, %v1311, %v1613
      %v1742 = vsel %vm1486, %v1314, %v1614
      %v1743 = vsel %vm1487, %v1319, %v1615
      %v1744 = vsel %vm1488, %v1322, %v1616
      %v1745 = vsel %vm1489, %v1327, %v1617
      %v1746 = vsel %vm1490, %v1330, %v1618
      %v1747 = vsel %vm1491, %v1335, %v1619
      %v1748 = vsel %vm1492, %v1338, %v1620
      %v1749 = vsel %vm1493, %v1343, %v1621
      %v1750 = vsel %vm1494, %v1346, %v1622
      %v1751 = vsel %vm1495, %v1351, %v1623
      %v1752 = vsel %vm1496, %v1354, %v1624
      %v1753 = vsel %vm1497, %v1359, %v1625
      %v1754 = vsel %vm1498, %v1362, %v1626
      %v1755 = vsel %vm1499, %v1367, %v1627
      %v1756 = vsel %vm1500, %v1370, %v1628
      %v1757 = vpack.c.bf16 %v1630, %v1629
      %v1758 = vpack.c.bf16 %v1632, %v1631
      %v1759 = vpack.c.bf16 %v1634, %v1633
      %v1760 = vpack.c.bf16 %v1636, %v1635
      %v1761 = vpack.c.bf16 %v1638, %v1637
      %v1762 = vpack.c.bf16 %v1640, %v1639
      %v1763 = vpack.c.bf16 %v1642, %v1641
      %v1764 = vpack.c.bf16 %v1644, %v1643
      %v1765 = vpack.c.bf16 %v1646, %v1645
      %v1766 = vpack.c.bf16 %v1648, %v1647
      %v1767 = vpack.c.bf16 %v1650, %v1649
      %v1768 = vpack.c.bf16 %v1652, %v1651
      %v1769 = vpack.c.bf16 %v1654, %v1653
      %v1770 = vpack.c.bf16 %v1656, %v1655
      %v1771 = vpack.c.bf16 %v1658, %v1657
      %v1772 = vpack.c.bf16 %v1660, %v1659
      %v1773 = vpack.c.bf16 %v1662, %v1661
      %v1774 = vpack.c.bf16 %v1664, %v1663
      %v1775 = vpack.c.bf16 %v1666, %v1665
      %v1776 = vpack.c.bf16 %v1668, %v1667
      %v1777 = vpack.c.bf16 %v1670, %v1669
      %v1778 = vpack.c.bf16 %v1672, %v1671
      %v1779 = vpack.c.bf16 %v1674, %v1673
      %v1780 = vpack.c.bf16 %v1676, %v1675
      %v1781 = vpack.c.bf16 %v1678, %v1677
      %v1782 = vpack.c.bf16 %v1680, %v1679
      %v1783 = vpack.c.bf16 %v1682, %v1681
      %v1784 = vpack.c.bf16 %v1684, %v1683
      %v1785 = vpack.c.bf16 %v1686, %v1685
      %v1786 = vpack.c.bf16 %v1688, %v1687
      %v1787 = vpack.c.bf16 %v1690, %v1689
      %v1788 = vpack.c.bf16 %v1692, %v1691
      %v1789 = vpack.c.bf16 %v1694, %v1693
      %v1790 = vpack.c.bf16 %v1696, %v1695
      %v1791 = vpack.c.bf16 %v1698, %v1697
      %v1792 = vpack.c.bf16 %v1700, %v1699
      %v1793 = vpack.c.bf16 %v1702, %v1701
      %v1794 = vpack.c.bf16 %v1704, %v1703
      %v1795 = vpack.c.bf16 %v1706, %v1705
      %v1796 = vpack.c.bf16 %v1708, %v1707
      %v1797 = vpack.c.bf16 %v1710, %v1709
      %v1798 = vpack.c.bf16 %v1712, %v1711
      %v1799 = vpack.c.bf16 %v1714, %v1713
      %v1800 = vpack.c.bf16 %v1716, %v1715
      %v1801 = vpack.c.bf16 %v1718, %v1717
      %v1802 = vpack.c.bf16 %v1720, %v1719
      %v1803 = vpack.c.bf16 %v1722, %v1721
      %v1804 = vpack.c.bf16 %v1724, %v1723
      %v1805 = vpack.c.bf16 %v1726, %v1725
      %v1806 = vpack.c.bf16 %v1728, %v1727
      %v1807 = vpack.c.bf16 %v1730, %v1729
      %v1808 = vpack.c.bf16 %v1732, %v1731
      %v1809 = vpack.c.bf16 %v1734, %v1733
      %v1810 = vpack.c.bf16 %v1736, %v1735
      %v1811 = vpack.c.bf16 %v1738, %v1737
      %v1812 = vpack.c.bf16 %v1740, %v1739
      %v1813 = vpack.c.bf16 %v1742, %v1741
      %v1814 = vpack.c.bf16 %v1744, %v1743
      %v1815 = vpack.c.bf16 %v1746, %v1745
      %v1816 = vpack.c.bf16 %v1748, %v1747
      %v1817 = vpack.c.bf16 %v1750, %v1749
      %v1818 = vpack.c.bf16 %v1752, %v1751
      %v1819 = vpack.c.bf16 %v1754, %v1753
      %v1820 = vpack.c.bf16 %v1756, %v1755
      %v1885 = vunpack.c.l.b16 %v1757
      %v1886 = vunpack.c.h.b16 %v1757
      %v1887 = vunpack.c.l.b16 %v1758
      %v1888 = vunpack.c.h.b16 %v1758
      %v1889 = vunpack.c.l.b16 %v1759
      %v1890 = vunpack.c.h.b16 %v1759
      %v1891 = vunpack.c.l.b16 %v1760
      %v1892 = vunpack.c.h.b16 %v1760
      %v1893 = vunpack.c.l.b16 %v1761
      %v1894 = vunpack.c.h.b16 %v1761
      %v1895 = vunpack.c.l.b16 %v1762
      %v1896 = vunpack.c.h.b16 %v1762
      %v1897 = vunpack.c.l.b16 %v1763
      %v1898 = vunpack.c.h.b16 %v1763
      %v1899 = vunpack.c.l.b16 %v1764
      %v1900 = vunpack.c.h.b16 %v1764
      %v1901 = vunpack.c.l.b16 %v1765
      %v1902 = vunpack.c.h.b16 %v1765
      %v1903 = vunpack.c.l.b16 %v1766
      %v1904 = vunpack.c.h.b16 %v1766
      %v1905 = vunpack.c.l.b16 %v1767
      %v1906 = vunpack.c.h.b16 %v1767
      %v1907 = vunpack.c.l.b16 %v1768
      %v1908 = vunpack.c.h.b16 %v1768
      %v1909 = vunpack.c.l.b16 %v1769
      %v1910 = vunpack.c.h.b16 %v1769
      %v1911 = vunpack.c.l.b16 %v1770
      %v1912 = vunpack.c.h.b16 %v1770
      %v1913 = vunpack.c.l.b16 %v1771
      %v1914 = vunpack.c.h.b16 %v1771
      %v1915 = vunpack.c.l.b16 %v1772
      %v1916 = vunpack.c.h.b16 %v1772
      %v1917 = vunpack.c.l.b16 %v1773
      %v1918 = vunpack.c.h.b16 %v1773
      %v1919 = vunpack.c.l.b16 %v1774
      %v1920 = vunpack.c.h.b16 %v1774
      %v1921 = vunpack.c.l.b16 %v1775
      %v1922 = vunpack.c.h.b16 %v1775
      %v1923 = vunpack.c.l.b16 %v1776
      %v1924 = vunpack.c.h.b16 %v1776
      %v1925 = vunpack.c.l.b16 %v1777
      %v1926 = vunpack.c.h.b16 %v1777
      %v1927 = vunpack.c.l.b16 %v1778
      %v1928 = vunpack.c.h.b16 %v1778
      %v1929 = vunpack.c.l.b16 %v1779
      %v1930 = vunpack.c.h.b16 %v1779
      %v1931 = vunpack.c.l.b16 %v1780
      %v1932 = vunpack.c.h.b16 %v1780
      %v1933 = vunpack.c.l.b16 %v1781
      %v1934 = vunpack.c.h.b16 %v1781
      %v1935 = vunpack.c.l.b16 %v1782
      %v1936 = vunpack.c.h.b16 %v1782
      %v1937 = vunpack.c.l.b16 %v1783
      %v1938 = vunpack.c.h.b16 %v1783
      %v1939 = vunpack.c.l.b16 %v1784
      %v1940 = vunpack.c.h.b16 %v1784
      %v1941 = vunpack.c.l.b16 %v1785
      %v1942 = vunpack.c.h.b16 %v1785
      %v1943 = vunpack.c.l.b16 %v1786
      %v1944 = vunpack.c.h.b16 %v1786
      %v1945 = vunpack.c.l.b16 %v1787
      %v1946 = vunpack.c.h.b16 %v1787
      %v1947 = vunpack.c.l.b16 %v1788
      %v1948 = vunpack.c.h.b16 %v1788
      %v1949 = vunpack.c.l.b16 %v1789
      %v1950 = vunpack.c.h.b16 %v1789
      %v1951 = vunpack.c.l.b16 %v1790
      %v1952 = vunpack.c.h.b16 %v1790
      %v1953 = vunpack.c.l.b16 %v1791
      %v1954 = vunpack.c.h.b16 %v1791
      %v1955 = vunpack.c.l.b16 %v1792
      %v1956 = vunpack.c.h.b16 %v1792
      %v1957 = vunpack.c.l.b16 %v1793
      %v1958 = vunpack.c.h.b16 %v1793
      %v1959 = vunpack.c.l.b16 %v1794
      %v1960 = vunpack.c.h.b16 %v1794
      %v1961 = vunpack.c.l.b16 %v1795
      %v1962 = vunpack.c.h.b16 %v1795
      %v1963 = vunpack.c.l.b16 %v1796
      %v1964 = vunpack.c.h.b16 %v1796
      %v1965 = vunpack.c.l.b16 %v1797
      %v1966 = vunpack.c.h.b16 %v1797
      %v1967 = vunpack.c.l.b16 %v1798
      %v1968 = vunpack.c.h.b16 %v1798
      %v1969 = vunpack.c.l.b16 %v1799
      %v1970 = vunpack.c.h.b16 %v1799
      %v1971 = vunpack.c.l.b16 %v1800
      %v1972 = vunpack.c.h.b16 %v1800
      %v1973 = vunpack.c.l.b16 %v1801
      %v1974 = vunpack.c.h.b16 %v1801
      %v1975 = vunpack.c.l.b16 %v1802
      %v1976 = vunpack.c.h.b16 %v1802
      %v1977 = vunpack.c.l.b16 %v1803
      %v1978 = vunpack.c.h.b16 %v1803
      %v1979 = vunpack.c.l.b16 %v1804
      %v1980 = vunpack.c.h.b16 %v1804
      %v1981 = vunpack.c.l.b16 %v1805
      %v1982 = vunpack.c.h.b16 %v1805
      %v1983 = vunpack.c.l.b16 %v1806
      %v1984 = vunpack.c.h.b16 %v1806
      %v1985 = vunpack.c.l.b16 %v1807
      %v1986 = vunpack.c.h.b16 %v1807
      %v1987 = vunpack.c.l.b16 %v1808
      %v1988 = vunpack.c.h.b16 %v1808
      %v1989 = vunpack.c.l.b16 %v1809
      %v1990 = vunpack.c.h.b16 %v1809
      %v1991 = vunpack.c.l.b16 %v1810
      %v1992 = vunpack.c.h.b16 %v1810
      %v1993 = vunpack.c.l.b16 %v1811
      %v1994 = vunpack.c.h.b16 %v1811
      %v1995 = vunpack.c.l.b16 %v1812
      %v1996 = vunpack.c.h.b16 %v1812
      %v1997 = vunpack.c.l.b16 %v1813
      %v1998 = vunpack.c.h.b16 %v1813
      %v1999 = vunpack.c.l.b16 %v1814
      %v2000 = vunpack.c.h.b16 %v1814
      %v2001 = vunpack.c.l.b16 %v1815
      %v2002 = vunpack.c.h.b16 %v1815
      %v2003 = vunpack.c.l.b16 %v1816
      %v2004 = vunpack.c.h.b16 %v1816
      %v2005 = vunpack.c.l.b16 %v1817
      %v2006 = vunpack.c.h.b16 %v1817
      %v2007 = vunpack.c.l.b16 %v1818
      %v2008 = vunpack.c.h.b16 %v1818
      %v2009 = vunpack.c.l.b16 %v1819
      %v2010 = vunpack.c.h.b16 %v1819
      %v2011 = vunpack.c.l.b16 %v1820
      %v2012 = vunpack.c.h.b16 %v1820
      %v2013 = vpack.c.b16 %v1885, %v1885
      %v2014 = vpack.c.b16 %v1886, %v1886
      %v2015 = vpack.c.b16 %v1887, %v1887
      %v2016 = vpack.c.b16 %v1888, %v1888
      %v2017 = vpack.c.b16 %v1889, %v1889
      %v2018 = vpack.c.b16 %v1890, %v1890
      %v2019 = vpack.c.b16 %v1891, %v1891
      %v2020 = vpack.c.b16 %v1892, %v1892
      %v2021 = vpack.c.b16 %v1893, %v1893
      %v2022 = vpack.c.b16 %v1894, %v1894
      %v2023 = vpack.c.b16 %v1895, %v1895
      %v2024 = vpack.c.b16 %v1896, %v1896
      %v2025 = vpack.c.b16 %v1897, %v1897
      %v2026 = vpack.c.b16 %v1898, %v1898
      %v2027 = vpack.c.b16 %v1899, %v1899
      %v2028 = vpack.c.b16 %v1900, %v1900
      %v2029 = vpack.c.b16 %v1901, %v1901
      %v2030 = vpack.c.b16 %v1902, %v1902
      %v2031 = vpack.c.b16 %v1903, %v1903
      %v2032 = vpack.c.b16 %v1904, %v1904
      %v2033 = vpack.c.b16 %v1905, %v1905
      %v2034 = vpack.c.b16 %v1906, %v1906
      %v2035 = vpack.c.b16 %v1907, %v1907
      %v2036 = vpack.c.b16 %v1908, %v1908
      %v2037 = vpack.c.b16 %v1909, %v1909
      %v2038 = vpack.c.b16 %v1910, %v1910
      %v2039 = vpack.c.b16 %v1911, %v1911
      %v2040 = vpack.c.b16 %v1912, %v1912
      %v2041 = vpack.c.b16 %v1913, %v1913
      %v2042 = vpack.c.b16 %v1914, %v1914
      %v2043 = vpack.c.b16 %v1915, %v1915
      %v2044 = vpack.c.b16 %v1916, %v1916
      %v2045 = vpack.c.b16 %v1917, %v1917
      %v2046 = vpack.c.b16 %v1918, %v1918
      %v2047 = vpack.c.b16 %v1919, %v1919
      %v2048 = vpack.c.b16 %v1920, %v1920
      %v2049 = vpack.c.b16 %v1921, %v1921
      %v2050 = vpack.c.b16 %v1922, %v1922
      %v2051 = vpack.c.b16 %v1923, %v1923
      %v2052 = vpack.c.b16 %v1924, %v1924
      %v2053 = vpack.c.b16 %v1925, %v1925
      %v2054 = vpack.c.b16 %v1926, %v1926
      %v2055 = vpack.c.b16 %v1927, %v1927
      %v2056 = vpack.c.b16 %v1928, %v1928
      %v2057 = vpack.c.b16 %v1929, %v1929
      %v2058 = vpack.c.b16 %v1930, %v1930
      %v2059 = vpack.c.b16 %v1931, %v1931
      %v2060 = vpack.c.b16 %v1932, %v1932
      %v2061 = vpack.c.b16 %v1933, %v1933
      %v2062 = vpack.c.b16 %v1934, %v1934
      %v2063 = vpack.c.b16 %v1935, %v1935
      %v2064 = vpack.c.b16 %v1936, %v1936
      %v2065 = vpack.c.b16 %v1937, %v1937
      %v2066 = vpack.c.b16 %v1938, %v1938
      %v2067 = vpack.c.b16 %v1939, %v1939
      %v2068 = vpack.c.b16 %v1940, %v1940
      %v2069 = vpack.c.b16 %v1941, %v1941
      %v2070 = vpack.c.b16 %v1942, %v1942
      %v2071 = vpack.c.b16 %v1943, %v1943
      %v2072 = vpack.c.b16 %v1944, %v1944
      %v2073 = vpack.c.b16 %v1945, %v1945
      %v2074 = vpack.c.b16 %v1946, %v1946
      %v2075 = vpack.c.b16 %v1947, %v1947
      %v2076 = vpack.c.b16 %v1948, %v1948
      %v2077 = vpack.c.b16 %v1949, %v1949
      %v2078 = vpack.c.b16 %v1950, %v1950
      %v2079 = vpack.c.b16 %v1951, %v1951
      %v2080 = vpack.c.b16 %v1952, %v1952
      %v2081 = vpack.c.b16 %v1953, %v1953
      %v2082 = vpack.c.b16 %v1954, %v1954
      %v2083 = vpack.c.b16 %v1955, %v1955
      %v2084 = vpack.c.b16 %v1956, %v1956
      %v2085 = vpack.c.b16 %v1957, %v1957
      %v2086 = vpack.c.b16 %v1958, %v1958
      %v2087 = vpack.c.b16 %v1959, %v1959
      %v2088 = vpack.c.b16 %v1960, %v1960
      %v2089 = vpack.c.b16 %v1961, %v1961
      %v2090 = vpack.c.b16 %v1962, %v1962
      %v2091 = vpack.c.b16 %v1963, %v1963
      %v2092 = vpack.c.b16 %v1964, %v1964
      %v2093 = vpack.c.b16 %v1965, %v1965
      %v2094 = vpack.c.b16 %v1966, %v1966
      %v2095 = vpack.c.b16 %v1967, %v1967
      %v2096 = vpack.c.b16 %v1968, %v1968
      %v2097 = vpack.c.b16 %v1969, %v1969
      %v2098 = vpack.c.b16 %v1970, %v1970
      %v2099 = vpack.c.b16 %v1971, %v1971
      %v2100 = vpack.c.b16 %v1972, %v1972
      %v2101 = vpack.c.b16 %v1973, %v1973
      %v2102 = vpack.c.b16 %v1974, %v1974
      %v2103 = vpack.c.b16 %v1975, %v1975
      %v2104 = vpack.c.b16 %v1976, %v1976
      %v2105 = vpack.c.b16 %v1977, %v1977
      %v2106 = vpack.c.b16 %v1978, %v1978
      %v2107 = vpack.c.b16 %v1979, %v1979
      %v2108 = vpack.c.b16 %v1980, %v1980
      %v2109 = vpack.c.b16 %v1981, %v1981
      %v2110 = vpack.c.b16 %v1982, %v1982
      %v2111 = vpack.c.b16 %v1983, %v1983
      %v2112 = vpack.c.b16 %v1984, %v1984
      %v2113 = vpack.c.b16 %v1985, %v1985
      %v2114 = vpack.c.b16 %v1986, %v1986
      %v2115 = vpack.c.b16 %v1987, %v1987
      %v2116 = vpack.c.b16 %v1988, %v1988
      %v2117 = vpack.c.b16 %v1989, %v1989
      %v2118 = vpack.c.b16 %v1990, %v1990
      %v2119 = vpack.c.b16 %v1991, %v1991
      %v2120 = vpack.c.b16 %v1992, %v1992
      %v2121 = vpack.c.b16 %v1993, %v1993
      %v2122 = vpack.c.b16 %v1994, %v1994
      %v2123 = vpack.c.b16 %v1995, %v1995
      %v2124 = vpack.c.b16 %v1996, %v1996
      %v2125 = vpack.c.b16 %v1997, %v1997
      %v2126 = vpack.c.b16 %v1998, %v1998
      %v2127 = vpack.c.b16 %v1999, %v1999
      %v2128 = vpack.c.b16 %v2000, %v2000
      %v2129 = vpack.c.b16 %v2001, %v2001
      %v2130 = vpack.c.b16 %v2002, %v2002
      %v2131 = vpack.c.b16 %v2003, %v2003
      %v2132 = vpack.c.b16 %v2004, %v2004
      %v2133 = vpack.c.b16 %v2005, %v2005
      %v2134 = vpack.c.b16 %v2006, %v2006
      %v2135 = vpack.c.b16 %v2007, %v2007
      %v2136 = vpack.c.b16 %v2008, %v2008
      %v2137 = vpack.c.b16 %v2009, %v2009
      %v2138 = vpack.c.b16 %v2010, %v2010
      %v2139 = vpack.c.b16 %v2011, %v2011
      %v2140 = vpack.c.b16 %v2012, %v2012
      %vm2269 = vcmask 257024
      %2270 = vst.msk [vmem:[%s170] sm:$0xf] %vm2269, %v2013
      %2271 = vst.msk [vmem:[%s170 + $0x4] sm:$0xf] %vm2269, %v2014
      %2272 = vst.msk [vmem:[%s170 + $0x8] sm:$0xf] %vm2269, %v2015
      %2273 = vst.msk [vmem:[%s170 + $0xc] sm:$0xf] %vm2269, %v2016
      %2274 = vst.msk [vmem:[%s170 + $0x10] sm:$0xf] %vm2269, %v2017
      %2275 = vst.msk [vmem:[%s170 + $0x14] sm:$0xf] %vm2269, %v2018
      %2276 = vst.msk [vmem:[%s170 + $0x18] sm:$0xf] %vm2269, %v2019
      %2277 = vst.msk [vmem:[%s170 + $0x1c] sm:$0xf] %vm2269, %v2020
      %2278 = vst.msk [vmem:[%s170 + $0x20] sm:$0xf] %vm2269, %v2021
      %2279 = vst.msk [vmem:[%s170 + $0x24] sm:$0xf] %vm2269, %v2022
      %2280 = vst.msk [vmem:[%s170 + $0x28] sm:$0xf] %vm2269, %v2023
      %2281 = vst.msk [vmem:[%s170 + $0x2c] sm:$0xf] %vm2269, %v2024
      %2282 = vst.msk [vmem:[%s170 + $0x30] sm:$0xf] %vm2269, %v2025
      %2283 = vst.msk [vmem:[%s170 + $0x34] sm:$0xf] %vm2269, %v2026
      %2284 = vst.msk [vmem:[%s170 + $0x38] sm:$0xf] %vm2269, %v2027
      %2285 = vst.msk [vmem:[%s170 + $0x3c] sm:$0xf] %vm2269, %v2028
      %2286 = vst.msk [vmem:[%s170 + $0x40] sm:$0xf] %vm2269, %v2029
      %2287 = vst.msk [vmem:[%s170 + $0x44] sm:$0xf] %vm2269, %v2030
      %2288 = vst.msk [vmem:[%s170 + $0x48] sm:$0xf] %vm2269, %v2031
      %2289 = vst.msk [vmem:[%s170 + $0x4c] sm:$0xf] %vm2269, %v2032
      %2290 = vst.msk [vmem:[%s170 + $0x50] sm:$0xf] %vm2269, %v2033
      %2291 = vst.msk [vmem:[%s170 + $0x54] sm:$0xf] %vm2269, %v2034
      %2292 = vst.msk [vmem:[%s170 + $0x58] sm:$0xf] %vm2269, %v2035
      %2293 = vst.msk [vmem:[%s170 + $0x5c] sm:$0xf] %vm2269, %v2036
      %2294 = vst.msk [vmem:[%s170 + $0x60] sm:$0xf] %vm2269, %v2037
      %2295 = vst.msk [vmem:[%s170 + $0x64] sm:$0xf] %vm2269, %v2038
      %2296 = vst.msk [vmem:[%s170 + $0x68] sm:$0xf] %vm2269, %v2039
      %2297 = vst.msk [vmem:[%s170 + $0x6c] sm:$0xf] %vm2269, %v2040
      %2298 = vst.msk [vmem:[%s170 + $0x70] sm:$0xf] %vm2269, %v2041
      %2299 = vst.msk [vmem:[%s170 + $0x74] sm:$0xf] %vm2269, %v2042
      %2300 = vst.msk [vmem:[%s170 + $0x78] sm:$0xf] %vm2269, %v2043
      %2301 = vst.msk [vmem:[%s170 + $0x7c] sm:$0xf] %vm2269, %v2044
      %2302 = vst.msk [vmem:[%s170 + $0x80] sm:$0xf] %vm2269, %v2045
      %2303 = vst.msk [vmem:[%s170 + $0x84] sm:$0xf] %vm2269, %v2046
      %2304 = vst.msk [vmem:[%s170 + $0x88] sm:$0xf] %vm2269, %v2047
      %2305 = vst.msk [vmem:[%s170 + $0x8c] sm:$0xf] %vm2269, %v2048
      %2306 = vst.msk [vmem:[%s170 + $0x90] sm:$0xf] %vm2269, %v2049
      %2307 = vst.msk [vmem:[%s170 + $0x94] sm:$0xf] %vm2269, %v2050
      %2308 = vst.msk [vmem:[%s170 + $0x98] sm:$0xf] %vm2269, %v2051
      %2309 = vst.msk [vmem:[%s170 + $0x9c] sm:$0xf] %vm2269, %v2052
      %2310 = vst.msk [vmem:[%s170 + $0xa0] sm:$0xf] %vm2269, %v2053
      %2311 = vst.msk [vmem:[%s170 + $0xa4] sm:$0xf] %vm2269, %v2054
      %2312 = vst.msk [vmem:[%s170 + $0xa8] sm:$0xf] %vm2269, %v2055
      %2313 = vst.msk [vmem:[%s170 + $0xac] sm:$0xf] %vm2269, %v2056
      %2314 = vst.msk [vmem:[%s170 + $0xb0] sm:$0xf] %vm2269, %v2057
      %2315 = vst.msk [vmem:[%s170 + $0xb4] sm:$0xf] %vm2269, %v2058
      %2316 = vst.msk [vmem:[%s170 + $0xb8] sm:$0xf] %vm2269, %v2059
      %2317 = vst.msk [vmem:[%s170 + $0xbc] sm:$0xf] %vm2269, %v2060
      %2318 = vst.msk [vmem:[%s170 + $0xc0] sm:$0xf] %vm2269, %v2061
      %2319 = vst.msk [vmem:[%s170 + $0xc4] sm:$0xf] %vm2269, %v2062
      %2320 = vst.msk [vmem:[%s170 + $0xc8] sm:$0xf] %vm2269, %v2063
      %2321 = vst.msk [vmem:[%s170 + $0xcc] sm:$0xf] %vm2269, %v2064
      %2322 = vst.msk [vmem:[%s170 + $0xd0] sm:$0xf] %vm2269, %v2065
      %2323 = vst.msk [vmem:[%s170 + $0xd4] sm:$0xf] %vm2269, %v2066
      %2324 = vst.msk [vmem:[%s170 + $0xd8] sm:$0xf] %vm2269, %v2067
      %2325 = vst.msk [vmem:[%s170 + $0xdc] sm:$0xf] %vm2269, %v2068
      %2326 = vst.msk [vmem:[%s170 + $0xe0] sm:$0xf] %vm2269, %v2069
      %2327 = vst.msk [vmem:[%s170 + $0xe4] sm:$0xf] %vm2269, %v2070
      %2328 = vst.msk [vmem:[%s170 + $0xe8] sm:$0xf] %vm2269, %v2071
      %2329 = vst.msk [vmem:[%s170 + $0xec] sm:$0xf] %vm2269, %v2072
      %2330 = vst.msk [vmem:[%s170 + $0xf0] sm:$0xf] %vm2269, %v2073
      %2331 = vst.msk [vmem:[%s170 + $0xf4] sm:$0xf] %vm2269, %v2074
      %2332 = vst.msk [vmem:[%s170 + $0xf8] sm:$0xf] %vm2269, %v2075
      %2333 = vst.msk [vmem:[%s170 + $0xfc] sm:$0xf] %vm2269, %v2076
      %2334 = vst.msk [vmem:[%s170 + $0x100] sm:$0xf] %vm2269, %v2077
      %2335 = vst.msk [vmem:[%s170 + $0x104] sm:$0xf] %vm2269, %v2078
      %2336 = vst.msk [vmem:[%s170 + $0x108] sm:$0xf] %vm2269, %v2079
      %2337 = vst.msk [vmem:[%s170 + $0x10c] sm:$0xf] %vm2269, %v2080
      %2338 = vst.msk [vmem:[%s170 + $0x110] sm:$0xf] %vm2269, %v2081
      %2339 = vst.msk [vmem:[%s170 + $0x114] sm:$0xf] %vm2269, %v2082
      %2340 = vst.msk [vmem:[%s170 + $0x118] sm:$0xf] %vm2269, %v2083
      %2341 = vst.msk [vmem:[%s170 + $0x11c] sm:$0xf] %vm2269, %v2084
      %2342 = vst.msk [vmem:[%s170 + $0x120] sm:$0xf] %vm2269, %v2085
      %2343 = vst.msk [vmem:[%s170 + $0x124] sm:$0xf] %vm2269, %v2086
      %2344 = vst.msk [vmem:[%s170 + $0x128] sm:$0xf] %vm2269, %v2087
      %2345 = vst.msk [vmem:[%s170 + $0x12c] sm:$0xf] %vm2269, %v2088
      %2346 = vst.msk [vmem:[%s170 + $0x130] sm:$0xf] %vm2269, %v2089
      %2347 = vst.msk [vmem:[%s170 + $0x134] sm:$0xf] %vm2269, %v2090
      %2348 = vst.msk [vmem:[%s170 + $0x138] sm:$0xf] %vm2269, %v2091
      %2349 = vst.msk [vmem:[%s170 + $0x13c] sm:$0xf] %vm2269, %v2092
      %2350 = vst.msk [vmem:[%s170 + $0x140] sm:$0xf] %vm2269, %v2093
      %2351 = vst.msk [vmem:[%s170 + $0x144] sm:$0xf] %vm2269, %v2094
      %2352 = vst.msk [vmem:[%s170 + $0x148] sm:$0xf] %vm2269, %v2095
      %2353 = vst.msk [vmem:[%s170 + $0x14c] sm:$0xf] %vm2269, %v2096
      %2354 = vst.msk [vmem:[%s170 + $0x150] sm:$0xf] %vm2269, %v2097
      %2355 = vst.msk [vmem:[%s170 + $0x154] sm:$0xf] %vm2269, %v2098
      %2356 = vst.msk [vmem:[%s170 + $0x158] sm:$0xf] %vm2269, %v2099
      %2357 = vst.msk [vmem:[%s170 + $0x15c] sm:$0xf] %vm2269, %v2100
      %2358 = vst.msk [vmem:[%s170 + $0x160] sm:$0xf] %vm2269, %v2101
      %2359 = vst.msk [vmem:[%s170 + $0x164] sm:$0xf] %vm2269, %v2102
      %2360 = vst.msk [vmem:[%s170 + $0x168] sm:$0xf] %vm2269, %v2103
      %2361 = vst.msk [vmem:[%s170 + $0x16c] sm:$0xf] %vm2269, %v2104
      %2362 = vst.msk [vmem:[%s170 + $0x170] sm:$0xf] %vm2269, %v2105
      %2363 = vst.msk [vmem:[%s170 + $0x174] sm:$0xf] %vm2269, %v2106
      %2364 = vst.msk [vmem:[%s170 + $0x178] sm:$0xf] %vm2269, %v2107
      %2365 = vst.msk [vmem:[%s170 + $0x17c] sm:$0xf] %vm2269, %v2108
      %2366 = vst.msk [vmem:[%s170 + $0x180] sm:$0xf] %vm2269, %v2109
      %2367 = vst.msk [vmem:[%s170 + $0x184] sm:$0xf] %vm2269, %v2110
      %2368 = vst.msk [vmem:[%s170 + $0x188] sm:$0xf] %vm2269, %v2111
      %2369 = vst.msk [vmem:[%s170 + $0x18c] sm:$0xf] %vm2269, %v2112
      %2370 = vst.msk [vmem:[%s170 + $0x190] sm:$0xf] %vm2269, %v2113
      %2371 = vst.msk [vmem:[%s170 + $0x194] sm:$0xf] %vm2269, %v2114
      %2372 = vst.msk [vmem:[%s170 + $0x198] sm:$0xf] %vm2269, %v2115
      %2373 = vst.msk [vmem:[%s170 + $0x19c] sm:$0xf] %vm2269, %v2116
      %2374 = vst.msk [vmem:[%s170 + $0x1a0] sm:$0xf] %vm2269, %v2117
      %2375 = vst.msk [vmem:[%s170 + $0x1a4] sm:$0xf] %vm2269, %v2118
      %2376 = vst.msk [vmem:[%s170 + $0x1a8] sm:$0xf] %vm2269, %v2119
      %2377 = vst.msk [vmem:[%s170 + $0x1ac] sm:$0xf] %vm2269, %v2120
      %2378 = vst.msk [vmem:[%s170 + $0x1b0] sm:$0xf] %vm2269, %v2121
      %2379 = vst.msk [vmem:[%s170 + $0x1b4] sm:$0xf] %vm2269, %v2122
      %2380 = vst.msk [vmem:[%s170 + $0x1b8] sm:$0xf] %vm2269, %v2123
      %2381 = vst.msk [vmem:[%s170 + $0x1bc] sm:$0xf] %vm2269, %v2124
      %2382 = vst.msk [vmem:[%s170 + $0x1c0] sm:$0xf] %vm2269, %v2125
      %2383 = vst.msk [vmem:[%s170 + $0x1c4] sm:$0xf] %vm2269, %v2126
      %2384 = vst.msk [vmem:[%s170 + $0x1c8] sm:$0xf] %vm2269, %v2127
      %2385 = vst.msk [vmem:[%s170 + $0x1cc] sm:$0xf] %vm2269, %v2128
      %2386 = vst.msk [vmem:[%s170 + $0x1d0] sm:$0xf] %vm2269, %v2129
      %2387 = vst.msk [vmem:[%s170 + $0x1d4] sm:$0xf] %vm2269, %v2130
      %2388 = vst.msk [vmem:[%s170 + $0x1d8] sm:$0xf] %vm2269, %v2131
      %2389 = vst.msk [vmem:[%s170 + $0x1dc] sm:$0xf] %vm2269, %v2132
      %2390 = vst.msk [vmem:[%s170 + $0x1e0] sm:$0xf] %vm2269, %v2133
      %2391 = vst.msk [vmem:[%s170 + $0x1e4] sm:$0xf] %vm2269, %v2134
      %2392 = vst.msk [vmem:[%s170 + $0x1e8] sm:$0xf] %vm2269, %v2135
      %2393 = vst.msk [vmem:[%s170 + $0x1ec] sm:$0xf] %vm2269, %v2136
      %2394 = vst.msk [vmem:[%s170 + $0x1f0] sm:$0xf] %vm2269, %v2137
      %2395 = vst.msk [vmem:[%s170 + $0x1f4] sm:$0xf] %vm2269, %v2138
      %2396 = vst.msk [vmem:[%s170 + $0x1f8] sm:$0xf] %vm2269, %v2139
      %2397 = vst.msk [vmem:[%s170 + $0x1fc] sm:$0xf] %vm2269, %v2140
      %p2398 = scmp.lt.s32.totalorder %s14, 1
      %s2399 = scalar_select %p2398, %s14, 1
      %s2400 = smul.addr %s2399, 128
      %s2401 = smul.addr %s2400, 4
      %s2402 = scalar_lea.vmem %s3, %s2401
      // Predicated region
      $region33: #{encoder_forward.5} parent=31 // pred_check
        %p2403 = pneg %p100
      $region34: #{encoder_forward.5} parent=31 // pred_check_branch
        %2405 = sbr.rel (%p2403) target = $region36
      $region35: #{encoder_forward.5} parent=31 // pred_region
        _
      $region36: #{encoder_forward.5} parent=31 // pred_fallthru
        _
    $region32: #{encoder_forward.5} parent=5 // pred_fallthru
      _
    %p2406 = scmp.le.s32.totalorder 2, %s9
    // Predicated region
    $region37: #{encoder_forward.5} parent=5 // pred_check
      %p2407 = pneg %p2406
    $region38: #{encoder_forward.5} parent=5 // pred_check_branch
      %2409 = sbr.rel (%p2407) target = $region40
    $region39: #{encoder_forward.5} parent=5 // pred_region
      %s2410 = ssub.s32 %s9, 2
      // Predicated region
      $region41: #{encoder_forward.5} parent=39 // pred_check
        %p2411 = pneg %p106
      $region42: #{encoder_forward.5} parent=39 // pred_check_branch
        %2413 = sbr.rel (%p2411) target = $region44
      $region43: #{encoder_forward.5} parent=39 // pred_region
        %p2414 = scmp.lt.s32.totalorder %s15, 1
        %s2415 = scalar_select %p2414, %s15, 1
        %s2416 = smul.addr %s2415, 128
        %s2417 = smul.addr %s2416, 4
        %s2418 = scalar_lea.vmem %s3, %s2417
      $region44: #{encoder_forward.5} parent=39 // pred_fallthru
        _
    $region40: #{encoder_forward.5} parent=5 // pred_fallthru
      _
  $region6: #{encoder_forward.5} parent=0 // loop_footer
    %s13 = sadd.s32 1, %s9
  $region7: #{encoder_forward.5} parent=0 // loop_footer_branch
    %8 = sbr.rel target = $region3
  $region8: #{encoder_forward.5} parent=0 // loop_exit
    _

// kernel: encoder_forward.6
$region0: #{encoder_forward.6}
  #allocation0 [shape = 'u32[]', space=smem, size = 0x4, offset = 0x4, fixed_abs, tag = 'smem constant byte address 0x4 - core index']
  #allocation1 [shape = 'u32[144,128]{1,0:T(1,128)}', space=vmem, size = 0x12000, scoped, tag = 'internal scratch']
  %s0 = inlined_call_operand.vmem [shape: bf16[2,17,17,128], index: 0, kind: input, shape index: {}]
  %s1 = inlined_call_operand.vmem [shape: bf16[2,256,32], index: 1, kind: input, shape index: {}]
  %s2 = inlined_call_operand.vmem [shape: f32[1,32], index: 2, kind: input, shape index: {}]
  %s3 = inlined_call_operand.vmem [shape: bf16[2,16,16,32], index: 3, kind: output, shape index: {}]
  %s4 = sld [smem:[#allocation0]]
  $region45: #{encoder_forward.6} parent=0
    _
  %s6 = ssub.s32 1, %s4
  %s7 = scalar_select 0, %s6, %s4
  loop: start=0, step=1, limit=4
  $region2: #{encoder_forward.6} parent=0 // loop_pre_header
    _
  $region3: #{encoder_forward.6} parent=0 // loop_header
    %s9 = sphi 0, %s13
    %p10 = scmp.ge.s32.totalorder %s9, 4
    %s19 = sphi 0, %s21
    %s22 = sphi 0, %s19
    %s23 = sphi 0, %s22
    %s39 = sphi 0, %s23
    %s43 = sphi 0, %s43
    %s45 = sphi 0, %s43
    %s46 = sphi 0, %s45
    %s60 = sphi 0, %s46
    %s64 = sphi 0, %s64
    %s66 = sphi 0, %s64
    %s67 = sphi 0, %s66
    %s81 = sphi 0, %s67
    %s87 = sphi 0, %s89
    %s90 = sphi 0, %s87
    %s91 = sphi 0, %s90
    %s107 = sphi 0, %s91
  $region4: #{encoder_forward.6} parent=0 // loop_header_branch
    %12 = sbr.rel (%p10) target = $region8
  $region5: #{encoder_forward.6} parent=0 // loop_body
    %s14 = ssub.s32 %s9, 1
    %s15 = ssub.s32 %s9, 2
    %s16 = sadd.s32 %s9, 1
    %s17 = ssub.s32 %s9, %s16
    %p18 = scmp.eq.s32.totalorder %s17, 0
    %s20 = sadd.s32 %s19, 1
    %s21 = scalar_select %p18, %s19, %s20
    %p24 = pneg %p18
    %p25 = scmp.eq.s32.totalorder %s9, 1
    %p26 = por %p24, %p25
    %p27 = scmp.ne.s32.totalorder %s19, %s22
    %p28 = scmp.eq.s32.totalorder %s9, 0
    %p29 = por %p27, %p28
    %p30 = scmp.ne.s32.totalorder %s19, %s22
    %p31 = scmp.eq.s32.totalorder %s14, 1
    %p32 = por %p30, %p31
    %p33 = scmp.ne.s32.totalorder %s22, %s23
    %p34 = scmp.eq.s32.totalorder %s14, 0
    %p35 = por %p33, %p34
    %p36 = scmp.ne.s32.totalorder %s22, %s23
    %p37 = scmp.eq.s32.totalorder %s15, 1
    %p38 = por %p36, %p37
    %p40 = scmp.ne.s32.totalorder %s23, %s39
    %p41 = scmp.eq.s32.totalorder %s15, 0
    %p42 = por %p40, %p41
    %s44 = sadd.s32 %s43, 1
    %p47 = scmp.eq.s32.totalorder %s9, 1
    %p48 = scmp.ne.s32.totalorder %s43, %s45
    %p49 = scmp.eq.s32.totalorder %s9, 0
    %p50 = por %p48, %p49
    %p51 = scmp.ne.s32.totalorder %s43, %s45
    %p52 = scmp.eq.s32.totalorder %s14, 1
    %p53 = por %p51, %p52
    %p54 = scmp.ne.s32.totalorder %s45, %s46
    %p55 = scmp.eq.s32.totalorder %s14, 0
    %p56 = por %p54, %p55
    %p57 = scmp.ne.s32.totalorder %s45, %s46
    %p58 = scmp.eq.s32.totalorder %s15, 1
    %p59 = por %p57, %p58
    %p61 = scmp.ne.s32.totalorder %s46, %s60
    %p62 = scmp.eq.s32.totalorder %s15, 0
    %p63 = por %p61, %p62
    %s65 = sadd.s32 %s64, 1
    %p68 = scmp.eq.s32.totalorder %s9, 1
    %p69 = scmp.ne.s32.totalorder %s64, %s66
    %p70 = scmp.eq.s32.totalorder %s9, 0
    %p71 = por %p69, %p70
    %p72 = scmp.ne.s32.totalorder %s64, %s66
    %p73 = scmp.eq.s32.totalorder %s14, 1
    %p74 = por %p72, %p73
    %p75 = scmp.ne.s32.totalorder %s66, %s67
    %p76 = scmp.eq.s32.totalorder %s14, 0
    %p77 = por %p75, %p76
    %p78 = scmp.ne.s32.totalorder %s66, %s67
    %p79 = scmp.eq.s32.totalorder %s15, 1
    %p80 = por %p78, %p79
    %p82 = scmp.ne.s32.totalorder %s67, %s81
    %p83 = scmp.eq.s32.totalorder %s15, 0
    %p84 = por %p82, %p83
    %s85 = ssub.s32 %s9, %s16
    %p86 = scmp.eq.s32.totalorder %s85, 0
    %s88 = sadd.s32 %s87, 1
    %s89 = scalar_select %p86, %s87, %s88
    %p92 = pneg %p86
    %p93 = scmp.eq.s32.totalorder %s9, 1
    %p94 = por %p92, %p93
    %p95 = scmp.ne.s32.totalorder %s87, %s90
    %p96 = scmp.eq.s32.totalorder %s9, 0
    %p97 = por %p95, %p96
    %p98 = scmp.ne.s32.totalorder %s87, %s90
    %p99 = scmp.eq.s32.totalorder %s14, 1
    %p100 = por %p98, %p99
    %p101 = scmp.ne.s32.totalorder %s90, %s91
    %p102 = scmp.eq.s32.totalorder %s14, 0
    %p103 = por %p101, %p102
    %p104 = scmp.ne.s32.totalorder %s90, %s91
    %p105 = scmp.eq.s32.totalorder %s15, 1
    %p106 = por %p104, %p105
    %p108 = scmp.ne.s32.totalorder %s91, %s107
    %p109 = scmp.eq.s32.totalorder %s15, 0
    %p110 = por %p108, %p109
    %p111 = scmp.le.s32.totalorder 1, %s9
    %p112 = scmp.lt.s32.totalorder %s9, 3
    %p113 = pnand %p111, %p112
    %p114 = pneg %p113
    // Predicated region
    $region9: #{encoder_forward.6} parent=5 // pred_check
      _
    $region10: #{encoder_forward.6} parent=5 // pred_check_branch
      %116 = sbr.rel (%p113) target = $region12
    $region11: #{encoder_forward.6} parent=5 // pred_region
      %s117 = ssub.s32 %s9, 1
      // Predicated region
      $region13: #{encoder_forward.6} parent=11 // pred_check
        %p118 = pneg %p56
      $region14: #{encoder_forward.6} parent=11 // pred_check_branch
        %120 = sbr.rel (%p118) target = $region16
      $region15: #{encoder_forward.6} parent=11 // pred_region
        _
      $region16: #{encoder_forward.6} parent=11 // pred_fallthru
        _
      // Predicated region
      $region17: #{encoder_forward.6} parent=11 // pred_check
        %p121 = pneg %p77
      $region18: #{encoder_forward.6} parent=11 // pred_check_branch
        %123 = sbr.rel (%p121) target = $region20
      $region19: #{encoder_forward.6} parent=11 // pred_region
        _
      $region20: #{encoder_forward.6} parent=11 // pred_fallthru
        _
    $region12: #{encoder_forward.6} parent=5 // pred_fallthru
      _
    %p124 = scmp.lt.s32.totalorder %s9, 2
    // Predicated region
    $region21: #{encoder_forward.6} parent=5 // pred_check
      %p125 = pneg %p124
    $region22: #{encoder_forward.6} parent=5 // pred_check_branch
      %127 = sbr.rel (%p125) target = $region24
    $region23: #{encoder_forward.6} parent=5 // pred_region
      // Predicated region
      $region25: #{encoder_forward.6} parent=23 // pred_check
        %p128 = pneg %p29
      $region26: #{encoder_forward.6} parent=23 // pred_check_branch
        %130 = sbr.rel (%p128) target = $region28
      $region27: #{encoder_forward.6} parent=23 // pred_region
        %p131 = scmp.lt.s32.totalorder %s9, 1
        %s132 = scalar_select %p131, %s9, 1
        %s133 = smul.addr %s132, 51
        %s134 = smul.addr %s133, 4
        %s135 = scalar_lea.vmem %s0, %s134
      $region28: #{encoder_forward.6} parent=23 // pred_fallthru
        _
    $region24: #{encoder_forward.6} parent=5 // pred_fallthru
      _
    %p136 = scmp.le.s32.totalorder 1, %s9
    %p137 = scmp.lt.s32.totalorder %s9, 3
    %p138 = pnand %p136, %p137
    %p139 = pneg %p138
    // Predicated region
    $region29: #{encoder_forward.6} parent=5 // pred_check
      _
    $region30: #{encoder_forward.6} parent=5 // pred_check_branch
      %141 = sbr.rel (%p138) target = $region32
    $region31: #{encoder_forward.6} parent=5 // pred_region
      %s142 = ssub.s32 %s9, 1
      %p143 = scmp.lt.s32.totalorder %s14, 1
      %s144 = scalar_select %p143, %s14, 1
      %s145 = smul.addr %s144, 51
      %s146 = smul.addr %s145, 4
      %s147 = scalar_lea.vmem %s0, %s146
      %p148 = pneg %p35
      %p149 = pneg %p32
      %p150 = pneg %p56
      %p151 = pneg %p53
      %p152 = pneg %p77
      %p153 = pneg %p74
      %p154 = pneg %p103
      %p155 = pneg %p100
      %p156 = scmp.lt.s32.totalorder %s14, 1
      %s157 = scalar_select %p156, %s14, 1
      %s158 = smul.addr %s157, 32
      %s159 = smul.addr %s158, 4
      %s160 = scalar_lea.vmem %s3, %s159
      %p161 = scmp.lt.s32.totalorder %s14, 1
      %s162 = scalar_select %p161, %s14, 1
      %s163 = smul.addr %s162, 51
      %s164 = smul.addr %s163, 4
      %s165 = scalar_lea.vmem %s0, %s164
      %p166 = scmp.lt.s32.totalorder %s14, 1
      %s167 = scalar_select %p166, %s14, 1
      %s168 = smul.addr %s167, 32
      %s169 = smul.addr %s168, 4
      %s170 = scalar_lea.vmem %s3, %s169
      %v172 = vld [vmem:[%s2] sm:$0x1]
      %v173 = vld [vmem:[%s165] sm:$0xf]
      %v174 = vld [vmem:[%s165 + $0x4] sm:$0xf]
      %v175 = vld [vmem:[%s165 + $0x8] sm:$0x1]
      %v176 = vld [vmem:[%s165 + $0xc] sm:$0xf]
      %v177 = vld [vmem:[%s165 + $0x10] sm:$0xf]
      %v178 = vld [vmem:[%s165 + $0x14] sm:$0x1]
      %v179 = vld [vmem:[%s165 + $0x18] sm:$0xf]
      %v180 = vld [vmem:[%s165 + $0x1c] sm:$0xf]
      %v181 = vld [vmem:[%s165 + $0x20] sm:$0x1]
      %v182 = vld [vmem:[%s165 + $0x24] sm:$0xf]
      %v183 = vld [vmem:[%s165 + $0x28] sm:$0xf]
      %v184 = vld [vmem:[%s165 + $0x2c] sm:$0x1]
      %v185 = vld [vmem:[%s165 + $0x30] sm:$0xf]
      %v186 = vld [vmem:[%s165 + $0x34] sm:$0xf]
      %v187 = vld [vmem:[%s165 + $0x38] sm:$0x1]
      %v188 = vld [vmem:[%s165 + $0x3c] sm:$0xf]
      %v189 = vld [vmem:[%s165 + $0x40] sm:$0xf]
      %v190 = vld [vmem:[%s165 + $0x44] sm:$0x1]
      %v191 = vld [vmem:[%s165 + $0x48] sm:$0xf]
      %v192 = vld [vmem:[%s165 + $0x4c] sm:$0xf]
      %v193 = vld [vmem:[%s165 + $0x50] sm:$0x1]
      %v194 = vld [vmem:[%s165 + $0x54] sm:$0xf]
      %v195 = vld [vmem:[%s165 + $0x58] sm:$0xf]
      %v196 = vld [vmem:[%s165 + $0x5c] sm:$0x1]
      %v197 = vld [vmem:[%s165 + $0x60] sm:$0xf]
      %v198 = vld [vmem:[%s165 + $0x64] sm:$0xf]
      %v199 = vld [vmem:[%s165 + $0x68] sm:$0x1]
      %v200 = vld [vmem:[%s165 + $0x6c] sm:$0xf]
      %v201 = vld [vmem:[%s165 + $0x70] sm:$0xf]
      %v202 = vld [vmem:[%s165 + $0x74] sm:$0x1]
      %v203 = vld [vmem:[%s165 + $0x78] sm:$0xf]
      %v204 = vld [vmem:[%s165 + $0x7c] sm:$0xf]
      %v205 = vld [vmem:[%s165 + $0x80] sm:$0x1]
      %v206 = vld [vmem:[%s165 + $0x84] sm:$0xf]
      %v207 = vld [vmem:[%s165 + $0x88] sm:$0xf]
      %v208 = vld [vmem:[%s165 + $0x8c] sm:$0x1]
      %v209 = vld [vmem:[%s165 + $0x90] sm:$0xf]
      %v210 = vld [vmem:[%s165 + $0x94] sm:$0xf]
      %v211 = vld [vmem:[%s165 + $0x98] sm:$0x1]
      %v212 = vld [vmem:[%s165 + $0x9c] sm:$0xf]
      %v213 = vld [vmem:[%s165 + $0xa0] sm:$0xf]
      %v214 = vld [vmem:[%s165 + $0xa4] sm:$0x1]
      %v215 = vld [vmem:[%s165 + $0xa8] sm:$0xf]
      %v216 = vld [vmem:[%s165 + $0xac] sm:$0xf]
      %v217 = vld [vmem:[%s165 + $0xb0] sm:$0x1]
      %v218 = vld [vmem:[%s165 + $0xb4] sm:$0xf]
      %v219 = vld [vmem:[%s165 + $0xb8] sm:$0xf]
      %v220 = vld [vmem:[%s165 + $0xbc] sm:$0x1]
      %v253 = vunpack.c.l.b16 %v173
      %v254 = vunpack.c.l.b16 %v174
      %v255 = vunpack.c.l.b16 %v176
      %v256 = vunpack.c.l.b16 %v177
      %v257 = vunpack.c.l.b16 %v179
      %v258 = vunpack.c.l.b16 %v180
      %v259 = vunpack.c.l.b16 %v182
      %v260 = vunpack.c.l.b16 %v183
      %v261 = vunpack.c.l.b16 %v185
      %v262 = vunpack.c.l.b16 %v186
      %v263 = vunpack.c.l.b16 %v188
      %v264 = vunpack.c.l.b16 %v189
      %v265 = vunpack.c.l.b16 %v191
      %v266 = vunpack.c.l.b16 %v192
      %v267 = vunpack.c.l.b16 %v194
      %v268 = vunpack.c.l.b16 %v195
      %v269 = vunpack.c.l.b16 %v197
      %v270 = vunpack.c.l.b16 %v198
      %v271 = vunpack.c.l.b16 %v200
      %v272 = vunpack.c.l.b16 %v201
      %v273 = vunpack.c.l.b16 %v203
      %v274 = vunpack.c.l.b16 %v204
      %v275 = vunpack.c.l.b16 %v206
      %v276 = vunpack.c.l.b16 %v207
      %v277 = vunpack.c.l.b16 %v209
      %v278 = vunpack.c.l.b16 %v210
      %v279 = vunpack.c.l.b16 %v212
      %v280 = vunpack.c.l.b16 %v213
      %v281 = vunpack.c.l.b16 %v215
      %v282 = vunpack.c.l.b16 %v216
      %v283 = vunpack.c.l.b16 %v218
      %v284 = vunpack.c.l.b16 %v219
      %v285 = vpack.c.b16 %v254, %v253
      %v286 = vpack.c.b16 %v256, %v255
      %v287 = vpack.c.b16 %v258, %v257
      %v288 = vpack.c.b16 %v260, %v259
      %v289 = vpack.c.b16 %v262, %v261
      %v290 = vpack.c.b16 %v264, %v263
      %v291 = vpack.c.b16 %v266, %v265
      %v292 = vpack.c.b16 %v268, %v267
      %v293 = vpack.c.b16 %v270, %v269
      %v294 = vpack.c.b16 %v272, %v271
      %v295 = vpack.c.b16 %v274, %v273
      %v296 = vpack.c.b16 %v276, %v275
      %v297 = vpack.c.b16 %v278, %v277
      %v298 = vpack.c.b16 %v280, %v279
      %v299 = vpack.c.b16 %v282, %v281
      %v300 = vpack.c.b16 %v284, %v283
      %v333 = vunpack.c.l.b16 %v175
      %v334 = vunpack.c.l.b16 %v178
      %v335 = vunpack.c.l.b16 %v181
      %v336 = vunpack.c.l.b16 %v184
      %v337 = vunpack.c.l.b16 %v187
      %v338 = vunpack.c.l.b16 %v190
      %v339 = vunpack.c.l.b16 %v193
      %v340 = vunpack.c.l.b16 %v196
      %v341 = vunpack.c.l.b16 %v199
      %v342 = vunpack.c.l.b16 %v202
      %v343 = vunpack.c.l.b16 %v205
      %v344 = vunpack.c.l.b16 %v208
      %v345 = vunpack.c.l.b16 %v211
      %v346 = vunpack.c.l.b16 %v214
      %v347 = vunpack.c.l.b16 %v217
      %v348 = vunpack.c.l.b16 %v220
      %v349 = vpack.c.b16 %v333, %v333
      %v350 = vpack.c.b16 %v334, %v334
      %v351 = vpack.c.b16 %v335, %v335
      %v352 = vpack.c.b16 %v336, %v336
      %v353 = vpack.c.b16 %v337, %v337
      %v354 = vpack.c.b16 %v338, %v338
      %v355 = vpack.c.b16 %v339, %v339
      %v356 = vpack.c.b16 %v340, %v340
      %v357 = vpack.c.b16 %v341, %v341
      %v358 = vpack.c.b16 %v342, %v342
      %v359 = vpack.c.b16 %v343, %v343
      %v360 = vpack.c.b16 %v344, %v344
      %v361 = vpack.c.b16 %v345, %v345
      %v362 = vpack.c.b16 %v346, %v346
      %v363 = vpack.c.b16 %v347, %v347
      %v364 = vpack.c.b16 %v348, %v348
      %vm365 = vsmask.f32 7424
      %v367 = vshrl.u32 %v285, 16
      %v369 = vshll.u32 %v285, 16
      %v371 = vrot.slane %v369, 1
      %v372 = vor.u32 %v367, %v371
      %v374 = vshll.u32 %v349, 16
      %v376 = vrot.slane %v374, 1
      %v377 = vsel %vm365, %v372, %v376
      %v379 = vshrl.u32 %v286, 16
      %v381 = vshll.u32 %v286, 16
      %v383 = vrot.slane %v381, 1
      %v384 = vor.u32 %v379, %v383
      %v386 = vshll.u32 %v350, 16
      %v388 = vrot.slane %v386, 1
      %v389 = vsel %vm365, %v384, %v388
      %v391 = vshrl.u32 %v287, 16
      %v393 = vshll.u32 %v287, 16
      %v395 = vrot.slane %v393, 1
      %v396 = vor.u32 %v391, %v395
      %v398 = vshll.u32 %v351, 16
      %v400 = vrot.slane %v398, 1
      %v401 = vsel %vm365, %v396, %v400
      %v403 = vshrl.u32 %v288, 16
      %v405 = vshll.u32 %v288, 16
      %v407 = vrot.slane %v405, 1
      %v408 = vor.u32 %v403, %v407
      %v410 = vshll.u32 %v352, 16
      %v412 = vrot.slane %v410, 1
      %v413 = vsel %vm365, %v408, %v412
      %v415 = vshrl.u32 %v289, 16
      %v417 = vshll.u32 %v289, 16
      %v419 = vrot.slane %v417, 1
      %v420 = vor.u32 %v415, %v419
      %v422 = vshll.u32 %v353, 16
      %v424 = vrot.slane %v422, 1
      %v425 = vsel %vm365, %v420, %v424
      %v427 = vshrl.u32 %v290, 16
      %v429 = vshll.u32 %v290, 16
      %v431 = vrot.slane %v429, 1
      %v432 = vor.u32 %v427, %v431
      %v434 = vshll.u32 %v354, 16
      %v436 = vrot.slane %v434, 1
      %v437 = vsel %vm365, %v432, %v436
      %v439 = vshrl.u32 %v291, 16
      %v441 = vshll.u32 %v291, 16
      %v443 = vrot.slane %v441, 1
      %v444 = vor.u32 %v439, %v443
      %v446 = vshll.u32 %v355, 16
      %v448 = vrot.slane %v446, 1
      %v449 = vsel %vm365, %v444, %v448
      %v451 = vshrl.u32 %v292, 16
      %v453 = vshll.u32 %v292, 16
      %v455 = vrot.slane %v453, 1
      %v456 = vor.u32 %v451, %v455
      %v458 = vshll.u32 %v356, 16
      %v460 = vrot.slane %v458, 1
      %v461 = vsel %vm365, %v456, %v460
      %v463 = vshrl.u32 %v293, 16
      %v465 = vshll.u32 %v293, 16
      %v467 = vrot.slane %v465, 1
      %v468 = vor.u32 %v463, %v467
      %v470 = vshll.u32 %v357, 16
      %v472 = vrot.slane %v470, 1
      %v473 = vsel %vm365, %v468, %v472
      %v475 = vshrl.u32 %v294, 16
      %v477 = vshll.u32 %v294, 16
      %v479 = vrot.slane %v477, 1
      %v480 = vor.u32 %v475, %v479
      %v482 = vshll.u32 %v358, 16
      %v484 = vrot.slane %v482, 1
      %v485 = vsel %vm365, %v480, %v484
      %v487 = vshrl.u32 %v295, 16
      %v489 = vshll.u32 %v295, 16
      %v491 = vrot.slane %v489, 1
      %v492 = vor.u32 %v487, %v491
      %v494 = vshll.u32 %v359, 16
      %v496 = vrot.slane %v494, 1
      %v497 = vsel %vm365, %v492, %v496
      %v499 = vshrl.u32 %v296, 16
      %v501 = vshll.u32 %v296, 16
      %v503 = vrot.slane %v501, 1
      %v504 = vor.u32 %v499, %v503
      %v506 = vshll.u32 %v360, 16
      %v508 = vrot.slane %v506, 1
      %v509 = vsel %vm365, %v504, %v508
      %v511 = vshrl.u32 %v297, 16
      %v513 = vshll.u32 %v297, 16
      %v515 = vrot.slane %v513, 1
      %v516 = vor.u32 %v511, %v515
      %v518 = vshll.u32 %v361, 16
      %v520 = vrot.slane %v518, 1
      %v521 = vsel %vm365, %v516, %v520
      %v523 = vshrl.u32 %v298, 16
      %v525 = vshll.u32 %v298, 16
      %v527 = vrot.slane %v525, 1
      %v528 = vor.u32 %v523, %v527
      %v530 = vshll.u32 %v362, 16
      %v532 = vrot.slane %v530, 1
      %v533 = vsel %vm365, %v528, %v532
      %v535 = vshrl.u32 %v299, 16
      %v537 = vshll.u32 %v299, 16
      %v539 = vrot.slane %v537, 1
      %v540 = vor.u32 %v535, %v539
      %v542 = vshll.u32 %v363, 16
      %v544 = vrot.slane %v542, 1
      %v545 = vsel %vm365, %v540, %v544
      %v547 = vshrl.u32 %v300, 16
      %v549 = vshll.u32 %v300, 16
      %v551 = vrot.slane %v549, 1
      %v552 = vor.u32 %v547, %v551
      %v554 = vshll.u32 %v364, 16
      %v556 = vrot.slane %v554, 1
      %v557 = vsel %vm365, %v552, %v556
      %v574 = vld [vmem:[%s1] sm:$0xf]
      %v575 = vld [vmem:[%s1 + $0x4] sm:$0xf]
      %v576 = vld [vmem:[%s1 + $0x8] sm:$0xf]
      %v577 = vld [vmem:[%s1 + $0xc] sm:$0xf]
      %v578 = vld [vmem:[%s1 + $0x10] sm:$0xf]
      %v579 = vld [vmem:[%s1 + $0x14] sm:$0xf]
      %v580 = vld [vmem:[%s1 + $0x18] sm:$0xf]
      %v581 = vld [vmem:[%s1 + $0x1c] sm:$0xf]
      %v582 = vld [vmem:[%s1 + $0x20] sm:$0xf]
      %v583 = vld [vmem:[%s1 + $0x24] sm:$0xf]
      %v584 = vld [vmem:[%s1 + $0x28] sm:$0xf]
      %v585 = vld [vmem:[%s1 + $0x2c] sm:$0xf]
      %v586 = vld [vmem:[%s1 + $0x30] sm:$0xf]
      %v587 = vld [vmem:[%s1 + $0x34] sm:$0xf]
      %v588 = vld [vmem:[%s1 + $0x38] sm:$0xf]
      %v589 = vld [vmem:[%s1 + $0x3c] sm:$0xf]
      %v590 = vld [vmem:[%s1 + $0x40] sm:$0xf]
      %v591 = vld [vmem:[%s1 + $0x44] sm:$0xf]
      %v592 = vld [vmem:[%s1 + $0x48] sm:$0xf]
      %v593 = vld [vmem:[%s1 + $0x4c] sm:$0xf]
      %v594 = vld [vmem:[%s1 + $0x50] sm:$0xf]
      %v595 = vld [vmem:[%s1 + $0x54] sm:$0xf]
      %v596 = vld [vmem:[%s1 + $0x58] sm:$0xf]
      %v597 = vld [vmem:[%s1 + $0x5c] sm:$0xf]
      %v598 = vld [vmem:[%s1 + $0x60] sm:$0xf]
      %v599 = vld [vmem:[%s1 + $0x64] sm:$0xf]
      %v600 = vld [vmem:[%s1 + $0x68] sm:$0xf]
      %v601 = vld [vmem:[%s1 + $0x6c] sm:$0xf]
      %v602 = vld [vmem:[%s1 + $0x70] sm:$0xf]
      %v603 = vld [vmem:[%s1 + $0x74] sm:$0xf]
      %v604 = vld [vmem:[%s1 + $0x78] sm:$0xf]
      %v605 = vld [vmem:[%s1 + $0x7c] sm:$0xf]
      %s606 = scalar_lea.vmem %s165, 12
      %v607 = vld [vmem:[%s606] sm:$0xf]
      %v608 = vld [vmem:[%s606 + $0x4] sm:$0xf]
      %v609 = vld [vmem:[%s606 + $0x8] sm:$0x1]
      %v610 = vld [vmem:[%s606 + $0xc] sm:$0xf]
      %v611 = vld [vmem:[%s606 + $0x10] sm:$0xf]
      %v612 = vld [vmem:[%s606 + $0x14] sm:$0x1]
      %v613 = vld [vmem:[%s606 + $0x18] sm:$0xf]
      %v614 = vld [vmem:[%s606 + $0x1c] sm:$0xf]
      %v615 = vld [vmem:[%s606 + $0x20] sm:$0x1]
      %v616 = vld [vmem:[%s606 + $0x24] sm:$0xf]
      %v617 = vld [vmem:[%s606 + $0x28] sm:$0xf]
      %v618 = vld [vmem:[%s606 + $0x2c] sm:$0x1]
      %v619 = vld [vmem:[%s606 + $0x30] sm:$0xf]
      %v620 = vld [vmem:[%s606 + $0x34] sm:$0xf]
      %v621 = vld [vmem:[%s606 + $0x38] sm:$0x1]
      %v622 = vld [vmem:[%s606 + $0x3c] sm:$0xf]
      %v623 = vld [vmem:[%s606 + $0x40] sm:$0xf]
      %v624 = vld [vmem:[%s606 + $0x44] sm:$0x1]
      %v625 = vld [vmem:[%s606 + $0x48] sm:$0xf]
      %v626 = vld [vmem:[%s606 + $0x4c] sm:$0xf]
      %v627 = vld [vmem:[%s606 + $0x50] sm:$0x1]
      %v628 = vld [vmem:[%s606 + $0x54] sm:$0xf]
      %v629 = vld [vmem:[%s606 + $0x58] sm:$0xf]
      %v630 = vld [vmem:[%s606 + $0x5c] sm:$0x1]
      %v631 = vld [vmem:[%s606 + $0x60] sm:$0xf]
      %v632 = vld [vmem:[%s606 + $0x64] sm:$0xf]
      %v633 = vld [vmem:[%s606 + $0x68] sm:$0x1]
      %v634 = vld [vmem:[%s606 + $0x6c] sm:$0xf]
      %v635 = vld [vmem:[%s606 + $0x70] sm:$0xf]
      %v636 = vld [vmem:[%s606 + $0x74] sm:$0x1]
      %v637 = vld [vmem:[%s606 + $0x78] sm:$0xf]
      %v638 = vld [vmem:[%s606 + $0x7c] sm:$0xf]
      %v639 = vld [vmem:[%s606 + $0x80] sm:$0x1]
      %v640 = vld [vmem:[%s606 + $0x84] sm:$0xf]
      %v641 = vld [vmem:[%s606 + $0x88] sm:$0xf]
      %v642 = vld [vmem:[%s606 + $0x8c] sm:$0x1]
      %v643 = vld [vmem:[%s606 + $0x90] sm:$0xf]
      %v644 = vld [vmem:[%s606 + $0x94] sm:$0xf]
      %v645 = vld [vmem:[%s606 + $0x98] sm:$0x1]
      %v646 = vld [vmem:[%s606 + $0x9c] sm:$0xf]
      %v647 = vld [vmem:[%s606 + $0xa0] sm:$0xf]
      %v648 = vld [vmem:[%s606 + $0xa4] sm:$0x1]
      %v649 = vld [vmem:[%s606 + $0xa8] sm:$0xf]
      %v650 = vld [vmem:[%s606 + $0xac] sm:$0xf]
      %v651 = vld [vmem:[%s606 + $0xb0] sm:$0x1]
      %v652 = vld [vmem:[%s606 + $0xb4] sm:$0xf]
      %v653 = vld [vmem:[%s606 + $0xb8] sm:$0xf]
      %v654 = vld [vmem:[%s606 + $0xbc] sm:$0x1]
      %v687 = vunpack.c.l.b16 %v607
      %v688 = vunpack.c.l.b16 %v608
      %v689 = vunpack.c.l.b16 %v610
      %v690 = vunpack.c.l.b16 %v611
      %v691 = vunpack.c.l.b16 %v613
      %v692 = vunpack.c.l.b16 %v614
      %v693 = vunpack.c.l.b16 %v616
      %v694 = vunpack.c.l.b16 %v617
      %v695 = vunpack.c.l.b16 %v619
      %v696 = vunpack.c.l.b16 %v620
      %v697 = vunpack.c.l.b16 %v622
      %v698 = vunpack.c.l.b16 %v623
      %v699 = vunpack.c.l.b16 %v625
      %v700 = vunpack.c.l.b16 %v626
      %v701 = vunpack.c.l.b16 %v628
      %v702 = vunpack.c.l.b16 %v629
      %v703 = vunpack.c.l.b16 %v631
      %v704 = vunpack.c.l.b16 %v632
      %v705 = vunpack.c.l.b16 %v634
      %v706 = vunpack.c.l.b16 %v635
      %v707 = vunpack.c.l.b16 %v637
      %v708 = vunpack.c.l.b16 %v638
      %v709 = vunpack.c.l.b16 %v640
      %v710 = vunpack.c.l.b16 %v641
      %v711 = vunpack.c.l.b16 %v643
      %v712 = vunpack.c.l.b16 %v644
      %v713 = vunpack.c.l.b16 %v646
      %v714 = vunpack.c.l.b16 %v647
      %v715 = vunpack.c.l.b16 %v649
      %v716 = vunpack.c.l.b16 %v650
      %v717 = vunpack.c.l.b16 %v652
      %v718 = vunpack.c.l.b16 %v653
      %v719 = vpack.c.b16 %v688, %v687
      %v720 = vpack.c.b16 %v690, %v689
      %v721 = vpack.c.b16 %v692, %v691
      %v722 = vpack.c.b16 %v694, %v693
      %v723 = vpack.c.b16 %v696, %v695
      %v724 = vpack.c.b16 %v698, %v697
      %v725 = vpack.c.b16 %v700, %v699
      %v726 = vpack.c.b16 %v702, %v701
      %v727 = vpack.c.b16 %v704, %v703
      %v728 = vpack.c.b16 %v706, %v705
      %v729 = vpack.c.b16 %v708, %v707
      %v730 = vpack.c.b16 %v710, %v709
      %v731 = vpack.c.b16 %v712, %v711
      %v732 = vpack.c.b16 %v714, %v713
      %v733 = vpack.c.b16 %v716, %v715
      %v734 = vpack.c.b16 %v718, %v717
      %v767 = vunpack.c.l.b16 %v609
      %v768 = vunpack.c.l.b16 %v612
      %v769 = vunpack.c.l.b16 %v615
      %v770 = vunpack.c.l.b16 %v618
      %v771 = vunpack.c.l.b16 %v621
      %v772 = vunpack.c.l.b16 %v624
      %v773 = vunpack.c.l.b16 %v627
      %v774 = vunpack.c.l.b16 %v630
      %v775 = vunpack.c.l.b16 %v633
      %v776 = vunpack.c.l.b16 %v636
      %v777 = vunpack.c.l.b16 %v639
      %v778 = vunpack.c.l.b16 %v642
      %v779 = vunpack.c.l.b16 %v645
      %v780 = vunpack.c.l.b16 %v648
      %v781 = vunpack.c.l.b16 %v651
      %v782 = vunpack.c.l.b16 %v654
      %v783 = vpack.c.b16 %v767, %v767
      %v784 = vpack.c.b16 %v768, %v768
      %v785 = vpack.c.b16 %v769, %v769
      %v786 = vpack.c.b16 %v770, %v770
      %v787 = vpack.c.b16 %v771, %v771
      %v788 = vpack.c.b16 %v772, %v772
      %v789 = vpack.c.b16 %v773, %v773
      %v790 = vpack.c.b16 %v774, %v774
      %v791 = vpack.c.b16 %v775, %v775
      %v792 = vpack.c.b16 %v776, %v776
      %v793 = vpack.c.b16 %v777, %v777
      %v794 = vpack.c.b16 %v778, %v778
      %v795 = vpack.c.b16 %v779, %v779
      %v796 = vpack.c.b16 %v780, %v780
      %v797 = vpack.c.b16 %v781, %v781
      %v798 = vpack.c.b16 %v782, %v782
      %v800 = vshrl.u32 %v719, 16
      %v802 = vshll.u32 %v719, 16
      %v804 = vrot.slane %v802, 1
      %v805 = vor.u32 %v800, %v804
      %v807 = vshll.u32 %v783, 16
      %v809 = vrot.slane %v807, 1
      %v810 = vsel %vm365, %v805, %v809
      %v812 = vshrl.u32 %v720, 16
      %v814 = vshll.u32 %v720, 16
      %v816 = vrot.slane %v814, 1
      %v817 = vor.u32 %v812, %v816
      %v819 = vshll.u32 %v784, 16
      %v821 = vrot.slane %v819, 1
      %v822 = vsel %vm365, %v817, %v821
      %v824 = vshrl.u32 %v721, 16
      %v826 = vshll.u32 %v721, 16
      %v828 = vrot.slane %v826, 1
      %v829 = vor.u32 %v824, %v828
      %v831 = vshll.u32 %v785, 16
      %v833 = vrot.slane %v831, 1
      %v834 = vsel %vm365, %v829, %v833
      %v836 = vshrl.u32 %v722, 16
      %v838 = vshll.u32 %v722, 16
      %v840 = vrot.slane %v838, 1
      %v841 = vor.u32 %v836, %v840
      %v843 = vshll.u32 %v786, 16
      %v845 = vrot.slane %v843, 1
      %v846 = vsel %vm365, %v841, %v845
      %v848 = vshrl.u32 %v723, 16
      %v850 = vshll.u32 %v723, 16
      %v852 = vrot.slane %v850, 1
      %v853 = vor.u32 %v848, %v852
      %v855 = vshll.u32 %v787, 16
      %v857 = vrot.slane %v855, 1
      %v858 = vsel %vm365, %v853, %v857
      %v860 = vshrl.u32 %v724, 16
      %v862 = vshll.u32 %v724, 16
      %v864 = vrot.slane %v862, 1
      %v865 = vor.u32 %v860, %v864
      %v867 = vshll.u32 %v788, 16
      %v869 = vrot.slane %v867, 1
      %v870 = vsel %vm365, %v865, %v869
      %v872 = vshrl.u32 %v725, 16
      %v874 = vshll.u32 %v725, 16
      %v876 = vrot.slane %v874, 1
      %v877 = vor.u32 %v872, %v876
      %v879 = vshll.u32 %v789, 16
      %v881 = vrot.slane %v879, 1
      %v882 = vsel %vm365, %v877, %v881
      %v884 = vshrl.u32 %v726, 16
      %v886 = vshll.u32 %v726, 16
      %v888 = vrot.slane %v886, 1
      %v889 = vor.u32 %v884, %v888
      %v891 = vshll.u32 %v790, 16
      %v893 = vrot.slane %v891, 1
      %v894 = vsel %vm365, %v889, %v893
      %v896 = vshrl.u32 %v727, 16
      %v898 = vshll.u32 %v727, 16
      %v900 = vrot.slane %v898, 1
      %v901 = vor.u32 %v896, %v900
      %v903 = vshll.u32 %v791, 16
      %v905 = vrot.slane %v903, 1
      %v906 = vsel %vm365, %v901, %v905
      %v908 = vshrl.u32 %v728, 16
      %v910 = vshll.u32 %v728, 16
      %v912 = vrot.slane %v910, 1
      %v913 = vor.u32 %v908, %v912
      %v915 = vshll.u32 %v792, 16
      %v917 = vrot.slane %v915, 1
      %v918 = vsel %vm365, %v913, %v917
      %v920 = vshrl.u32 %v729, 16
      %v922 = vshll.u32 %v729, 16
      %v924 = vrot.slane %v922, 1
      %v925 = vor.u32 %v920, %v924
      %v927 = vshll.u32 %v793, 16
      %v929 = vrot.slane %v927, 1
      %v930 = vsel %vm365, %v925, %v929
      %v932 = vshrl.u32 %v730, 16
      %v934 = vshll.u32 %v730, 16
      %v936 = vrot.slane %v934, 1
      %v937 = vor.u32 %v932, %v936
      %v939 = vshll.u32 %v794, 16
      %v941 = vrot.slane %v939, 1
      %v942 = vsel %vm365, %v937, %v941
      %v944 = vshrl.u32 %v731, 16
      %v946 = vshll.u32 %v731, 16
      %v948 = vrot.slane %v946, 1
      %v949 = vor.u32 %v944, %v948
      %v951 = vshll.u32 %v795, 16
      %v953 = vrot.slane %v951, 1
      %v954 = vsel %vm365, %v949, %v953
      %v956 = vshrl.u32 %v732, 16
      %v958 = vshll.u32 %v732, 16
      %v960 = vrot.slane %v958, 1
      %v961 = vor.u32 %v956, %v960
      %v963 = vshll.u32 %v796, 16
      %v965 = vrot.slane %v963, 1
      %v966 = vsel %vm365, %v961, %v965
      %v968 = vshrl.u32 %v733, 16
      %v970 = vshll.u32 %v733, 16
      %v972 = vrot.slane %v970, 1
      %v973 = vor.u32 %v968, %v972
      %v975 = vshll.u32 %v797, 16
      %v977 = vrot.slane %v975, 1
      %v978 = vsel %vm365, %v973, %v977
      %v980 = vshrl.u32 %v734, 16
      %v982 = vshll.u32 %v734, 16
      %v984 = vrot.slane %v982, 1
      %v985 = vor.u32 %v980, %v984
      %v987 = vshll.u32 %v798, 16
      %v989 = vrot.slane %v987, 1
      %v990 = vsel %vm365, %v985, %v989
      %s1007 = scalar_lea.vmem %s1, 128
      %v1008 = vld [vmem:[%s1007] sm:$0xf]
      %v1009 = vld [vmem:[%s1007 + $0x4] sm:$0xf]
      %v1010 = vld [vmem:[%s1007 + $0x8] sm:$0xf]
      %v1011 = vld [vmem:[%s1007 + $0xc] sm:$0xf]
      %v1012 = vld [vmem:[%s1007 + $0x10] sm:$0xf]
      %v1013 = vld [vmem:[%s1007 + $0x14] sm:$0xf]
      %v1014 = vld [vmem:[%s1007 + $0x18] sm:$0xf]
      %v1015 = vld [vmem:[%s1007 + $0x1c] sm:$0xf]
      %v1016 = vld [vmem:[%s1007 + $0x20] sm:$0xf]
      %v1017 = vld [vmem:[%s1007 + $0x24] sm:$0xf]
      %v1018 = vld [vmem:[%s1007 + $0x28] sm:$0xf]
      %v1019 = vld [vmem:[%s1007 + $0x2c] sm:$0xf]
      %v1020 = vld [vmem:[%s1007 + $0x30] sm:$0xf]
      %v1021 = vld [vmem:[%s1007 + $0x34] sm:$0xf]
      %v1022 = vld [vmem:[%s1007 + $0x38] sm:$0xf]
      %v1023 = vld [vmem:[%s1007 + $0x3c] sm:$0xf]
      %v1024 = vld [vmem:[%s1007 + $0x40] sm:$0xf]
      %v1025 = vld [vmem:[%s1007 + $0x44] sm:$0xf]
      %v1026 = vld [vmem:[%s1007 + $0x48] sm:$0xf]
      %v1027 = vld [vmem:[%s1007 + $0x4c] sm:$0xf]
      %v1028 = vld [vmem:[%s1007 + $0x50] sm:$0xf]
      %v1029 = vld [vmem:[%s1007 + $0x54] sm:$0xf]
      %v1030 = vld [vmem:[%s1007 + $0x58] sm:$0xf]
      %v1031 = vld [vmem:[%s1007 + $0x5c] sm:$0xf]
      %v1032 = vld [vmem:[%s1007 + $0x60] sm:$0xf]
      %v1033 = vld [vmem:[%s1007 + $0x64] sm:$0xf]
      %v1034 = vld [vmem:[%s1007 + $0x68] sm:$0xf]
      %v1035 = vld [vmem:[%s1007 + $0x6c] sm:$0xf]
      %v1036 = vld [vmem:[%s1007 + $0x70] sm:$0xf]
      %v1037 = vld [vmem:[%s1007 + $0x74] sm:$0xf]
      %v1038 = vld [vmem:[%s1007 + $0x78] sm:$0xf]
      %v1039 = vld [vmem:[%s1007 + $0x7c] sm:$0xf]
      %v1072 = vunpack.c.l.b16 %v1008
      %v1073 = vunpack.c.l.b16 %v1009
      %v1074 = vunpack.c.l.b16 %v1010
      %v1075 = vunpack.c.l.b16 %v1011
      %v1076 = vunpack.c.l.b16 %v1012
      %v1077 = vunpack.c.l.b16 %v1013
      %v1078 = vunpack.c.l.b16 %v1014
      %v1079 = vunpack.c.l.b16 %v1015
      %v1080 = vunpack.c.l.b16 %v1016
      %v1081 = vunpack.c.l.b16 %v1017
      %v1082 = vunpack.c.l.b16 %v1018
      %v1083 = vunpack.c.l.b16 %v1019
      %v1084 = vunpack.c.l.b16 %v1020
      %v1085 = vunpack.c.l.b16 %v1021
      %v1086 = vunpack.c.l.b16 %v1022
      %v1087 = vunpack.c.l.b16 %v1023
      %v1088 = vunpack.c.l.b16 %v1024
      %v1089 = vunpack.c.l.b16 %v1025
      %v1090 = vunpack.c.l.b16 %v1026
      %v1091 = vunpack.c.l.b16 %v1027
      %v1092 = vunpack.c.l.b16 %v1028
      %v1093 = vunpack.c.l.b16 %v1029
      %v1094 = vunpack.c.l.b16 %v1030
      %v1095 = vunpack.c.l.b16 %v1031
      %v1096 = vunpack.c.l.b16 %v1032
      %v1097 = vunpack.c.l.b16 %v1033
      %v1098 = vunpack.c.l.b16 %v1034
      %v1099 = vunpack.c.l.b16 %v1035
      %v1100 = vunpack.c.l.b16 %v1036
      %v1101 = vunpack.c.l.b16 %v1037
      %v1102 = vunpack.c.l.b16 %v1038
      %v1103 = vunpack.c.l.b16 %v1039
      %v1104 = vpack.c.b16 %v1073, %v1072
      %v1105 = vpack.c.b16 %v1075, %v1074
      %v1106 = vpack.c.b16 %v1077, %v1076
      %v1107 = vpack.c.b16 %v1079, %v1078
      %v1108 = vpack.c.b16 %v1081, %v1080
      %v1109 = vpack.c.b16 %v1083, %v1082
      %v1110 = vpack.c.b16 %v1085, %v1084
      %v1111 = vpack.c.b16 %v1087, %v1086
      %v1112 = vpack.c.b16 %v1089, %v1088
      %v1113 = vpack.c.b16 %v1091, %v1090
      %v1114 = vpack.c.b16 %v1093, %v1092
      %v1115 = vpack.c.b16 %v1095, %v1094
      %v1116 = vpack.c.b16 %v1097, %v1096
      %v1117 = vpack.c.b16 %v1099, %v1098
      %v1118 = vpack.c.b16 %v1101, %v1100
      %v1119 = vpack.c.b16 %v1103, %v1102
      %1136 = vmatprep.subr.bf16.mxu0 0
      %1137 = vmatpush1.bf16.msra.mxu0 %v1104
      %1138 = vmatprep.subr.bf16.mxu0 0
      %1139 = vmatpush1.bf16.msra.mxu0 %v1105
      %1140 = vmatprep.subr.bf16.mxu0 0
      %1141 = vmatpush1.bf16.msra.mxu0 %v1106
      %1142 = vmatprep.subr.bf16.mxu0 0
      %1143 = vmatpush1.bf16.msra.mxu0 %v1107
      %1144 = vmatprep.subr.bf16.mxu0 0
      %1145 = vmatpush1.bf16.msra.mxu0 %v1108
      %1146 = vmatprep.subr.bf16.mxu0 0
      %1147 = vmatpush1.bf16.msra.mxu0 %v1109
      %1148 = vmatprep.subr.bf16.mxu0 0
      %1149 = vmatpush1.bf16.msra.mxu0 %v1110
      %1150 = vmatprep.subr.bf16.mxu0 0
      %1151 = vmatpush1.bf16.msra.mxu0 %v1111
      %1152 = vmatprep.subr.bf16.mxu0 0
      %1153 = vmatpush1.bf16.msra.mxu0 %v1112
      %1154 = vmatprep.subr.bf16.mxu0 0
      %1155 = vmatpush1.bf16.msra.mxu0 %v1113
      %1156 = vmatprep.subr.bf16.mxu0 0
      %1157 = vmatpush1.bf16.msra.mxu0 %v1114
      %1158 = vmatprep.subr.bf16.mxu0 0
      %1159 = vmatpush1.bf16.msra.mxu0 %v1115
      %1160 = vmatprep.subr.bf16.mxu0 0
      %1161 = vmatpush1.bf16.msra.mxu0 %v1116
      %1162 = vmatprep.subr.bf16.mxu0 0
      %1163 = vmatpush1.bf16.msra.mxu0 %v1117
      %1164 = vmatprep.subr.bf16.mxu0 0
      %1165 = vmatpush1.bf16.msra.mxu0 %v1118
      %1166 = vmatprep.subr.bf16.mxu0 0
      %1167 = vmatpush1.bf16.msra.mxu0 %v1119
      %1168 = vmatprep.mubr.bf16.mxu0 %v810
      %1169 = vmatmul.mubr.bf16.gmra.mrb[0].mxu0 %v719
      %v1170 = vpop.f32.mrb[0].mxu0
      %v1171 = vadd.f32 0.0, %v1170
      %v1172 = vpop.f32.mrb[0].mxu0
      %v1173 = vpop.f32.mrb[0].mxu0
      %v1174 = vadd.f32 0.0, %v1173
      %v1175 = vpop.f32.mrb[0].mxu0
      %1176 = vmatprep.mubr.bf16.mxu0 %v822
      %1177 = vmatmul.mubr.bf16.gmra.mrb[0].mxu0 %v720
      %v1178 = vpop.f32.mrb[0].mxu0
      %v1179 = vadd.f32 0.0, %v1178
      %v1180 = vpop.f32.mrb[0].mxu0
      %v1181 = vpop.f32.mrb[0].mxu0
      %v1182 = vadd.f32 0.0, %v1181
      %v1183 = vpop.f32.mrb[0].mxu0
      %1184 = vmatprep.mubr.bf16.mxu0 %v834
      %1185 = vmatmul.mubr.bf16.gmra.mrb[0].mxu0 %v721
      %v1186 = vpop.f32.mrb[0].mxu0
      %v1187 = vadd.f32 0.0, %v1186
      %v1188 = vpop.f32.mrb[0].mxu0
      %v1189 = vpop.f32.mrb[0].mxu0
      %v1190 = vadd.f32 0.0, %v1189
      %v1191 = vpop.f32.mrb[0].mxu0
      %1192 = vmatprep.mubr.bf16.mxu0 %v846
      %1193 = vmatmul.mubr.bf16.gmra.mrb[0].mxu0 %v722
      %v1194 = vpop.f32.mrb[0].mxu0
      %v1195 = vadd.f32 0.0, %v1194
      %v1196 = vpop.f32.mrb[0].mxu0
      %v1197 = vpop.f32.mrb[0].mxu0
      %v1198 = vadd.f32 0.0, %v1197
      %v1199 = vpop.f32.mrb[0].mxu0
      %1200 = vmatprep.mubr.bf16.mxu0 %v858
      %1201 = vmatmul.mubr.bf16.gmra.mrb[0].mxu0 %v723
      %v1202 = vpop.f32.mrb[0].mxu0
      %v1203 = vadd.f32 0.0, %v1202
      %v1204 = vpop.f32.mrb[0].mxu0
      %v1205 = vpop.f32.mrb[0].mxu0
      %v1206 = vadd.f32 0.0, %v1205
      %v1207 = vpop.f32.mrb[0].mxu0
      %1208 = vmatprep.mubr.bf16.mxu0 %v870
      %1209 = vmatmul.mubr.bf16.gmra.mrb[0].mxu0 %v724
      %v1210 = vpop.f32.mrb[0].mxu0
      %v1211 = vadd.f32 0.0, %v1210
      %v1212 = vpop.f32.mrb[0].mxu0
      %v1213 = vpop.f32.mrb[0].mxu0
      %v1214 = vadd.f32 0.0, %v1213
      %v1215 = vpop.f32.mrb[0].mxu0
      %1216 = vmatprep.mubr.bf16.mxu0 %v882
      %1217 = vmatmul.mubr.bf16.gmra.mrb[0].mxu0 %v725
      %v1218 = vpop.f32.mrb[0].mxu0
      %v1219 = vadd.f32 0.0, %v1218
      %v1220 = vpop.f32.mrb[0].mxu0
      %v1221 = vpop.f32.mrb[0].mxu0
      %v1222 = vadd.f32 0.0, %v1221
      %v1223 = vpop.f32.mrb[0].mxu0
      %1224 = vmatprep.mubr.bf16.mxu0 %v894
      %1225 = vmatmul.mubr.bf16.gmra.mrb[0].mxu0 %v726
      %v1226 = vpop.f32.mrb[0].mxu0
      %v1227 = vadd.f32 0.0, %v1226
      %v1228 = vpop.f32.mrb[0].mxu0
      %v1229 = vpop.f32.mrb[0].mxu0
      %v1230 = vadd.f32 0.0, %v1229
      %v1231 = vpop.f32.mrb[0].mxu0
      %1232 = vmatprep.mubr.bf16.mxu0 %v906
      %1233 = vmatmul.mubr.bf16.gmra.mrb[0].mxu0 %v727
      %v1234 = vpop.f32.mrb[0].mxu0
      %v1235 = vadd.f32 0.0, %v1234
      %v1236 = vpop.f32.mrb[0].mxu0
      %v1237 = vpop.f32.mrb[0].mxu0
      %v1238 = vadd.f32 0.0, %v1237
      %v1239 = vpop.f32.mrb[0].mxu0
      %1240 = vmatprep.mubr.bf16.mxu0 %v918
      %1241 = vmatmul.mubr.bf16.gmra.mrb[0].mxu0 %v728
      %v1242 = vpop.f32.mrb[0].mxu0
      %v1243 = vadd.f32 0.0, %v1242
      %v1244 = vpop.f32.mrb[0].mxu0
      %v1245 = vpop.f32.mrb[0].mxu0
      %v1246 = vadd.f32 0.0, %v1245
      %v1247 = vpop.f32.mrb[0].mxu0
      %1248 = vmatprep.mubr.bf16.mxu0 %v930
      %1249 = vmatmul.mubr.bf16.gmra.mrb[0].mxu0 %v729
      %v1250 = vpop.f32.mrb[0].mxu0
      %v1251 = vadd.f32 0.0, %v1250
      %v1252 = vpop.f32.mrb[0].mxu0
      %v1253 = vpop.f32.mrb[0].mxu0
      %v1254 = vadd.f32 0.0, %v1253
      %v1255 = vpop.f32.mrb[0].mxu0
      %1256 = vmatprep.mubr.bf16.mxu0 %v942
      %1257 = vmatmul.mubr.bf16.gmra.mrb[0].mxu0 %v730
      %v1258 = vpop.f32.mrb[0].mxu0
      %v1259 = vadd.f32 0.0, %v1258
      %v1260 = vpop.f32.mrb[0].mxu0
      %v1261 = vpop.f32.mrb[0].mxu0
      %v1262 = vadd.f32 0.0, %v1261
      %v1263 = vpop.f32.mrb[0].mxu0
      %1264 = vmatprep.mubr.bf16.mxu0 %v954
      %1265 = vmatmul.mubr.bf16.gmra.mrb[0].mxu0 %v731
      %v1266 = vpop.f32.mrb[0].mxu0
      %v1267 = vadd.f32 0.0, %v1266
      %v1268 = vpop.f32.mrb[0].mxu0
      %v1269 = vpop.f32.mrb[0].mxu0
      %v1270 = vadd.f32 0.0, %v1269
      %v1271 = vpop.f32.mrb[0].mxu0
      %1272 = vmatprep.mubr.bf16.mxu0 %v966
      %1273 = vmatmul.mubr.bf16.gmra.mrb[0].mxu0 %v732
      %v1274 = vpop.f32.mrb[0].mxu0
      %v1275 = vadd.f32 0.0, %v1274
      %v1276 = vpop.f32.mrb[0].mxu0
      %v1277 = vpop.f32.mrb[0].mxu0
      %v1278 = vadd.f32 0.0, %v1277
      %v1279 = vpop.f32.mrb[0].mxu0
      %1280 = vmatprep.mubr.bf16.mxu0 %v978
      %1281 = vmatmul.mubr.bf16.gmra.mrb[0].mxu0 %v733
      %v1282 = vpop.f32.mrb[0].mxu0
      %v1283 = vadd.f32 0.0, %v1282
      %v1284 = vpop.f32.mrb[0].mxu0
      %v1285 = vpop.f32.mrb[0].mxu0
      %v1286 = vadd.f32 0.0, %v1285
      %v1287 = vpop.f32.mrb[0].mxu0
      %1288 = vmatprep.mubr.bf16.mxu0 %v990
      %1289 = vmatmul.mubr.bf16.gmra.mrb[0].mxu0 %v734
      %v1290 = vpop.f32.mrb[0].mxu0
      %v1291 = vadd.f32 0.0, %v1290
      %v1292 = vpop.f32.mrb[0].mxu0
      %v1293 = vpop.f32.mrb[0].mxu0
      %v1294 = vadd.f32 0.0, %v1293
      %v1295 = vpop.f32.mrb[0].mxu0
      %1296 = vdwg.mxu0
      %v1329 = vunpack.c.l.b16 %v574
      %v1330 = vunpack.c.l.b16 %v575
      %v1331 = vunpack.c.l.b16 %v576
      %v1332 = vunpack.c.l.b16 %v577
      %v1333 = vunpack.c.l.b16 %v578
      %v1334 = vunpack.c.l.b16 %v579
      %v1335 = vunpack.c.l.b16 %v580
      %v1336 = vunpack.c.l.b16 %v581
      %v1337 = vunpack.c.l.b16 %v582
      %v1338 = vunpack.c.l.b16 %v583
      %v1339 = vunpack.c.l.b16 %v584
      %v1340 = vunpack.c.l.b16 %v585
      %v1341 = vunpack.c.l.b16 %v586
      %v1342 = vunpack.c.l.b16 %v587
      %v1343 = vunpack.c.l.b16 %v588
      %v1344 = vunpack.c.l.b16 %v589
      %v1345 = vunpack.c.l.b16 %v590
      %v1346 = vunpack.c.l.b16 %v591
      %v1347 = vunpack.c.l.b16 %v592
      %v1348 = vunpack.c.l.b16 %v593
      %v1349 = vunpack.c.l.b16 %v594
      %v1350 = vunpack.c.l.b16 %v595
      %v1351 = vunpack.c.l.b16 %v596
      %v1352 = vunpack.c.l.b16 %v597
      %v1353 = vunpack.c.l.b16 %v598
      %v1354 = vunpack.c.l.b16 %v599
      %v1355 = vunpack.c.l.b16 %v600
      %v1356 = vunpack.c.l.b16 %v601
      %v1357 = vunpack.c.l.b16 %v602
      %v1358 = vunpack.c.l.b16 %v603
      %v1359 = vunpack.c.l.b16 %v604
      %v1360 = vunpack.c.l.b16 %v605
      %v1361 = vpack.c.b16 %v1330, %v1329
      %v1362 = vpack.c.b16 %v1332, %v1331
      %v1363 = vpack.c.b16 %v1334, %v1333
      %v1364 = vpack.c.b16 %v1336, %v1335
      %v1365 = vpack.c.b16 %v1338, %v1337
      %v1366 = vpack.c.b16 %v1340, %v1339
      %v1367 = vpack.c.b16 %v1342, %v1341
      %v1368 = vpack.c.b16 %v1344, %v1343
      %v1369 = vpack.c.b16 %v1346, %v1345
      %v1370 = vpack.c.b16 %v1348, %v1347
      %v1371 = vpack.c.b16 %v1350, %v1349
      %v1372 = vpack.c.b16 %v1352, %v1351
      %v1373 = vpack.c.b16 %v1354, %v1353
      %v1374 = vpack.c.b16 %v1356, %v1355
      %v1375 = vpack.c.b16 %v1358, %v1357
      %v1376 = vpack.c.b16 %v1360, %v1359
      %1393 = vmatprep.subr.bf16.mxu0 0
      %1394 = vmatpush1.bf16.msra.mxu0 %v1361
      %1395 = vmatprep.subr.bf16.mxu0 0
      %1396 = vmatpush1.bf16.msra.mxu0 %v1362
      %1397 = vmatprep.subr.bf16.mxu0 0
      %1398 = vmatpush1.bf16.msra.mxu0 %v1363
      %1399 = vmatprep.subr.bf16.mxu0 0
      %1400 = vmatpush1.bf16.msra.mxu0 %v1364
      %1401 = vmatprep.subr.bf16.mxu0 0
      %1402 = vmatpush1.bf16.msra.mxu0 %v1365
      %1403 = vmatprep.subr.bf16.mxu0 0
      %1404 = vmatpush1.bf16.msra.mxu0 %v1366
      %1405 = vmatprep.subr.bf16.mxu0 0
      %1406 = vmatpush1.bf16.msra.mxu0 %v1367
      %1407 = vmatprep.subr.bf16.mxu0 0
      %1408 = vmatpush1.bf16.msra.mxu0 %v1368
      %1409 = vmatprep.subr.bf16.mxu0 0
      %1410 = vmatpush1.bf16.msra.mxu0 %v1369
      %1411 = vmatprep.subr.bf16.mxu0 0
      %1412 = vmatpush1.bf16.msra.mxu0 %v1370
      %1413 = vmatprep.subr.bf16.mxu0 0
      %1414 = vmatpush1.bf16.msra.mxu0 %v1371
      %1415 = vmatprep.subr.bf16.mxu0 0
      %1416 = vmatpush1.bf16.msra.mxu0 %v1372
      %1417 = vmatprep.subr.bf16.mxu0 0
      %1418 = vmatpush1.bf16.msra.mxu0 %v1373
      %1419 = vmatprep.subr.bf16.mxu0 0
      %1420 = vmatpush1.bf16.msra.mxu0 %v1374
      %1421 = vmatprep.subr.bf16.mxu0 0
      %1422 = vmatpush1.bf16.msra.mxu0 %v1375
      %1423 = vmatprep.subr.bf16.mxu0 0
      %1424 = vmatpush1.bf16.msra.mxu0 %v1376
      %1425 = vmatprep.mubr.bf16.mxu0 %v377
      %1426 = vmatmul.mubr.bf16.gmra.mrb[0].mxu0 %v285
      %v1427 = vpop.f32.mrb[0].mxu0
      %v1428 = vadd.f32 %v1171, %v1427
      %v1429 = vpop.f32.mrb[0].mxu0
      %v1430 = vpop.f32.mrb[0].mxu0
      %v1431 = vadd.f32 %v1174, %v1430
      %v1432 = vpop.f32.mrb[0].mxu0
      %1433 = vmatprep.mubr.bf16.mxu0 %v389
      %1434 = vmatmul.mubr.bf16.gmra.mrb[0].mxu0 %v286
      %v1435 = vpop.f32.mrb[0].mxu0
      %v1436 = vadd.f32 %v1179, %v1435
      %v1437 = vpop.f32.mrb[0].mxu0
      %v1438 = vpop.f32.mrb[0].mxu0
      %v1439 = vadd.f32 %v1182, %v1438
      %v1440 = vpop.f32.mrb[0].mxu0
      %1441 = vmatprep.mubr.bf16.mxu0 %v401
      %1442 = vmatmul.mubr.bf16.gmra.mrb[0].mxu0 %v287
      %v1443 = vpop.f32.mrb[0].mxu0
      %v1444 = vadd.f32 %v1187, %v1443
      %v1445 = vpop.f32.mrb[0].mxu0
      %v1446 = vpop.f32.mrb[0].mxu0
      %v1447 = vadd.f32 %v1190, %v1446
      %v1448 = vpop.f32.mrb[0].mxu0
      %1449 = vmatprep.mubr.bf16.mxu0 %v413
      %1450 = vmatmul.mubr.bf16.gmra.mrb[0].mxu0 %v288
      %v1451 = vpop.f32.mrb[0].mxu0
      %v1452 = vadd.f32 %v1195, %v1451
      %v1453 = vpop.f32.mrb[0].mxu0
      %v1454 = vpop.f32.mrb[0].mxu0
      %v1455 = vadd.f32 %v1198, %v1454
      %v1456 = vpop.f32.mrb[0].mxu0
      %1457 = vmatprep.mubr.bf16.mxu0 %v425
      %1458 = vmatmul.mubr.bf16.gmra.mrb[0].mxu0 %v289
      %v1459 = vpop.f32.mrb[0].mxu0
      %v1460 = vadd.f32 %v1203, %v1459
      %v1461 = vpop.f32.mrb[0].mxu0
      %v1462 = vpop.f32.mrb[0].mxu0
      %v1463 = vadd.f32 %v1206, %v1462
      %v1464 = vpop.f32.mrb[0].mxu0
      %1465 = vmatprep.mubr.bf16.mxu0 %v437
      %1466 = vmatmul.mubr.bf16.gmra.mrb[0].mxu0 %v290
      %v1467 = vpop.f32.mrb[0].mxu0
      %v1468 = vadd.f32 %v1211, %v1467
      %v1469 = vpop.f32.mrb[0].mxu0
      %v1470 = vpop.f32.mrb[0].mxu0
      %v1471 = vadd.f32 %v1214, %v1470
      %v1472 = vpop.f32.mrb[0].mxu0
      %1473 = vmatprep.mubr.bf16.mxu0 %v449
      %1474 = vmatmul.mubr.bf16.gmra.mrb[0].mxu0 %v291
      %v1475 = vpop.f32.mrb[0].mxu0
      %v1476 = vadd.f32 %v1219, %v1475
      %v1477 = vpop.f32.mrb[0].mxu0
      %v1478 = vpop.f32.mrb[0].mxu0
      %v1479 = vadd.f32 %v1222, %v1478
      %v1480 = vpop.f32.mrb[0].mxu0
      %1481 = vmatprep.mubr.bf16.mxu0 %v461
      %1482 = vmatmul.mubr.bf16.gmra.mrb[0].mxu0 %v292
      %v1483 = vpop.f32.mrb[0].mxu0
      %v1484 = vadd.f32 %v1227, %v1483
      %v1485 = vpop.f32.mrb[0].mxu0
      %v1486 = vpop.f32.mrb[0].mxu0
      %v1487 = vadd.f32 %v1230, %v1486
      %v1488 = vpop.f32.mrb[0].mxu0
      %1489 = vmatprep.mubr.bf16.mxu0 %v473
      %1490 = vmatmul.mubr.bf16.gmra.mrb[0].mxu0 %v293
      %v1491 = vpop.f32.mrb[0].mxu0
      %v1492 = vadd.f32 %v1235, %v1491
      %v1493 = vpop.f32.mrb[0].mxu0
      %v1494 = vpop.f32.mrb[0].mxu0
      %v1495 = vadd.f32 %v1238, %v1494
      %v1496 = vpop.f32.mrb[0].mxu0
      %1497 = vmatprep.mubr.bf16.mxu0 %v485
      %1498 = vmatmul.mubr.bf16.gmra.mrb[0].mxu0 %v294
      %v1499 = vpop.f32.mrb[0].mxu0
      %v1500 = vadd.f32 %v1243, %v1499
      %v1501 = vpop.f32.mrb[0].mxu0
      %v1502 = vpop.f32.mrb[0].mxu0
      %v1503 = vadd.f32 %v1246, %v1502
      %v1504 = vpop.f32.mrb[0].mxu0
      %1505 = vmatprep.mubr.bf16.mxu0 %v497
      %1506 = vmatmul.mubr.bf16.gmra.mrb[0].mxu0 %v295
      %v1507 = vpop.f32.mrb[0].mxu0
      %v1508 = vadd.f32 %v1251, %v1507
      %v1509 = vpop.f32.mrb[0].mxu0
      %v1510 = vpop.f32.mrb[0].mxu0
      %v1511 = vadd.f32 %v1254, %v1510
      %v1512 = vpop.f32.mrb[0].mxu0
      %1513 = vmatprep.mubr.bf16.mxu0 %v509
      %1514 = vmatmul.mubr.bf16.gmra.mrb[0].mxu0 %v296
      %v1515 = vpop.f32.mrb[0].mxu0
      %v1516 = vadd.f32 %v1259, %v1515
      %v1517 = vpop.f32.mrb[0].mxu0
      %v1518 = vpop.f32.mrb[0].mxu0
      %v1519 = vadd.f32 %v1262, %v1518
      %v1520 = vpop.f32.mrb[0].mxu0
      %1521 = vmatprep.mubr.bf16.mxu0 %v521
      %1522 = vmatmul.mubr.bf16.gmra.mrb[0].mxu0 %v297
      %v1523 = vpop.f32.mrb[0].mxu0
      %v1524 = vadd.f32 %v1267, %v1523
      %v1525 = vpop.f32.mrb[0].mxu0
      %v1526 = vpop.f32.mrb[0].mxu0
      %v1527 = vadd.f32 %v1270, %v1526
      %v1528 = vpop.f32.mrb[0].mxu0
      %1529 = vmatprep.mubr.bf16.mxu0 %v533
      %1530 = vmatmul.mubr.bf16.gmra.mrb[0].mxu0 %v298
      %v1531 = vpop.f32.mrb[0].mxu0
      %v1532 = vadd.f32 %v1275, %v1531
      %v1533 = vpop.f32.mrb[0].mxu0
      %v1534 = vpop.f32.mrb[0].mxu0
      %v1535 = vadd.f32 %v1278, %v1534
      %v1536 = vpop.f32.mrb[0].mxu0
      %1537 = vmatprep.mubr.bf16.mxu0 %v545
      %1538 = vmatmul.mubr.bf16.gmra.mrb[0].mxu0 %v299
      %v1539 = vpop.f32.mrb[0].mxu0
      %v1540 = vadd.f32 %v1283, %v1539
      %v1541 = vpop.f32.mrb[0].mxu0
      %v1542 = vpop.f32.mrb[0].mxu0
      %v1543 = vadd.f32 %v1286, %v1542
      %v1544 = vpop.f32.mrb[0].mxu0
      %1545 = vmatprep.mubr.bf16.mxu0 %v557
      %1546 = vmatmul.mubr.bf16.gmra.mrb[0].mxu0 %v300
      %v1547 = vpop.f32.mrb[0].mxu0
      %v1548 = vadd.f32 %v1291, %v1547
      %v1549 = vpop.f32.mrb[0].mxu0
      %v1550 = vpop.f32.mrb[0].mxu0
      %v1551 = vadd.f32 %v1294, %v1550
      %v1552 = vpop.f32.mrb[0].mxu0
      %1553 = vdwg.mxu0
      %v1555 = vlaneseq
      %v1556 = vshrl.u32 %v1555, 7
      %v1557 = vsub.s32 0, %v1556
      %v1558 = vrot.slane %v172, %v1557
      %v1560 = vadd.f32 %v1428, %v1558
      %v1561 = vadd.f32 %v1431, %v1558
      %v1562 = vadd.f32 %v1436, %v1558
      %v1563 = vadd.f32 %v1439, %v1558
      %v1564 = vadd.f32 %v1444, %v1558
      %v1565 = vadd.f32 %v1447, %v1558
      %v1566 = vadd.f32 %v1452, %v1558
      %v1567 = vadd.f32 %v1455, %v1558
      %v1568 = vadd.f32 %v1460, %v1558
      %v1569 = vadd.f32 %v1463, %v1558
      %v1570 = vadd.f32 %v1468, %v1558
      %v1571 = vadd.f32 %v1471, %v1558
      %v1572 = vadd.f32 %v1476, %v1558
      %v1573 = vadd.f32 %v1479, %v1558
      %v1574 = vadd.f32 %v1484, %v1558
      %v1575 = vadd.f32 %v1487, %v1558
      %v1576 = vadd.f32 %v1492, %v1558
      %v1577 = vadd.f32 %v1495, %v1558
      %v1578 = vadd.f32 %v1500, %v1558
      %v1579 = vadd.f32 %v1503, %v1558
      %v1580 = vadd.f32 %v1508, %v1558
      %v1581 = vadd.f32 %v1511, %v1558
      %v1582 = vadd.f32 %v1516, %v1558
      %v1583 = vadd.f32 %v1519, %v1558
      %v1584 = vadd.f32 %v1524, %v1558
      %v1585 = vadd.f32 %v1527, %v1558
      %v1586 = vadd.f32 %v1532, %v1558
      %v1587 = vadd.f32 %v1535, %v1558
      %v1588 = vadd.f32 %v1540, %v1558
      %v1589 = vadd.f32 %v1543, %v1558
      %v1590 = vadd.f32 %v1548, %v1558
      %v1591 = vadd.f32 %v1551, %v1558
      %vm1592 = vcmp.gt.f32.partialorder %v1560, 0.0
      %vm1593 = vcmp.gt.f32.partialorder %v1561, 0.0
      %vm1594 = vcmp.gt.f32.partialorder %v1562, 0.0
      %vm1595 = vcmp.gt.f32.partialorder %v1563, 0.0
      %vm1596 = vcmp.gt.f32.partialorder %v1564, 0.0
      %vm1597 = vcmp.gt.f32.partialorder %v1565, 0.0
      %vm1598 = vcmp.gt.f32.partialorder %v1566, 0.0
      %vm1599 = vcmp.gt.f32.partialorder %v1567, 0.0
      %vm1600 = vcmp.gt.f32.partialorder %v1568, 0.0
      %vm1601 = vcmp.gt.f32.partialorder %v1569, 0.0
      %vm1602 = vcmp.gt.f32.partialorder %v1570, 0.0
      %vm1603 = vcmp.gt.f32.partialorder %v1571, 0.0
      %vm1604 = vcmp.gt.f32.partialorder %v1572, 0.0
      %vm1605 = vcmp.gt.f32.partialorder %v1573, 0.0
      %vm1606 = vcmp.gt.f32.partialorder %v1574, 0.0
      %vm1607 = vcmp.gt.f32.partialorder %v1575, 0.0
      %vm1608 = vcmp.gt.f32.partialorder %v1576, 0.0
      %vm1609 = vcmp.gt.f32.partialorder %v1577, 0.0
      %vm1610 = vcmp.gt.f32.partialorder %v1578, 0.0
      %vm1611 = vcmp.gt.f32.partialorder %v1579, 0.0
      %vm1612 = vcmp.gt.f32.partialorder %v1580, 0.0
      %vm1613 = vcmp.gt.f32.partialorder %v1581, 0.0
      %vm1614 = vcmp.gt.f32.partialorder %v1582, 0.0
      %vm1615 = vcmp.gt.f32.partialorder %v1583, 0.0
      %vm1616 = vcmp.gt.f32.partialorder %v1584, 0.0
      %vm1617 = vcmp.gt.f32.partialorder %v1585, 0.0
      %vm1618 = vcmp.gt.f32.partialorder %v1586, 0.0
      %vm1619 = vcmp.gt.f32.partialorder %v1587, 0.0
      %vm1620 = vcmp.gt.f32.partialorder %v1588, 0.0
      %vm1621 = vcmp.gt.f32.partialorder %v1589, 0.0
      %vm1622 = vcmp.gt.f32.partialorder %v1590, 0.0
      %vm1623 = vcmp.gt.f32.partialorder %v1591, 0.0
      %v1624 = vmul.f32 %v1560, 0.2
      %v1625 = vmul.f32 %v1561, 0.2
      %v1626 = vmul.f32 %v1562, 0.2
      %v1627 = vmul.f32 %v1563, 0.2
      %v1628 = vmul.f32 %v1564, 0.2
      %v1629 = vmul.f32 %v1565, 0.2
      %v1630 = vmul.f32 %v1566, 0.2
      %v1631 = vmul.f32 %v1567, 0.2
      %v1632 = vmul.f32 %v1568, 0.2
      %v1633 = vmul.f32 %v1569, 0.2
      %v1634 = vmul.f32 %v1570, 0.2
      %v1635 = vmul.f32 %v1571, 0.2
      %v1636 = vmul.f32 %v1572, 0.2
      %v1637 = vmul.f32 %v1573, 0.2
      %v1638 = vmul.f32 %v1574, 0.2
      %v1639 = vmul.f32 %v1575, 0.2
      %v1640 = vmul.f32 %v1576, 0.2
      %v1641 = vmul.f32 %v1577, 0.2
      %v1642 = vmul.f32 %v1578, 0.2
      %v1643 = vmul.f32 %v1579, 0.2
      %v1644 = vmul.f32 %v1580, 0.2
      %v1645 = vmul.f32 %v1581, 0.2
      %v1646 = vmul.f32 %v1582, 0.2
      %v1647 = vmul.f32 %v1583, 0.2
      %v1648 = vmul.f32 %v1584, 0.2
      %v1649 = vmul.f32 %v1585, 0.2
      %v1650 = vmul.f32 %v1586, 0.2
      %v1651 = vmul.f32 %v1587, 0.2
      %v1652 = vmul.f32 %v1588, 0.2
      %v1653 = vmul.f32 %v1589, 0.2
      %v1654 = vmul.f32 %v1590, 0.2
      %v1655 = vmul.f32 %v1591, 0.2
      %v1656 = vsel %vm1592, %v1560, %v1624
      %v1657 = vsel %vm1593, %v1561, %v1625
      %v1658 = vsel %vm1594, %v1562, %v1626
      %v1659 = vsel %vm1595, %v1563, %v1627
      %v1660 = vsel %vm1596, %v1564, %v1628
      %v1661 = vsel %vm1597, %v1565, %v1629
      %v1662 = vsel %vm1598, %v1566, %v1630
      %v1663 = vsel %vm1599, %v1567, %v1631
      %v1664 = vsel %vm1600, %v1568, %v1632
      %v1665 = vsel %vm1601, %v1569, %v1633
      %v1666 = vsel %vm1602, %v1570, %v1634
      %v1667 = vsel %vm1603, %v1571, %v1635
      %v1668 = vsel %vm1604, %v1572, %v1636
      %v1669 = vsel %vm1605, %v1573, %v1637
      %v1670 = vsel %vm1606, %v1574, %v1638
      %v1671 = vsel %vm1607, %v1575, %v1639
      %v1672 = vsel %vm1608, %v1576, %v1640
      %v1673 = vsel %vm1609, %v1577, %v1641
      %v1674 = vsel %vm1610, %v1578, %v1642
      %v1675 = vsel %vm1611, %v1579, %v1643
      %v1676 = vsel %vm1612, %v1580, %v1644
      %v1677 = vsel %vm1613, %v1581, %v1645
      %v1678 = vsel %vm1614, %v1582, %v1646
      %v1679 = vsel %vm1615, %v1583, %v1647
      %v1680 = vsel %vm1616, %v1584, %v1648
      %v1681 = vsel %vm1617, %v1585, %v1649
      %v1682 = vsel %vm1618, %v1586, %v1650
      %v1683 = vsel %vm1619, %v1587, %v1651
      %v1684 = vsel %vm1620, %v1588, %v1652
      %v1685 = vsel %vm1621, %v1589, %v1653
      %v1686 = vsel %vm1622, %v1590, %v1654
      %v1687 = vsel %vm1623, %v1591, %v1655
      %v1688 = vpack.c.bf16 %v1657, %v1656
      %v1689 = vpack.c.bf16 %v1659, %v1658
      %v1690 = vpack.c.bf16 %v1661, %v1660
      %v1691 = vpack.c.bf16 %v1663, %v1662
      %v1692 = vpack.c.bf16 %v1665, %v1664
      %v1693 = vpack.c.bf16 %v1667, %v1666
      %v1694 = vpack.c.bf16 %v1669, %v1668
      %v1695 = vpack.c.bf16 %v1671, %v1670
      %v1696 = vpack.c.bf16 %v1673, %v1672
      %v1697 = vpack.c.bf16 %v1675, %v1674
      %v1698 = vpack.c.bf16 %v1677, %v1676
      %v1699 = vpack.c.bf16 %v1679, %v1678
      %v1700 = vpack.c.bf16 %v1681, %v1680
      %v1701 = vpack.c.bf16 %v1683, %v1682
      %v1702 = vpack.c.bf16 %v1685, %v1684
      %v1703 = vpack.c.bf16 %v1687, %v1686
      %v1720 = vunpack.c.l.b16 %v1688
      %v1721 = vunpack.c.h.b16 %v1688
      %v1722 = vunpack.c.l.b16 %v1689
      %v1723 = vunpack.c.h.b16 %v1689
      %v1724 = vunpack.c.l.b16 %v1690
      %v1725 = vunpack.c.h.b16 %v1690
      %v1726 = vunpack.c.l.b16 %v1691
      %v1727 = vunpack.c.h.b16 %v1691
      %v1728 = vunpack.c.l.b16 %v1692
      %v1729 = vunpack.c.h.b16 %v1692
      %v1730 = vunpack.c.l.b16 %v1693
      %v1731 = vunpack.c.h.b16 %v1693
      %v1732 = vunpack.c.l.b16 %v1694
      %v1733 = vunpack.c.h.b16 %v1694
      %v1734 = vunpack.c.l.b16 %v1695
      %v1735 = vunpack.c.h.b16 %v1695
      %v1736 = vunpack.c.l.b16 %v1696
      %v1737 = vunpack.c.h.b16 %v1696
      %v1738 = vunpack.c.l.b16 %v1697
      %v1739 = vunpack.c.h.b16 %v1697
      %v1740 = vunpack.c.l.b16 %v1698
      %v1741 = vunpack.c.h.b16 %v1698
      %v1742 = vunpack.c.l.b16 %v1699
      %v1743 = vunpack.c.h.b16 %v1699
      %v1744 = vunpack.c.l.b16 %v1700
      %v1745 = vunpack.c.h.b16 %v1700
      %v1746 = vunpack.c.l.b16 %v1701
      %v1747 = vunpack.c.h.b16 %v1701
      %v1748 = vunpack.c.l.b16 %v1702
      %v1749 = vunpack.c.h.b16 %v1702
      %v1750 = vunpack.c.l.b16 %v1703
      %v1751 = vunpack.c.h.b16 %v1703
      %v1752 = vpack.c.b16 %v1720, %v1720
      %v1753 = vpack.c.b16 %v1721, %v1721
      %v1754 = vpack.c.b16 %v1722, %v1722
      %v1755 = vpack.c.b16 %v1723, %v1723
      %v1756 = vpack.c.b16 %v1724, %v1724
      %v1757 = vpack.c.b16 %v1725, %v1725
      %v1758 = vpack.c.b16 %v1726, %v1726
      %v1759 = vpack.c.b16 %v1727, %v1727
      %v1760 = vpack.c.b16 %v1728, %v1728
      %v1761 = vpack.c.b16 %v1729, %v1729
      %v1762 = vpack.c.b16 %v1730, %v1730
      %v1763 = vpack.c.b16 %v1731, %v1731
      %v1764 = vpack.c.b16 %v1732, %v1732
      %v1765 = vpack.c.b16 %v1733, %v1733
      %v1766 = vpack.c.b16 %v1734, %v1734
      %v1767 = vpack.c.b16 %v1735, %v1735
      %v1768 = vpack.c.b16 %v1736, %v1736
      %v1769 = vpack.c.b16 %v1737, %v1737
      %v1770 = vpack.c.b16 %v1738, %v1738
      %v1771 = vpack.c.b16 %v1739, %v1739
      %v1772 = vpack.c.b16 %v1740, %v1740
      %v1773 = vpack.c.b16 %v1741, %v1741
      %v1774 = vpack.c.b16 %v1742, %v1742
      %v1775 = vpack.c.b16 %v1743, %v1743
      %v1776 = vpack.c.b16 %v1744, %v1744
      %v1777 = vpack.c.b16 %v1745, %v1745
      %v1778 = vpack.c.b16 %v1746, %v1746
      %v1779 = vpack.c.b16 %v1747, %v1747
      %v1780 = vpack.c.b16 %v1748, %v1748
      %v1781 = vpack.c.b16 %v1749, %v1749
      %v1782 = vpack.c.b16 %v1750, %v1750
      %v1783 = vpack.c.b16 %v1751, %v1751
      %vm1816 = vcmask 257024
      %1817 = vst.msk [vmem:[%s170] sm:$0xf] %vm1816, %v1752
      %1818 = vst.msk [vmem:[%s170 + $0x4] sm:$0xf] %vm1816, %v1753
      %1819 = vst.msk [vmem:[%s170 + $0x8] sm:$0xf] %vm1816, %v1754
      %1820 = vst.msk [vmem:[%s170 + $0xc] sm:$0xf] %vm1816, %v1755
      %1821 = vst.msk [vmem:[%s170 + $0x10] sm:$0xf] %vm1816, %v1756
      %1822 = vst.msk [vmem:[%s170 + $0x14] sm:$0xf] %vm1816, %v1757
      %1823 = vst.msk [vmem:[%s170 + $0x18] sm:$0xf] %vm1816, %v1758
      %1824 = vst.msk [vmem:[%s170 + $0x1c] sm:$0xf] %vm1816, %v1759
      %1825 = vst.msk [vmem:[%s170 + $0x20] sm:$0xf] %vm1816, %v1760
      %1826 = vst.msk [vmem:[%s170 + $0x24] sm:$0xf] %vm1816, %v1761
      %1827 = vst.msk [vmem:[%s170 + $0x28] sm:$0xf] %vm1816, %v1762
      %1828 = vst.msk [vmem:[%s170 + $0x2c] sm:$0xf] %vm1816, %v1763
      %1829 = vst.msk [vmem:[%s170 + $0x30] sm:$0xf] %vm1816, %v1764
      %1830 = vst.msk [vmem:[%s170 + $0x34] sm:$0xf] %vm1816, %v1765
      %1831 = vst.msk [vmem:[%s170 + $0x38] sm:$0xf] %vm1816, %v1766
      %1832 = vst.msk [vmem:[%s170 + $0x3c] sm:$0xf] %vm1816, %v1767
      %1833 = vst.msk [vmem:[%s170 + $0x40] sm:$0xf] %vm1816, %v1768
      %1834 = vst.msk [vmem:[%s170 + $0x44] sm:$0xf] %vm1816, %v1769
      %1835 = vst.msk [vmem:[%s170 + $0x48] sm:$0xf] %vm1816, %v1770
      %1836 = vst.msk [vmem:[%s170 + $0x4c] sm:$0xf] %vm1816, %v1771
      %1837 = vst.msk [vmem:[%s170 + $0x50] sm:$0xf] %vm1816, %v1772
      %1838 = vst.msk [vmem:[%s170 + $0x54] sm:$0xf] %vm1816, %v1773
      %1839 = vst.msk [vmem:[%s170 + $0x58] sm:$0xf] %vm1816, %v1774
      %1840 = vst.msk [vmem:[%s170 + $0x5c] sm:$0xf] %vm1816, %v1775
      %1841 = vst.msk [vmem:[%s170 + $0x60] sm:$0xf] %vm1816, %v1776
      %1842 = vst.msk [vmem:[%s170 + $0x64] sm:$0xf] %vm1816, %v1777
      %1843 = vst.msk [vmem:[%s170 + $0x68] sm:$0xf] %vm1816, %v1778
      %1844 = vst.msk [vmem:[%s170 + $0x6c] sm:$0xf] %vm1816, %v1779
      %1845 = vst.msk [vmem:[%s170 + $0x70] sm:$0xf] %vm1816, %v1780
      %1846 = vst.msk [vmem:[%s170 + $0x74] sm:$0xf] %vm1816, %v1781
      %1847 = vst.msk [vmem:[%s170 + $0x78] sm:$0xf] %vm1816, %v1782
      %1848 = vst.msk [vmem:[%s170 + $0x7c] sm:$0xf] %vm1816, %v1783
      %p1849 = scmp.lt.s32.totalorder %s14, 1
      %s1850 = scalar_select %p1849, %s14, 1
      %s1851 = smul.addr %s1850, 32
      %s1852 = smul.addr %s1851, 4
      %s1853 = scalar_lea.vmem %s3, %s1852
      // Predicated region
      $region33: #{encoder_forward.6} parent=31 // pred_check
        %p1854 = pneg %p100
      $region34: #{encoder_forward.6} parent=31 // pred_check_branch
        %1856 = sbr.rel (%p1854) target = $region36
      $region35: #{encoder_forward.6} parent=31 // pred_region
        _
      $region36: #{encoder_forward.6} parent=31 // pred_fallthru
        _
    $region32: #{encoder_forward.6} parent=5 // pred_fallthru
      _
    %p1857 = scmp.le.s32.totalorder 2, %s9
    // Predicated region
    $region37: #{encoder_forward.6} parent=5 // pred_check
      %p1858 = pneg %p1857
    $region38: #{encoder_forward.6} parent=5 // pred_check_branch
      %1860 = sbr.rel (%p1858) target = $region40
    $region39: #{encoder_forward.6} parent=5 // pred_region
      %s1861 = ssub.s32 %s9, 2
      // Predicated region
      $region41: #{encoder_forward.6} parent=39 // pred_check
        %p1862 = pneg %p106
      $region42: #{encoder_forward.6} parent=39 // pred_check_branch
        %1864 = sbr.rel (%p1862) target = $region44
      $region43: #{encoder_forward.6} parent=39 // pred_region
        %p1865 = scmp.lt.s32.totalorder %s15, 1
        %s1866 = scalar_select %p1865, %s15, 1
        %s1867 = smul.addr %s1866, 32
        %s1868 = smul.addr %s1867, 4
        %s1869 = scalar_lea.vmem %s3, %s1868
      $region44: #{encoder_forward.6} parent=39 // pred_fallthru
        _
    $region40: #{encoder_forward.6} parent=5 // pred_fallthru
      _
  $region6: #{encoder_forward.6} parent=0 // loop_footer
    %s13 = sadd.s32 1, %s9
  $region7: #{encoder_forward.6} parent=0 // loop_footer_branch
    %8 = sbr.rel target = $region3
  $region8: #{encoder_forward.6} parent=0 // loop_exit
    _

// kernel: encoder_forward.7
$region0: #{encoder_forward.7}
  #allocation0 [shape = 'u32[]', space=smem, size = 0x4, offset = 0x4, fixed_abs, tag = 'smem constant byte address 0x4 - core index']
  #allocation1 [shape = 'u32[144,128]{1,0:T(1,128)}', space=vmem, size = 0x12000, scoped, tag = 'internal scratch']
  %s0 = inlined_call_operand.vmem [shape: bf16[2,9,9,128], index: 0, kind: input, shape index: {}]
  %s1 = inlined_call_operand.vmem [shape: bf16[2,256,64], index: 1, kind: input, shape index: {}]
  %s2 = inlined_call_operand.vmem [shape: f32[1,64], index: 2, kind: input, shape index: {}]
  %s3 = inlined_call_operand.vmem [shape: bf16[2,8,8,64], index: 3, kind: output, shape index: {}]
  %s4 = sld [smem:[#allocation0]]
  $region45: #{encoder_forward.7} parent=0
    _
  %s6 = ssub.s32 1, %s4
  %s7 = scalar_select 0, %s6, %s4
  loop: start=0, step=1, limit=4
  $region2: #{encoder_forward.7} parent=0 // loop_pre_header
    _
  $region3: #{encoder_forward.7} parent=0 // loop_header
    %s9 = sphi 0, %s13
    %p10 = scmp.ge.s32.totalorder %s9, 4
    %s19 = sphi 0, %s21
    %s22 = sphi 0, %s19
    %s23 = sphi 0, %s22
    %s39 = sphi 0, %s23
    %s43 = sphi 0, %s43
    %s45 = sphi 0, %s43
    %s46 = sphi 0, %s45
    %s60 = sphi 0, %s46
    %s64 = sphi 0, %s64
    %s66 = sphi 0, %s64
    %s67 = sphi 0, %s66
    %s81 = sphi 0, %s67
    %s87 = sphi 0, %s89
    %s90 = sphi 0, %s87
    %s91 = sphi 0, %s90
    %s107 = sphi 0, %s91
  $region4: #{encoder_forward.7} parent=0 // loop_header_branch
    %12 = sbr.rel (%p10) target = $region8
  $region5: #{encoder_forward.7} parent=0 // loop_body
    %s14 = ssub.s32 %s9, 1
    %s15 = ssub.s32 %s9, 2
    %s16 = sadd.s32 %s9, 1
    %s17 = ssub.s32 %s9, %s16
    %p18 = scmp.eq.s32.totalorder %s17, 0
    %s20 = sadd.s32 %s19, 1
    %s21 = scalar_select %p18, %s19, %s20
    %p24 = pneg %p18
    %p25 = scmp.eq.s32.totalorder %s9, 1
    %p26 = por %p24, %p25
    %p27 = scmp.ne.s32.totalorder %s19, %s22
    %p28 = scmp.eq.s32.totalorder %s9, 0
    %p29 = por %p27, %p28
    %p30 = scmp.ne.s32.totalorder %s19, %s22
    %p31 = scmp.eq.s32.totalorder %s14, 1
    %p32 = por %p30, %p31
    %p33 = scmp.ne.s32.totalorder %s22, %s23
    %p34 = scmp.eq.s32.totalorder %s14, 0
    %p35 = por %p33, %p34
    %p36 = scmp.ne.s32.totalorder %s22, %s23
    %p37 = scmp.eq.s32.totalorder %s15, 1
    %p38 = por %p36, %p37
    %p40 = scmp.ne.s32.totalorder %s23, %s39
    %p41 = scmp.eq.s32.totalorder %s15, 0
    %p42 = por %p40, %p41
    %s44 = sadd.s32 %s43, 1
    %p47 = scmp.eq.s32.totalorder %s9, 1
    %p48 = scmp.ne.s32.totalorder %s43, %s45
    %p49 = scmp.eq.s32.totalorder %s9, 0
    %p50 = por %p48, %p49
    %p51 = scmp.ne.s32.totalorder %s43, %s45
    %p52 = scmp.eq.s32.totalorder %s14, 1
    %p53 = por %p51, %p52
    %p54 = scmp.ne.s32.totalorder %s45, %s46
    %p55 = scmp.eq.s32.totalorder %s14, 0
    %p56 = por %p54, %p55
    %p57 = scmp.ne.s32.totalorder %s45, %s46
    %p58 = scmp.eq.s32.totalorder %s15, 1
    %p59 = por %p57, %p58
    %p61 = scmp.ne.s32.totalorder %s46, %s60
    %p62 = scmp.eq.s32.totalorder %s15, 0
    %p63 = por %p61, %p62
    %s65 = sadd.s32 %s64, 1
    %p68 = scmp.eq.s32.totalorder %s9, 1
    %p69 = scmp.ne.s32.totalorder %s64, %s66
    %p70 = scmp.eq.s32.totalorder %s9, 0
    %p71 = por %p69, %p70
    %p72 = scmp.ne.s32.totalorder %s64, %s66
    %p73 = scmp.eq.s32.totalorder %s14, 1
    %p74 = por %p72, %p73
    %p75 = scmp.ne.s32.totalorder %s66, %s67
    %p76 = scmp.eq.s32.totalorder %s14, 0
    %p77 = por %p75, %p76
    %p78 = scmp.ne.s32.totalorder %s66, %s67
    %p79 = scmp.eq.s32.totalorder %s15, 1
    %p80 = por %p78, %p79
    %p82 = scmp.ne.s32.totalorder %s67, %s81
    %p83 = scmp.eq.s32.totalorder %s15, 0
    %p84 = por %p82, %p83
    %s85 = ssub.s32 %s9, %s16
    %p86 = scmp.eq.s32.totalorder %s85, 0
    %s88 = sadd.s32 %s87, 1
    %s89 = scalar_select %p86, %s87, %s88
    %p92 = pneg %p86
    %p93 = scmp.eq.s32.totalorder %s9, 1
    %p94 = por %p92, %p93
    %p95 = scmp.ne.s32.totalorder %s87, %s90
    %p96 = scmp.eq.s32.totalorder %s9, 0
    %p97 = por %p95, %p96
    %p98 = scmp.ne.s32.totalorder %s87, %s90
    %p99 = scmp.eq.s32.totalorder %s14, 1
    %p100 = por %p98, %p99
    %p101 = scmp.ne.s32.totalorder %s90, %s91
    %p102 = scmp.eq.s32.totalorder %s14, 0
    %p103 = por %p101, %p102
    %p104 = scmp.ne.s32.totalorder %s90, %s91
    %p105 = scmp.eq.s32.totalorder %s15, 1
    %p106 = por %p104, %p105
    %p108 = scmp.ne.s32.totalorder %s91, %s107
    %p109 = scmp.eq.s32.totalorder %s15, 0
    %p110 = por %p108, %p109
    %p111 = scmp.le.s32.totalorder 1, %s9
    %p112 = scmp.lt.s32.totalorder %s9, 3
    %p113 = pnand %p111, %p112
    %p114 = pneg %p113
    // Predicated region
    $region9: #{encoder_forward.7} parent=5 // pred_check
      _
    $region10: #{encoder_forward.7} parent=5 // pred_check_branch
      %116 = sbr.rel (%p113) target = $region12
    $region11: #{encoder_forward.7} parent=5 // pred_region
      %s117 = ssub.s32 %s9, 1
      // Predicated region
      $region13: #{encoder_forward.7} parent=11 // pred_check
        %p118 = pneg %p56
      $region14: #{encoder_forward.7} parent=11 // pred_check_branch
        %120 = sbr.rel (%p118) target = $region16
      $region15: #{encoder_forward.7} parent=11 // pred_region
        _
      $region16: #{encoder_forward.7} parent=11 // pred_fallthru
        _
      // Predicated region
      $region17: #{encoder_forward.7} parent=11 // pred_check
        %p121 = pneg %p77
      $region18: #{encoder_forward.7} parent=11 // pred_check_branch
        %123 = sbr.rel (%p121) target = $region20
      $region19: #{encoder_forward.7} parent=11 // pred_region
        _
      $region20: #{encoder_forward.7} parent=11 // pred_fallthru
        _
    $region12: #{encoder_forward.7} parent=5 // pred_fallthru
      _
    %p124 = scmp.lt.s32.totalorder %s9, 2
    // Predicated region
    $region21: #{encoder_forward.7} parent=5 // pred_check
      %p125 = pneg %p124
    $region22: #{encoder_forward.7} parent=5 // pred_check_branch
      %127 = sbr.rel (%p125) target = $region24
    $region23: #{encoder_forward.7} parent=5 // pred_region
      // Predicated region
      $region25: #{encoder_forward.7} parent=23 // pred_check
        %p128 = pneg %p29
      $region26: #{encoder_forward.7} parent=23 // pred_check_branch
        %130 = sbr.rel (%p128) target = $region28
      $region27: #{encoder_forward.7} parent=23 // pred_region
        %p131 = scmp.lt.s32.totalorder %s9, 1
        %s132 = scalar_select %p131, %s9, 1
        %s133 = smul.addr %s132, 18
        %s134 = smul.addr %s133, 4
        %s135 = scalar_lea.vmem %s0, %s134
      $region28: #{encoder_forward.7} parent=23 // pred_fallthru
        _
    $region24: #{encoder_forward.7} parent=5 // pred_fallthru
      _
    %p136 = scmp.le.s32.totalorder 1, %s9
    %p137 = scmp.lt.s32.totalorder %s9, 3
    %p138 = pnand %p136, %p137
    %p139 = pneg %p138
    // Predicated region
    $region29: #{encoder_forward.7} parent=5 // pred_check
      _
    $region30: #{encoder_forward.7} parent=5 // pred_check_branch
      %141 = sbr.rel (%p138) target = $region32
    $region31: #{encoder_forward.7} parent=5 // pred_region
      %s142 = ssub.s32 %s9, 1
      %p143 = scmp.lt.s32.totalorder %s14, 1
      %s144 = scalar_select %p143, %s14, 1
      %s145 = smul.addr %s144, 18
      %s146 = smul.addr %s145, 4
      %s147 = scalar_lea.vmem %s0, %s146
      %p148 = pneg %p35
      %p149 = pneg %p32
      %p150 = pneg %p56
      %p151 = pneg %p53
      %p152 = pneg %p77
      %p153 = pneg %p74
      %p154 = pneg %p103
      %p155 = pneg %p100
      %p156 = scmp.lt.s32.totalorder %s14, 1
      %s157 = scalar_select %p156, %s14, 1
      %s158 = smul.addr %s157, 8
      %s159 = smul.addr %s158, 4
      %s160 = scalar_lea.vmem %s3, %s159
      %p161 = scmp.lt.s32.totalorder %s14, 1
      %s162 = scalar_select %p161, %s14, 1
      %s163 = smul.addr %s162, 18
      %s164 = smul.addr %s163, 4
      %s165 = scalar_lea.vmem %s0, %s164
      %p166 = scmp.lt.s32.totalorder %s14, 1
      %s167 = scalar_select %p166, %s14, 1
      %s168 = smul.addr %s167, 8
      %s169 = smul.addr %s168, 4
      %s170 = scalar_lea.vmem %s3, %s169
      %v172 = vld [vmem:[%s2] sm:$0x1]
      %v173 = vld [vmem:[%s165] sm:$0xf]
      %v174 = vld [vmem:[%s165 + $0x4] sm:$0x1]
      %v175 = vld [vmem:[%s165 + $0x8] sm:$0xf]
      %v176 = vld [vmem:[%s165 + $0xc] sm:$0x1]
      %v177 = vld [vmem:[%s165 + $0x10] sm:$0xf]
      %v178 = vld [vmem:[%s165 + $0x14] sm:$0x1]
      %v179 = vld [vmem:[%s165 + $0x18] sm:$0xf]
      %v180 = vld [vmem:[%s165 + $0x1c] sm:$0x1]
      %v181 = vld [vmem:[%s165 + $0x20] sm:$0xf]
      %v182 = vld [vmem:[%s165 + $0x24] sm:$0x1]
      %v183 = vld [vmem:[%s165 + $0x28] sm:$0xf]
      %v184 = vld [vmem:[%s165 + $0x2c] sm:$0x1]
      %v185 = vld [vmem:[%s165 + $0x30] sm:$0xf]
      %v186 = vld [vmem:[%s165 + $0x34] sm:$0x1]
      %v187 = vld [vmem:[%s165 + $0x38] sm:$0xf]
      %v188 = vld [vmem:[%s165 + $0x3c] sm:$0x1]
      %v205 = vunpack.c.l.b16 %v173
      %v206 = vunpack.c.l.b16 %v174
      %v207 = vunpack.c.l.b16 %v175
      %v208 = vunpack.c.l.b16 %v176
      %v209 = vunpack.c.l.b16 %v177
      %v210 = vunpack.c.l.b16 %v178
      %v211 = vunpack.c.l.b16 %v179
      %v212 = vunpack.c.l.b16 %v180
      %v213 = vunpack.c.l.b16 %v181
      %v214 = vunpack.c.l.b16 %v182
      %v215 = vunpack.c.l.b16 %v183
      %v216 = vunpack.c.l.b16 %v184
      %v217 = vunpack.c.l.b16 %v185
      %v218 = vunpack.c.l.b16 %v186
      %v219 = vunpack.c.l.b16 %v187
      %v220 = vunpack.c.l.b16 %v188
      %v221 = vpack.c.b16 %v206, %v205
      %v222 = vpack.c.b16 %v208, %v207
      %v223 = vpack.c.b16 %v210, %v209
      %v224 = vpack.c.b16 %v212, %v211
      %v225 = vpack.c.b16 %v214, %v213
      %v226 = vpack.c.b16 %v216, %v215
      %v227 = vpack.c.b16 %v218, %v217
      %v228 = vpack.c.b16 %v220, %v219
      %v230 = vshrl.u32 %v221, 16
      %v232 = vshll.u32 %v221, 16
      %v234 = vrot.slane %v232, 1
      %v235 = vor.u32 %v230, %v234
      %v237 = vshrl.u32 %v222, 16
      %v239 = vshll.u32 %v222, 16
      %v241 = vrot.slane %v239, 1
      %v242 = vor.u32 %v237, %v241
      %v244 = vshrl.u32 %v223, 16
      %v246 = vshll.u32 %v223, 16
      %v248 = vrot.slane %v246, 1
      %v249 = vor.u32 %v244, %v248
      %v251 = vshrl.u32 %v224, 16
      %v253 = vshll.u32 %v224, 16
      %v255 = vrot.slane %v253, 1
      %v256 = vor.u32 %v251, %v255
      %v258 = vshrl.u32 %v225, 16
      %v260 = vshll.u32 %v225, 16
      %v262 = vrot.slane %v260, 1
      %v263 = vor.u32 %v258, %v262
      %v265 = vshrl.u32 %v226, 16
      %v267 = vshll.u32 %v226, 16
      %v269 = vrot.slane %v267, 1
      %v270 = vor.u32 %v265, %v269
      %v272 = vshrl.u32 %v227, 16
      %v274 = vshll.u32 %v227, 16
      %v276 = vrot.slane %v274, 1
      %v277 = vor.u32 %v272, %v276
      %v279 = vshrl.u32 %v228, 16
      %v281 = vshll.u32 %v228, 16
      %v283 = vrot.slane %v281, 1
      %v284 = vor.u32 %v279, %v283
      %v285 = vunpack.c.l.b16 %v235
      %v286 = vunpack.c.l.b16 %v242
      %v287 = vunpack.c.l.b16 %v249
      %v288 = vunpack.c.l.b16 %v256
      %v289 = vunpack.c.l.b16 %v263
      %v290 = vunpack.c.l.b16 %v270
      %v291 = vunpack.c.l.b16 %v277
      %v292 = vunpack.c.l.b16 %v284
      %v293 = vld [vmem:[%s1] sm:$0xf]
      %v294 = vld [vmem:[%s1 + $0x4] sm:$0xf]
      %v295 = vld [vmem:[%s1 + $0x8] sm:$0xf]
      %v296 = vld [vmem:[%s1 + $0xc] sm:$0xf]
      %v297 = vld [vmem:[%s1 + $0x10] sm:$0xf]
      %v298 = vld [vmem:[%s1 + $0x14] sm:$0xf]
      %v299 = vld [vmem:[%s1 + $0x18] sm:$0xf]
      %v300 = vld [vmem:[%s1 + $0x1c] sm:$0xf]
      %v301 = vld [vmem:[%s1 + $0x20] sm:$0xf]
      %v302 = vld [vmem:[%s1 + $0x24] sm:$0xf]
      %v303 = vld [vmem:[%s1 + $0x28] sm:$0xf]
      %v304 = vld [vmem:[%s1 + $0x2c] sm:$0xf]
      %v305 = vld [vmem:[%s1 + $0x30] sm:$0xf]
      %v306 = vld [vmem:[%s1 + $0x34] sm:$0xf]
      %v307 = vld [vmem:[%s1 + $0x38] sm:$0xf]
      %v308 = vld [vmem:[%s1 + $0x3c] sm:$0xf]
      %v309 = vld [vmem:[%s1 + $0x40] sm:$0xf]
      %v310 = vld [vmem:[%s1 + $0x44] sm:$0xf]
      %v311 = vld [vmem:[%s1 + $0x48] sm:$0xf]
      %v312 = vld [vmem:[%s1 + $0x4c] sm:$0xf]
      %v313 = vld [vmem:[%s1 + $0x50] sm:$0xf]
      %v314 = vld [vmem:[%s1 + $0x54] sm:$0xf]
      %v315 = vld [vmem:[%s1 + $0x58] sm:$0xf]
      %v316 = vld [vmem:[%s1 + $0x5c] sm:$0xf]
      %v317 = vld [vmem:[%s1 + $0x60] sm:$0xf]
      %v318 = vld [vmem:[%s1 + $0x64] sm:$0xf]
      %v319 = vld [vmem:[%s1 + $0x68] sm:$0xf]
      %v320 = vld [vmem:[%s1 + $0x6c] sm:$0xf]
      %v321 = vld [vmem:[%s1 + $0x70] sm:$0xf]
      %v322 = vld [vmem:[%s1 + $0x74] sm:$0xf]
      %v323 = vld [vmem:[%s1 + $0x78] sm:$0xf]
      %v324 = vld [vmem:[%s1 + $0x7c] sm:$0xf]
      %s325 = scalar_lea.vmem %s165, 8
      %v326 = vld [vmem:[%s325] sm:$0xf]
      %v327 = vld [vmem:[%s325 + $0x4] sm:$0x1]
      %v328 = vld [vmem:[%s325 + $0x8] sm:$0xf]
      %v329 = vld [vmem:[%s325 + $0xc] sm:$0x1]
      %v330 = vld [vmem:[%s325 + $0x10] sm:$0xf]
      %v331 = vld [vmem:[%s325 + $0x14] sm:$0x1]
      %v332 = vld [vmem:[%s325 + $0x18] sm:$0xf]
      %v333 = vld [vmem:[%s325 + $0x1c] sm:$0x1]
      %v334 = vld [vmem:[%s325 + $0x20] sm:$0xf]
      %v335 = vld [vmem:[%s325 + $0x24] sm:$0x1]
      %v336 = vld [vmem:[%s325 + $0x28] sm:$0xf]
      %v337 = vld [vmem:[%s325 + $0x2c] sm:$0x1]
      %v338 = vld [vmem:[%s325 + $0x30] sm:$0xf]
      %v339 = vld [vmem:[%s325 + $0x34] sm:$0x1]
      %v340 = vld [vmem:[%s325 + $0x38] sm:$0xf]
      %v341 = vld [vmem:[%s325 + $0x3c] sm:$0x1]
      %v358 = vunpack.c.l.b16 %v326
      %v359 = vunpack.c.l.b16 %v327
      %v360 = vunpack.c.l.b16 %v328
      %v361 = vunpack.c.l.b16 %v329
      %v362 = vunpack.c.l.b16 %v330
      %v363 = vunpack.c.l.b16 %v331
      %v364 = vunpack.c.l.b16 %v332
      %v365 = vunpack.c.l.b16 %v333
      %v366 = vunpack.c.l.b16 %v334
      %v367 = vunpack.c.l.b16 %v335
      %v368 = vunpack.c.l.b16 %v336
      %v369 = vunpack.c.l.b16 %v337
      %v370 = vunpack.c.l.b16 %v338
      %v371 = vunpack.c.l.b16 %v339
      %v372 = vunpack.c.l.b16 %v340
      %v373 = vunpack.c.l.b16 %v341
      %v374 = vpack.c.b16 %v359, %v358
      %v375 = vpack.c.b16 %v361, %v360
      %v376 = vpack.c.b16 %v363, %v362
      %v377 = vpack.c.b16 %v365, %v364
      %v378 = vpack.c.b16 %v367, %v366
      %v379 = vpack.c.b16 %v369, %v368
      %v380 = vpack.c.b16 %v371, %v370
      %v381 = vpack.c.b16 %v373, %v372
      %v383 = vshrl.u32 %v374, 16
      %v385 = vshll.u32 %v374, 16
      %v387 = vrot.slane %v385, 1
      %v388 = vor.u32 %v383, %v387
      %v390 = vshrl.u32 %v375, 16
      %v392 = vshll.u32 %v375, 16
      %v394 = vrot.slane %v392, 1
      %v395 = vor.u32 %v390, %v394
      %v397 = vshrl.u32 %v376, 16
      %v399 = vshll.u32 %v376, 16
      %v401 = vrot.slane %v399, 1
      %v402 = vor.u32 %v397, %v401
      %v404 = vshrl.u32 %v377, 16
      %v406 = vshll.u32 %v377, 16
      %v408 = vrot.slane %v406, 1
      %v409 = vor.u32 %v404, %v408
      %v411 = vshrl.u32 %v378, 16
      %v413 = vshll.u32 %v378, 16
      %v415 = vrot.slane %v413, 1
      %v416 = vor.u32 %v411, %v415
      %v418 = vshrl.u32 %v379, 16
      %v420 = vshll.u32 %v379, 16
      %v422 = vrot.slane %v420, 1
      %v423 = vor.u32 %v418, %v422
      %v425 = vshrl.u32 %v380, 16
      %v427 = vshll.u32 %v380, 16
      %v429 = vrot.slane %v427, 1
      %v430 = vor.u32 %v425, %v429
      %v432 = vshrl.u32 %v381, 16
      %v434 = vshll.u32 %v381, 16
      %v436 = vrot.slane %v434, 1
      %v437 = vor.u32 %v432, %v436
      %v438 = vunpack.c.l.b16 %v388
      %v439 = vunpack.c.l.b16 %v395
      %v440 = vunpack.c.l.b16 %v402
      %v441 = vunpack.c.l.b16 %v409
      %v442 = vunpack.c.l.b16 %v416
      %v443 = vunpack.c.l.b16 %v423
      %v444 = vunpack.c.l.b16 %v430
      %v445 = vunpack.c.l.b16 %v437
      %s446 = scalar_lea.vmem %s1, 128
      %v447 = vld [vmem:[%s446] sm:$0xf]
      %v448 = vld [vmem:[%s446 + $0x4] sm:$0xf]
      %v449 = vld [vmem:[%s446 + $0x8] sm:$0xf]
      %v450 = vld [vmem:[%s446 + $0xc] sm:$0xf]
      %v451 = vld [vmem:[%s446 + $0x10] sm:$0xf]
      %v452 = vld [vmem:[%s446 + $0x14] sm:$0xf]
      %v453 = vld [vmem:[%s446 + $0x18] sm:$0xf]
      %v454 = vld [vmem:[%s446 + $0x1c] sm:$0xf]
      %v455 = vld [vmem:[%s446 + $0x20] sm:$0xf]
      %v456 = vld [vmem:[%s446 + $0x24] sm:$0xf]
      %v457 = vld [vmem:[%s446 + $0x28] sm:$0xf]
      %v458 = vld [vmem:[%s446 + $0x2c] sm:$0xf]
      %v459 = vld [vmem:[%s446 + $0x30] sm:$0xf]
      %v460 = vld [vmem:[%s446 + $0x34] sm:$0xf]
      %v461 = vld [vmem:[%s446 + $0x38] sm:$0xf]
      %v462 = vld [vmem:[%s446 + $0x3c] sm:$0xf]
      %v463 = vld [vmem:[%s446 + $0x40] sm:$0xf]
      %v464 = vld [vmem:[%s446 + $0x44] sm:$0xf]
      %v465 = vld [vmem:[%s446 + $0x48] sm:$0xf]
      %v466 = vld [vmem:[%s446 + $0x4c] sm:$0xf]
      %v467 = vld [vmem:[%s446 + $0x50] sm:$0xf]
      %v468 = vld [vmem:[%s446 + $0x54] sm:$0xf]
      %v469 = vld [vmem:[%s446 + $0x58] sm:$0xf]
      %v470 = vld [vmem:[%s446 + $0x5c] sm:$0xf]
      %v471 = vld [vmem:[%s446 + $0x60] sm:$0xf]
      %v472 = vld [vmem:[%s446 + $0x64] sm:$0xf]
      %v473 = vld [vmem:[%s446 + $0x68] sm:$0xf]
      %v474 = vld [vmem:[%s446 + $0x6c] sm:$0xf]
      %v475 = vld [vmem:[%s446 + $0x70] sm:$0xf]
      %v476 = vld [vmem:[%s446 + $0x74] sm:$0xf]
      %v477 = vld [vmem:[%s446 + $0x78] sm:$0xf]
      %v478 = vld [vmem:[%s446 + $0x7c] sm:$0xf]
      %v479 = vpack.c.b16 %v360, %v358
      %v480 = vpack.c.b16 %v439, %v438
      %v481 = vpack.c.b16 %v364, %v362
      %v482 = vpack.c.b16 %v441, %v440
      %v483 = vpack.c.b16 %v368, %v366
      %v484 = vpack.c.b16 %v443, %v442
      %v485 = vpack.c.b16 %v372, %v370
      %v486 = vpack.c.b16 %v445, %v444
      %v527 = vunpack.c.l.b16 %v447
      %v528 = vunpack.c.l.b16 %v448
      %v529 = vunpack.c.l.b16 %v449
      %v530 = vunpack.c.l.b16 %v450
      %v531 = vunpack.c.l.b16 %v451
      %v532 = vunpack.c.l.b16 %v452
      %v533 = vunpack.c.l.b16 %v453
      %v534 = vunpack.c.l.b16 %v454
      %v535 = vunpack.c.l.b16 %v455
      %v536 = vunpack.c.l.b16 %v456
      %v537 = vunpack.c.l.b16 %v457
      %v538 = vunpack.c.l.b16 %v458
      %v539 = vunpack.c.l.b16 %v459
      %v540 = vunpack.c.l.b16 %v460
      %v541 = vunpack.c.l.b16 %v461
      %v542 = vunpack.c.l.b16 %v462
      %v543 = vunpack.c.l.b16 %v463
      %v544 = vunpack.c.l.b16 %v464
      %v545 = vunpack.c.l.b16 %v465
      %v546 = vunpack.c.l.b16 %v466
      %v547 = vunpack.c.l.b16 %v467
      %v548 = vunpack.c.l.b16 %v468
      %v549 = vunpack.c.l.b16 %v469
      %v550 = vunpack.c.l.b16 %v470
      %v551 = vunpack.c.l.b16 %v471
      %v552 = vunpack.c.l.b16 %v472
      %v553 = vunpack.c.l.b16 %v473
      %v554 = vunpack.c.l.b16 %v474
      %v555 = vunpack.c.l.b16 %v475
      %v556 = vunpack.c.l.b16 %v476
      %v557 = vunpack.c.l.b16 %v477
      %v558 = vunpack.c.l.b16 %v478
      %v559 = vpack.c.b16 %v528, %v527
      %v560 = vpack.c.b16 %v530, %v529
      %v561 = vpack.c.b16 %v532, %v531
      %v562 = vpack.c.b16 %v534, %v533
      %v563 = vpack.c.b16 %v536, %v535
      %v564 = vpack.c.b16 %v538, %v537
      %v565 = vpack.c.b16 %v540, %v539
      %v566 = vpack.c.b16 %v542, %v541
      %v567 = vpack.c.b16 %v544, %v543
      %v568 = vpack.c.b16 %v546, %v545
      %v569 = vpack.c.b16 %v548, %v547
      %v570 = vpack.c.b16 %v550, %v549
      %v571 = vpack.c.b16 %v552, %v551
      %v572 = vpack.c.b16 %v554, %v553
      %v573 = vpack.c.b16 %v556, %v555
      %v574 = vpack.c.b16 %v558, %v557
      %591 = vmatprep.subr.bf16.mxu0 0
      %592 = vmatpush1.bf16.msra.mxu0 %v559
      %593 = vmatprep.subr.bf16.mxu0 0
      %594 = vmatpush1.bf16.msra.mxu0 %v560
      %595 = vmatprep.subr.bf16.mxu0 0
      %596 = vmatpush1.bf16.msra.mxu0 %v561
      %597 = vmatprep.subr.bf16.mxu0 0
      %598 = vmatpush1.bf16.msra.mxu0 %v562
      %599 = vmatprep.subr.bf16.mxu0 0
      %600 = vmatpush1.bf16.msra.mxu0 %v563
      %601 = vmatprep.subr.bf16.mxu0 0
      %602 = vmatpush1.bf16.msra.mxu0 %v564
      %603 = vmatprep.subr.bf16.mxu0 0
      %604 = vmatpush1.bf16.msra.mxu0 %v565
      %605 = vmatprep.subr.bf16.mxu0 0
      %606 = vmatpush1.bf16.msra.mxu0 %v566
      %607 = vmatprep.subr.bf16.mxu0 0
      %608 = vmatpush1.bf16.msra.mxu0 %v567
      %609 = vmatprep.subr.bf16.mxu0 0
      %610 = vmatpush1.bf16.msra.mxu0 %v568
      %611 = vmatprep.subr.bf16.mxu0 0
      %612 = vmatpush1.bf16.msra.mxu0 %v569
      %613 = vmatprep.subr.bf16.mxu0 0
      %614 = vmatpush1.bf16.msra.mxu0 %v570
      %615 = vmatprep.subr.bf16.mxu0 0
      %616 = vmatpush1.bf16.msra.mxu0 %v571
      %617 = vmatprep.subr.bf16.mxu0 0
      %618 = vmatpush1.bf16.msra.mxu0 %v572
      %619 = vmatprep.subr.bf16.mxu0 0
      %620 = vmatpush1.bf16.msra.mxu0 %v573
      %621 = vmatprep.subr.bf16.mxu0 0
      %622 = vmatpush1.bf16.msra.mxu0 %v574
      %623 = vmatprep.mubr.bf16.mxu0 %v480
      %624 = vmatmul.mubr.bf16.gmra.mrb[0].mxu0 %v479
      %v625 = vpop.f32.mrb[0].mxu0
      %v626 = vadd.f32 0.0, %v625
      %v627 = vpop.f32.mrb[0].mxu0
      %v628 = vpop.f32.mrb[0].mxu0
      %v629 = vadd.f32 0.0, %v628
      %v630 = vpop.f32.mrb[0].mxu0
      %631 = vmatprep.mubr.bf16.mxu0 %v482
      %632 = vmatmul.mubr.bf16.gmra.mrb[0].mxu0 %v481
      %v633 = vpop.f32.mrb[0].mxu0
      %v634 = vadd.f32 0.0, %v633
      %v635 = vpop.f32.mrb[0].mxu0
      %v636 = vpop.f32.mrb[0].mxu0
      %v637 = vadd.f32 0.0, %v636
      %v638 = vpop.f32.mrb[0].mxu0
      %639 = vmatprep.mubr.bf16.mxu0 %v484
      %640 = vmatmul.mubr.bf16.gmra.mrb[0].mxu0 %v483
      %v641 = vpop.f32.mrb[0].mxu0
      %v642 = vadd.f32 0.0, %v641
      %v643 = vpop.f32.mrb[0].mxu0
      %v644 = vpop.f32.mrb[0].mxu0
      %v645 = vadd.f32 0.0, %v644
      %v646 = vpop.f32.mrb[0].mxu0
      %647 = vmatprep.mubr.bf16.mxu0 %v486
      %648 = vmatmul.mubr.bf16.gmra.mrb[0].mxu0 %v485
      %v649 = vpop.f32.mrb[0].mxu0
      %v650 = vadd.f32 0.0, %v649
      %v651 = vpop.f32.mrb[0].mxu0
      %v652 = vpop.f32.mrb[0].mxu0
      %v653 = vadd.f32 0.0, %v652
      %v654 = vpop.f32.mrb[0].mxu0
      %655 = vdwg.mxu0
      %v656 = vpack.c.b16 %v207, %v205
      %v657 = vpack.c.b16 %v286, %v285
      %v658 = vpack.c.b16 %v211, %v209
      %v659 = vpack.c.b16 %v288, %v287
      %v660 = vpack.c.b16 %v215, %v213
      %v661 = vpack.c.b16 %v290, %v289
      %v662 = vpack.c.b16 %v219, %v217
      %v663 = vpack.c.b16 %v292, %v291
      %v704 = vunpack.c.l.b16 %v293
      %v705 = vunpack.c.l.b16 %v294
      %v706 = vunpack.c.l.b16 %v295
      %v707 = vunpack.c.l.b16 %v296
      %v708 = vunpack.c.l.b16 %v297
      %v709 = vunpack.c.l.b16 %v298
      %v710 = vunpack.c.l.b16 %v299
      %v711 = vunpack.c.l.b16 %v300
      %v712 = vunpack.c.l.b16 %v301
      %v713 = vunpack.c.l.b16 %v302
      %v714 = vunpack.c.l.b16 %v303
      %v715 = vunpack.c.l.b16 %v304
      %v716 = vunpack.c.l.b16 %v305
      %v717 = vunpack.c.l.b16 %v306
      %v718 = vunpack.c.l.b16 %v307
      %v719 = vunpack.c.l.b16 %v308
      %v720 = vunpack.c.l.b16 %v309
      %v721 = vunpack.c.l.b16 %v310
      %v722 = vunpack.c.l.b16 %v311
      %v723 = vunpack.c.l.b16 %v312
      %v724 = vunpack.c.l.b16 %v313
      %v725 = vunpack.c.l.b16 %v314
      %v726 = vunpack.c.l.b16 %v315
      %v727 = vunpack.c.l.b16 %v316
      %v728 = vunpack.c.l.b16 %v317
      %v729 = vunpack.c.l.b16 %v318
      %v730 = vunpack.c.l.b16 %v319
      %v731 = vunpack.c.l.b16 %v320
      %v732 = vunpack.c.l.b16 %v321
      %v733 = vunpack.c.l.b16 %v322
      %v734 = vunpack.c.l.b16 %v323
      %v735 = vunpack.c.l.b16 %v324
      %v736 = vpack.c.b16 %v705, %v704
      %v737 = vpack.c.b16 %v707, %v706
      %v738 = vpack.c.b16 %v709, %v708
      %v739 = vpack.c.b16 %v711, %v710
      %v740 = vpack.c.b16 %v713, %v712
      %v741 = vpack.c.b16 %v715, %v714
      %v742 = vpack.c.b16 %v717, %v716
      %v743 = vpack.c.b16 %v719, %v718
      %v744 = vpack.c.b16 %v721, %v720
      %v745 = vpack.c.b16 %v723, %v722
      %v746 = vpack.c.b16 %v725, %v724
      %v747 = vpack.c.b16 %v727, %v726
      %v748 = vpack.c.b16 %v729, %v728
      %v749 = vpack.c.b16 %v731, %v730
      %v750 = vpack.c.b16 %v733, %v732
      %v751 = vpack.c.b16 %v735, %v734
      %768 = vmatprep.subr.bf16.mxu0 0
      %769 = vmatpush1.bf16.msra.mxu0 %v736
      %770 = vmatprep.subr.bf16.mxu0 0
      %771 = vmatpush1.bf16.msra.mxu0 %v737
      %772 = vmatprep.subr.bf16.mxu0 0
      %773 = vmatpush1.bf16.msra.mxu0 %v738
      %774 = vmatprep.subr.bf16.mxu0 0
      %775 = vmatpush1.bf16.msra.mxu0 %v739
      %776 = vmatprep.subr.bf16.mxu0 0
      %777 = vmatpush1.bf16.msra.mxu0 %v740
      %778 = vmatprep.subr.bf16.mxu0 0
      %779 = vmatpush1.bf16.msra.mxu0 %v741
      %780 = vmatprep.subr.bf16.mxu0 0
      %781 = vmatpush1.bf16.msra.mxu0 %v742
      %782 = vmatprep.subr.bf16.mxu0 0
      %783 = vmatpush1.bf16.msra.mxu0 %v743
      %784 = vmatprep.subr.bf16.mxu0 0
      %785 = vmatpush1.bf16.msra.mxu0 %v744
      %786 = vmatprep.subr.bf16.mxu0 0
      %787 = vmatpush1.bf16.msra.mxu0 %v745
      %788 = vmatprep.subr.bf16.mxu0 0
      %789 = vmatpush1.bf16.msra.mxu0 %v746
      %790 = vmatprep.subr.bf16.mxu0 0
      %791 = vmatpush1.bf16.msra.mxu0 %v747
      %792 = vmatprep.subr.bf16.mxu0 0
      %793 = vmatpush1.bf16.msra.mxu0 %v748
      %794 = vmatprep.subr.bf16.mxu0 0
      %795 = vmatpush1.bf16.msra.mxu0 %v749
      %796 = vmatprep.subr.bf16.mxu0 0
      %797 = vmatpush1.bf16.msra.mxu0 %v750
      %798 = vmatprep.subr.bf16.mxu0 0
      %799 = vmatpush1.bf16.msra.mxu0 %v751
      %800 = vmatprep.mubr.bf16.mxu0 %v657
      %801 = vmatmul.mubr.bf16.gmra.mrb[0].mxu0 %v656
      %v802 = vpop.f32.mrb[0].mxu0
      %v803 = vadd.f32 %v626, %v802
      %v804 = vpop.f32.mrb[0].mxu0
      %v805 = vpop.f32.mrb[0].mxu0
      %v806 = vadd.f32 %v629, %v805
      %v807 = vpop.f32.mrb[0].mxu0
      %808 = vmatprep.mubr.bf16.mxu0 %v659
      %809 = vmatmul.mubr.bf16.gmra.mrb[0].mxu0 %v658
      %v810 = vpop.f32.mrb[0].mxu0
      %v811 = vadd.f32 %v634, %v810
      %v812 = vpop.f32.mrb[0].mxu0
      %v813 = vpop.f32.mrb[0].mxu0
      %v814 = vadd.f32 %v637, %v813
      %v815 = vpop.f32.mrb[0].mxu0
      %816 = vmatprep.mubr.bf16.mxu0 %v661
      %817 = vmatmul.mubr.bf16.gmra.mrb[0].mxu0 %v660
      %v818 = vpop.f32.mrb[0].mxu0
      %v819 = vadd.f32 %v642, %v818
      %v820 = vpop.f32.mrb[0].mxu0
      %v821 = vpop.f32.mrb[0].mxu0
      %v822 = vadd.f32 %v645, %v821
      %v823 = vpop.f32.mrb[0].mxu0
      %824 = vmatprep.mubr.bf16.mxu0 %v663
      %825 = vmatmul.mubr.bf16.gmra.mrb[0].mxu0 %v662
      %v826 = vpop.f32.mrb[0].mxu0
      %v827 = vadd.f32 %v650, %v826
      %v828 = vpop.f32.mrb[0].mxu0
      %v829 = vpop.f32.mrb[0].mxu0
      %v830 = vadd.f32 %v653, %v829
      %v831 = vpop.f32.mrb[0].mxu0
      %832 = vdwg.mxu0
      %v834 = vlaneseq
      %v835 = vshrl.u32 %v834, 7
      %v836 = vsub.s32 0, %v835
      %v837 = vrot.slane %v172, %v836
      %v839 = vadd.f32 %v803, %v837
      %v840 = vadd.f32 %v806, %v837
      %v841 = vadd.f32 %v811, %v837
      %v842 = vadd.f32 %v814, %v837
      %v843 = vadd.f32 %v819, %v837
      %v844 = vadd.f32 %v822, %v837
      %v845 = vadd.f32 %v827, %v837
      %v846 = vadd.f32 %v830, %v837
      %vm847 = vcmp.gt.f32.partialorder %v839, 0.0
      %vm848 = vcmp.gt.f32.partialorder %v840, 0.0
      %vm849 = vcmp.gt.f32.partialorder %v841, 0.0
      %vm850 = vcmp.gt.f32.partialorder %v842, 0.0
      %vm851 = vcmp.gt.f32.partialorder %v843, 0.0
      %vm852 = vcmp.gt.f32.partialorder %v844, 0.0
      %vm853 = vcmp.gt.f32.partialorder %v845, 0.0
      %vm854 = vcmp.gt.f32.partialorder %v846, 0.0
      %v855 = vmul.f32 %v839, 0.2
      %v856 = vmul.f32 %v840, 0.2
      %v857 = vmul.f32 %v841, 0.2
      %v858 = vmul.f32 %v842, 0.2
      %v859 = vmul.f32 %v843, 0.2
      %v860 = vmul.f32 %v844, 0.2
      %v861 = vmul.f32 %v845, 0.2
      %v862 = vmul.f32 %v846, 0.2
      %v863 = vsel %vm847, %v839, %v855
      %v864 = vsel %vm848, %v840, %v856
      %v865 = vsel %vm849, %v841, %v857
      %v866 = vsel %vm850, %v842, %v858
      %v867 = vsel %vm851, %v843, %v859
      %v868 = vsel %vm852, %v844, %v860
      %v869 = vsel %vm853, %v845, %v861
      %v870 = vsel %vm854, %v846, %v862
      %v871 = vpack.c.bf16 %v863, %v863
      %v872 = vpack.c.bf16 %v864, %v864
      %v873 = vpack.c.bf16 %v865, %v865
      %v874 = vpack.c.bf16 %v866, %v866
      %v875 = vpack.c.bf16 %v867, %v867
      %v876 = vpack.c.bf16 %v868, %v868
      %v877 = vpack.c.bf16 %v869, %v869
      %v878 = vpack.c.bf16 %v870, %v870
      %vm879 = vcmask 519168
      %880 = vst.msk [vmem:[%s170] sm:$0xf] %vm879, %v871
      %881 = vst.msk [vmem:[%s170 + $0x4] sm:$0xf] %vm879, %v872
      %882 = vst.msk [vmem:[%s170 + $0x8] sm:$0xf] %vm879, %v873
      %883 = vst.msk [vmem:[%s170 + $0xc] sm:$0xf] %vm879, %v874
      %884 = vst.msk [vmem:[%s170 + $0x10] sm:$0xf] %vm879, %v875
      %885 = vst.msk [vmem:[%s170 + $0x14] sm:$0xf] %vm879, %v876
      %886 = vst.msk [vmem:[%s170 + $0x18] sm:$0xf] %vm879, %v877
      %887 = vst.msk [vmem:[%s170 + $0x1c] sm:$0xf] %vm879, %v878
      %p888 = scmp.lt.s32.totalorder %s14, 1
      %s889 = scalar_select %p888, %s14, 1
      %s890 = smul.addr %s889, 8
      %s891 = smul.addr %s890, 4
      %s892 = scalar_lea.vmem %s3, %s891
      // Predicated region
      $region33: #{encoder_forward.7} parent=31 // pred_check
        %p893 = pneg %p100
      $region34: #{encoder_forward.7} parent=31 // pred_check_branch
        %895 = sbr.rel (%p893) target = $region36
      $region35: #{encoder_forward.7} parent=31 // pred_region
        _
      $region36: #{encoder_forward.7} parent=31 // pred_fallthru
        _
    $region32: #{encoder_forward.7} parent=5 // pred_fallthru
      _
    %p896 = scmp.le.s32.totalorder 2, %s9
    // Predicated region
    $region37: #{encoder_forward.7} parent=5 // pred_check
      %p897 = pneg %p896
    $region38: #{encoder_forward.7} parent=5 // pred_check_branch
      %899 = sbr.rel (%p897) target = $region40
    $region39: #{encoder_forward.7} parent=5 // pred_region
      %s900 = ssub.s32 %s9, 2
      // Predicated region
      $region41: #{encoder_forward.7} parent=39 // pred_check
        %p901 = pneg %p106
      $region42: #{encoder_forward.7} parent=39 // pred_check_branch
        %903 = sbr.rel (%p901) target = $region44
      $region43: #{encoder_forward.7} parent=39 // pred_region
        %p904 = scmp.lt.s32.totalorder %s15, 1
        %s905 = scalar_select %p904, %s15, 1
        %s906 = smul.addr %s905, 8
        %s907 = smul.addr %s906, 4
        %s908 = scalar_lea.vmem %s3, %s907
      $region44: #{encoder_forward.7} parent=39 // pred_fallthru
        _
    $region40: #{encoder_forward.7} parent=5 // pred_fallthru
      _
  $region6: #{encoder_forward.7} parent=0 // loop_footer
    %s13 = sadd.s32 1, %s9
  $region7: #{encoder_forward.7} parent=0 // loop_footer_branch
    %8 = sbr.rel target = $region3
  $region8: #{encoder_forward.7} parent=0 // loop_exit
    _

// kernel: encoder_forward.8
$region0: #{encoder_forward.8}
  #allocation0 [shape = 'u32[]', space=smem, size = 0x4, offset = 0x4, fixed_abs, tag = 'smem constant byte address 0x4 - core index']
  #allocation1 [shape = 'u32[144,128]{1,0:T(1,128)}', space=vmem, size = 0x12000, scoped, tag = 'internal scratch']
  %s0 = inlined_call_operand.vmem [shape: bf16[2,5,5,256], index: 0, kind: input, shape index: {}]
  %s1 = inlined_call_operand.vmem [shape: bf16[2,512,64], index: 1, kind: input, shape index: {}]
  %s2 = inlined_call_operand.vmem [shape: f32[1,64], index: 2, kind: input, shape index: {}]
  %s3 = inlined_call_operand.vmem [shape: bf16[2,4,4,64], index: 3, kind: output, shape index: {}]
  %s4 = sld [smem:[#allocation0]]
  $region45: #{encoder_forward.8} parent=0
    _
  %s6 = ssub.s32 1, %s4
  %s7 = scalar_select 0, %s6, %s4
  loop: start=0, step=1, limit=4
  $region2: #{encoder_forward.8} parent=0 // loop_pre_header
    _
  $region3: #{encoder_forward.8} parent=0 // loop_header
    %s9 = sphi 0, %s13
    %p10 = scmp.ge.s32.totalorder %s9, 4
    %s19 = sphi 0, %s21
    %s22 = sphi 0, %s19
    %s23 = sphi 0, %s22
    %s39 = sphi 0, %s23
    %s43 = sphi 0, %s43
    %s45 = sphi 0, %s43
    %s46 = sphi 0, %s45
    %s60 = sphi 0, %s46
    %s64 = sphi 0, %s64
    %s66 = sphi 0, %s64
    %s67 = sphi 0, %s66
    %s81 = sphi 0, %s67
    %s87 = sphi 0, %s89
    %s90 = sphi 0, %s87
    %s91 = sphi 0, %s90
    %s107 = sphi 0, %s91
  $region4: #{encoder_forward.8} parent=0 // loop_header_branch
    %12 = sbr.rel (%p10) target = $region8
  $region5: #{encoder_forward.8} parent=0 // loop_body
    %s14 = ssub.s32 %s9, 1
    %s15 = ssub.s32 %s9, 2
    %s16 = sadd.s32 %s9, 1
    %s17 = ssub.s32 %s9, %s16
    %p18 = scmp.eq.s32.totalorder %s17, 0
    %s20 = sadd.s32 %s19, 1
    %s21 = scalar_select %p18, %s19, %s20
    %p24 = pneg %p18
    %p25 = scmp.eq.s32.totalorder %s9, 1
    %p26 = por %p24, %p25
    %p27 = scmp.ne.s32.totalorder %s19, %s22
    %p28 = scmp.eq.s32.totalorder %s9, 0
    %p29 = por %p27, %p28
    %p30 = scmp.ne.s32.totalorder %s19, %s22
    %p31 = scmp.eq.s32.totalorder %s14, 1
    %p32 = por %p30, %p31
    %p33 = scmp.ne.s32.totalorder %s22, %s23
    %p34 = scmp.eq.s32.totalorder %s14, 0
    %p35 = por %p33, %p34
    %p36 = scmp.ne.s32.totalorder %s22, %s23
    %p37 = scmp.eq.s32.totalorder %s15, 1
    %p38 = por %p36, %p37
    %p40 = scmp.ne.s32.totalorder %s23, %s39
    %p41 = scmp.eq.s32.totalorder %s15, 0
    %p42 = por %p40, %p41
    %s44 = sadd.s32 %s43, 1
    %p47 = scmp.eq.s32.totalorder %s9, 1
    %p48 = scmp.ne.s32.totalorder %s43, %s45
    %p49 = scmp.eq.s32.totalorder %s9, 0
    %p50 = por %p48, %p49
    %p51 = scmp.ne.s32.totalorder %s43, %s45
    %p52 = scmp.eq.s32.totalorder %s14, 1
    %p53 = por %p51, %p52
    %p54 = scmp.ne.s32.totalorder %s45, %s46
    %p55 = scmp.eq.s32.totalorder %s14, 0
    %p56 = por %p54, %p55
    %p57 = scmp.ne.s32.totalorder %s45, %s46
    %p58 = scmp.eq.s32.totalorder %s15, 1
    %p59 = por %p57, %p58
    %p61 = scmp.ne.s32.totalorder %s46, %s60
    %p62 = scmp.eq.s32.totalorder %s15, 0
    %p63 = por %p61, %p62
    %s65 = sadd.s32 %s64, 1
    %p68 = scmp.eq.s32.totalorder %s9, 1
    %p69 = scmp.ne.s32.totalorder %s64, %s66
    %p70 = scmp.eq.s32.totalorder %s9, 0
    %p71 = por %p69, %p70
    %p72 = scmp.ne.s32.totalorder %s64, %s66
    %p73 = scmp.eq.s32.totalorder %s14, 1
    %p74 = por %p72, %p73
    %p75 = scmp.ne.s32.totalorder %s66, %s67
    %p76 = scmp.eq.s32.totalorder %s14, 0
    %p77 = por %p75, %p76
    %p78 = scmp.ne.s32.totalorder %s66, %s67
    %p79 = scmp.eq.s32.totalorder %s15, 1
    %p80 = por %p78, %p79
    %p82 = scmp.ne.s32.totalorder %s67, %s81
    %p83 = scmp.eq.s32.totalorder %s15, 0
    %p84 = por %p82, %p83
    %s85 = ssub.s32 %s9, %s16
    %p86 = scmp.eq.s32.totalorder %s85, 0
    %s88 = sadd.s32 %s87, 1
    %s89 = scalar_select %p86, %s87, %s88
    %p92 = pneg %p86
    %p93 = scmp.eq.s32.totalorder %s9, 1
    %p94 = por %p92, %p93
    %p95 = scmp.ne.s32.totalorder %s87, %s90
    %p96 = scmp.eq.s32.totalorder %s9, 0
    %p97 = por %p95, %p96
    %p98 = scmp.ne.s32.totalorder %s87, %s90
    %p99 = scmp.eq.s32.totalorder %s14, 1
    %p100 = por %p98, %p99
    %p101 = scmp.ne.s32.totalorder %s90, %s91
    %p102 = scmp.eq.s32.totalorder %s14, 0
    %p103 = por %p101, %p102
    %p104 = scmp.ne.s32.totalorder %s90, %s91
    %p105 = scmp.eq.s32.totalorder %s15, 1
    %p106 = por %p104, %p105
    %p108 = scmp.ne.s32.totalorder %s91, %s107
    %p109 = scmp.eq.s32.totalorder %s15, 0
    %p110 = por %p108, %p109
    %p111 = scmp.le.s32.totalorder 1, %s9
    %p112 = scmp.lt.s32.totalorder %s9, 3
    %p113 = pnand %p111, %p112
    %p114 = pneg %p113
    // Predicated region
    $region9: #{encoder_forward.8} parent=5 // pred_check
      _
    $region10: #{encoder_forward.8} parent=5 // pred_check_branch
      %116 = sbr.rel (%p113) target = $region12
    $region11: #{encoder_forward.8} parent=5 // pred_region
      %s117 = ssub.s32 %s9, 1
      // Predicated region
      $region13: #{encoder_forward.8} parent=11 // pred_check
        %p118 = pneg %p56
      $region14: #{encoder_forward.8} parent=11 // pred_check_branch
        %120 = sbr.rel (%p118) target = $region16
      $region15: #{encoder_forward.8} parent=11 // pred_region
        _
      $region16: #{encoder_forward.8} parent=11 // pred_fallthru
        _
      // Predicated region
      $region17: #{encoder_forward.8} parent=11 // pred_check
        %p121 = pneg %p77
      $region18: #{encoder_forward.8} parent=11 // pred_check_branch
        %123 = sbr.rel (%p121) target = $region20
      $region19: #{encoder_forward.8} parent=11 // pred_region
        _
      $region20: #{encoder_forward.8} parent=11 // pred_fallthru
        _
    $region12: #{encoder_forward.8} parent=5 // pred_fallthru
      _
    %p124 = scmp.lt.s32.totalorder %s9, 2
    // Predicated region
    $region21: #{encoder_forward.8} parent=5 // pred_check
      %p125 = pneg %p124
    $region22: #{encoder_forward.8} parent=5 // pred_check_branch
      %127 = sbr.rel (%p125) target = $region24
    $region23: #{encoder_forward.8} parent=5 // pred_region
      // Predicated region
      $region25: #{encoder_forward.8} parent=23 // pred_check
        %p128 = pneg %p29
      $region26: #{encoder_forward.8} parent=23 // pred_check_branch
        %130 = sbr.rel (%p128) target = $region28
      $region27: #{encoder_forward.8} parent=23 // pred_region
        %p131 = scmp.lt.s32.totalorder %s9, 1
        %s132 = scalar_select %p131, %s9, 1
        %s133 = smul.addr %s132, 10
        %s134 = smul.addr %s133, 4
        %s135 = scalar_lea.vmem %s0, %s134
      $region28: #{encoder_forward.8} parent=23 // pred_fallthru
        _
    $region24: #{encoder_forward.8} parent=5 // pred_fallthru
      _
    %p136 = scmp.le.s32.totalorder 1, %s9
    %p137 = scmp.lt.s32.totalorder %s9, 3
    %p138 = pnand %p136, %p137
    %p139 = pneg %p138
    // Predicated region
    $region29: #{encoder_forward.8} parent=5 // pred_check
      _
    $region30: #{encoder_forward.8} parent=5 // pred_check_branch
      %141 = sbr.rel (%p138) target = $region32
    $region31: #{encoder_forward.8} parent=5 // pred_region
      %s142 = ssub.s32 %s9, 1
      %p143 = scmp.lt.s32.totalorder %s14, 1
      %s144 = scalar_select %p143, %s14, 1
      %s145 = smul.addr %s144, 10
      %s146 = smul.addr %s145, 4
      %s147 = scalar_lea.vmem %s0, %s146
      %p148 = pneg %p35
      %p149 = pneg %p32
      %p150 = pneg %p56
      %p151 = pneg %p53
      %p152 = pneg %p77
      %p153 = pneg %p74
      %p154 = pneg %p103
      %p155 = pneg %p100
      %p156 = scmp.lt.s32.totalorder %s14, 1
      %s157 = scalar_select %p156, %s14, 1
      %s158 = smul.addr %s157, 4
      %s159 = smul.addr %s158, 2
      %s160 = scalar_lea.vmem %s3, %s159
      %p161 = scmp.lt.s32.totalorder %s14, 1
      %s162 = scalar_select %p161, %s14, 1
      %s163 = smul.addr %s162, 10
      %s164 = smul.addr %s163, 4
      %s165 = scalar_lea.vmem %s0, %s164
      %p166 = scmp.lt.s32.totalorder %s14, 1
      %s167 = scalar_select %p166, %s14, 1
      %s168 = smul.addr %s167, 4
      %s169 = smul.addr %s168, 2
      %s170 = scalar_lea.vmem %s3, %s169
      %v172 = vld [vmem:[%s2] sm:$0x1]
      %v173 = vld [vmem:[%s1] sm:$0xf]
      %v174 = vld [vmem:[%s1 + $0x4] sm:$0xf]
      %v175 = vld [vmem:[%s1 + $0x8] sm:$0xf]
      %v176 = vld [vmem:[%s1 + $0xc] sm:$0xf]
      %v177 = vld [vmem:[%s1 + $0x10] sm:$0xf]
      %v178 = vld [vmem:[%s1 + $0x14] sm:$0xf]
      %v179 = vld [vmem:[%s1 + $0x18] sm:$0xf]
      %v180 = vld [vmem:[%s1 + $0x1c] sm:$0xf]
      %v181 = vld [vmem:[%s1 + $0x20] sm:$0xf]
      %v182 = vld [vmem:[%s1 + $0x24] sm:$0xf]
      %v183 = vld [vmem:[%s1 + $0x28] sm:$0xf]
      %v184 = vld [vmem:[%s1 + $0x2c] sm:$0xf]
      %v185 = vld [vmem:[%s1 + $0x30] sm:$0xf]
      %v186 = vld [vmem:[%s1 + $0x34] sm:$0xf]
      %v187 = vld [vmem:[%s1 + $0x38] sm:$0xf]
      %v188 = vld [vmem:[%s1 + $0x3c] sm:$0xf]
      %v189 = vld [vmem:[%s1 + $0x40] sm:$0xf]
      %v190 = vld [vmem:[%s1 + $0x44] sm:$0xf]
      %v191 = vld [vmem:[%s1 + $0x48] sm:$0xf]
      %v192 = vld [vmem:[%s1 + $0x4c] sm:$0xf]
      %v193 = vld [vmem:[%s1 + $0x50] sm:$0xf]
      %v194 = vld [vmem:[%s1 + $0x54] sm:$0xf]
      %v195 = vld [vmem:[%s1 + $0x58] sm:$0xf]
      %v196 = vld [vmem:[%s1 + $0x5c] sm:$0xf]
      %v197 = vld [vmem:[%s1 + $0x60] sm:$0xf]
      %v198 = vld [vmem:[%s1 + $0x64] sm:$0xf]
      %v199 = vld [vmem:[%s1 + $0x68] sm:$0xf]
      %v200 = vld [vmem:[%s1 + $0x6c] sm:$0xf]
      %v201 = vld [vmem:[%s1 + $0x70] sm:$0xf]
      %v202 = vld [vmem:[%s1 + $0x74] sm:$0xf]
      %v203 = vld [vmem:[%s1 + $0x78] sm:$0xf]
      %v204 = vld [vmem:[%s1 + $0x7c] sm:$0xf]
      %v205 = vld [vmem:[%s1 + $0x80] sm:$0xf]
      %v206 = vld [vmem:[%s1 + $0x84] sm:$0xf]
      %v207 = vld [vmem:[%s1 + $0x88] sm:$0xf]
      %v208 = vld [vmem:[%s1 + $0x8c] sm:$0xf]
      %v209 = vld [vmem:[%s1 + $0x90] sm:$0xf]
      %v210 = vld [vmem:[%s1 + $0x94] sm:$0xf]
      %v211 = vld [vmem:[%s1 + $0x98] sm:$0xf]
      %v212 = vld [vmem:[%s1 + $0x9c] sm:$0xf]
      %v213 = vld [vmem:[%s1 + $0xa0] sm:$0xf]
      %v214 = vld [vmem:[%s1 + $0xa4] sm:$0xf]
      %v215 = vld [vmem:[%s1 + $0xa8] sm:$0xf]
      %v216 = vld [vmem:[%s1 + $0xac] sm:$0xf]
      %v217 = vld [vmem:[%s1 + $0xb0] sm:$0xf]
      %v218 = vld [vmem:[%s1 + $0xb4] sm:$0xf]
      %v219 = vld [vmem:[%s1 + $0xb8] sm:$0xf]
      %v220 = vld [vmem:[%s1 + $0xbc] sm:$0xf]
      %v221 = vld [vmem:[%s1 + $0xc0] sm:$0xf]
      %v222 = vld [vmem:[%s1 + $0xc4] sm:$0xf]
      %v223 = vld [vmem:[%s1 + $0xc8] sm:$0xf]
      %v224 = vld [vmem:[%s1 + $0xcc] sm:$0xf]
      %v225 = vld [vmem:[%s1 + $0xd0] sm:$0xf]
      %v226 = vld [vmem:[%s1 + $0xd4] sm:$0xf]
      %v227 = vld [vmem:[%s1 + $0xd8] sm:$0xf]
      %v228 = vld [vmem:[%s1 + $0xdc] sm:$0xf]
      %v229 = vld [vmem:[%s1 + $0xe0] sm:$0xf]
      %v230 = vld [vmem:[%s1 + $0xe4] sm:$0xf]
      %v231 = vld [vmem:[%s1 + $0xe8] sm:$0xf]
      %v232 = vld [vmem:[%s1 + $0xec] sm:$0xf]
      %v233 = vld [vmem:[%s1 + $0xf0] sm:$0xf]
      %v234 = vld [vmem:[%s1 + $0xf4] sm:$0xf]
      %v235 = vld [vmem:[%s1 + $0xf8] sm:$0xf]
      %v236 = vld [vmem:[%s1 + $0xfc] sm:$0xf]
      %s237 = scalar_lea.vmem %s1, 256
      %v238 = vld [vmem:[%s237] sm:$0xf]
      %v239 = vld [vmem:[%s237 + $0x4] sm:$0xf]
      %v240 = vld [vmem:[%s237 + $0x8] sm:$0xf]
      %v241 = vld [vmem:[%s237 + $0xc] sm:$0xf]
      %v242 = vld [vmem:[%s237 + $0x10] sm:$0xf]
      %v243 = vld [vmem:[%s237 + $0x14] sm:$0xf]
      %v244 = vld [vmem:[%s237 + $0x18] sm:$0xf]
      %v245 = vld [vmem:[%s237 + $0x1c] sm:$0xf]
      %v246 = vld [vmem:[%s237 + $0x20] sm:$0xf]
      %v247 = vld [vmem:[%s237 + $0x24] sm:$0xf]
      %v248 = vld [vmem:[%s237 + $0x28] sm:$0xf]
      %v249 = vld [vmem:[%s237 + $0x2c] sm:$0xf]
      %v250 = vld [vmem:[%s237 + $0x30] sm:$0xf]
      %v251 = vld [vmem:[%s237 + $0x34] sm:$0xf]
      %v252 = vld [vmem:[%s237 + $0x38] sm:$0xf]
      %v253 = vld [vmem:[%s237 + $0x3c] sm:$0xf]
      %v254 = vld [vmem:[%s237 + $0x40] sm:$0xf]
      %v255 = vld [vmem:[%s237 + $0x44] sm:$0xf]
      %v256 = vld [vmem:[%s237 + $0x48] sm:$0xf]
      %v257 = vld [vmem:[%s237 + $0x4c] sm:$0xf]
      %v258 = vld [vmem:[%s237 + $0x50] sm:$0xf]
      %v259 = vld [vmem:[%s237 + $0x54] sm:$0xf]
      %v260 = vld [vmem:[%s237 + $0x58] sm:$0xf]
      %v261 = vld [vmem:[%s237 + $0x5c] sm:$0xf]
      %v262 = vld [vmem:[%s237 + $0x60] sm:$0xf]
      %v263 = vld [vmem:[%s237 + $0x64] sm:$0xf]
      %v264 = vld [vmem:[%s237 + $0x68] sm:$0xf]
      %v265 = vld [vmem:[%s237 + $0x6c] sm:$0xf]
      %v266 = vld [vmem:[%s237 + $0x70] sm:$0xf]
      %v267 = vld [vmem:[%s237 + $0x74] sm:$0xf]
      %v268 = vld [vmem:[%s237 + $0x78] sm:$0xf]
      %v269 = vld [vmem:[%s237 + $0x7c] sm:$0xf]
      %v270 = vld [vmem:[%s237 + $0x80] sm:$0xf]
      %v271 = vld [vmem:[%s237 + $0x84] sm:$0xf]
      %v272 = vld [vmem:[%s237 + $0x88] sm:$0xf]
      %v273 = vld [vmem:[%s237 + $0x8c] sm:$0xf]
      %v274 = vld [vmem:[%s237 + $0x90] sm:$0xf]
      %v275 = vld [vmem:[%s237 + $0x94] sm:$0xf]
      %v276 = vld [vmem:[%s237 + $0x98] sm:$0xf]
      %v277 = vld [vmem:[%s237 + $0x9c] sm:$0xf]
      %v278 = vld [vmem:[%s237 + $0xa0] sm:$0xf]
      %v279 = vld [vmem:[%s237 + $0xa4] sm:$0xf]
      %v280 = vld [vmem:[%s237 + $0xa8] sm:$0xf]
      %v281 = vld [vmem:[%s237 + $0xac] sm:$0xf]
      %v282 = vld [vmem:[%s237 + $0xb0] sm:$0xf]
      %v283 = vld [vmem:[%s237 + $0xb4] sm:$0xf]
      %v284 = vld [vmem:[%s237 + $0xb8] sm:$0xf]
      %v285 = vld [vmem:[%s237 + $0xbc] sm:$0xf]
      %v286 = vld [vmem:[%s237 + $0xc0] sm:$0xf]
      %v287 = vld [vmem:[%s237 + $0xc4] sm:$0xf]
      %v288 = vld [vmem:[%s237 + $0xc8] sm:$0xf]
      %v289 = vld [vmem:[%s237 + $0xcc] sm:$0xf]
      %v290 = vld [vmem:[%s237 + $0xd0] sm:$0xf]
      %v291 = vld [vmem:[%s237 + $0xd4] sm:$0xf]
      %v292 = vld [vmem:[%s237 + $0xd8] sm:$0xf]
      %v293 = vld [vmem:[%s237 + $0xdc] sm:$0xf]
      %v294 = vld [vmem:[%s237 + $0xe0] sm:$0xf]
      %v295 = vld [vmem:[%s237 + $0xe4] sm:$0xf]
      %v296 = vld [vmem:[%s237 + $0xe8] sm:$0xf]
      %v297 = vld [vmem:[%s237 + $0xec] sm:$0xf]
      %v298 = vld [vmem:[%s237 + $0xf0] sm:$0xf]
      %v299 = vld [vmem:[%s237 + $0xf4] sm:$0xf]
      %v300 = vld [vmem:[%s237 + $0xf8] sm:$0xf]
      %v301 = vld [vmem:[%s237 + $0xfc] sm:$0xf]
      %v302 = vld [vmem:[%s165] sm:$0x77]
      %s303 = scalar_lea.vmem %s165, 8
      %v304 = vld [vmem:[%s303] sm:$0x77]
      %s305 = scalar_lea.vmem %s165, 16
      %v306 = vld [vmem:[%s305] sm:$0x77]
      %s307 = scalar_lea.vmem %s165, 24
      %v308 = vld [vmem:[%s307] sm:$0x77]
      %s309 = scalar_lea.vmem %s165, 32
      %v310 = vld [vmem:[%s309] sm:$0x77]
      %v312 = vunpack.c.l.b16 %v302
      %v313 = vunpack.c.h.b16 %v302
      %v314 = vpack.c.b16 %v312, %v312
      %v315 = vpack.c.b16 %v313, %v313
      %v319 = vshrl.u32 %v314, 16
      %v321 = vshll.u32 %v314, 16
      %v323 = vrot.slane %v321, 1
      %v324 = vor.u32 %v319, %v323
      %v326 = vshrl.u32 %v315, 16
      %v328 = vshll.u32 %v315, 16
      %v330 = vrot.slane %v328, 1
      %v331 = vor.u32 %v326, %v330
      %v335 = vunpack.c.l.b16 %v304
      %v336 = vunpack.c.h.b16 %v304
      %v337 = vpack.c.b16 %v335, %v335
      %v338 = vpack.c.b16 %v336, %v336
      %v342 = vshrl.u32 %v337, 16
      %v344 = vshll.u32 %v337, 16
      %v346 = vrot.slane %v344, 1
      %v347 = vor.u32 %v342, %v346
      %v349 = vshrl.u32 %v338, 16
      %v351 = vshll.u32 %v338, 16
      %v353 = vrot.slane %v351, 1
      %v354 = vor.u32 %v349, %v353
      %v358 = vunpack.c.l.b16 %v306
      %v359 = vunpack.c.h.b16 %v306
      %v360 = vpack.c.b16 %v358, %v358
      %v361 = vpack.c.b16 %v359, %v359
      %v365 = vshrl.u32 %v360, 16
      %v367 = vshll.u32 %v360, 16
      %v369 = vrot.slane %v367, 1
      %v370 = vor.u32 %v365, %v369
      %v372 = vshrl.u32 %v361, 16
      %v374 = vshll.u32 %v361, 16
      %v376 = vrot.slane %v374, 1
      %v377 = vor.u32 %v372, %v376
      %v381 = vunpack.c.l.b16 %v308
      %v382 = vunpack.c.h.b16 %v308
      %v383 = vpack.c.b16 %v381, %v381
      %v384 = vpack.c.b16 %v382, %v382
      %v388 = vshrl.u32 %v383, 16
      %v390 = vshll.u32 %v383, 16
      %v392 = vrot.slane %v390, 1
      %v393 = vor.u32 %v388, %v392
      %v395 = vshrl.u32 %v384, 16
      %v397 = vshll.u32 %v384, 16
      %v399 = vrot.slane %v397, 1
      %v400 = vor.u32 %v395, %v399
      %v404 = vunpack.c.l.b16 %v310
      %v405 = vunpack.c.h.b16 %v310
      %v406 = vpack.c.b16 %v404, %v404
      %v407 = vpack.c.b16 %v405, %v405
      %v411 = vshrl.u32 %v406, 16
      %v413 = vshll.u32 %v406, 16
      %v415 = vrot.slane %v413, 1
      %v416 = vor.u32 %v411, %v415
      %v418 = vshrl.u32 %v407, 16
      %v420 = vshll.u32 %v407, 16
      %v422 = vrot.slane %v420, 1
      %v423 = vor.u32 %v418, %v422
      %v490 = vunpack.c.l.b16 %v238
      %v491 = vunpack.c.l.b16 %v239
      %v492 = vunpack.c.l.b16 %v240
      %v493 = vunpack.c.l.b16 %v241
      %v494 = vunpack.c.l.b16 %v242
      %v495 = vunpack.c.l.b16 %v243
      %v496 = vunpack.c.l.b16 %v244
      %v497 = vunpack.c.l.b16 %v245
      %v498 = vunpack.c.l.b16 %v246
      %v499 = vunpack.c.l.b16 %v247
      %v500 = vunpack.c.l.b16 %v248
      %v501 = vunpack.c.l.b16 %v249
      %v502 = vunpack.c.l.b16 %v250
      %v503 = vunpack.c.l.b16 %v251
      %v504 = vunpack.c.l.b16 %v252
      %v505 = vunpack.c.l.b16 %v253
      %v506 = vunpack.c.l.b16 %v254
      %v507 = vunpack.c.l.b16 %v255
      %v508 = vunpack.c.l.b16 %v256
      %v509 = vunpack.c.l.b16 %v257
      %v510 = vunpack.c.l.b16 %v258
      %v511 = vunpack.c.l.b16 %v259
      %v512 = vunpack.c.l.b16 %v260
      %v513 = vunpack.c.l.b16 %v261
      %v514 = vunpack.c.l.b16 %v262
      %v515 = vunpack.c.l.b16 %v263
      %v516 = vunpack.c.l.b16 %v264
      %v517 = vunpack.c.l.b16 %v265
      %v518 = vunpack.c.l.b16 %v266
      %v519 = vunpack.c.l.b16 %v267
      %v520 = vunpack.c.l.b16 %v268
      %v521 = vunpack.c.l.b16 %v269
      %v522 = vunpack.c.l.b16 %v270
      %v523 = vunpack.c.l.b16 %v271
      %v524 = vunpack.c.l.b16 %v272
      %v525 = vunpack.c.l.b16 %v273
      %v526 = vunpack.c.l.b16 %v274
      %v527 = vunpack.c.l.b16 %v275
      %v528 = vunpack.c.l.b16 %v276
      %v529 = vunpack.c.l.b16 %v277
      %v530 = vunpack.c.l.b16 %v278
      %v531 = vunpack.c.l.b16 %v279
      %v532 = vunpack.c.l.b16 %v280
      %v533 = vunpack.c.l.b16 %v281
      %v534 = vunpack.c.l.b16 %v282
      %v535 = vunpack.c.l.b16 %v283
      %v536 = vunpack.c.l.b16 %v284
      %v537 = vunpack.c.l.b16 %v285
      %v538 = vunpack.c.l.b16 %v286
      %v539 = vunpack.c.l.b16 %v287
      %v540 = vunpack.c.l.b16 %v288
      %v541 = vunpack.c.l.b16 %v289
      %v542 = vunpack.c.l.b16 %v290
      %v543 = vunpack.c.l.b16 %v291
      %v544 = vunpack.c.l.b16 %v292
      %v545 = vunpack.c.l.b16 %v293
      %v546 = vunpack.c.l.b16 %v294
      %v547 = vunpack.c.l.b16 %v295
      %v548 = vunpack.c.l.b16 %v296
      %v549 = vunpack.c.l.b16 %v297
      %v550 = vunpack.c.l.b16 %v298
      %v551 = vunpack.c.l.b16 %v299
      %v552 = vunpack.c.l.b16 %v300
      %v553 = vunpack.c.l.b16 %v301
      %v554 = vpack.c.b16 %v491, %v490
      %v555 = vpack.c.b16 %v493, %v492
      %v556 = vpack.c.b16 %v495, %v494
      %v557 = vpack.c.b16 %v497, %v496
      %v558 = vpack.c.b16 %v499, %v498
      %v559 = vpack.c.b16 %v501, %v500
      %v560 = vpack.c.b16 %v503, %v502
      %v561 = vpack.c.b16 %v505, %v504
      %v562 = vpack.c.b16 %v507, %v506
      %v563 = vpack.c.b16 %v509, %v508
      %v564 = vpack.c.b16 %v511, %v510
      %v565 = vpack.c.b16 %v513, %v512
      %v566 = vpack.c.b16 %v515, %v514
      %v567 = vpack.c.b16 %v517, %v516
      %v568 = vpack.c.b16 %v519, %v518
      %v569 = vpack.c.b16 %v521, %v520
      %v570 = vpack.c.b16 %v523, %v522
      %v571 = vpack.c.b16 %v525, %v524
      %v572 = vpack.c.b16 %v527, %v526
      %v573 = vpack.c.b16 %v529, %v528
      %v574 = vpack.c.b16 %v531, %v530
      %v575 = vpack.c.b16 %v533, %v532
      %v576 = vpack.c.b16 %v535, %v534
      %v577 = vpack.c.b16 %v537, %v536
      %v578 = vpack.c.b16 %v539, %v538
      %v579 = vpack.c.b16 %v541, %v540
      %v580 = vpack.c.b16 %v543, %v542
      %v581 = vpack.c.b16 %v545, %v544
      %v582 = vpack.c.b16 %v547, %v546
      %v583 = vpack.c.b16 %v549, %v548
      %v584 = vpack.c.b16 %v551, %v550
      %v585 = vpack.c.b16 %v553, %v552
      %618 = vmatprep.subr.bf16.mxu0 0
      %619 = vmatpush1.bf16.msra.mxu0 %v554
      %620 = vmatprep.subr.bf16.mxu0 0
      %621 = vmatpush1.bf16.msra.mxu0 %v555
      %622 = vmatprep.subr.bf16.mxu0 0
      %623 = vmatpush1.bf16.msra.mxu0 %v556
      %624 = vmatprep.subr.bf16.mxu0 0
      %625 = vmatpush1.bf16.msra.mxu0 %v557
      %626 = vmatprep.subr.bf16.mxu0 0
      %627 = vmatpush1.bf16.msra.mxu0 %v558
      %628 = vmatprep.subr.bf16.mxu0 0
      %629 = vmatpush1.bf16.msra.mxu0 %v559
      %630 = vmatprep.subr.bf16.mxu0 0
      %631 = vmatpush1.bf16.msra.mxu0 %v560
      %632 = vmatprep.subr.bf16.mxu0 0
      %633 = vmatpush1.bf16.msra.mxu0 %v561
      %634 = vmatprep.subr.bf16.mxu0 0
      %635 = vmatpush1.bf16.msra.mxu0 %v562
      %636 = vmatprep.subr.bf16.mxu0 0
      %637 = vmatpush1.bf16.msra.mxu0 %v563
      %638 = vmatprep.subr.bf16.mxu0 0
      %639 = vmatpush1.bf16.msra.mxu0 %v564
      %640 = vmatprep.subr.bf16.mxu0 0
      %641 = vmatpush1.bf16.msra.mxu0 %v565
      %642 = vmatprep.subr.bf16.mxu0 0
      %643 = vmatpush1.bf16.msra.mxu0 %v566
      %644 = vmatprep.subr.bf16.mxu0 0
      %645 = vmatpush1.bf16.msra.mxu0 %v567
      %646 = vmatprep.subr.bf16.mxu0 0
      %647 = vmatpush1.bf16.msra.mxu0 %v568
      %648 = vmatprep.subr.bf16.mxu0 0
      %649 = vmatpush1.bf16.msra.mxu0 %v569
      %650 = vmatprep.mubr.bf16.mxu0 %v338
      %651 = vmatmul.mubr.bf16.gmra.mrb[0].mxu0 %v337
      %v652 = vpop.f32.mrb[0].mxu0
      %v653 = vadd.f32 0.0, %v652
      %v654 = vpop.f32.mrb[0].mxu0
      %v655 = vpop.f32.mrb[0].mxu0
      %v656 = vpop.f32.mrb[0].mxu0
      %657 = vdwg.mxu0
      %658 = vmatprep.subr.bf16.mxu0 0
      %659 = vmatpush1.bf16.msra.mxu0 %v570
      %660 = vmatprep.subr.bf16.mxu0 0
      %661 = vmatpush1.bf16.msra.mxu0 %v571
      %662 = vmatprep.subr.bf16.mxu0 0
      %663 = vmatpush1.bf16.msra.mxu0 %v572
      %664 = vmatprep.subr.bf16.mxu0 0
      %665 = vmatpush1.bf16.msra.mxu0 %v573
      %666 = vmatprep.subr.bf16.mxu0 0
      %667 = vmatpush1.bf16.msra.mxu0 %v574
      %668 = vmatprep.subr.bf16.mxu0 0
      %669 = vmatpush1.bf16.msra.mxu0 %v575
      %670 = vmatprep.subr.bf16.mxu0 0
      %671 = vmatpush1.bf16.msra.mxu0 %v576
      %672 = vmatprep.subr.bf16.mxu0 0
      %673 = vmatpush1.bf16.msra.mxu0 %v577
      %674 = vmatprep.subr.bf16.mxu0 0
      %675 = vmatpush1.bf16.msra.mxu0 %v578
      %676 = vmatprep.subr.bf16.mxu0 0
      %677 = vmatpush1.bf16.msra.mxu0 %v579
      %678 = vmatprep.subr.bf16.mxu0 0
      %679 = vmatpush1.bf16.msra.mxu0 %v580
      %680 = vmatprep.subr.bf16.mxu0 0
      %681 = vmatpush1.bf16.msra.mxu0 %v581
      %682 = vmatprep.subr.bf16.mxu0 0
      %683 = vmatpush1.bf16.msra.mxu0 %v582
      %684 = vmatprep.subr.bf16.mxu0 0
      %685 = vmatpush1.bf16.msra.mxu0 %v583
      %686 = vmatprep.subr.bf16.mxu0 0
      %687 = vmatpush1.bf16.msra.mxu0 %v584
      %688 = vmatprep.subr.bf16.mxu0 0
      %689 = vmatpush1.bf16.msra.mxu0 %v585
      %690 = vmatprep.mubr.bf16.mxu0 %v354
      %691 = vmatmul.mubr.bf16.gmra.mrb[0].mxu0 %v347
      %v692 = vpop.f32.mrb[0].mxu0
      %v693 = vadd.f32 %v653, %v692
      %v694 = vpop.f32.mrb[0].mxu0
      %v695 = vpop.f32.mrb[0].mxu0
      %v696 = vpop.f32.mrb[0].mxu0
      %697 = vdwg.mxu0
      %v762 = vunpack.c.l.b16 %v173
      %v763 = vunpack.c.l.b16 %v174
      %v764 = vunpack.c.l.b16 %v175
      %v765 = vunpack.c.l.b16 %v176
      %v766 = vunpack.c.l.b16 %v177
      %v767 = vunpack.c.l.b16 %v178
      %v768 = vunpack.c.l.b16 %v179
      %v769 = vunpack.c.l.b16 %v180
      %v770 = vunpack.c.l.b16 %v181
      %v771 = vunpack.c.l.b16 %v182
      %v772 = vunpack.c.l.b16 %v183
      %v773 = vunpack.c.l.b16 %v184
      %v774 = vunpack.c.l.b16 %v185
      %v775 = vunpack.c.l.b16 %v186
      %v776 = vunpack.c.l.b16 %v187
      %v777 = vunpack.c.l.b16 %v188
      %v778 = vunpack.c.l.b16 %v189
      %v779 = vunpack.c.l.b16 %v190
      %v780 = vunpack.c.l.b16 %v191
      %v781 = vunpack.c.l.b16 %v192
      %v782 = vunpack.c.l.b16 %v193
      %v783 = vunpack.c.l.b16 %v194
      %v784 = vunpack.c.l.b16 %v195
      %v785 = vunpack.c.l.b16 %v196
      %v786 = vunpack.c.l.b16 %v197
      %v787 = vunpack.c.l.b16 %v198
      %v788 = vunpack.c.l.b16 %v199
      %v789 = vunpack.c.l.b16 %v200
      %v790 = vunpack.c.l.b16 %v201
      %v791 = vunpack.c.l.b16 %v202
      %v792 = vunpack.c.l.b16 %v203
      %v793 = vunpack.c.l.b16 %v204
      %v794 = vunpack.c.l.b16 %v205
      %v795 = vunpack.c.l.b16 %v206
      %v796 = vunpack.c.l.b16 %v207
      %v797 = vunpack.c.l.b16 %v208
      %v798 = vunpack.c.l.b16 %v209
      %v799 = vunpack.c.l.b16 %v210
      %v800 = vunpack.c.l.b16 %v211
      %v801 = vunpack.c.l.b16 %v212
      %v802 = vunpack.c.l.b16 %v213
      %v803 = vunpack.c.l.b16 %v214
      %v804 = vunpack.c.l.b16 %v215
      %v805 = vunpack.c.l.b16 %v216
      %v806 = vunpack.c.l.b16 %v217
      %v807 = vunpack.c.l.b16 %v218
      %v808 = vunpack.c.l.b16 %v219
      %v809 = vunpack.c.l.b16 %v220
      %v810 = vunpack.c.l.b16 %v221
      %v811 = vunpack.c.l.b16 %v222
      %v812 = vunpack.c.l.b16 %v223
      %v813 = vunpack.c.l.b16 %v224
      %v814 = vunpack.c.l.b16 %v225
      %v815 = vunpack.c.l.b16 %v226
      %v816 = vunpack.c.l.b16 %v227
      %v817 = vunpack.c.l.b16 %v228
      %v818 = vunpack.c.l.b16 %v229
      %v819 = vunpack.c.l.b16 %v230
      %v820 = vunpack.c.l.b16 %v231
      %v821 = vunpack.c.l.b16 %v232
      %v822 = vunpack.c.l.b16 %v233
      %v823 = vunpack.c.l.b16 %v234
      %v824 = vunpack.c.l.b16 %v235
      %v825 = vunpack.c.l.b16 %v236
      %v826 = vpack.c.b16 %v763, %v762
      %v827 = vpack.c.b16 %v765, %v764
      %v828 = vpack.c.b16 %v767, %v766
      %v829 = vpack.c.b16 %v769, %v768
      %v830 = vpack.c.b16 %v771, %v770
      %v831 = vpack.c.b16 %v773, %v772
      %v832 = vpack.c.b16 %v775, %v774
      %v833 = vpack.c.b16 %v777, %v776
      %v834 = vpack.c.b16 %v779, %v778
      %v835 = vpack.c.b16 %v781, %v780
      %v836 = vpack.c.b16 %v783, %v782
      %v837 = vpack.c.b16 %v785, %v784
      %v838 = vpack.c.b16 %v787, %v786
      %v839 = vpack.c.b16 %v789, %v788
      %v840 = vpack.c.b16 %v791, %v790
      %v841 = vpack.c.b16 %v793, %v792
      %v842 = vpack.c.b16 %v795, %v794
      %v843 = vpack.c.b16 %v797, %v796
      %v844 = vpack.c.b16 %v799, %v798
      %v845 = vpack.c.b16 %v801, %v800
      %v846 = vpack.c.b16 %v803, %v802
      %v847 = vpack.c.b16 %v805, %v804
      %v848 = vpack.c.b16 %v807, %v806
      %v849 = vpack.c.b16 %v809, %v808
      %v850 = vpack.c.b16 %v811, %v810
      %v851 = vpack.c.b16 %v813, %v812
      %v852 = vpack.c.b16 %v815, %v814
      %v853 = vpack.c.b16 %v817, %v816
      %v854 = vpack.c.b16 %v819, %v818
      %v855 = vpack.c.b16 %v821, %v820
      %v856 = vpack.c.b16 %v823, %v822
      %v857 = vpack.c.b16 %v825, %v824
      %890 = vmatprep.subr.bf16.mxu0 0
      %891 = vmatpush1.bf16.msra.mxu0 %v826
      %892 = vmatprep.subr.bf16.mxu0 0
      %893 = vmatpush1.bf16.msra.mxu0 %v827
      %894 = vmatprep.subr.bf16.mxu0 0
      %895 = vmatpush1.bf16.msra.mxu0 %v828
      %896 = vmatprep.subr.bf16.mxu0 0
      %897 = vmatpush1.bf16.msra.mxu0 %v829
      %898 = vmatprep.subr.bf16.mxu0 0
      %899 = vmatpush1.bf16.msra.mxu0 %v830
      %900 = vmatprep.subr.bf16.mxu0 0
      %901 = vmatpush1.bf16.msra.mxu0 %v831
      %902 = vmatprep.subr.bf16.mxu0 0
      %903 = vmatpush1.bf16.msra.mxu0 %v832
      %904 = vmatprep.subr.bf16.mxu0 0
      %905 = vmatpush1.bf16.msra.mxu0 %v833
      %906 = vmatprep.subr.bf16.mxu0 0
      %907 = vmatpush1.bf16.msra.mxu0 %v834
      %908 = vmatprep.subr.bf16.mxu0 0
      %909 = vmatpush1.bf16.msra.mxu0 %v835
      %910 = vmatprep.subr.bf16.mxu0 0
      %911 = vmatpush1.bf16.msra.mxu0 %v836
      %912 = vmatprep.subr.bf16.mxu0 0
      %913 = vmatpush1.bf16.msra.mxu0 %v837
      %914 = vmatprep.subr.bf16.mxu0 0
      %915 = vmatpush1.bf16.msra.mxu0 %v838
      %916 = vmatprep.subr.bf16.mxu0 0
      %917 = vmatpush1.bf16.msra.mxu0 %v839
      %918 = vmatprep.subr.bf16.mxu0 0
      %919 = vmatpush1.bf16.msra.mxu0 %v840
      %920 = vmatprep.subr.bf16.mxu0 0
      %921 = vmatpush1.bf16.msra.mxu0 %v841
      %922 = vmatprep.mubr.bf16.mxu0 %v315
      %923 = vmatmul.mubr.bf16.gmra.mrb[0].mxu0 %v314
      %v924 = vpop.f32.mrb[0].mxu0
      %v925 = vadd.f32 %v693, %v924
      %v926 = vpop.f32.mrb[0].mxu0
      %v927 = vpop.f32.mrb[0].mxu0
      %v928 = vpop.f32.mrb[0].mxu0
      %929 = vdwg.mxu0
      %930 = vmatprep.subr.bf16.mxu0 0
      %931 = vmatpush1.bf16.msra.mxu0 %v842
      %932 = vmatprep.subr.bf16.mxu0 0
      %933 = vmatpush1.bf16.msra.mxu0 %v843
      %934 = vmatprep.subr.bf16.mxu0 0
      %935 = vmatpush1.bf16.msra.mxu0 %v844
      %936 = vmatprep.subr.bf16.mxu0 0
      %937 = vmatpush1.bf16.msra.mxu0 %v845
      %938 = vmatprep.subr.bf16.mxu0 0
      %939 = vmatpush1.bf16.msra.mxu0 %v846
      %940 = vmatprep.subr.bf16.mxu0 0
      %941 = vmatpush1.bf16.msra.mxu0 %v847
      %942 = vmatprep.subr.bf16.mxu0 0
      %943 = vmatpush1.bf16.msra.mxu0 %v848
      %944 = vmatprep.subr.bf16.mxu0 0
      %945 = vmatpush1.bf16.msra.mxu0 %v849
      %946 = vmatprep.subr.bf16.mxu0 0
      %947 = vmatpush1.bf16.msra.mxu0 %v850
      %948 = vmatprep.subr.bf16.mxu0 0
      %949 = vmatpush1.bf16.msra.mxu0 %v851
      %950 = vmatprep.subr.bf16.mxu0 0
      %951 = vmatpush1.bf16.msra.mxu0 %v852
      %952 = vmatprep.subr.bf16.mxu0 0
      %953 = vmatpush1.bf16.msra.mxu0 %v853
      %954 = vmatprep.subr.bf16.mxu0 0
      %955 = vmatpush1.bf16.msra.mxu0 %v854
      %956 = vmatprep.subr.bf16.mxu0 0
      %957 = vmatpush1.bf16.msra.mxu0 %v855
      %958 = vmatprep.subr.bf16.mxu0 0
      %959 = vmatpush1.bf16.msra.mxu0 %v856
      %960 = vmatprep.subr.bf16.mxu0 0
      %961 = vmatpush1.bf16.msra.mxu0 %v857
      %962 = vmatprep.mubr.bf16.mxu0 %v331
      %963 = vmatmul.mubr.bf16.gmra.mrb[0].mxu0 %v324
      %v964 = vpop.f32.mrb[0].mxu0
      %v965 = vadd.f32 %v925, %v964
      %v966 = vpop.f32.mrb[0].mxu0
      %v967 = vpop.f32.mrb[0].mxu0
      %v968 = vpop.f32.mrb[0].mxu0
      %969 = vdwg.mxu0
      %v971 = vlaneseq
      %v972 = vshrl.u32 %v971, 7
      %v973 = vsub.s32 0, %v972
      %v974 = vrot.slane %v172, %v973
      %v976 = vadd.f32 %v965, %v974
      %vm977 = vcmp.gt.f32.partialorder %v976, 0.0
      %v978 = vmul.f32 %v976, 0.2
      %v979 = vsel %vm977, %v976, %v978
      %v980 = vpack.c.bf16 %v979, %v979
      %vm981 = vcmask 517120
      %982 = vst.msk [vmem:[%s170] sm:$0x3] %vm981, %v980
      %983 = vmatprep.subr.bf16.mxu0 0
      %984 = vmatpush1.bf16.msra.mxu0 %v554
      %985 = vmatprep.subr.bf16.mxu0 0
      %986 = vmatpush1.bf16.msra.mxu0 %v555
      %987 = vmatprep.subr.bf16.mxu0 0
      %988 = vmatpush1.bf16.msra.mxu0 %v556
      %989 = vmatprep.subr.bf16.mxu0 0
      %990 = vmatpush1.bf16.msra.mxu0 %v557
      %991 = vmatprep.subr.bf16.mxu0 0
      %992 = vmatpush1.bf16.msra.mxu0 %v558
      %993 = vmatprep.subr.bf16.mxu0 0
      %994 = vmatpush1.bf16.msra.mxu0 %v559
      %995 = vmatprep.subr.bf16.mxu0 0
      %996 = vmatpush1.bf16.msra.mxu0 %v560
      %997 = vmatprep.subr.bf16.mxu0 0
      %998 = vmatpush1.bf16.msra.mxu0 %v561
      %999 = vmatprep.subr.bf16.mxu0 0
      %1000 = vmatpush1.bf16.msra.mxu0 %v562
      %1001 = vmatprep.subr.bf16.mxu0 0
      %1002 = vmatpush1.bf16.msra.mxu0 %v563
      %1003 = vmatprep.subr.bf16.mxu0 0
      %1004 = vmatpush1.bf16.msra.mxu0 %v564
      %1005 = vmatprep.subr.bf16.mxu0 0
      %1006 = vmatpush1.bf16.msra.mxu0 %v565
      %1007 = vmatprep.subr.bf16.mxu0 0
      %1008 = vmatpush1.bf16.msra.mxu0 %v566
      %1009 = vmatprep.subr.bf16.mxu0 0
      %1010 = vmatpush1.bf16.msra.mxu0 %v567
      %1011 = vmatprep.subr.bf16.mxu0 0
      %1012 = vmatpush1.bf16.msra.mxu0 %v568
      %1013 = vmatprep.subr.bf16.mxu0 0
      %1014 = vmatpush1.bf16.msra.mxu0 %v569
      %1015 = vmatprep.mubr.bf16.mxu0 %v361
      %1016 = vmatmul.mubr.bf16.gmra.mrb[0].mxu0 %v360
      %v1017 = vpop.f32.mrb[0].mxu0
      %v1018 = vadd.f32 0.0, %v1017
      %v1019 = vpop.f32.mrb[0].mxu0
      %v1020 = vpop.f32.mrb[0].mxu0
      %v1021 = vpop.f32.mrb[0].mxu0
      %1022 = vdwg.mxu0
      %1023 = vmatprep.subr.bf16.mxu0 0
      %1024 = vmatpush1.bf16.msra.mxu0 %v570
      %1025 = vmatprep.subr.bf16.mxu0 0
      %1026 = vmatpush1.bf16.msra.mxu0 %v571
      %1027 = vmatprep.subr.bf16.mxu0 0
      %1028 = vmatpush1.bf16.msra.mxu0 %v572
      %1029 = vmatprep.subr.bf16.mxu0 0
      %1030 = vmatpush1.bf16.msra.mxu0 %v573
      %1031 = vmatprep.subr.bf16.mxu0 0
      %1032 = vmatpush1.bf16.msra.mxu0 %v574
      %1033 = vmatprep.subr.bf16.mxu0 0
      %1034 = vmatpush1.bf16.msra.mxu0 %v575
      %1035 = vmatprep.subr.bf16.mxu0 0
      %1036 = vmatpush1.bf16.msra.mxu0 %v576
      %1037 = vmatprep.subr.bf16.mxu0 0
      %1038 = vmatpush1.bf16.msra.mxu0 %v577
      %1039 = vmatprep.subr.bf16.mxu0 0
      %1040 = vmatpush1.bf16.msra.mxu0 %v578
      %1041 = vmatprep.subr.bf16.mxu0 0
      %1042 = vmatpush1.bf16.msra.mxu0 %v579
      %1043 = vmatprep.subr.bf16.mxu0 0
      %1044 = vmatpush1.bf16.msra.mxu0 %v580
      %1045 = vmatprep.subr.bf16.mxu0 0
      %1046 = vmatpush1.bf16.msra.mxu0 %v581
      %1047 = vmatprep.subr.bf16.mxu0 0
      %1048 = vmatpush1.bf16.msra.mxu0 %v582
      %1049 = vmatprep.subr.bf16.mxu0 0
      %1050 = vmatpush1.bf16.msra.mxu0 %v583
      %1051 = vmatprep.subr.bf16.mxu0 0
      %1052 = vmatpush1.bf16.msra.mxu0 %v584
      %1053 = vmatprep.subr.bf16.mxu0 0
      %1054 = vmatpush1.bf16.msra.mxu0 %v585
      %1055 = vmatprep.mubr.bf16.mxu0 %v377
      %1056 = vmatmul.mubr.bf16.gmra.mrb[0].mxu0 %v370
      %v1057 = vpop.f32.mrb[0].mxu0
      %v1058 = vadd.f32 %v1018, %v1057
      %v1059 = vpop.f32.mrb[0].mxu0
      %v1060 = vpop.f32.mrb[0].mxu0
      %v1061 = vpop.f32.mrb[0].mxu0
      %1062 = vdwg.mxu0
      %1063 = vmatprep.subr.bf16.mxu0 0
      %1064 = vmatpush1.bf16.msra.mxu0 %v826
      %1065 = vmatprep.subr.bf16.mxu0 0
      %1066 = vmatpush1.bf16.msra.mxu0 %v827
      %1067 = vmatprep.subr.bf16.mxu0 0
      %1068 = vmatpush1.bf16.msra.mxu0 %v828
      %1069 = vmatprep.subr.bf16.mxu0 0
      %1070 = vmatpush1.bf16.msra.mxu0 %v829
      %1071 = vmatprep.subr.bf16.mxu0 0
      %1072 = vmatpush1.bf16.msra.mxu0 %v830
      %1073 = vmatprep.subr.bf16.mxu0 0
      %1074 = vmatpush1.bf16.msra.mxu0 %v831
      %1075 = vmatprep.subr.bf16.mxu0 0
      %1076 = vmatpush1.bf16.msra.mxu0 %v832
      %1077 = vmatprep.subr.bf16.mxu0 0
      %1078 = vmatpush1.bf16.msra.mxu0 %v833
      %1079 = vmatprep.subr.bf16.mxu0 0
      %1080 = vmatpush1.bf16.msra.mxu0 %v834
      %1081 = vmatprep.subr.bf16.mxu0 0
      %1082 = vmatpush1.bf16.msra.mxu0 %v835
      %1083 = vmatprep.subr.bf16.mxu0 0
      %1084 = vmatpush1.bf16.msra.mxu0 %v836
      %1085 = vmatprep.subr.bf16.mxu0 0
      %1086 = vmatpush1.bf16.msra.mxu0 %v837
      %1087 = vmatprep.subr.bf16.mxu0 0
      %1088 = vmatpush1.bf16.msra.mxu0 %v838
      %1089 = vmatprep.subr.bf16.mxu0 0
      %1090 = vmatpush1.bf16.msra.mxu0 %v839
      %1091 = vmatprep.subr.bf16.mxu0 0
      %1092 = vmatpush1.bf16.msra.mxu0 %v840
      %1093 = vmatprep.subr.bf16.mxu0 0
      %1094 = vmatpush1.bf16.msra.mxu0 %v841
      %1095 = vmatprep.mubr.bf16.mxu0 %v338
      %1096 = vmatmul.mubr.bf16.gmra.mrb[0].mxu0 %v337
      %v1097 = vpop.f32.mrb[0].mxu0
      %v1098 = vadd.f32 %v1058, %v1097
      %v1099 = vpop.f32.mrb[0].mxu0
      %v1100 = vpop.f32.mrb[0].mxu0
      %v1101 = vpop.f32.mrb[0].mxu0
      %1102 = vdwg.mxu0
      %1103 = vmatprep.subr.bf16.mxu0 0
      %1104 = vmatpush1.bf16.msra.mxu0 %v842
      %1105 = vmatprep.subr.bf16.mxu0 0
      %1106 = vmatpush1.bf16.msra.mxu0 %v843
      %1107 = vmatprep.subr.bf16.mxu0 0
      %1108 = vmatpush1.bf16.msra.mxu0 %v844
      %1109 = vmatprep.subr.bf16.mxu0 0
      %1110 = vmatpush1.bf16.msra.mxu0 %v845
      %1111 = vmatprep.subr.bf16.mxu0 0
      %1112 = vmatpush1.bf16.msra.mxu0 %v846
      %1113 = vmatprep.subr.bf16.mxu0 0
      %1114 = vmatpush1.bf16.msra.mxu0 %v847
      %1115 = vmatprep.subr.bf16.mxu0 0
      %1116 = vmatpush1.bf16.msra.mxu0 %v848
      %1117 = vmatprep.subr.bf16.mxu0 0
      %1118 = vmatpush1.bf16.msra.mxu0 %v849
      %1119 = vmatprep.subr.bf16.mxu0 0
      %1120 = vmatpush1.bf16.msra.mxu0 %v850
      %1121 = vmatprep.subr.bf16.mxu0 0
      %1122 = vmatpush1.bf16.msra.mxu0 %v851
      %1123 = vmatprep.subr.bf16.mxu0 0
      %1124 = vmatpush1.bf16.msra.mxu0 %v852
      %1125 = vmatprep.subr.bf16.mxu0 0
      %1126 = vmatpush1.bf16.msra.mxu0 %v853
      %1127 = vmatprep.subr.bf16.mxu0 0
      %1128 = vmatpush1.bf16.msra.mxu0 %v854
      %1129 = vmatprep.subr.bf16.mxu0 0
      %1130 = vmatpush1.bf16.msra.mxu0 %v855
      %1131 = vmatprep.subr.bf16.mxu0 0
      %1132 = vmatpush1.bf16.msra.mxu0 %v856
      %1133 = vmatprep.subr.bf16.mxu0 0
      %1134 = vmatpush1.bf16.msra.mxu0 %v857
      %1135 = vmatprep.mubr.bf16.mxu0 %v354
      %1136 = vmatmul.mubr.bf16.gmra.mrb[0].mxu0 %v347
      %v1137 = vpop.f32.mrb[0].mxu0
      %v1138 = vadd.f32 %v1098, %v1137
      %v1139 = vpop.f32.mrb[0].mxu0
      %v1140 = vpop.f32.mrb[0].mxu0
      %v1141 = vpop.f32.mrb[0].mxu0
      %1142 = vdwg.mxu0
      %v1143 = vadd.f32 %v1138, %v974
      %vm1144 = vcmp.gt.f32.partialorder %v1143, 0.0
      %v1145 = vmul.f32 %v1143, 0.2
      %v1146 = vsel %vm1144, %v1143, %v1145
      %v1147 = vpack.c.bf16 %v1146, %v1146
      %s1148 = scalar_lea.vmem %s170, 2
      %1149 = vst.msk [vmem:[%s1148] sm:$0x3] %vm981, %v1147
      %1150 = vmatprep.subr.bf16.mxu0 0
      %1151 = vmatpush1.bf16.msra.mxu0 %v554
      %1152 = vmatprep.subr.bf16.mxu0 0
      %1153 = vmatpush1.bf16.msra.mxu0 %v555
      %1154 = vmatprep.subr.bf16.mxu0 0
      %1155 = vmatpush1.bf16.msra.mxu0 %v556
      %1156 = vmatprep.subr.bf16.mxu0 0
      %1157 = vmatpush1.bf16.msra.mxu0 %v557
      %1158 = vmatprep.subr.bf16.mxu0 0
      %1159 = vmatpush1.bf16.msra.mxu0 %v558
      %1160 = vmatprep.subr.bf16.mxu0 0
      %1161 = vmatpush1.bf16.msra.mxu0 %v559
      %1162 = vmatprep.subr.bf16.mxu0 0
      %1163 = vmatpush1.bf16.msra.mxu0 %v560
      %1164 = vmatprep.subr.bf16.mxu0 0
      %1165 = vmatpush1.bf16.msra.mxu0 %v561
      %1166 = vmatprep.subr.bf16.mxu0 0
      %1167 = vmatpush1.bf16.msra.mxu0 %v562
      %1168 = vmatprep.subr.bf16.mxu0 0
      %1169 = vmatpush1.bf16.msra.mxu0 %v563
      %1170 = vmatprep.subr.bf16.mxu0 0
      %1171 = vmatpush1.bf16.msra.mxu0 %v564
      %1172 = vmatprep.subr.bf16.mxu0 0
      %1173 = vmatpush1.bf16.msra.mxu0 %v565
      %1174 = vmatprep.subr.bf16.mxu0 0
      %1175 = vmatpush1.bf16.msra.mxu0 %v566
      %1176 = vmatprep.subr.bf16.mxu0 0
      %1177 = vmatpush1.bf16.msra.mxu0 %v567
      %1178 = vmatprep.subr.bf16.mxu0 0
      %1179 = vmatpush1.bf16.msra.mxu0 %v568
      %1180 = vmatprep.subr.bf16.mxu0 0
      %1181 = vmatpush1.bf16.msra.mxu0 %v569
      %1182 = vmatprep.mubr.bf16.mxu0 %v384
      %1183 = vmatmul.mubr.bf16.gmra.mrb[0].mxu0 %v383
      %v1184 = vpop.f32.mrb[0].mxu0
      %v1185 = vadd.f32 0.0, %v1184
      %v1186 = vpop.f32.mrb[0].mxu0
      %v1187 = vpop.f32.mrb[0].mxu0
      %v1188 = vpop.f32.mrb[0].mxu0
      %1189 = vdwg.mxu0
      %1190 = vmatprep.subr.bf16.mxu0 0
      %1191 = vmatpush1.bf16.msra.mxu0 %v570
      %1192 = vmatprep.subr.bf16.mxu0 0
      %1193 = vmatpush1.bf16.msra.mxu0 %v571
      %1194 = vmatprep.subr.bf16.mxu0 0
      %1195 = vmatpush1.bf16.msra.mxu0 %v572
      %1196 = vmatprep.subr.bf16.mxu0 0
      %1197 = vmatpush1.bf16.msra.mxu0 %v573
      %1198 = vmatprep.subr.bf16.mxu0 0
      %1199 = vmatpush1.bf16.msra.mxu0 %v574
      %1200 = vmatprep.subr.bf16.mxu0 0
      %1201 = vmatpush1.bf16.msra.mxu0 %v575
      %1202 = vmatprep.subr.bf16.mxu0 0
      %1203 = vmatpush1.bf16.msra.mxu0 %v576
      %1204 = vmatprep.subr.bf16.mxu0 0
      %1205 = vmatpush1.bf16.msra.mxu0 %v577
      %1206 = vmatprep.subr.bf16.mxu0 0
      %1207 = vmatpush1.bf16.msra.mxu0 %v578
      %1208 = vmatprep.subr.bf16.mxu0 0
      %1209 = vmatpush1.bf16.msra.mxu0 %v579
      %1210 = vmatprep.subr.bf16.mxu0 0
      %1211 = vmatpush1.bf16.msra.mxu0 %v580
      %1212 = vmatprep.subr.bf16.mxu0 0
      %1213 = vmatpush1.bf16.msra.mxu0 %v581
      %1214 = vmatprep.subr.bf16.mxu0 0
      %1215 = vmatpush1.bf16.msra.mxu0 %v582
      %1216 = vmatprep.subr.bf16.mxu0 0
      %1217 = vmatpush1.bf16.msra.mxu0 %v583
      %1218 = vmatprep.subr.bf16.mxu0 0
      %1219 = vmatpush1.bf16.msra.mxu0 %v584
      %1220 = vmatprep.subr.bf16.mxu0 0
      %1221 = vmatpush1.bf16.msra.mxu0 %v585
      %1222 = vmatprep.mubr.bf16.mxu0 %v400
      %1223 = vmatmul.mubr.bf16.gmra.mrb[0].mxu0 %v393
      %v1224 = vpop.f32.mrb[0].mxu0
      %v1225 = vadd.f32 %v1185, %v1224
      %v1226 = vpop.f32.mrb[0].mxu0
      %v1227 = vpop.f32.mrb[0].mxu0
      %v1228 = vpop.f32.mrb[0].mxu0
      %1229 = vdwg.mxu0
      %1230 = vmatprep.subr.bf16.mxu0 0
      %1231 = vmatpush1.bf16.msra.mxu0 %v826
      %1232 = vmatprep.subr.bf16.mxu0 0
      %1233 = vmatpush1.bf16.msra.mxu0 %v827
      %1234 = vmatprep.subr.bf16.mxu0 0
      %1235 = vmatpush1.bf16.msra.mxu0 %v828
      %1236 = vmatprep.subr.bf16.mxu0 0
      %1237 = vmatpush1.bf16.msra.mxu0 %v829
      %1238 = vmatprep.subr.bf16.mxu0 0
      %1239 = vmatpush1.bf16.msra.mxu0 %v830
      %1240 = vmatprep.subr.bf16.mxu0 0
      %1241 = vmatpush1.bf16.msra.mxu0 %v831
      %1242 = vmatprep.subr.bf16.mxu0 0
      %1243 = vmatpush1.bf16.msra.mxu0 %v832
      %1244 = vmatprep.subr.bf16.mxu0 0
      %1245 = vmatpush1.bf16.msra.mxu0 %v833
      %1246 = vmatprep.subr.bf16.mxu0 0
      %1247 = vmatpush1.bf16.msra.mxu0 %v834
      %1248 = vmatprep.subr.bf16.mxu0 0
      %1249 = vmatpush1.bf16.msra.mxu0 %v835
      %1250 = vmatprep.subr.bf16.mxu0 0
      %1251 = vmatpush1.bf16.msra.mxu0 %v836
      %1252 = vmatprep.subr.bf16.mxu0 0
      %1253 = vmatpush1.bf16.msra.mxu0 %v837
      %1254 = vmatprep.subr.bf16.mxu0 0
      %1255 = vmatpush1.bf16.msra.mxu0 %v838
      %1256 = vmatprep.subr.bf16.mxu0 0
      %1257 = vmatpush1.bf16.msra.mxu0 %v839
      %1258 = vmatprep.subr.bf16.mxu0 0
      %1259 = vmatpush1.bf16.msra.mxu0 %v840
      %1260 = vmatprep.subr.bf16.mxu0 0
      %1261 = vmatpush1.bf16.msra.mxu0 %v841
      %1262 = vmatprep.mubr.bf16.mxu0 %v361
      %1263 = vmatmul.mubr.bf16.gmra.mrb[0].mxu0 %v360
      %v1264 = vpop.f32.mrb[0].mxu0
      %v1265 = vadd.f32 %v1225, %v1264
      %v1266 = vpop.f32.mrb[0].mxu0
      %v1267 = vpop.f32.mrb[0].mxu0
      %v1268 = vpop.f32.mrb[0].mxu0
      %1269 = vdwg.mxu0
      %1270 = vmatprep.subr.bf16.mxu0 0
      %1271 = vmatpush1.bf16.msra.mxu0 %v842
      %1272 = vmatprep.subr.bf16.mxu0 0
      %1273 = vmatpush1.bf16.msra.mxu0 %v843
      %1274 = vmatprep.subr.bf16.mxu0 0
      %1275 = vmatpush1.bf16.msra.mxu0 %v844
      %1276 = vmatprep.subr.bf16.mxu0 0
      %1277 = vmatpush1.bf16.msra.mxu0 %v845
      %1278 = vmatprep.subr.bf16.mxu0 0
      %1279 = vmatpush1.bf16.msra.mxu0 %v846
      %1280 = vmatprep.subr.bf16.mxu0 0
      %1281 = vmatpush1.bf16.msra.mxu0 %v847
      %1282 = vmatprep.subr.bf16.mxu0 0
      %1283 = vmatpush1.bf16.msra.mxu0 %v848
      %1284 = vmatprep.subr.bf16.mxu0 0
      %1285 = vmatpush1.bf16.msra.mxu0 %v849
      %1286 = vmatprep.subr.bf16.mxu0 0
      %1287 = vmatpush1.bf16.msra.mxu0 %v850
      %1288 = vmatprep.subr.bf16.mxu0 0
      %1289 = vmatpush1.bf16.msra.mxu0 %v851
      %1290 = vmatprep.subr.bf16.mxu0 0
      %1291 = vmatpush1.bf16.msra.mxu0 %v852
      %1292 = vmatprep.subr.bf16.mxu0 0
      %1293 = vmatpush1.bf16.msra.mxu0 %v853
      %1294 = vmatprep.subr.bf16.mxu0 0
      %1295 = vmatpush1.bf16.msra.mxu0 %v854
      %1296 = vmatprep.subr.bf16.mxu0 0
      %1297 = vmatpush1.bf16.msra.mxu0 %v855
      %1298 = vmatprep.subr.bf16.mxu0 0
      %1299 = vmatpush1.bf16.msra.mxu0 %v856
      %1300 = vmatprep.subr.bf16.mxu0 0
      %1301 = vmatpush1.bf16.msra.mxu0 %v857
      %1302 = vmatprep.mubr.bf16.mxu0 %v377
      %1303 = vmatmul.mubr.bf16.gmra.mrb[0].mxu0 %v370
      %v1304 = vpop.f32.mrb[0].mxu0
      %v1305 = vadd.f32 %v1265, %v1304
      %v1306 = vpop.f32.mrb[0].mxu0
      %v1307 = vpop.f32.mrb[0].mxu0
      %v1308 = vpop.f32.mrb[0].mxu0
      %1309 = vdwg.mxu0
      %v1310 = vadd.f32 %v1305, %v974
      %vm1311 = vcmp.gt.f32.partialorder %v1310, 0.0
      %v1312 = vmul.f32 %v1310, 0.2
      %v1313 = vsel %vm1311, %v1310, %v1312
      %v1314 = vpack.c.bf16 %v1313, %v1313
      %s1315 = scalar_lea.vmem %s170, 4
      %1316 = vst.msk [vmem:[%s1315] sm:$0x3] %vm981, %v1314
      %1317 = vmatprep.subr.bf16.mxu0 0
      %1318 = vmatpush1.bf16.msra.mxu0 %v554
      %1319 = vmatprep.subr.bf16.mxu0 0
      %1320 = vmatpush1.bf16.msra.mxu0 %v555
      %1321 = vmatprep.subr.bf16.mxu0 0
      %1322 = vmatpush1.bf16.msra.mxu0 %v556
      %1323 = vmatprep.subr.bf16.mxu0 0
      %1324 = vmatpush1.bf16.msra.mxu0 %v557
      %1325 = vmatprep.subr.bf16.mxu0 0
      %1326 = vmatpush1.bf16.msra.mxu0 %v558
      %1327 = vmatprep.subr.bf16.mxu0 0
      %1328 = vmatpush1.bf16.msra.mxu0 %v559
      %1329 = vmatprep.subr.bf16.mxu0 0
      %1330 = vmatpush1.bf16.msra.mxu0 %v560
      %1331 = vmatprep.subr.bf16.mxu0 0
      %1332 = vmatpush1.bf16.msra.mxu0 %v561
      %1333 = vmatprep.subr.bf16.mxu0 0
      %1334 = vmatpush1.bf16.msra.mxu0 %v562
      %1335 = vmatprep.subr.bf16.mxu0 0
      %1336 = vmatpush1.bf16.msra.mxu0 %v563
      %1337 = vmatprep.subr.bf16.mxu0 0
      %1338 = vmatpush1.bf16.msra.mxu0 %v564
      %1339 = vmatprep.subr.bf16.mxu0 0
      %1340 = vmatpush1.bf16.msra.mxu0 %v565
      %1341 = vmatprep.subr.bf16.mxu0 0
      %1342 = vmatpush1.bf16.msra.mxu0 %v566
      %1343 = vmatprep.subr.bf16.mxu0 0
      %1344 = vmatpush1.bf16.msra.mxu0 %v567
      %1345 = vmatprep.subr.bf16.mxu0 0
      %1346 = vmatpush1.bf16.msra.mxu0 %v568
      %1347 = vmatprep.subr.bf16.mxu0 0
      %1348 = vmatpush1.bf16.msra.mxu0 %v569
      %1349 = vmatprep.mubr.bf16.mxu0 %v407
      %1350 = vmatmul.mubr.bf16.gmra.mrb[0].mxu0 %v406
      %v1351 = vpop.f32.mrb[0].mxu0
      %v1352 = vadd.f32 0.0, %v1351
      %v1353 = vpop.f32.mrb[0].mxu0
      %v1354 = vpop.f32.mrb[0].mxu0
      %v1355 = vpop.f32.mrb[0].mxu0
      %1356 = vdwg.mxu0
      %1357 = vmatprep.subr.bf16.mxu0 0
      %1358 = vmatpush1.bf16.msra.mxu0 %v570
      %1359 = vmatprep.subr.bf16.mxu0 0
      %1360 = vmatpush1.bf16.msra.mxu0 %v571
      %1361 = vmatprep.subr.bf16.mxu0 0
      %1362 = vmatpush1.bf16.msra.mxu0 %v572
      %1363 = vmatprep.subr.bf16.mxu0 0
      %1364 = vmatpush1.bf16.msra.mxu0 %v573
      %1365 = vmatprep.subr.bf16.mxu0 0
      %1366 = vmatpush1.bf16.msra.mxu0 %v574
      %1367 = vmatprep.subr.bf16.mxu0 0
      %1368 = vmatpush1.bf16.msra.mxu0 %v575
      %1369 = vmatprep.subr.bf16.mxu0 0
      %1370 = vmatpush1.bf16.msra.mxu0 %v576
      %1371 = vmatprep.subr.bf16.mxu0 0
      %1372 = vmatpush1.bf16.msra.mxu0 %v577
      %1373 = vmatprep.subr.bf16.mxu0 0
      %1374 = vmatpush1.bf16.msra.mxu0 %v578
      %1375 = vmatprep.subr.bf16.mxu0 0
      %1376 = vmatpush1.bf16.msra.mxu0 %v579
      %1377 = vmatprep.subr.bf16.mxu0 0
      %1378 = vmatpush1.bf16.msra.mxu0 %v580
      %1379 = vmatprep.subr.bf16.mxu0 0
      %1380 = vmatpush1.bf16.msra.mxu0 %v581
      %1381 = vmatprep.subr.bf16.mxu0 0
      %1382 = vmatpush1.bf16.msra.mxu0 %v582
      %1383 = vmatprep.subr.bf16.mxu0 0
      %1384 = vmatpush1.bf16.msra.mxu0 %v583
      %1385 = vmatprep.subr.bf16.mxu0 0
      %1386 = vmatpush1.bf16.msra.mxu0 %v584
      %1387 = vmatprep.subr.bf16.mxu0 0
      %1388 = vmatpush1.bf16.msra.mxu0 %v585
      %1389 = vmatprep.mubr.bf16.mxu0 %v423
      %1390 = vmatmul.mubr.bf16.gmra.mrb[0].mxu0 %v416
      %v1391 = vpop.f32.mrb[0].mxu0
      %v1392 = vadd.f32 %v1352, %v1391
      %v1393 = vpop.f32.mrb[0].mxu0
      %v1394 = vpop.f32.mrb[0].mxu0
      %v1395 = vpop.f32.mrb[0].mxu0
      %1396 = vdwg.mxu0
      %1397 = vmatprep.subr.bf16.mxu0 0
      %1398 = vmatpush1.bf16.msra.mxu0 %v826
      %1399 = vmatprep.subr.bf16.mxu0 0
      %1400 = vmatpush1.bf16.msra.mxu0 %v827
      %1401 = vmatprep.subr.bf16.mxu0 0
      %1402 = vmatpush1.bf16.msra.mxu0 %v828
      %1403 = vmatprep.subr.bf16.mxu0 0
      %1404 = vmatpush1.bf16.msra.mxu0 %v829
      %1405 = vmatprep.subr.bf16.mxu0 0
      %1406 = vmatpush1.bf16.msra.mxu0 %v830
      %1407 = vmatprep.subr.bf16.mxu0 0
      %1408 = vmatpush1.bf16.msra.mxu0 %v831
      %1409 = vmatprep.subr.bf16.mxu0 0
      %1410 = vmatpush1.bf16.msra.mxu0 %v832
      %1411 = vmatprep.subr.bf16.mxu0 0
      %1412 = vmatpush1.bf16.msra.mxu0 %v833
      %1413 = vmatprep.subr.bf16.mxu0 0
      %1414 = vmatpush1.bf16.msra.mxu0 %v834
      %1415 = vmatprep.subr.bf16.mxu0 0
      %1416 = vmatpush1.bf16.msra.mxu0 %v835
      %1417 = vmatprep.subr.bf16.mxu0 0
      %1418 = vmatpush1.bf16.msra.mxu0 %v836
      %1419 = vmatprep.subr.bf16.mxu0 0
      %1420 = vmatpush1.bf16.msra.mxu0 %v837
      %1421 = vmatprep.subr.bf16.mxu0 0
      %1422 = vmatpush1.bf16.msra.mxu0 %v838
      %1423 = vmatprep.subr.bf16.mxu0 0
      %1424 = vmatpush1.bf16.msra.mxu0 %v839
      %1425 = vmatprep.subr.bf16.mxu0 0
      %1426 = vmatpush1.bf16.msra.mxu0 %v840
      %1427 = vmatprep.subr.bf16.mxu0 0
      %1428 = vmatpush1.bf16.msra.mxu0 %v841
      %1429 = vmatprep.mubr.bf16.mxu0 %v384
      %1430 = vmatmul.mubr.bf16.gmra.mrb[0].mxu0 %v383
      %v1431 = vpop.f32.mrb[0].mxu0
      %v1432 = vadd.f32 %v1392, %v1431
      %v1433 = vpop.f32.mrb[0].mxu0
      %v1434 = vpop.f32.mrb[0].mxu0
      %v1435 = vpop.f32.mrb[0].mxu0
      %1436 = vdwg.mxu0
      %1437 = vmatprep.subr.bf16.mxu0 0
      %1438 = vmatpush1.bf16.msra.mxu0 %v842
      %1439 = vmatprep.subr.bf16.mxu0 0
      %1440 = vmatpush1.bf16.msra.mxu0 %v843
      %1441 = vmatprep.subr.bf16.mxu0 0
      %1442 = vmatpush1.bf16.msra.mxu0 %v844
      %1443 = vmatprep.subr.bf16.mxu0 0
      %1444 = vmatpush1.bf16.msra.mxu0 %v845
      %1445 = vmatprep.subr.bf16.mxu0 0
      %1446 = vmatpush1.bf16.msra.mxu0 %v846
      %1447 = vmatprep.subr.bf16.mxu0 0
      %1448 = vmatpush1.bf16.msra.mxu0 %v847
      %1449 = vmatprep.subr.bf16.mxu0 0
      %1450 = vmatpush1.bf16.msra.mxu0 %v848
      %1451 = vmatprep.subr.bf16.mxu0 0
      %1452 = vmatpush1.bf16.msra.mxu0 %v849
      %1453 = vmatprep.subr.bf16.mxu0 0
      %1454 = vmatpush1.bf16.msra.mxu0 %v850
      %1455 = vmatprep.subr.bf16.mxu0 0
      %1456 = vmatpush1.bf16.msra.mxu0 %v851
      %1457 = vmatprep.subr.bf16.mxu0 0
      %1458 = vmatpush1.bf16.msra.mxu0 %v852
      %1459 = vmatprep.subr.bf16.mxu0 0
      %1460 = vmatpush1.bf16.msra.mxu0 %v853
      %1461 = vmatprep.subr.bf16.mxu0 0
      %1462 = vmatpush1.bf16.msra.mxu0 %v854
      %1463 = vmatprep.subr.bf16.mxu0 0
      %1464 = vmatpush1.bf16.msra.mxu0 %v855
      %1465 = vmatprep.subr.bf16.mxu0 0
      %1466 = vmatpush1.bf16.msra.mxu0 %v856
      %1467 = vmatprep.subr.bf16.mxu0 0
      %1468 = vmatpush1.bf16.msra.mxu0 %v857
      %1469 = vmatprep.mubr.bf16.mxu0 %v400
      %1470 = vmatmul.mubr.bf16.gmra.mrb[0].mxu0 %v393
      %v1471 = vpop.f32.mrb[0].mxu0
      %v1472 = vadd.f32 %v1432, %v1471
      %v1473 = vpop.f32.mrb[0].mxu0
      %v1474 = vpop.f32.mrb[0].mxu0
      %v1475 = vpop.f32.mrb[0].mxu0
      %1476 = vdwg.mxu0
      %v1477 = vadd.f32 %v1472, %v974
      %vm1478 = vcmp.gt.f32.partialorder %v1477, 0.0
      %v1479 = vmul.f32 %v1477, 0.2
      %v1480 = vsel %vm1478, %v1477, %v1479
      %v1481 = vpack.c.bf16 %v1480, %v1480
      %s1482 = scalar_lea.vmem %s170, 6
      %1483 = vst.msk [vmem:[%s1482] sm:$0x3] %vm981, %v1481
      %p1484 = scmp.lt.s32.totalorder %s14, 1
      %s1485 = scalar_select %p1484, %s14, 1
      %s1486 = smul.addr %s1485, 4
      %s1487 = smul.addr %s1486, 2
      %s1488 = scalar_lea.vmem %s3, %s1487
      // Predicated region
      $region33: #{encoder_forward.8} parent=31 // pred_check
        %p1489 = pneg %p100
      $region34: #{encoder_forward.8} parent=31 // pred_check_branch
        %1491 = sbr.rel (%p1489) target = $region36
      $region35: #{encoder_forward.8} parent=31 // pred_region
        _
      $region36: #{encoder_forward.8} parent=31 // pred_fallthru
        _
    $region32: #{encoder_forward.8} parent=5 // pred_fallthru
      _
    %p1492 = scmp.le.s32.totalorder 2, %s9
    // Predicated region
    $region37: #{encoder_forward.8} parent=5 // pred_check
      %p1493 = pneg %p1492
    $region38: #{encoder_forward.8} parent=5 // pred_check_branch
      %1495 = sbr.rel (%p1493) target = $region40
    $region39: #{encoder_forward.8} parent=5 // pred_region
      %s1496 = ssub.s32 %s9, 2
      // Predicated region
      $region41: #{encoder_forward.8} parent=39 // pred_check
        %p1497 = pneg %p106
      $region42: #{encoder_forward.8} parent=39 // pred_check_branch
        %1499 = sbr.rel (%p1497) target = $region44
      $region43: #{encoder_forward.8} parent=39 // pred_region
        %p1500 = scmp.lt.s32.totalorder %s15, 1
        %s1501 = scalar_select %p1500, %s15, 1
        %s1502 = smul.addr %s1501, 4
        %s1503 = smul.addr %s1502, 2
        %s1504 = scalar_lea.vmem %s3, %s1503
      $region44: #{encoder_forward.8} parent=39 // pred_fallthru
        _
    $region40: #{encoder_forward.8} parent=5 // pred_fallthru
      _
  $region6: #{encoder_forward.8} parent=0 // loop_footer
    %s13 = sadd.s32 1, %s9
  $region7: #{encoder_forward.8} parent=0 // loop_footer_branch
    %8 = sbr.rel target = $region3
  $region8: #{encoder_forward.8} parent=0 // loop_exit
    _

// kernel: encoder_forward.9
$region0: #{encoder_forward.9}
  #allocation0 [shape = 'u32[]', space=smem, size = 0x4, offset = 0x4, fixed_abs, tag = 'smem constant byte address 0x4 - core index']
  #allocation1 [shape = 'u32[144,128]{1,0:T(1,128)}', space=vmem, size = 0x12000, scoped, tag = 'internal scratch']
  %s0 = inlined_call_operand.vmem [shape: bf16[2,1024], index: 0, kind: input, shape index: {}]
  %s1 = inlined_call_operand.vmem [shape: bf16[1024,128], index: 1, kind: input, shape index: {}]
  %s2 = inlined_call_operand.vmem [shape: f32[1,128], index: 2, kind: input, shape index: {}]
  %s3 = inlined_call_operand.vmem [shape: bf16[128,128], index: 3, kind: input, shape index: {}]
  %s4 = inlined_call_operand.vmem [shape: f32[1,128], index: 4, kind: input, shape index: {}]
  %s5 = inlined_call_operand.vmem [shape: bf16[128,128], index: 5, kind: input, shape index: {}]
  %s6 = inlined_call_operand.vmem [shape: f32[1,128], index: 6, kind: input, shape index: {}]
  %s7 = inlined_call_operand.vmem [shape: f32[2,128], index: 7, kind: output, shape index: {}]
  %s8 = sld [smem:[#allocation0]]
  $region38: #{encoder_forward.9} parent=0
    _
  %s10 = ssub.s32 1, %s8
  %s11 = scalar_select 0, %s10, %s8
  // Predicated region
  $region2: #{encoder_forward.9} parent=0 // pred_check
    _
  $region3: #{encoder_forward.9} parent=0 // pred_check_branch
    %13 = sbr.rel (0) target = $region5
  $region4: #{encoder_forward.9} parent=0 // pred_region
    _
  $region5: #{encoder_forward.9} parent=0 // pred_fallthru
    _
  // Predicated region
  $region6: #{encoder_forward.9} parent=0 // pred_check
    _
  $region7: #{encoder_forward.9} parent=0 // pred_check_branch
    %15 = sbr.rel (0) target = $region9
  $region8: #{encoder_forward.9} parent=0 // pred_region
    _
  $region9: #{encoder_forward.9} parent=0 // pred_fallthru
    _
  // Predicated region
  $region10: #{encoder_forward.9} parent=0 // pred_check
    _
  $region11: #{encoder_forward.9} parent=0 // pred_check_branch
    %17 = sbr.rel (0) target = $region13
  $region12: #{encoder_forward.9} parent=0 // pred_region
    _
  $region13: #{encoder_forward.9} parent=0 // pred_fallthru
    _
  // Predicated region
  $region14: #{encoder_forward.9} parent=0 // pred_check
    _
  $region15: #{encoder_forward.9} parent=0 // pred_check_branch
    %19 = sbr.rel (0) target = $region17
  $region16: #{encoder_forward.9} parent=0 // pred_region
    _
  $region17: #{encoder_forward.9} parent=0 // pred_fallthru
    _
  // Predicated region
  $region18: #{encoder_forward.9} parent=0 // pred_check
    _
  $region19: #{encoder_forward.9} parent=0 // pred_check_branch
    %21 = sbr.rel (0) target = $region21
  $region20: #{encoder_forward.9} parent=0 // pred_region
    _
  $region21: #{encoder_forward.9} parent=0 // pred_fallthru
    _
  // Predicated region
  $region22: #{encoder_forward.9} parent=0 // pred_check
    _
  $region23: #{encoder_forward.9} parent=0 // pred_check_branch
    %23 = sbr.rel (0) target = $region25
  $region24: #{encoder_forward.9} parent=0 // pred_region
    _
  $region25: #{encoder_forward.9} parent=0 // pred_fallthru
    _
  // Predicated region
  $region26: #{encoder_forward.9} parent=0 // pred_check
    _
  $region27: #{encoder_forward.9} parent=0 // pred_check_branch
    %25 = sbr.rel (0) target = $region29
  $region28: #{encoder_forward.9} parent=0 // pred_region
    _
  $region29: #{encoder_forward.9} parent=0 // pred_fallthru
    _
  %v27 = vld [vmem:[%s0] sm:$0xff]
  %v28 = vld [vmem:[%s1] sm:$0xf]
  %v29 = vld [vmem:[%s1 + $0x4] sm:$0xf]
  %v30 = vld [vmem:[%s1 + $0x8] sm:$0xf]
  %v31 = vld [vmem:[%s1 + $0xc] sm:$0xf]
  %v32 = vld [vmem:[%s1 + $0x10] sm:$0xf]
  %v33 = vld [vmem:[%s1 + $0x14] sm:$0xf]
  %v34 = vld [vmem:[%s1 + $0x18] sm:$0xf]
  %v35 = vld [vmem:[%s1 + $0x1c] sm:$0xf]
  %v36 = vld [vmem:[%s1 + $0x20] sm:$0xf]
  %v37 = vld [vmem:[%s1 + $0x24] sm:$0xf]
  %v38 = vld [vmem:[%s1 + $0x28] sm:$0xf]
  %v39 = vld [vmem:[%s1 + $0x2c] sm:$0xf]
  %v40 = vld [vmem:[%s1 + $0x30] sm:$0xf]
  %v41 = vld [vmem:[%s1 + $0x34] sm:$0xf]
  %v42 = vld [vmem:[%s1 + $0x38] sm:$0xf]
  %v43 = vld [vmem:[%s1 + $0x3c] sm:$0xf]
  %v44 = vld [vmem:[%s1 + $0x40] sm:$0xf]
  %v45 = vld [vmem:[%s1 + $0x44] sm:$0xf]
  %v46 = vld [vmem:[%s1 + $0x48] sm:$0xf]
  %v47 = vld [vmem:[%s1 + $0x4c] sm:$0xf]
  %v48 = vld [vmem:[%s1 + $0x50] sm:$0xf]
  %v49 = vld [vmem:[%s1 + $0x54] sm:$0xf]
  %v50 = vld [vmem:[%s1 + $0x58] sm:$0xf]
  %v51 = vld [vmem:[%s1 + $0x5c] sm:$0xf]
  %v52 = vld [vmem:[%s1 + $0x60] sm:$0xf]
  %v53 = vld [vmem:[%s1 + $0x64] sm:$0xf]
  %v54 = vld [vmem:[%s1 + $0x68] sm:$0xf]
  %v55 = vld [vmem:[%s1 + $0x6c] sm:$0xf]
  %v56 = vld [vmem:[%s1 + $0x70] sm:$0xf]
  %v57 = vld [vmem:[%s1 + $0x74] sm:$0xf]
  %v58 = vld [vmem:[%s1 + $0x78] sm:$0xf]
  %v59 = vld [vmem:[%s1 + $0x7c] sm:$0xf]
  %v60 = vld [vmem:[%s1 + $0x80] sm:$0xf]
  %v61 = vld [vmem:[%s1 + $0x84] sm:$0xf]
  %v62 = vld [vmem:[%s1 + $0x88] sm:$0xf]
  %v63 = vld [vmem:[%s1 + $0x8c] sm:$0xf]
  %v64 = vld [vmem:[%s1 + $0x90] sm:$0xf]
  %v65 = vld [vmem:[%s1 + $0x94] sm:$0xf]
  %v66 = vld [vmem:[%s1 + $0x98] sm:$0xf]
  %v67 = vld [vmem:[%s1 + $0x9c] sm:$0xf]
  %v68 = vld [vmem:[%s1 + $0xa0] sm:$0xf]
  %v69 = vld [vmem:[%s1 + $0xa4] sm:$0xf]
  %v70 = vld [vmem:[%s1 + $0xa8] sm:$0xf]
  %v71 = vld [vmem:[%s1 + $0xac] sm:$0xf]
  %v72 = vld [vmem:[%s1 + $0xb0] sm:$0xf]
  %v73 = vld [vmem:[%s1 + $0xb4] sm:$0xf]
  %v74 = vld [vmem:[%s1 + $0xb8] sm:$0xf]
  %v75 = vld [vmem:[%s1 + $0xbc] sm:$0xf]
  %v76 = vld [vmem:[%s1 + $0xc0] sm:$0xf]
  %v77 = vld [vmem:[%s1 + $0xc4] sm:$0xf]
  %v78 = vld [vmem:[%s1 + $0xc8] sm:$0xf]
  %v79 = vld [vmem:[%s1 + $0xcc] sm:$0xf]
  %v80 = vld [vmem:[%s1 + $0xd0] sm:$0xf]
  %v81 = vld [vmem:[%s1 + $0xd4] sm:$0xf]
  %v82 = vld [vmem:[%s1 + $0xd8] sm:$0xf]
  %v83 = vld [vmem:[%s1 + $0xdc] sm:$0xf]
  %v84 = vld [vmem:[%s1 + $0xe0] sm:$0xf]
  %v85 = vld [vmem:[%s1 + $0xe4] sm:$0xf]
  %v86 = vld [vmem:[%s1 + $0xe8] sm:$0xf]
  %v87 = vld [vmem:[%s1 + $0xec] sm:$0xf]
  %v88 = vld [vmem:[%s1 + $0xf0] sm:$0xf]
  %v89 = vld [vmem:[%s1 + $0xf4] sm:$0xf]
  %v90 = vld [vmem:[%s1 + $0xf8] sm:$0xf]
  %v91 = vld [vmem:[%s1 + $0xfc] sm:$0xf]
  %v92 = vld [vmem:[%s1 + $0x100] sm:$0xf]
  %v93 = vld [vmem:[%s1 + $0x104] sm:$0xf]
  %v94 = vld [vmem:[%s1 + $0x108] sm:$0xf]
  %v95 = vld [vmem:[%s1 + $0x10c] sm:$0xf]
  %v96 = vld [vmem:[%s1 + $0x110] sm:$0xf]
  %v97 = vld [vmem:[%s1 + $0x114] sm:$0xf]
  %v98 = vld [vmem:[%s1 + $0x118] sm:$0xf]
  %v99 = vld [vmem:[%s1 + $0x11c] sm:$0xf]
  %v100 = vld [vmem:[%s1 + $0x120] sm:$0xf]
  %v101 = vld [vmem:[%s1 + $0x124] sm:$0xf]
  %v102 = vld [vmem:[%s1 + $0x128] sm:$0xf]
  %v103 = vld [vmem:[%s1 + $0x12c] sm:$0xf]
  %v104 = vld [vmem:[%s1 + $0x130] sm:$0xf]
  %v105 = vld [vmem:[%s1 + $0x134] sm:$0xf]
  %v106 = vld [vmem:[%s1 + $0x138] sm:$0xf]
  %v107 = vld [vmem:[%s1 + $0x13c] sm:$0xf]
  %v108 = vld [vmem:[%s1 + $0x140] sm:$0xf]
  %v109 = vld [vmem:[%s1 + $0x144] sm:$0xf]
  %v110 = vld [vmem:[%s1 + $0x148] sm:$0xf]
  %v111 = vld [vmem:[%s1 + $0x14c] sm:$0xf]
  %v112 = vld [vmem:[%s1 + $0x150] sm:$0xf]
  %v113 = vld [vmem:[%s1 + $0x154] sm:$0xf]
  %v114 = vld [vmem:[%s1 + $0x158] sm:$0xf]
  %v115 = vld [vmem:[%s1 + $0x15c] sm:$0xf]
  %v116 = vld [vmem:[%s1 + $0x160] sm:$0xf]
  %v117 = vld [vmem:[%s1 + $0x164] sm:$0xf]
  %v118 = vld [vmem:[%s1 + $0x168] sm:$0xf]
  %v119 = vld [vmem:[%s1 + $0x16c] sm:$0xf]
  %v120 = vld [vmem:[%s1 + $0x170] sm:$0xf]
  %v121 = vld [vmem:[%s1 + $0x174] sm:$0xf]
  %v122 = vld [vmem:[%s1 + $0x178] sm:$0xf]
  %v123 = vld [vmem:[%s1 + $0x17c] sm:$0xf]
  %v124 = vld [vmem:[%s1 + $0x180] sm:$0xf]
  %v125 = vld [vmem:[%s1 + $0x184] sm:$0xf]
  %v126 = vld [vmem:[%s1 + $0x188] sm:$0xf]
  %v127 = vld [vmem:[%s1 + $0x18c] sm:$0xf]
  %v128 = vld [vmem:[%s1 + $0x190] sm:$0xf]
  %v129 = vld [vmem:[%s1 + $0x194] sm:$0xf]
  %v130 = vld [vmem:[%s1 + $0x198] sm:$0xf]
  %v131 = vld [vmem:[%s1 + $0x19c] sm:$0xf]
  %v132 = vld [vmem:[%s1 + $0x1a0] sm:$0xf]
  %v133 = vld [vmem:[%s1 + $0x1a4] sm:$0xf]
  %v134 = vld [vmem:[%s1 + $0x1a8] sm:$0xf]
  %v135 = vld [vmem:[%s1 + $0x1ac] sm:$0xf]
  %v136 = vld [vmem:[%s1 + $0x1b0] sm:$0xf]
  %v137 = vld [vmem:[%s1 + $0x1b4] sm:$0xf]
  %v138 = vld [vmem:[%s1 + $0x1b8] sm:$0xf]
  %v139 = vld [vmem:[%s1 + $0x1bc] sm:$0xf]
  %v140 = vld [vmem:[%s1 + $0x1c0] sm:$0xf]
  %v141 = vld [vmem:[%s1 + $0x1c4] sm:$0xf]
  %v142 = vld [vmem:[%s1 + $0x1c8] sm:$0xf]
  %v143 = vld [vmem:[%s1 + $0x1cc] sm:$0xf]
  %v144 = vld [vmem:[%s1 + $0x1d0] sm:$0xf]
  %v145 = vld [vmem:[%s1 + $0x1d4] sm:$0xf]
  %v146 = vld [vmem:[%s1 + $0x1d8] sm:$0xf]
  %v147 = vld [vmem:[%s1 + $0x1dc] sm:$0xf]
  %v148 = vld [vmem:[%s1 + $0x1e0] sm:$0xf]
  %v149 = vld [vmem:[%s1 + $0x1e4] sm:$0xf]
  %v150 = vld [vmem:[%s1 + $0x1e8] sm:$0xf]
  %v151 = vld [vmem:[%s1 + $0x1ec] sm:$0xf]
  %v152 = vld [vmem:[%s1 + $0x1f0] sm:$0xf]
  %v153 = vld [vmem:[%s1 + $0x1f4] sm:$0xf]
  %v154 = vld [vmem:[%s1 + $0x1f8] sm:$0xf]
  %v155 = vld [vmem:[%s1 + $0x1fc] sm:$0xf]
  %v156 = vld [vmem:[%s2] sm:$0x1]
  %v158 = vlaneseq
  %v159 = vshrl.u32 %v158, 7
  %v160 = vsub.s32 0, %v159
  %v161 = vrot.slane %v156, %v160
  %v164 = vcombine.high %v27, %v27
  %v166 = vunpack.c.l.s4 1966171168
  %v167 = vunpack.c.0.s8 %v166
  %v168 = vlaneseq
  %v169 = vshrl.u32 %v168, 7
  %v170 = vsub.s32 %v167, %v169
  %v171 = vrot.slane %v27, %v170
  %v173 = vunpack.c.l.s4 1966171168
  %v174 = vunpack.c.0.s8 %v173
  %v175 = vlaneseq
  %v176 = vshrl.u32 %v175, 7
  %v177 = vsub.s32 %v174, %v176
  %v178 = vrot.slane %v164, %v177
  %v179 = vcombine.high %v171, %v171
  %v180 = vcombine.high %v178, %v178
  %v182 = vunpack.c.l.s4 1966171168
  %v183 = vunpack.c.0.s8 %v182
  %v184 = vlaneseq
  %v185 = vshrl.u32 %v184, 7
  %v186 = vsub.s32 %v183, %v185
  %v187 = vrot.slane %v171, %v186
  %v189 = vunpack.c.l.s4 1966171168
  %v190 = vunpack.c.0.s8 %v189
  %v191 = vlaneseq
  %v192 = vshrl.u32 %v191, 7
  %v193 = vsub.s32 %v190, %v192
  %v194 = vrot.slane %v178, %v193
  %v196 = vunpack.c.l.s4 1966171168
  %v197 = vunpack.c.0.s8 %v196
  %v198 = vlaneseq
  %v199 = vshrl.u32 %v198, 7
  %v200 = vsub.s32 %v197, %v199
  %v201 = vrot.slane %v179, %v200
  %v203 = vunpack.c.l.s4 1966171168
  %v204 = vunpack.c.0.s8 %v203
  %v205 = vlaneseq
  %v206 = vshrl.u32 %v205, 7
  %v207 = vsub.s32 %v204, %v206
  %v208 = vrot.slane %v180, %v207
  %v209 = vcombine.high %v187, %v187
  %v210 = vcombine.high %v194, %v194
  %v211 = vcombine.high %v201, %v201
  %v212 = vcombine.high %v208, %v208
  %v349 = vunpack.c.l.b16 %v28
  %v350 = vunpack.c.l.b16 %v29
  %v351 = vunpack.c.l.b16 %v30
  %v352 = vunpack.c.l.b16 %v31
  %v353 = vunpack.c.l.b16 %v32
  %v354 = vunpack.c.l.b16 %v33
  %v355 = vunpack.c.l.b16 %v34
  %v356 = vunpack.c.l.b16 %v35
  %v357 = vunpack.c.l.b16 %v36
  %v358 = vunpack.c.l.b16 %v37
  %v359 = vunpack.c.l.b16 %v38
  %v360 = vunpack.c.l.b16 %v39
  %v361 = vunpack.c.l.b16 %v40
  %v362 = vunpack.c.l.b16 %v41
  %v363 = vunpack.c.l.b16 %v42
  %v364 = vunpack.c.l.b16 %v43
  %v365 = vunpack.c.l.b16 %v44
  %v366 = vunpack.c.l.b16 %v45
  %v367 = vunpack.c.l.b16 %v46
  %v368 = vunpack.c.l.b16 %v47
  %v369 = vunpack.c.l.b16 %v48
  %v370 = vunpack.c.l.b16 %v49
  %v371 = vunpack.c.l.b16 %v50
  %v372 = vunpack.c.l.b16 %v51
  %v373 = vunpack.c.l.b16 %v52
  %v374 = vunpack.c.l.b16 %v53
  %v375 = vunpack.c.l.b16 %v54
  %v376 = vunpack.c.l.b16 %v55
  %v377 = vunpack.c.l.b16 %v56
  %v378 = vunpack.c.l.b16 %v57
  %v379 = vunpack.c.l.b16 %v58
  %v380 = vunpack.c.l.b16 %v59
  %v381 = vunpack.c.l.b16 %v60
  %v382 = vunpack.c.l.b16 %v61
  %v383 = vunpack.c.l.b16 %v62
  %v384 = vunpack.c.l.b16 %v63
  %v385 = vunpack.c.l.b16 %v64
  %v386 = vunpack.c.l.b16 %v65
  %v387 = vunpack.c.l.b16 %v66
  %v388 = vunpack.c.l.b16 %v67
  %v389 = vunpack.c.l.b16 %v68
  %v390 = vunpack.c.l.b16 %v69
  %v391 = vunpack.c.l.b16 %v70
  %v392 = vunpack.c.l.b16 %v71
  %v393 = vunpack.c.l.b16 %v72
  %v394 = vunpack.c.l.b16 %v73
  %v395 = vunpack.c.l.b16 %v74
  %v396 = vunpack.c.l.b16 %v75
  %v397 = vunpack.c.l.b16 %v76
  %v398 = vunpack.c.l.b16 %v77
  %v399 = vunpack.c.l.b16 %v78
  %v400 = vunpack.c.l.b16 %v79
  %v401 = vunpack.c.l.b16 %v80
  %v402 = vunpack.c.l.b16 %v81
  %v403 = vunpack.c.l.b16 %v82
  %v404 = vunpack.c.l.b16 %v83
  %v405 = vunpack.c.l.b16 %v84
  %v406 = vunpack.c.l.b16 %v85
  %v407 = vunpack.c.l.b16 %v86
  %v408 = vunpack.c.l.b16 %v87
  %v409 = vunpack.c.l.b16 %v88
  %v410 = vunpack.c.l.b16 %v89
  %v411 = vunpack.c.l.b16 %v90
  %v412 = vunpack.c.l.b16 %v91
  %v413 = vunpack.c.l.b16 %v92
  %v414 = vunpack.c.l.b16 %v93
  %v415 = vunpack.c.l.b16 %v94
  %v416 = vunpack.c.l.b16 %v95
  %v417 = vunpack.c.l.b16 %v96
  %v418 = vunpack.c.l.b16 %v97
  %v419 = vunpack.c.l.b16 %v98
  %v420 = vunpack.c.l.b16 %v99
  %v421 = vunpack.c.l.b16 %v100
  %v422 = vunpack.c.l.b16 %v101
  %v423 = vunpack.c.l.b16 %v102
  %v424 = vunpack.c.l.b16 %v103
  %v425 = vunpack.c.l.b16 %v104
  %v426 = vunpack.c.l.b16 %v105
  %v427 = vunpack.c.l.b16 %v106
  %v428 = vunpack.c.l.b16 %v107
  %v429 = vunpack.c.l.b16 %v108
  %v430 = vunpack.c.l.b16 %v109
  %v431 = vunpack.c.l.b16 %v110
  %v432 = vunpack.c.l.b16 %v111
  %v433 = vunpack.c.l.b16 %v112
  %v434 = vunpack.c.l.b16 %v113
  %v435 = vunpack.c.l.b16 %v114
  %v436 = vunpack.c.l.b16 %v115
  %v437 = vunpack.c.l.b16 %v116
  %v438 = vunpack.c.l.b16 %v117
  %v439 = vunpack.c.l.b16 %v118
  %v440 = vunpack.c.l.b16 %v119
  %v441 = vunpack.c.l.b16 %v120
  %v442 = vunpack.c.l.b16 %v121
  %v443 = vunpack.c.l.b16 %v122
  %v444 = vunpack.c.l.b16 %v123
  %v445 = vunpack.c.l.b16 %v124
  %v446 = vunpack.c.l.b16 %v125
  %v447 = vunpack.c.l.b16 %v126
  %v448 = vunpack.c.l.b16 %v127
  %v449 = vunpack.c.l.b16 %v128
  %v450 = vunpack.c.l.b16 %v129
  %v451 = vunpack.c.l.b16 %v130
  %v452 = vunpack.c.l.b16 %v131
  %v453 = vunpack.c.l.b16 %v132
  %v454 = vunpack.c.l.b16 %v133
  %v455 = vunpack.c.l.b16 %v134
  %v456 = vunpack.c.l.b16 %v135
  %v457 = vunpack.c.l.b16 %v136
  %v458 = vunpack.c.l.b16 %v137
  %v459 = vunpack.c.l.b16 %v138
  %v460 = vunpack.c.l.b16 %v139
  %v461 = vunpack.c.l.b16 %v140
  %v462 = vunpack.c.l.b16 %v141
  %v463 = vunpack.c.l.b16 %v142
  %v464 = vunpack.c.l.b16 %v143
  %v465 = vunpack.c.l.b16 %v144
  %v466 = vunpack.c.l.b16 %v145
  %v467 = vunpack.c.l.b16 %v146
  %v468 = vunpack.c.l.b16 %v147
  %v469 = vunpack.c.l.b16 %v148
  %v470 = vunpack.c.l.b16 %v149
  %v471 = vunpack.c.l.b16 %v150
  %v472 = vunpack.c.l.b16 %v151
  %v473 = vunpack.c.l.b16 %v152
  %v474 = vunpack.c.l.b16 %v153
  %v475 = vunpack.c.l.b16 %v154
  %v476 = vunpack.c.l.b16 %v155
  %v477 = vpack.c.b16 %v350, %v349
  %v478 = vpack.c.b16 %v352, %v351
  %v479 = vpack.c.b16 %v354, %v353
  %v480 = vpack.c.b16 %v356, %v355
  %v481 = vpack.c.b16 %v358, %v357
  %v482 = vpack.c.b16 %v360, %v359
  %v483 = vpack.c.b16 %v362, %v361
  %v484 = vpack.c.b16 %v364, %v363
  %v485 = vpack.c.b16 %v366, %v365
  %v486 = vpack.c.b16 %v368, %v367
  %v487 = vpack.c.b16 %v370, %v369
  %v488 = vpack.c.b16 %v372, %v371
  %v489 = vpack.c.b16 %v374, %v373
  %v490 = vpack.c.b16 %v376, %v375
  %v491 = vpack.c.b16 %v378, %v377
  %v492 = vpack.c.b16 %v380, %v379
  %v493 = vpack.c.b16 %v382, %v381
  %v494 = vpack.c.b16 %v384, %v383
  %v495 = vpack.c.b16 %v386, %v385
  %v496 = vpack.c.b16 %v388, %v387
  %v497 = vpack.c.b16 %v390, %v389
  %v498 = vpack.c.b16 %v392, %v391
  %v499 = vpack.c.b16 %v394, %v393
  %v500 = vpack.c.b16 %v396, %v395
  %v501 = vpack.c.b16 %v398, %v397
  %v502 = vpack.c.b16 %v400, %v399
  %v503 = vpack.c.b16 %v402, %v401
  %v504 = vpack.c.b16 %v404, %v403
  %v505 = vpack.c.b16 %v406, %v405
  %v506 = vpack.c.b16 %v408, %v407
  %v507 = vpack.c.b16 %v410, %v409
  %v508 = vpack.c.b16 %v412, %v411
  %v509 = vpack.c.b16 %v414, %v413
  %v510 = vpack.c.b16 %v416, %v415
  %v511 = vpack.c.b16 %v418, %v417
  %v512 = vpack.c.b16 %v420, %v419
  %v513 = vpack.c.b16 %v422, %v421
  %v514 = vpack.c.b16 %v424, %v423
  %v515 = vpack.c.b16 %v426, %v425
  %v516 = vpack.c.b16 %v428, %v427
  %v517 = vpack.c.b16 %v430, %v429
  %v518 = vpack.c.b16 %v432, %v431
  %v519 = vpack.c.b16 %v434, %v433
  %v520 = vpack.c.b16 %v436, %v435
  %v521 = vpack.c.b16 %v438, %v437
  %v522 = vpack.c.b16 %v440, %v439
  %v523 = vpack.c.b16 %v442, %v441
  %v524 = vpack.c.b16 %v444, %v443
  %v525 = vpack.c.b16 %v446, %v445
  %v526 = vpack.c.b16 %v448, %v447
  %v527 = vpack.c.b16 %v450, %v449
  %v528 = vpack.c.b16 %v452, %v451
  %v529 = vpack.c.b16 %v454, %v453
  %v530 = vpack.c.b16 %v456, %v455
  %v531 = vpack.c.b16 %v458, %v457
  %v532 = vpack.c.b16 %v460, %v459
  %v533 = vpack.c.b16 %v462, %v461
  %v534 = vpack.c.b16 %v464, %v463
  %v535 = vpack.c.b16 %v466, %v465
  %v536 = vpack.c.b16 %v468, %v467
  %v537 = vpack.c.b16 %v470, %v469
  %v538 = vpack.c.b16 %v472, %v471
  %v539 = vpack.c.b16 %v474, %v473
  %v540 = vpack.c.b16 %v476, %v475
  %605 = vmatprep.subr.bf16.mxu0 0
  %606 = vmatpush1.bf16.msra.mxu0 %v477
  %607 = vmatprep.subr.bf16.mxu0 0
  %608 = vmatpush1.bf16.msra.mxu0 %v478
  %609 = vmatprep.subr.bf16.mxu0 0
  %610 = vmatpush1.bf16.msra.mxu0 %v479
  %611 = vmatprep.subr.bf16.mxu0 0
  %612 = vmatpush1.bf16.msra.mxu0 %v480
  %613 = vmatprep.subr.bf16.mxu0 0
  %614 = vmatpush1.bf16.msra.mxu0 %v481
  %615 = vmatprep.subr.bf16.mxu0 0
  %616 = vmatpush1.bf16.msra.mxu0 %v482
  %617 = vmatprep.subr.bf16.mxu0 0
  %618 = vmatpush1.bf16.msra.mxu0 %v483
  %619 = vmatprep.subr.bf16.mxu0 0
  %620 = vmatpush1.bf16.msra.mxu0 %v484
  %621 = vmatprep.subr.bf16.mxu0 0
  %622 = vmatpush1.bf16.msra.mxu0 %v485
  %623 = vmatprep.subr.bf16.mxu0 0
  %624 = vmatpush1.bf16.msra.mxu0 %v486
  %625 = vmatprep.subr.bf16.mxu0 0
  %626 = vmatpush1.bf16.msra.mxu0 %v487
  %627 = vmatprep.subr.bf16.mxu0 0
  %628 = vmatpush1.bf16.msra.mxu0 %v488
  %629 = vmatprep.subr.bf16.mxu0 0
  %630 = vmatpush1.bf16.msra.mxu0 %v489
  %631 = vmatprep.subr.bf16.mxu0 0
  %632 = vmatpush1.bf16.msra.mxu0 %v490
  %633 = vmatprep.subr.bf16.mxu0 0
  %634 = vmatpush1.bf16.msra.mxu0 %v491
  %635 = vmatprep.subr.bf16.mxu0 0
  %636 = vmatpush1.bf16.msra.mxu0 %v492
  %637 = vmatprep.mubr.bf16.mxu0 %v201
  %638 = vmatmul.mubr.bf16.gmra.mrb[0].mxu0 %v187
  %v639 = vpop.f32.mrb[0].mxu0
  %v640 = vadd.f32 %v161, %v639
  %v641 = vpop.f32.mrb[0].mxu0
  %v642 = vpop.f32.mrb[0].mxu0
  %v643 = vpop.f32.mrb[0].mxu0
  %644 = vdwg.mxu0
  %645 = vmatprep.subr.bf16.mxu0 0
  %646 = vmatpush1.bf16.msra.mxu0 %v493
  %647 = vmatprep.subr.bf16.mxu0 0
  %648 = vmatpush1.bf16.msra.mxu0 %v494
  %649 = vmatprep.subr.bf16.mxu0 0
  %650 = vmatpush1.bf16.msra.mxu0 %v495
  %651 = vmatprep.subr.bf16.mxu0 0
  %652 = vmatpush1.bf16.msra.mxu0 %v496
  %653 = vmatprep.subr.bf16.mxu0 0
  %654 = vmatpush1.bf16.msra.mxu0 %v497
  %655 = vmatprep.subr.bf16.mxu0 0
  %656 = vmatpush1.bf16.msra.mxu0 %v498
  %657 = vmatprep.subr.bf16.mxu0 0
  %658 = vmatpush1.bf16.msra.mxu0 %v499
  %659 = vmatprep.subr.bf16.mxu0 0
  %660 = vmatpush1.bf16.msra.mxu0 %v500
  %661 = vmatprep.subr.bf16.mxu0 0
  %662 = vmatpush1.bf16.msra.mxu0 %v501
  %663 = vmatprep.subr.bf16.mxu0 0
  %664 = vmatpush1.bf16.msra.mxu0 %v502
  %665 = vmatprep.subr.bf16.mxu0 0
  %666 = vmatpush1.bf16.msra.mxu0 %v503
  %667 = vmatprep.subr.bf16.mxu0 0
  %668 = vmatpush1.bf16.msra.mxu0 %v504
  %669 = vmatprep.subr.bf16.mxu0 0
  %670 = vmatpush1.bf16.msra.mxu0 %v505
  %671 = vmatprep.subr.bf16.mxu0 0
  %672 = vmatpush1.bf16.msra.mxu0 %v506
  %673 = vmatprep.subr.bf16.mxu0 0
  %674 = vmatpush1.bf16.msra.mxu0 %v507
  %675 = vmatprep.subr.bf16.mxu0 0
  %676 = vmatpush1.bf16.msra.mxu0 %v508
  %677 = vmatprep.mubr.bf16.mxu0 %v211
  %678 = vmatmul.mubr.bf16.gmra.mrb[0].mxu0 %v209
  %v679 = vpop.f32.mrb[0].mxu0
  %v680 = vadd.f32 %v640, %v679
  %v681 = vpop.f32.mrb[0].mxu0
  %v682 = vpop.f32.mrb[0].mxu0
  %v683 = vpop.f32.mrb[0].mxu0
  %684 = vdwg.mxu0
  %685 = vmatprep.subr.bf16.mxu0 0
  %686 = vmatpush1.bf16.msra.mxu0 %v509
  %687 = vmatprep.subr.bf16.mxu0 0
  %688 = vmatpush1.bf16.msra.mxu0 %v510
  %689 = vmatprep.subr.bf16.mxu0 0
  %690 = vmatpush1.bf16.msra.mxu0 %v511
  %691 = vmatprep.subr.bf16.mxu0 0
  %692 = vmatpush1.bf16.msra.mxu0 %v512
  %693 = vmatprep.subr.bf16.mxu0 0
  %694 = vmatpush1.bf16.msra.mxu0 %v513
  %695 = vmatprep.subr.bf16.mxu0 0
  %696 = vmatpush1.bf16.msra.mxu0 %v514
  %697 = vmatprep.subr.bf16.mxu0 0
  %698 = vmatpush1.bf16.msra.mxu0 %v515
  %699 = vmatprep.subr.bf16.mxu0 0
  %700 = vmatpush1.bf16.msra.mxu0 %v516
  %701 = vmatprep.subr.bf16.mxu0 0
  %702 = vmatpush1.bf16.msra.mxu0 %v517
  %703 = vmatprep.subr.bf16.mxu0 0
  %704 = vmatpush1.bf16.msra.mxu0 %v518
  %705 = vmatprep.subr.bf16.mxu0 0
  %706 = vmatpush1.bf16.msra.mxu0 %v519
  %707 = vmatprep.subr.bf16.mxu0 0
  %708 = vmatpush1.bf16.msra.mxu0 %v520
  %709 = vmatprep.subr.bf16.mxu0 0
  %710 = vmatpush1.bf16.msra.mxu0 %v521
  %711 = vmatprep.subr.bf16.mxu0 0
  %712 = vmatpush1.bf16.msra.mxu0 %v522
  %713 = vmatprep.subr.bf16.mxu0 0
  %714 = vmatpush1.bf16.msra.mxu0 %v523
  %715 = vmatprep.subr.bf16.mxu0 0
  %716 = vmatpush1.bf16.msra.mxu0 %v524
  %717 = vmatprep.mubr.bf16.mxu0 %v208
  %718 = vmatmul.mubr.bf16.gmra.mrb[0].mxu0 %v194
  %v719 = vpop.f32.mrb[0].mxu0
  %v720 = vadd.f32 %v680, %v719
  %v721 = vpop.f32.mrb[0].mxu0
  %v722 = vpop.f32.mrb[0].mxu0
  %v723 = vpop.f32.mrb[0].mxu0
  %724 = vdwg.mxu0
  %725 = vmatprep.subr.bf16.mxu0 0
  %726 = vmatpush1.bf16.msra.mxu0 %v525
  %727 = vmatprep.subr.bf16.mxu0 0
  %728 = vmatpush1.bf16.msra.mxu0 %v526
  %729 = vmatprep.subr.bf16.mxu0 0
  %730 = vmatpush1.bf16.msra.mxu0 %v527
  %731 = vmatprep.subr.bf16.mxu0 0
  %732 = vmatpush1.bf16.msra.mxu0 %v528
  %733 = vmatprep.subr.bf16.mxu0 0
  %734 = vmatpush1.bf16.msra.mxu0 %v529
  %735 = vmatprep.subr.bf16.mxu0 0
  %736 = vmatpush1.bf16.msra.mxu0 %v530
  %737 = vmatprep.subr.bf16.mxu0 0
  %738 = vmatpush1.bf16.msra.mxu0 %v531
  %739 = vmatprep.subr.bf16.mxu0 0
  %740 = vmatpush1.bf16.msra.mxu0 %v532
  %741 = vmatprep.subr.bf16.mxu0 0
  %742 = vmatpush1.bf16.msra.mxu0 %v533
  %743 = vmatprep.subr.bf16.mxu0 0
  %744 = vmatpush1.bf16.msra.mxu0 %v534
  %745 = vmatprep.subr.bf16.mxu0 0
  %746 = vmatpush1.bf16.msra.mxu0 %v535
  %747 = vmatprep.subr.bf16.mxu0 0
  %748 = vmatpush1.bf16.msra.mxu0 %v536
  %749 = vmatprep.subr.bf16.mxu0 0
  %750 = vmatpush1.bf16.msra.mxu0 %v537
  %751 = vmatprep.subr.bf16.mxu0 0
  %752 = vmatpush1.bf16.msra.mxu0 %v538
  %753 = vmatprep.subr.bf16.mxu0 0
  %754 = vmatpush1.bf16.msra.mxu0 %v539
  %755 = vmatprep.subr.bf16.mxu0 0
  %756 = vmatpush1.bf16.msra.mxu0 %v540
  %757 = vmatprep.mubr.bf16.mxu0 %v212
  %758 = vmatmul.mubr.bf16.gmra.mrb[0].mxu0 %v210
  %v759 = vpop.f32.mrb[0].mxu0
  %v760 = vadd.f32 %v720, %v759
  %v761 = vpop.f32.mrb[0].mxu0
  %v762 = vpop.f32.mrb[0].mxu0
  %v763 = vpop.f32.mrb[0].mxu0
  %764 = vdwg.mxu0
  %vm765 = vcmp.gt.f32.partialorder %v760, 0.0
  %v766 = vmul.f32 %v760, 0.2
  %v767 = vsel %vm765, %v760, %v766
  %v768 = vpack.c.bf16 %v767, %v767
  %v769 = vld [vmem:[%s3] sm:$0xf]
  %v770 = vld [vmem:[%s3 + $0x4] sm:$0xf]
  %v771 = vld [vmem:[%s3 + $0x8] sm:$0xf]
  %v772 = vld [vmem:[%s3 + $0xc] sm:$0xf]
  %v773 = vld [vmem:[%s3 + $0x10] sm:$0xf]
  %v774 = vld [vmem:[%s3 + $0x14] sm:$0xf]
  %v775 = vld [vmem:[%s3 + $0x18] sm:$0xf]
  %v776 = vld [vmem:[%s3 + $0x1c] sm:$0xf]
  %v777 = vld [vmem:[%s3 + $0x20] sm:$0xf]
  %v778 = vld [vmem:[%s3 + $0x24] sm:$0xf]
  %v779 = vld [vmem:[%s3 + $0x28] sm:$0xf]
  %v780 = vld [vmem:[%s3 + $0x2c] sm:$0xf]
  %v781 = vld [vmem:[%s3 + $0x30] sm:$0xf]
  %v782 = vld [vmem:[%s3 + $0x34] sm:$0xf]
  %v783 = vld [vmem:[%s3 + $0x38] sm:$0xf]
  %v784 = vld [vmem:[%s3 + $0x3c] sm:$0xf]
  %v785 = vld [vmem:[%s4] sm:$0x1]
  %v787 = vlaneseq
  %v788 = vshrl.u32 %v787, 7
  %v789 = vsub.s32 0, %v788
  %v790 = vrot.slane %v785, %v789
  %v808 = vunpack.c.l.b16 %v769
  %v809 = vunpack.c.l.b16 %v770
  %v810 = vunpack.c.l.b16 %v771
  %v811 = vunpack.c.l.b16 %v772
  %v812 = vunpack.c.l.b16 %v773
  %v813 = vunpack.c.l.b16 %v774
  %v814 = vunpack.c.l.b16 %v775
  %v815 = vunpack.c.l.b16 %v776
  %v816 = vunpack.c.l.b16 %v777
  %v817 = vunpack.c.l.b16 %v778
  %v818 = vunpack.c.l.b16 %v779
  %v819 = vunpack.c.l.b16 %v780
  %v820 = vunpack.c.l.b16 %v781
  %v821 = vunpack.c.l.b16 %v782
  %v822 = vunpack.c.l.b16 %v783
  %v823 = vunpack.c.l.b16 %v784
  %v824 = vpack.c.b16 %v809, %v808
  %v825 = vpack.c.b16 %v811, %v810
  %v826 = vpack.c.b16 %v813, %v812
  %v827 = vpack.c.b16 %v815, %v814
  %v828 = vpack.c.b16 %v817, %v816
  %v829 = vpack.c.b16 %v819, %v818
  %v830 = vpack.c.b16 %v821, %v820
  %v831 = vpack.c.b16 %v823, %v822
  %840 = vmatprep.subr.bf16.mxu0 0
  %841 = vmatpush1.bf16.msra.mxu0 %v824
  %842 = vmatprep.subr.bf16.mxu0 0
  %843 = vmatpush1.bf16.msra.mxu0 %v825
  %844 = vmatprep.subr.bf16.mxu0 0
  %845 = vmatpush1.bf16.msra.mxu0 %v826
  %846 = vmatprep.subr.bf16.mxu0 0
  %847 = vmatpush1.bf16.msra.mxu0 %v827
  %848 = vmatprep.subr.bf16.mxu0 0
  %849 = vmatpush1.bf16.msra.mxu0 %v828
  %850 = vmatprep.subr.bf16.mxu0 0
  %851 = vmatpush1.bf16.msra.mxu0 %v829
  %852 = vmatprep.subr.bf16.mxu0 0
  %853 = vmatpush1.bf16.msra.mxu0 %v830
  %854 = vmatprep.subr.bf16.mxu0 0
  %855 = vmatpush1.bf16.msra.mxu0 %v831
  %856 = vmatprep.subr.bf16.mxu0 0
  %857 = vmatpush1.bf16.msra.mxu0 0
  %858 = vmatprep.subr.bf16.mxu0 0
  %859 = vmatpush1.bf16.msra.mxu0 0
  %860 = vmatprep.subr.bf16.mxu0 0
  %861 = vmatpush1.bf16.msra.mxu0 0
  %862 = vmatprep.subr.bf16.mxu0 0
  %863 = vmatpush1.bf16.msra.mxu0 0
  %864 = vmatprep.subr.bf16.mxu0 0
  %865 = vmatpush1.bf16.msra.mxu0 0
  %866 = vmatprep.subr.bf16.mxu0 0
  %867 = vmatpush1.bf16.msra.mxu0 0
  %868 = vmatprep.subr.bf16.mxu0 0
  %869 = vmatpush1.bf16.msra.mxu0 0
  %870 = vmatprep.subr.bf16.mxu0 0
  %871 = vmatpush1.bf16.msra.mxu0 0
  %872 = vmatprep.mubr.bf16.mxu0 0
  %873 = vmatmul.mubr.bf16.gmra.mrb[0].mxu0 %v768
  %v874 = vpop.f32.mrb[0].mxu0
  %v875 = vadd.f32 %v790, %v874
  %v876 = vpop.f32.mrb[0].mxu0
  %v877 = vpop.f32.mrb[0].mxu0
  %v878 = vpop.f32.mrb[0].mxu0
  %879 = vdwg.mxu0
  %vm880 = vcmp.gt.f32.partialorder %v875, 0.0
  %v881 = vmul.f32 %v875, 0.2
  %v882 = vsel %vm880, %v875, %v881
  %v883 = vpack.c.bf16 %v882, %v882
  %v884 = vld [vmem:[%s5] sm:$0xf]
  %v885 = vld [vmem:[%s5 + $0x4] sm:$0xf]
  %v886 = vld [vmem:[%s5 + $0x8] sm:$0xf]
  %v887 = vld [vmem:[%s5 + $0xc] sm:$0xf]
  %v888 = vld [vmem:[%s5 + $0x10] sm:$0xf]
  %v889 = vld [vmem:[%s5 + $0x14] sm:$0xf]
  %v890 = vld [vmem:[%s5 + $0x18] sm:$0xf]
  %v891 = vld [vmem:[%s5 + $0x1c] sm:$0xf]
  %v892 = vld [vmem:[%s5 + $0x20] sm:$0xf]
  %v893 = vld [vmem:[%s5 + $0x24] sm:$0xf]
  %v894 = vld [vmem:[%s5 + $0x28] sm:$0xf]
  %v895 = vld [vmem:[%s5 + $0x2c] sm:$0xf]
  %v896 = vld [vmem:[%s5 + $0x30] sm:$0xf]
  %v897 = vld [vmem:[%s5 + $0x34] sm:$0xf]
  %v898 = vld [vmem:[%s5 + $0x38] sm:$0xf]
  %v899 = vld [vmem:[%s5 + $0x3c] sm:$0xf]
  %v900 = vld [vmem:[%s6] sm:$0x1]
  %v902 = vlaneseq
  %v903 = vshrl.u32 %v902, 7
  %v904 = vsub.s32 0, %v903
  %v905 = vrot.slane %v900, %v904
  %v923 = vunpack.c.l.b16 %v884
  %v924 = vunpack.c.l.b16 %v885
  %v925 = vunpack.c.l.b16 %v886
  %v926 = vunpack.c.l.b16 %v887
  %v927 = vunpack.c.l.b16 %v888
  %v928 = vunpack.c.l.b16 %v889
  %v929 = vunpack.c.l.b16 %v890
  %v930 = vunpack.c.l.b16 %v891
  %v931 = vunpack.c.l.b16 %v892
  %v932 = vunpack.c.l.b16 %v893
  %v933 = vunpack.c.l.b16 %v894
  %v934 = vunpack.c.l.b16 %v895
  %v935 = vunpack.c.l.b16 %v896
  %v936 = vunpack.c.l.b16 %v897
  %v937 = vunpack.c.l.b16 %v898
  %v938 = vunpack.c.l.b16 %v899
  %v939 = vpack.c.b16 %v924, %v923
  %v940 = vpack.c.b16 %v926, %v925
  %v941 = vpack.c.b16 %v928, %v927
  %v942 = vpack.c.b16 %v930, %v929
  %v943 = vpack.c.b16 %v932, %v931
  %v944 = vpack.c.b16 %v934, %v933
  %v945 = vpack.c.b16 %v936, %v935
  %v946 = vpack.c.b16 %v938, %v937
  %955 = vmatprep.subr.bf16.mxu0 0
  %956 = vmatpush1.bf16.msra.mxu0 %v939
  %957 = vmatprep.subr.bf16.mxu0 0
  %958 = vmatpush1.bf16.msra.mxu0 %v940
  %959 = vmatprep.subr.bf16.mxu0 0
  %960 = vmatpush1.bf16.msra.mxu0 %v941
  %961 = vmatprep.subr.bf16.mxu0 0
  %962 = vmatpush1.bf16.msra.mxu0 %v942
  %963 = vmatprep.subr.bf16.mxu0 0
  %964 = vmatpush1.bf16.msra.mxu0 %v943
  %965 = vmatprep.subr.bf16.mxu0 0
  %966 = vmatpush1.bf16.msra.mxu0 %v944
  %967 = vmatprep.subr.bf16.mxu0 0
  %968 = vmatpush1.bf16.msra.mxu0 %v945
  %969 = vmatprep.subr.bf16.mxu0 0
  %970 = vmatpush1.bf16.msra.mxu0 %v946
  %971 = vmatprep.subr.bf16.mxu0 0
  %972 = vmatpush1.bf16.msra.mxu0 0
  %973 = vmatprep.subr.bf16.mxu0 0
  %974 = vmatpush1.bf16.msra.mxu0 0
  %975 = vmatprep.subr.bf16.mxu0 0
  %976 = vmatpush1.bf16.msra.mxu0 0
  %977 = vmatprep.subr.bf16.mxu0 0
  %978 = vmatpush1.bf16.msra.mxu0 0
  %979 = vmatprep.subr.bf16.mxu0 0
  %980 = vmatpush1.bf16.msra.mxu0 0
  %981 = vmatprep.subr.bf16.mxu0 0
  %982 = vmatpush1.bf16.msra.mxu0 0
  %983 = vmatprep.subr.bf16.mxu0 0
  %984 = vmatpush1.bf16.msra.mxu0 0
  %985 = vmatprep.subr.bf16.mxu0 0
  %986 = vmatpush1.bf16.msra.mxu0 0
  %987 = vmatprep.mubr.bf16.mxu0 0
  %988 = vmatmul.mubr.bf16.gmra.mrb[0].mxu0 %v883
  %v989 = vpop.f32.mrb[0].mxu0
  %v990 = vadd.f32 %v905, %v989
  %v991 = vpop.f32.mrb[0].mxu0
  %v992 = vpop.f32.mrb[0].mxu0
  %v993 = vpop.f32.mrb[0].mxu0
  %994 = vdwg.mxu0
  %v995 = vlaneseq
  %v996 = vand.u32 %v995, 127
  %vm997 = vcmp.lt.s32.totalorder %v996, 3
  %v998 = vsel %vm997, %v990, -1e+30
  %vm999 = vcmask 1041408
  %v1000 = vsel %vm999, %v998, -inf
  %1001 = vmax.xlane.f32.xlu0 %v1000
  %v1002 = vpop.xlane.xlu0 %1001
  %v1003 = vsub.f32 %v998, %v1002
  %v1004 = vmul.f32 %v1003, 1.442695
  %v1005 = vpow.pop %v1004
  %v1006 = vsel %vm999, %v1005, 0.0
  %1007 = vadd.xlane.f32.xlu0 %v1006
  %v1008 = vpop.xlane.xlu0 %1007
  %v1009 = vrcp.pop %v1008
  %v1010 = vmul.f32 %v1005, %v1009
  %v1011 = vsel %vm997, %v1010, %v990
  %1012 = vst [vmem:[%s7] sm:$0x3] %v1011
  // Predicated region
  $region30: #{encoder_forward.9} parent=0 // pred_check
    _
  $region31: #{encoder_forward.9} parent=0 // pred_check_branch
    %1014 = sbr.rel (0) target = $region33
  $region32: #{encoder_forward.9} parent=0 // pred_region
    _
  $region33: #{encoder_forward.9} parent=0 // pred_fallthru
    _
  // Predicated region
  $region34: #{encoder_forward.9} parent=0 // pred_check
    _
  $region35: #{encoder_forward.9} parent=0 // pred_check_branch
    %1016 = sbr.rel (0) target = $region37
  $region36: #{encoder_forward.9} parent=0 // pred_region
    _
  $region37: #{encoder_forward.9} parent=0 // pred_fallthru
    _

</llo_original>
